<compile_context>
chip_gen: v7x
topology: tpu7x:2x2x1
jax: 0.10.0
libtpu: 0.0.40
codegen_flags: <defaults>
</compile_context>

<pallas_src>
import functools

import jax
import jax.numpy as jnp
from jax.experimental import pallas as pl
from jax.experimental.pallas import tpu as pltpu

_LN_EPS = 1e-5
_MXU_DT = jnp.bfloat16          # MXU operand dtype; accumulation stays f32

# per-layer weight ordering used for the depth-stacked kernel inputs
_LAYER_KEYS = (
    ('pixel_attn', ('ln_g', 'ln_b', 'wqkv', 'bqkv', 'wo', 'bo')),
    ('pixel_mlp',  ('ln_g', 'ln_b', 'w1', 'b1', 'w2', 'b2')),
    ('pix2patch',  ('ln_g', 'ln_b', 'w', 'b')),
    ('patch_attn', ('ln_g', 'ln_b', 'wqkv', 'bqkv', 'wo', 'bo')),
    ('patch_mlp',  ('ln_g', 'ln_b', 'w1', 'b1', 'w2', 'b2')),
)
_N_LAYER_REFS = sum(len(k) for _, k in _LAYER_KEYS)   # 28


# ----------------------------------------------------------------------------
# helpers used inside the kernel
# ----------------------------------------------------------------------------
def _layernorm(x, g, b):
    mu = jnp.mean(x, axis=-1, keepdims=True)
    xc = x - mu
    var = jnp.mean(xc * xc, axis=-1, keepdims=True)
    return xc * jax.lax.rsqrt(var + _LN_EPS) * g + b


def _gelu(x):
    # tanh approximation of nn.GELU (tanh goes to the EUP slot); differs from the
    # exact erf form by <1e-3 and lowers on every Mosaic build.
    return 0.5 * x * (1.0 + jnp.tanh(0.7978845608028654 * (x + 0.044715 * x * x * x)))


def _attention(x2, groups, tokens, g, b, wqkv, bqkv, wo, bo, n_heads, head_dim):
    """PreNorm multi-head self-attention + residual on a grouped 2-D slab.

    x2: (groups*tokens, dim) with the rows of one attention group contiguous
    (patch-major for the inner transformer, groups=1 for the outer transformer).
    The 1/sqrt(head_dim) scale is pre-folded into the Q block of wqkv/bqkv.
    """
    inner = n_heads * head_dim
    y = _layernorm(x2, g, b)
    qkv = jnp.dot(y.astype(_MXU_DT), wqkv, preferred_element_type=jnp.float32) + bqkv
    qkv3 = qkv.reshape(groups, tokens, 3 * inner).astype(_MXU_DT)
    head_outs = []
    for h in range(n_heads):
        lo = h * head_dim
        q = qkv3[:, :, lo:lo + head_dim]
        k = qkv3[:, :, inner + lo:inner + lo + head_dim]
        v = qkv3[:, :, 2 * inner + lo:2 * inner + lo + head_dim]
        # per-group (block-diagonal) attention: scores are (groups, T, T)
        s = jnp.einsum('gid,gjd->gij', q, k, preferred_element_type=jnp.float32)
        s = s - jnp.max(s, axis=-1, keepdims=True)
        e = jnp.exp(s)
        p = e * pl.reciprocal(jnp.sum(e, axis=-1, keepdims=True), approx=True)
        head_outs.append(jnp.einsum('gij,gjd->gid', p.astype(_MXU_DT), v,
                                    preferred_element_type=jnp.float32))
    o = jnp.concatenate(head_outs, axis=-1) if n_heads > 1 else head_outs[0]
    o2 = o.reshape(groups * tokens, inner).astype(_MXU_DT)
    proj = jnp.dot(o2, wo, preferred_element_type=jnp.float32) + bo
    return x2 + proj


def _mlp(x2, g, b, w1, b1, w2, b2):
    y = _layernorm(x2, g, b)
    h = _gelu(jnp.dot(y.astype(_MXU_DT), w1, preferred_element_type=jnp.float32) + b1)
    return x2 + jnp.dot(h.astype(_MXU_DT), w2, preferred_element_type=jnp.float32) + b2


# ----------------------------------------------------------------------------
# the fused TNT kernel: grid = (batch, depth)
# ----------------------------------------------------------------------------
def _tnt_kernel(*refs, n_patches, n_pix, pixel_dim, patch_dim,
                inner_heads, inner_hd, outer_heads, outer_hd):
    (xu_ref, wpe_ref, bpe_ref, pos_ref, pat0_ref) = refs[:5]
    lw = refs[5:5 + _N_LAYER_REFS]
    hg_ref, hb_ref, hw_ref, hbias_ref = refs[5 + _N_LAYER_REFS:9 + _N_LAYER_REFS]
    out_ref = refs[9 + _N_LAYER_REFS]
    pix_st, pat_st = refs[10 + _N_LAYER_REFS], refs[11 + _N_LAYER_REFS]

    # stacked per-layer weights: leading depth-block of size 1 -> drop with [0]
    (pa_g, pa_b, pa_wqkv, pa_bqkv, pa_wo, pa_bo,
     pm_g, pm_b, pm_w1, pm_b1, pm_w2, pm_b2,
     pp_g, pp_b, pp_w, pp_bias,
     ta_g, ta_b, ta_wqkv, ta_bqkv, ta_wo, ta_bo,
     tm_g, tm_b, tm_w1, tm_b1, tm_w2, tm_b2) = [r[0] for r in lw]

    d = pl.program_id(1)
    P = n_patches

    # ---- first layer only: pixel embedding + pos emb, patch-token init ------
    @pl.when(d == 0)
    def _():
        emb = jnp.dot(xu_ref[0].astype(_MXU_DT), wpe_ref[...],
                      preferred_element_type=jnp.float32)
        pix_st[...] = emb + bpe_ref[...] + pos_ref[...]
        pat_st[...] = pat0_ref[...]

    pix = pix_st[...]          # (P*n_pix, pixel_dim), row = p*n_pix + pixel
    pat = pat_st[...]          # (P+1, patch_dim)

    # ---- inner transformer over pixel tokens (per-patch block attention) ----
    pix = _attention(pix, P, n_pix, pa_g, pa_b, pa_wqkv, pa_bqkv, pa_wo, pa_bo,
                     inner_heads, inner_hd)
    pix = _mlp(pix, pm_g, pm_b, pm_w1, pm_b1, pm_w2, pm_b2)

    # ---- pixel -> patch residual: LN, '(n d)' flatten, Linear ----------------
    y3 = _layernorm(pix, pp_g, pp_b).reshape(P, n_pix, pixel_dim).astype(_MXU_DT)
    # sum over pixel index n of y3[:, n, :] @ W[n*pd:(n+1)*pd]  ==  flatten+Linear
    res = None
    for n in range(n_pix):
        term = jnp.dot(y3[:, n, :], pp_w[n * pixel_dim:(n + 1) * pixel_dim, :],
                       preferred_element_type=jnp.float32)
        res = term if res is None else res + term
    res = res + pp_bias                                     # (P, patch_dim)
    # F.pad(..., (0,0,1,0)): zero row at the class-token slot
    pat = pat + jnp.concatenate(
        [jnp.zeros((1, patch_dim), jnp.float32), res], axis=0)

    # ---- outer transformer over patch tokens --------------------------------
    pat = _attention(pat, 1, P + 1, ta_g, ta_b, ta_wqkv, ta_bqkv, ta_wo, ta_bo,
                     outer_heads, outer_hd)
    pat = _mlp(pat, tm_g, tm_b, tm_w1, tm_b1, tm_w2, tm_b2)

    pix_st[...] = pix
    pat_st[...] = pat

    # ---- last layer only: classification head on the class token ------------
    @pl.when(d == pl.num_programs(1) - 1)
    def _():
        cls = _layernorm(pat[0:1, :], hg_ref[...], hb_ref[...])
        logits = jnp.dot(cls.astype(_MXU_DT), hw_ref[...],
                         preferred_element_type=jnp.float32) + hbias_ref[...]
        out_ref[0] = logits.astype(out_ref.dtype)


# ----------------------------------------------------------------------------
# BlockSpec helpers
# ----------------------------------------------------------------------------
def _rep(a):
    """Whole-array block, fetched once and kept resident across the grid."""
    zero = (0,) * a.ndim
    return pl.BlockSpec(a.shape, lambda i, d, _z=zero: _z)


def _per_layer(a):
    """Depth-stacked array: one layer slab per depth grid step (pipelined)."""
    tail = (0,) * (a.ndim - 1)
    return pl.BlockSpec((1,) + a.shape[1:], lambda i, d, _t=tail: (d,) + _t)


# ----------------------------------------------------------------------------
# forward
# ----------------------------------------------------------------------------
def tnt_forward(prep, x, cfg):
    b, c, H, W = x.shape
    ps, ks = cfg['patch_size'], cfg['pixel_size']
    nh, nw = H // ps, W // ps
    P = nh * nw                                   # num_patches
    pwid = (ps - ks) // ks + 1                    # get_output_size(ps, ks, ks, 0)
    n_pix = pwid * pwid
    R = P * n_pix
    F = c * ks * ks
    pd, xd = cfg['pixel_dim'], cfg['patch_dim']
    ncls, depth = cfg['n_classes'], cfg['depth']

    # host glue: Rearrange + Unfold(k=s=pixel_size) as reshape/transpose.
    # rows are patch-major: row = patch*(n_pix) + pixel, features = (c, ki, kj).
    xr = x.reshape(b, c, nh, pwid, ks, nw, pwid, ks)
    xu = xr.transpose(0, 2, 5, 3, 6, 1, 4, 7).reshape(b, R, F)

    pos_rows = jnp.tile(prep['pixel_pos_emb'][:n_pix], (P, 1))               # (R, pd)
    pat0 = prep['patch_tokens'][:P + 1] + prep['patch_pos_emb'][:P + 1]      # (P+1, xd)

    kern = functools.partial(
        _tnt_kernel, n_patches=P, n_pix=n_pix, pixel_dim=pd, patch_dim=xd,
        inner_heads=cfg['inner_n_heads'], inner_hd=cfg['inner_head_dim'],
        outer_heads=cfg['outer_n_heads'], outer_hd=cfg['outer_head_dim'])

    in_specs = ([pl.BlockSpec((1, R, F), lambda i, d: (i, 0, 0))]
                + [_rep(prep['embed_w']), _rep(prep['embed_b']),
                   _rep(pos_rows), _rep(pat0)]
                + [_per_layer(a) for a in prep['layer_stack']]
                + [_rep(prep['head_ln_g']), _rep(prep['head_ln_b']),
                   _rep(prep['head_w']), _rep(prep['head_b'])])

    out = pl.pallas_call(
        kern,
        out_shape=jax.ShapeDtypeStruct((b, 1, ncls), jnp.float32),
        grid=(b, depth),
        in_specs=in_specs,
        out_specs=pl.BlockSpec((1, 1, ncls), lambda i, d: (i, 0, 0)),
        scratch_shapes=[pltpu.VMEM((R, pd), jnp.float32),      # pixel tokens
                        pltpu.VMEM((P + 1, xd), jnp.float32)], # patch tokens
        compiler_params=pltpu.CompilerParams(
            dimension_semantics=("parallel", "arbitrary")),
    )(xu, prep['embed_w'], prep['embed_b'], pos_rows, pat0,
      *prep['layer_stack'],
      prep['head_ln_g'], prep['head_ln_b'], prep['head_w'], prep['head_b'])
    return out[:, 0, :]


# ----------------------------------------------------------------------------
# parameter preparation: fold Q scale, cast matmul weights to bf16, stack depth
# ----------------------------------------------------------------------------
def prepare_params(params, cfg):
    ii = cfg['inner_n_heads'] * cfg['inner_head_dim']
    oi = cfg['outer_n_heads'] * cfg['outer_head_dim']

    def fold_attn(a, inner, head_dim):
        s = 1.0 / float(head_dim) ** 0.5
        scale = jnp.concatenate([jnp.full((inner,), s, jnp.float32),
                                 jnp.ones((2 * inner,), jnp.float32)])
        return dict(ln_g=a['ln_g'], ln_b=a['ln_b'],
                    wqkv=(a['wqkv'] * scale).astype(_MXU_DT),
                    bqkv=a['bqkv'] * scale,
                    wo=a['wo'].astype(_MXU_DT), bo=a['bo'])

    def cast_mlp(m):
        return dict(ln_g=m['ln_g'], ln_b=m['ln_b'],
                    w1=m['w1'].astype(_MXU_DT), b1=m['b1'],
                    w2=m['w2'].astype(_MXU_DT), b2=m['b2'])

    layers = []
    for lp in params['layers']:
        layers.append(dict(
            pixel_attn=fold_attn(lp['pixel_attn'], ii, cfg['inner_head_dim']),
            pixel_mlp=cast_mlp(lp['pixel_mlp']),
            pix2patch=dict(ln_g=lp['pix2patch']['ln_g'],
                           ln_b=lp['pix2patch']['ln_b'],
                           w=lp['pix2patch']['w'].astype(_MXU_DT),
                           b=lp['pix2patch']['b']),
            patch_attn=fold_attn(lp['patch_attn'], oi, cfg['outer_head_dim']),
            patch_mlp=cast_mlp(lp['patch_mlp']),
        ))

    stack = []
    for group, keys in _LAYER_KEYS:
        for k in keys:
            stack.append(jnp.stack([l[group][k] for l in layers], axis=0))

    return dict(
        embed_w=params['pixel_embed']['w'].astype(_MXU_DT),
        embed_b=params['pixel_embed']['b'],
        pixel_pos_emb=params['pixel_pos_emb'],
        patch_tokens=params['patch_tokens'],
        patch_pos_emb=params['patch_pos_emb'],
        layer_stack=tuple(stack),
        head_ln_g=params['head']['ln_g'], head_ln_b=params['head']['ln_b'],
        head_w=params['head']['w'].astype(_MXU_DT), head_b=params['head']['b'])


# ----------------------------------------------------------------------------
# deterministic parameter init (shapes follow TNT.__init__; QKV stored fused)
# ----------------------------------------------------------------------------
def init_params(key, cfg):
    kit = iter(jax.random.split(key, 256))

    def nrm(shape, scale=0.02):
        return jax.random.normal(next(kit), shape, jnp.float32) * scale

    def linear(din, dout):
        return nrm((din, dout)), jnp.zeros((1, dout), jnp.float32)

    def ln(d):
        return jnp.ones((1, d), jnp.float32), jnp.zeros((1, d), jnp.float32)

    def attn(dim, n_heads, head_dim):
        inner = n_heads * head_dim
        g, b = ln(dim)
        wqkv, bqkv = linear(dim, 3 * inner)      # fused [q | k | v]
        wo, bo = linear(inner, dim)
        return dict(ln_g=g, ln_b=b, wqkv=wqkv, bqkv=bqkv, wo=wo, bo=bo)

    def mlp(dim, expansion=4):
        g, b = ln(dim)
        w1, b1 = linear(dim, expansion * dim)
        w2, b2 = linear(expansion * dim, dim)
        return dict(ln_g=g, ln_b=b, w1=w1, b1=b1, w2=w2, b2=b2)

    P = (cfg['image_size'] // cfg['patch_size']) ** 2
    pwid = (cfg['patch_size'] - cfg['pixel_size']) // cfg['pixel_size'] + 1
    n_pix = pwid * pwid
    F = cfg['channels'] * cfg['pixel_size'] ** 2
    pd, xd = cfg['pixel_dim'], cfg['patch_dim']

    wpe, bpe = linear(F, pd)
    layers = []
    for _ in range(cfg['depth']):
        g, b = ln(pd)
        w_p2p, b_p2p = linear(n_pix * pd, xd)    # '(n d)' flatten order: n*pd + d
        layers.append(dict(
            pixel_attn=attn(pd, cfg['inner_n_heads'], cfg['inner_head_dim']),
            pixel_mlp=mlp(pd),
            pix2patch=dict(ln_g=g, ln_b=b, w=w_p2p, b=b_p2p),
            patch_attn=attn(xd, cfg['outer_n_heads'], cfg['outer_head_dim']),
            patch_mlp=mlp(xd),
        ))
    gh, bh = ln(xd)
    wh, bhh = linear(xd, cfg['n_classes'])
    return dict(
        pixel_embed=dict(w=wpe, b=bpe),
        patch_tokens=nrm((P + 1, xd), 1.0),
        patch_pos_emb=nrm((P + 1, xd), 1.0),
        pixel_pos_emb=nrm((n_pix, pd), 1.0),
        layers=layers,
        head=dict(ln_g=gh, ln_b=bh, w=wh, b=bhh))


if __name__ == "__main__":
    cfg = dict(
        image_size=16, patch_size=8, pixel_size=2, channels=3,
        patch_dim=32, pixel_dim=16, n_classes=10, depth=2,
        inner_n_heads=2, inner_head_dim=8,   # inner attention dim = 16 = pixel_dim
        outer_n_heads=4, outer_head_dim=8,   # outer attention dim = 32 = patch_dim
    )
    key = jax.random.PRNGKey(0)
    kp, kx = jax.random.split(key)
    params = init_params(kp, cfg)
    prep = prepare_params(params, cfg)
    x = jax.random.normal(
        kx, (2, cfg['channels'], cfg['image_size'], cfg['image_size']), jnp.float32)

    fwd = jax.jit(functools.partial(tnt_forward, cfg=cfg))
    out = jax.block_until_ready(fwd(prep, x))

    assert out.shape == (2, cfg['n_classes']), out.shape
    assert bool(jnp.all(jnp.isfinite(out)))
    print("KERNEL_OK")
</pallas_src>

<mosaic_0001>
module attributes {stable_mosaic.version = 11 : i64} {
  func.func @_tnt_kernel(%arg0: i32, %arg1: i32, %arg2: memref<1x64x12xf32, #tpu.memory_space<vmem>>, %arg3: memref<12x16xbf16, #tpu.memory_space<vmem>>, %arg4: memref<1x16xf32, #tpu.memory_space<vmem>>, %arg5: memref<64x16xf32, #tpu.memory_space<vmem>>, %arg6: memref<5x32xf32, #tpu.memory_space<vmem>>, %arg7: memref<1x1x16xf32, #tpu.memory_space<vmem>>, %arg8: memref<1x1x16xf32, #tpu.memory_space<vmem>>, %arg9: memref<1x16x48xbf16, #tpu.memory_space<vmem>>, %arg10: memref<1x1x48xf32, #tpu.memory_space<vmem>>, %arg11: memref<1x16x16xbf16, #tpu.memory_space<vmem>>, %arg12: memref<1x1x16xf32, #tpu.memory_space<vmem>>, %arg13: memref<1x1x16xf32, #tpu.memory_space<vmem>>, %arg14: memref<1x1x16xf32, #tpu.memory_space<vmem>>, %arg15: memref<1x16x64xbf16, #tpu.memory_space<vmem>>, %arg16: memref<1x1x64xf32, #tpu.memory_space<vmem>>, %arg17: memref<1x64x16xbf16, #tpu.memory_space<vmem>>, %arg18: memref<1x1x16xf32, #tpu.memory_space<vmem>>, %arg19: memref<1x1x16xf32, #tpu.memory_space<vmem>>, %arg20: memref<1x1x16xf32, #tpu.memory_space<vmem>>, %arg21: memref<1x256x32xbf16, #tpu.memory_space<vmem>>, %arg22: memref<1x1x32xf32, #tpu.memory_space<vmem>>, %arg23: memref<1x1x32xf32, #tpu.memory_space<vmem>>, %arg24: memref<1x1x32xf32, #tpu.memory_space<vmem>>, %arg25: memref<1x32x96xbf16, #tpu.memory_space<vmem>>, %arg26: memref<1x1x96xf32, #tpu.memory_space<vmem>>, %arg27: memref<1x32x32xbf16, #tpu.memory_space<vmem>>, %arg28: memref<1x1x32xf32, #tpu.memory_space<vmem>>, %arg29: memref<1x1x32xf32, #tpu.memory_space<vmem>>, %arg30: memref<1x1x32xf32, #tpu.memory_space<vmem>>, %arg31: memref<1x32x128xbf16, #tpu.memory_space<vmem>>, %arg32: memref<1x1x128xf32, #tpu.memory_space<vmem>>, %arg33: memref<1x128x32xbf16, #tpu.memory_space<vmem>>, %arg34: memref<1x1x32xf32, #tpu.memory_space<vmem>>, %arg35: memref<1x32xf32, #tpu.memory_space<vmem>>, %arg36: memref<1x32xf32, #tpu.memory_space<vmem>>, %arg37: memref<32x10xbf16, #tpu.memory_space<vmem>>, %arg38: memref<1x10xf32, #tpu.memory_space<vmem>>, %arg39: memref<1x1x10xf32, #tpu.memory_space<vmem>>, %arg40: memref<64x16xf32, #tpu.memory_space<vmem>>, %arg41: memref<5x32xf32, #tpu.memory_space<vmem>>) attributes {dimension_semantics = [#tpu.dimension_semantics<parallel>, #tpu.dimension_semantics<arbitrary>], iteration_bounds = array<i64: 2, 2>, scalar_prefetch = 0 : i64, scratch_operands = 2 : i64, tpu.core_type = #tpu.core_type<tc>, window_params = [{transform_indices = @transform_0, window_bounds = array<i64: 1, 64, 12>}, {pipeline_mode = #tpu.pipeline_mode<synchronous>, transform_indices = @transform_1, window_bounds = array<i64: 12, 16>}, {pipeline_mode = #tpu.pipeline_mode<synchronous>, transform_indices = @transform_2, window_bounds = array<i64: 1, 16>}, {pipeline_mode = #tpu.pipeline_mode<synchronous>, transform_indices = @transform_3, window_bounds = array<i64: 64, 16>}, {pipeline_mode = #tpu.pipeline_mode<synchronous>, transform_indices = @transform_4, window_bounds = array<i64: 5, 32>}, {transform_indices = @transform_5, window_bounds = array<i64: 1, 1, 16>}, {transform_indices = @transform_6, window_bounds = array<i64: 1, 1, 16>}, {transform_indices = @transform_7, window_bounds = array<i64: 1, 16, 48>}, {transform_indices = @transform_8, window_bounds = array<i64: 1, 1, 48>}, {transform_indices = @transform_9, window_bounds = array<i64: 1, 16, 16>}, {transform_indices = @transform_10, window_bounds = array<i64: 1, 1, 16>}, {transform_indices = @transform_11, window_bounds = array<i64: 1, 1, 16>}, {transform_indices = @transform_12, window_bounds = array<i64: 1, 1, 16>}, {transform_indices = @transform_13, window_bounds = array<i64: 1, 16, 64>}, {transform_indices = @transform_14, window_bounds = array<i64: 1, 1, 64>}, {transform_indices = @transform_15, window_bounds = array<i64: 1, 64, 16>}, {transform_indices = @transform_16, window_bounds = array<i64: 1, 1, 16>}, {transform_indices = @transform_17, window_bounds = array<i64: 1, 1, 16>}, {transform_indices = @transform_18, window_bounds = array<i64: 1, 1, 16>}, {transform_indices = @transform_19, window_bounds = array<i64: 1, 256, 32>}, {transform_indices = @transform_20, window_bounds = array<i64: 1, 1, 32>}, {transform_indices = @transform_21, window_bounds = array<i64: 1, 1, 32>}, {transform_indices = @transform_22, window_bounds = array<i64: 1, 1, 32>}, {transform_indices = @transform_23, window_bounds = array<i64: 1, 32, 96>}, {transform_indices = @transform_24, window_bounds = array<i64: 1, 1, 96>}, {transform_indices = @transform_25, window_bounds = array<i64: 1, 32, 32>}, {transform_indices = @transform_26, window_bounds = array<i64: 1, 1, 32>}, {transform_indices = @transform_27, window_bounds = array<i64: 1, 1, 32>}, {transform_indices = @transform_28, window_bounds = array<i64: 1, 1, 32>}, {transform_indices = @transform_29, window_bounds = array<i64: 1, 32, 128>}, {transform_indices = @transform_30, window_bounds = array<i64: 1, 1, 128>}, {transform_indices = @transform_31, window_bounds = array<i64: 1, 128, 32>}, {transform_indices = @transform_32, window_bounds = array<i64: 1, 1, 32>}, {pipeline_mode = #tpu.pipeline_mode<synchronous>, transform_indices = @transform_33, window_bounds = array<i64: 1, 32>}, {pipeline_mode = #tpu.pipeline_mode<synchronous>, transform_indices = @transform_34, window_bounds = array<i64: 1, 32>}, {pipeline_mode = #tpu.pipeline_mode<synchronous>, transform_indices = @transform_35, window_bounds = array<i64: 32, 10>}, {pipeline_mode = #tpu.pipeline_mode<synchronous>, transform_indices = @transform_36, window_bounds = array<i64: 1, 10>}, {transform_indices = @transform_37, window_bounds = array<i64: 1, 1, 10>}]} {
    %c0 = arith.constant 0 : index
    %c0_0 = arith.constant 0 : index
    %c0_1 = arith.constant 0 : index
    %0 = vector.load %arg7[%c0, %c0_0, %c0_1] : memref<1x1x16xf32, #tpu.memory_space<vmem>>, vector<1x1x16xf32>
    %1 = vector.shape_cast %0 : vector<1x1x16xf32> to vector<1x16xf32>
    %c0_2 = arith.constant 0 : index
    %c0_3 = arith.constant 0 : index
    %c0_4 = arith.constant 0 : index
    %2 = vector.load %arg8[%c0_2, %c0_3, %c0_4] : memref<1x1x16xf32, #tpu.memory_space<vmem>>, vector<1x1x16xf32>
    %3 = vector.shape_cast %2 : vector<1x1x16xf32> to vector<1x16xf32>
    %c0_5 = arith.constant 0 : index
    %c0_6 = arith.constant 0 : index
    %c0_7 = arith.constant 0 : index
    %4 = vector.load %arg9[%c0_5, %c0_6, %c0_7] : memref<1x16x48xbf16, #tpu.memory_space<vmem>>, vector<1x16x48xbf16>
    %5 = vector.shape_cast %4 : vector<1x16x48xbf16> to vector<16x48xbf16>
    %c0_8 = arith.constant 0 : index
    %c0_9 = arith.constant 0 : index
    %c0_10 = arith.constant 0 : index
    %6 = vector.load %arg10[%c0_8, %c0_9, %c0_10] : memref<1x1x48xf32, #tpu.memory_space<vmem>>, vector<1x1x48xf32>
    %7 = vector.shape_cast %6 : vector<1x1x48xf32> to vector<1x48xf32>
    %c0_11 = arith.constant 0 : index
    %c0_12 = arith.constant 0 : index
    %c0_13 = arith.constant 0 : index
    %8 = vector.load %arg11[%c0_11, %c0_12, %c0_13] : memref<1x16x16xbf16, #tpu.memory_space<vmem>>, vector<1x16x16xbf16>
    %9 = vector.shape_cast %8 : vector<1x16x16xbf16> to vector<16x16xbf16>
    %c0_14 = arith.constant 0 : index
    %c0_15 = arith.constant 0 : index
    %c0_16 = arith.constant 0 : index
    %10 = vector.load %arg12[%c0_14, %c0_15, %c0_16] : memref<1x1x16xf32, #tpu.memory_space<vmem>>, vector<1x1x16xf32>
    %11 = vector.shape_cast %10 : vector<1x1x16xf32> to vector<1x16xf32>
    %c0_17 = arith.constant 0 : index
    %c0_18 = arith.constant 0 : index
    %c0_19 = arith.constant 0 : index
    %12 = vector.load %arg13[%c0_17, %c0_18, %c0_19] : memref<1x1x16xf32, #tpu.memory_space<vmem>>, vector<1x1x16xf32>
    %13 = vector.shape_cast %12 : vector<1x1x16xf32> to vector<1x16xf32>
    %c0_20 = arith.constant 0 : index
    %c0_21 = arith.constant 0 : index
    %c0_22 = arith.constant 0 : index
    %14 = vector.load %arg14[%c0_20, %c0_21, %c0_22] : memref<1x1x16xf32, #tpu.memory_space<vmem>>, vector<1x1x16xf32>
    %15 = vector.shape_cast %14 : vector<1x1x16xf32> to vector<1x16xf32>
    %c0_23 = arith.constant 0 : index
    %c0_24 = arith.constant 0 : index
    %c0_25 = arith.constant 0 : index
    %16 = vector.load %arg15[%c0_23, %c0_24, %c0_25] : memref<1x16x64xbf16, #tpu.memory_space<vmem>>, vector<1x16x64xbf16>
    %17 = vector.shape_cast %16 : vector<1x16x64xbf16> to vector<16x64xbf16>
    %c0_26 = arith.constant 0 : index
    %c0_27 = arith.constant 0 : index
    %c0_28 = arith.constant 0 : index
    %18 = vector.load %arg16[%c0_26, %c0_27, %c0_28] : memref<1x1x64xf32, #tpu.memory_space<vmem>>, vector<1x1x64xf32>
    %19 = vector.shape_cast %18 : vector<1x1x64xf32> to vector<1x64xf32>
    %c0_29 = arith.constant 0 : index
    %c0_30 = arith.constant 0 : index
    %c0_31 = arith.constant 0 : index
    %20 = vector.load %arg17[%c0_29, %c0_30, %c0_31] : memref<1x64x16xbf16, #tpu.memory_space<vmem>>, vector<1x64x16xbf16>
    %21 = vector.shape_cast %20 : vector<1x64x16xbf16> to vector<64x16xbf16>
    %c0_32 = arith.constant 0 : index
    %c0_33 = arith.constant 0 : index
    %c0_34 = arith.constant 0 : index
    %22 = vector.load %arg18[%c0_32, %c0_33, %c0_34] : memref<1x1x16xf32, #tpu.memory_space<vmem>>, vector<1x1x16xf32>
    %23 = vector.shape_cast %22 : vector<1x1x16xf32> to vector<1x16xf32>
    %c0_35 = arith.constant 0 : index
    %c0_36 = arith.constant 0 : index
    %c0_37 = arith.constant 0 : index
    %24 = vector.load %arg19[%c0_35, %c0_36, %c0_37] : memref<1x1x16xf32, #tpu.memory_space<vmem>>, vector<1x1x16xf32>
    %25 = vector.shape_cast %24 : vector<1x1x16xf32> to vector<1x16xf32>
    %c0_38 = arith.constant 0 : index
    %c0_39 = arith.constant 0 : index
    %c0_40 = arith.constant 0 : index
    %26 = vector.load %arg20[%c0_38, %c0_39, %c0_40] : memref<1x1x16xf32, #tpu.memory_space<vmem>>, vector<1x1x16xf32>
    %27 = vector.shape_cast %26 : vector<1x1x16xf32> to vector<1x16xf32>
    %c0_41 = arith.constant 0 : index
    %c0_42 = arith.constant 0 : index
    %c0_43 = arith.constant 0 : index
    %28 = vector.load %arg21[%c0_41, %c0_42, %c0_43] : memref<1x256x32xbf16, #tpu.memory_space<vmem>>, vector<1x256x32xbf16>
    %29 = vector.shape_cast %28 : vector<1x256x32xbf16> to vector<256x32xbf16>
    %c0_44 = arith.constant 0 : index
    %c0_45 = arith.constant 0 : index
    %c0_46 = arith.constant 0 : index
    %30 = vector.load %arg22[%c0_44, %c0_45, %c0_46] : memref<1x1x32xf32, #tpu.memory_space<vmem>>, vector<1x1x32xf32>
    %31 = vector.shape_cast %30 : vector<1x1x32xf32> to vector<1x32xf32>
    %c0_47 = arith.constant 0 : index
    %c0_48 = arith.constant 0 : index
    %c0_49 = arith.constant 0 : index
    %32 = vector.load %arg23[%c0_47, %c0_48, %c0_49] : memref<1x1x32xf32, #tpu.memory_space<vmem>>, vector<1x1x32xf32>
    %33 = vector.shape_cast %32 : vector<1x1x32xf32> to vector<1x32xf32>
    %c0_50 = arith.constant 0 : index
    %c0_51 = arith.constant 0 : index
    %c0_52 = arith.constant 0 : index
    %34 = vector.load %arg24[%c0_50, %c0_51, %c0_52] : memref<1x1x32xf32, #tpu.memory_space<vmem>>, vector<1x1x32xf32>
    %35 = vector.shape_cast %34 : vector<1x1x32xf32> to vector<1x32xf32>
    %c0_53 = arith.constant 0 : index
    %c0_54 = arith.constant 0 : index
    %c0_55 = arith.constant 0 : index
    %36 = vector.load %arg25[%c0_53, %c0_54, %c0_55] : memref<1x32x96xbf16, #tpu.memory_space<vmem>>, vector<1x32x96xbf16>
    %37 = vector.shape_cast %36 : vector<1x32x96xbf16> to vector<32x96xbf16>
    %c0_56 = arith.constant 0 : index
    %c0_57 = arith.constant 0 : index
    %c0_58 = arith.constant 0 : index
    %38 = vector.load %arg26[%c0_56, %c0_57, %c0_58] : memref<1x1x96xf32, #tpu.memory_space<vmem>>, vector<1x1x96xf32>
    %39 = vector.shape_cast %38 : vector<1x1x96xf32> to vector<1x96xf32>
    %c0_59 = arith.constant 0 : index
    %c0_60 = arith.constant 0 : index
    %c0_61 = arith.constant 0 : index
    %40 = vector.load %arg27[%c0_59, %c0_60, %c0_61] : memref<1x32x32xbf16, #tpu.memory_space<vmem>>, vector<1x32x32xbf16>
    %41 = vector.shape_cast %40 : vector<1x32x32xbf16> to vector<32x32xbf16>
    %c0_62 = arith.constant 0 : index
    %c0_63 = arith.constant 0 : index
    %c0_64 = arith.constant 0 : index
    %42 = vector.load %arg28[%c0_62, %c0_63, %c0_64] : memref<1x1x32xf32, #tpu.memory_space<vmem>>, vector<1x1x32xf32>
    %43 = vector.shape_cast %42 : vector<1x1x32xf32> to vector<1x32xf32>
    %c0_65 = arith.constant 0 : index
    %c0_66 = arith.constant 0 : index
    %c0_67 = arith.constant 0 : index
    %44 = vector.load %arg29[%c0_65, %c0_66, %c0_67] : memref<1x1x32xf32, #tpu.memory_space<vmem>>, vector<1x1x32xf32>
    %45 = vector.shape_cast %44 : vector<1x1x32xf32> to vector<1x32xf32>
    %c0_68 = arith.constant 0 : index
    %c0_69 = arith.constant 0 : index
    %c0_70 = arith.constant 0 : index
    %46 = vector.load %arg30[%c0_68, %c0_69, %c0_70] : memref<1x1x32xf32, #tpu.memory_space<vmem>>, vector<1x1x32xf32>
    %47 = vector.shape_cast %46 : vector<1x1x32xf32> to vector<1x32xf32>
    %c0_71 = arith.constant 0 : index
    %c0_72 = arith.constant 0 : index
    %c0_73 = arith.constant 0 : index
    %48 = vector.load %arg31[%c0_71, %c0_72, %c0_73] : memref<1x32x128xbf16, #tpu.memory_space<vmem>>, vector<1x32x128xbf16>
    %49 = vector.shape_cast %48 : vector<1x32x128xbf16> to vector<32x128xbf16>
    %c0_74 = arith.constant 0 : index
    %c0_75 = arith.constant 0 : index
    %c0_76 = arith.constant 0 : index
    %50 = vector.load %arg32[%c0_74, %c0_75, %c0_76] : memref<1x1x128xf32, #tpu.memory_space<vmem>>, vector<1x1x128xf32>
    %51 = vector.shape_cast %50 : vector<1x1x128xf32> to vector<1x128xf32>
    %c0_77 = arith.constant 0 : index
    %c0_78 = arith.constant 0 : index
    %c0_79 = arith.constant 0 : index
    %52 = vector.load %arg33[%c0_77, %c0_78, %c0_79] : memref<1x128x32xbf16, #tpu.memory_space<vmem>>, vector<1x128x32xbf16>
    %53 = vector.shape_cast %52 : vector<1x128x32xbf16> to vector<128x32xbf16>
    %c0_80 = arith.constant 0 : index
    %c0_81 = arith.constant 0 : index
    %c0_82 = arith.constant 0 : index
    %54 = vector.load %arg34[%c0_80, %c0_81, %c0_82] : memref<1x1x32xf32, #tpu.memory_space<vmem>>, vector<1x1x32xf32>
    %55 = vector.shape_cast %54 : vector<1x1x32xf32> to vector<1x32xf32>
    %c0_i32 = arith.constant 0 : i32
    %56 = arith.cmpi eq, %arg1, %c0_i32 : i32
    %57 = arith.extui %56 : i1 to i32
    %c0_i32_83 = arith.constant 0 : i32
    %58 = arith.cmpi ne, %57, %c0_i32_83 : i32
    scf.if %58 {
      %c0_174 = arith.constant 0 : index
      %c0_175 = arith.constant 0 : index
      %c0_176 = arith.constant 0 : index
      %418 = vector.load %arg2[%c0_174, %c0_175, %c0_176] : memref<1x64x12xf32, #tpu.memory_space<vmem>>, vector<1x64x12xf32>
      %419 = vector.shape_cast %418 : vector<1x64x12xf32> to vector<64x12xf32>
      %420 = arith.truncf %419 : vector<64x12xf32> to vector<64x12xbf16>
      %c0_177 = arith.constant 0 : index
      %c0_178 = arith.constant 0 : index
      %421 = vector.load %arg3[%c0_177, %c0_178] : memref<12x16xbf16, #tpu.memory_space<vmem>>, vector<12x16xbf16>
      %cst_179 = arith.constant dense<0.000000e+00> : vector<64x16xf32>
      %422 = tpu.matmul %420, %421, %cst_179 {dimension_numbers = #tpu.dot_dimension_numbers<[1], [0], [0], [1], [0, 0, 1, 1], [], []>} : vector<64x12xbf16>, vector<12x16xbf16>, vector<64x16xf32> -> vector<64x16xf32>
      %c0_180 = arith.constant 0 : index
      %c0_181 = arith.constant 0 : index
      %423 = vector.load %arg4[%c0_180, %c0_181] : memref<1x16xf32, #tpu.memory_space<vmem>>, vector<1x16xf32>
      %424 = vector.broadcast %423 : vector<1x16xf32> to vector<64x16xf32>
      %425 = arith.addf %422, %424 : vector<64x16xf32>
      %c0_182 = arith.constant 0 : index
      %c0_183 = arith.constant 0 : index
      %426 = vector.load %arg5[%c0_182, %c0_183] : memref<64x16xf32, #tpu.memory_space<vmem>>, vector<64x16xf32>
      %427 = arith.addf %425, %426 : vector<64x16xf32>
      %c0_184 = arith.constant 0 : index
      %c0_185 = arith.constant 0 : index
      %428 = vector.load %arg40[%c0_184, %c0_185] : memref<64x16xf32, #tpu.memory_space<vmem>>, vector<64x16xf32>
      tpu.vector_store %arg40[%c0_184, %c0_185], %427 {strides = array<i32>} : memref<64x16xf32, #tpu.memory_space<vmem>>, vector<64x16xf32>,
      %c0_186 = arith.constant 0 : index
      %c0_187 = arith.constant 0 : index
      %429 = vector.load %arg6[%c0_186, %c0_187] : memref<5x32xf32, #tpu.memory_space<vmem>>, vector<5x32xf32>
      %c0_188 = arith.constant 0 : index
      %c0_189 = arith.constant 0 : index
      %430 = vector.load %arg41[%c0_188, %c0_189] : memref<5x32xf32, #tpu.memory_space<vmem>>, vector<5x32xf32>
      tpu.vector_store %arg41[%c0_188, %c0_189], %429 {strides = array<i32>} : memref<5x32xf32, #tpu.memory_space<vmem>>, vector<5x32xf32>,
    } else {
    }
    %c0_84 = arith.constant 0 : index
    %c0_85 = arith.constant 0 : index
    %59 = vector.load %arg40[%c0_84, %c0_85] : memref<64x16xf32, #tpu.memory_space<vmem>>, vector<64x16xf32>
    %c0_86 = arith.constant 0 : index
    %c0_87 = arith.constant 0 : index
    %60 = vector.load %arg41[%c0_86, %c0_87] : memref<5x32xf32, #tpu.memory_space<vmem>>, vector<5x32xf32>
    %cst = arith.constant dense<0.000000e+00> : vector<64xf32>
    %61 = vector.multi_reduction <add>, %59, %cst [1] : vector<64x16xf32> to vector<64xf32>
    %62 = vector.shape_cast %61 : vector<64xf32> to vector<64x1xf32>
    %cst_88 = arith.constant 1.600000e+01 : f32
    %63 = vector.broadcast %cst_88 : f32 to vector<64x1xf32>
    %64 = arith.divf %62, %63 : vector<64x1xf32>
    %65 = vector.broadcast %64 : vector<64x1xf32> to vector<64x16xf32>
    %66 = arith.subf %59, %65 : vector<64x16xf32>
    %67 = arith.mulf %66, %66 : vector<64x16xf32>
    %cst_89 = arith.constant dense<0.000000e+00> : vector<64xf32>
    %68 = vector.multi_reduction <add>, %67, %cst_89 [1] : vector<64x16xf32> to vector<64xf32>
    %69 = vector.shape_cast %68 : vector<64xf32> to vector<64x1xf32>
    %cst_90 = arith.constant 1.600000e+01 : f32
    %70 = vector.broadcast %cst_90 : f32 to vector<64x1xf32>
    %71 = arith.divf %69, %70 : vector<64x1xf32>
    %cst_91 = arith.constant 9.99999974E-6 : f32
    %72 = vector.broadcast %cst_91 : f32 to vector<64x1xf32>
    %73 = arith.addf %71, %72 : vector<64x1xf32>
    %74 = math.rsqrt %73 : vector<64x1xf32>
    %75 = vector.broadcast %74 : vector<64x1xf32> to vector<64x16xf32>
    %76 = arith.mulf %66, %75 : vector<64x16xf32>
    %77 = vector.broadcast %1 : vector<1x16xf32> to vector<64x16xf32>
    %78 = arith.mulf %76, %77 : vector<64x16xf32>
    %79 = vector.broadcast %3 : vector<1x16xf32> to vector<64x16xf32>
    %80 = arith.addf %78, %79 : vector<64x16xf32>
    %81 = arith.truncf %80 : vector<64x16xf32> to vector<64x16xbf16>
    %cst_92 = arith.constant dense<0.000000e+00> : vector<64x48xf32>
    %82 = tpu.matmul %81, %5, %cst_92 {dimension_numbers = #tpu.dot_dimension_numbers<[1], [0], [0], [1], [0, 0, 1, 1], [], []>} : vector<64x16xbf16>, vector<16x48xbf16>, vector<64x48xf32> -> vector<64x48xf32>
    %83 = vector.broadcast %7 : vector<1x48xf32> to vector<64x48xf32>
    %84 = arith.addf %82, %83 : vector<64x48xf32>
    %85 = vector.shape_cast %84 : vector<64x48xf32> to vector<4x16x48xf32>
    %86 = arith.truncf %85 : vector<4x16x48xf32> to vector<4x16x48xbf16>
    %87 = vector.extract_strided_slice %86 {offsets = [0, 0, 0], sizes = [4, 16, 8], strides = [1, 1, 1]} : vector<4x16x48xbf16> to vector<4x16x8xbf16>
    %88 = vector.extract_strided_slice %86 {offsets = [0, 0, 16], sizes = [4, 16, 8], strides = [1, 1, 1]} : vector<4x16x48xbf16> to vector<4x16x8xbf16>
    %89 = vector.extract_strided_slice %86 {offsets = [0, 0, 32], sizes = [4, 16, 8], strides = [1, 1, 1]} : vector<4x16x48xbf16> to vector<4x16x8xbf16>
    "tpu.trace_start"() <{level = 10 : i32, message = "gid,gjd->gij"}> : () -> ()
    %cst_93 = arith.constant dense<0.000000e+00> : vector<4x16x16xf32>
    %90 = tpu.matmul %87, %88, %cst_93 {dimension_numbers = #tpu.dot_dimension_numbers<[2], [2], [1], [1], [0, 0, 0, 1, 1, 1], [0], [0]>} : vector<4x16x8xbf16>, vector<4x16x8xbf16>, vector<4x16x16xf32> -> vector<4x16x16xf32>
    "tpu.trace_stop"() : () -> ()
    %cst_94 = arith.constant dense<0xFF800000> : vector<4x16xf32>
    %91 = vector.multi_reduction <maximumf>, %90, %cst_94 [2] : vector<4x16x16xf32> to vector<4x16xf32>
    %92 = vector.shape_cast %91 : vector<4x16xf32> to vector<4x16x1xf32>
    %93 = vector.broadcast %92 : vector<4x16x1xf32> to vector<4x16x16xf32>
    %94 = arith.subf %90, %93 : vector<4x16x16xf32>
    %95 = math.exp %94 : vector<4x16x16xf32>
    %cst_95 = arith.constant dense<0.000000e+00> : vector<4x16xf32>
    %96 = vector.multi_reduction <add>, %95, %cst_95 [2] : vector<4x16x16xf32> to vector<4x16xf32>
    %97 = vector.shape_cast %96 : vector<4x16xf32> to vector<4x16x1xf32>
    %98 = tpu.reciprocal %97 {approx = true} : vector<4x16x1xf32> -> vector<4x16x1xf32>
    %99 = vector.broadcast %98 : vector<4x16x1xf32> to vector<4x16x16xf32>
    %100 = arith.mulf %95, %99 : vector<4x16x16xf32>
    %101 = arith.truncf %100 : vector<4x16x16xf32> to vector<4x16x16xbf16>
    "tpu.trace_start"() <{level = 10 : i32, message = "gij,gjd->gid"}> : () -> ()
    %cst_96 = arith.constant dense<0.000000e+00> : vector<4x16x8xf32>
    %102 = tpu.matmul %101, %89, %cst_96 {dimension_numbers = #tpu.dot_dimension_numbers<[2], [1], [1], [2], [0, 0, 0, 1, 1, 2], [0], [0]>} : vector<4x16x16xbf16>, vector<4x16x8xbf16>, vector<4x16x8xf32> -> vector<4x16x8xf32>
    "tpu.trace_stop"() : () -> ()
    %103 = vector.extract_strided_slice %86 {offsets = [0, 0, 8], sizes = [4, 16, 8], strides = [1, 1, 1]} : vector<4x16x48xbf16> to vector<4x16x8xbf16>
    %104 = vector.extract_strided_slice %86 {offsets = [0, 0, 24], sizes = [4, 16, 8], strides = [1, 1, 1]} : vector<4x16x48xbf16> to vector<4x16x8xbf16>
    %105 = vector.extract_strided_slice %86 {offsets = [0, 0, 40], sizes = [4, 16, 8], strides = [1, 1, 1]} : vector<4x16x48xbf16> to vector<4x16x8xbf16>
    "tpu.trace_start"() <{level = 10 : i32, message = "gid,gjd->gij"}> : () -> ()
    %cst_97 = arith.constant dense<0.000000e+00> : vector<4x16x16xf32>
    %106 = tpu.matmul %103, %104, %cst_97 {dimension_numbers = #tpu.dot_dimension_numbers<[2], [2], [1], [1], [0, 0, 0, 1, 1, 1], [0], [0]>} : vector<4x16x8xbf16>, vector<4x16x8xbf16>, vector<4x16x16xf32> -> vector<4x16x16xf32>
    "tpu.trace_stop"() : () -> ()
    %cst_98 = arith.constant dense<0xFF800000> : vector<4x16xf32>
    %107 = vector.multi_reduction <maximumf>, %106, %cst_98 [2] : vector<4x16x16xf32> to vector<4x16xf32>
    %108 = vector.shape_cast %107 : vector<4x16xf32> to vector<4x16x1xf32>
    %109 = vector.broadcast %108 : vector<4x16x1xf32> to vector<4x16x16xf32>
    %110 = arith.subf %106, %109 : vector<4x16x16xf32>
    %111 = math.exp %110 : vector<4x16x16xf32>
    %cst_99 = arith.constant dense<0.000000e+00> : vector<4x16xf32>
    %112 = vector.multi_reduction <add>, %111, %cst_99 [2] : vector<4x16x16xf32> to vector<4x16xf32>
    %113 = vector.shape_cast %112 : vector<4x16xf32> to vector<4x16x1xf32>
    %114 = tpu.reciprocal %113 {approx = true} : vector<4x16x1xf32> -> vector<4x16x1xf32>
    %115 = vector.broadcast %114 : vector<4x16x1xf32> to vector<4x16x16xf32>
    %116 = arith.mulf %111, %115 : vector<4x16x16xf32>
    %117 = arith.truncf %116 : vector<4x16x16xf32> to vector<4x16x16xbf16>
    "tpu.trace_start"() <{level = 10 : i32, message = "gij,gjd->gid"}> : () -> ()
    %cst_100 = arith.constant dense<0.000000e+00> : vector<4x16x8xf32>
    %118 = tpu.matmul %117, %105, %cst_100 {dimension_numbers = #tpu.dot_dimension_numbers<[2], [1], [1], [2], [0, 0, 0, 1, 1, 2], [0], [0]>} : vector<4x16x16xbf16>, vector<4x16x8xbf16>, vector<4x16x8xf32> -> vector<4x16x8xf32>
    "tpu.trace_stop"() : () -> ()
    %119 = tpu.concatenate %102, %118 in 2 : vector<4x16x8xf32>, vector<4x16x8xf32> -> vector<4x16x16xf32>
    %120 = vector.shape_cast %119 : vector<4x16x16xf32> to vector<64x16xf32>
    %121 = arith.truncf %120 : vector<64x16xf32> to vector<64x16xbf16>
    %cst_101 = arith.constant dense<0.000000e+00> : vector<64x16xf32>
    %122 = tpu.matmul %121, %9, %cst_101 {dimension_numbers = #tpu.dot_dimension_numbers<[1], [0], [0], [1], [0, 0, 1, 1], [], []>} : vector<64x16xbf16>, vector<16x16xbf16>, vector<64x16xf32> -> vector<64x16xf32>
    %123 = vector.broadcast %11 : vector<1x16xf32> to vector<64x16xf32>
    %124 = arith.addf %122, %123 : vector<64x16xf32>
    %125 = arith.addf %59, %124 : vector<64x16xf32>
    %cst_102 = arith.constant dense<0.000000e+00> : vector<64xf32>
    %126 = vector.multi_reduction <add>, %125, %cst_102 [1] : vector<64x16xf32> to vector<64xf32>
    %127 = vector.shape_cast %126 : vector<64xf32> to vector<64x1xf32>
    %cst_103 = arith.constant 1.600000e+01 : f32
    %128 = vector.broadcast %cst_103 : f32 to vector<64x1xf32>
    %129 = arith.divf %127, %128 : vector<64x1xf32>
    %130 = vector.broadcast %129 : vector<64x1xf32> to vector<64x16xf32>
    %131 = arith.subf %125, %130 : vector<64x16xf32>
    %132 = arith.mulf %131, %131 : vector<64x16xf32>
    %cst_104 = arith.constant dense<0.000000e+00> : vector<64xf32>
    %133 = vector.multi_reduction <add>, %132, %cst_104 [1] : vector<64x16xf32> to vector<64xf32>
    %134 = vector.shape_cast %133 : vector<64xf32> to vector<64x1xf32>
    %cst_105 = arith.constant 1.600000e+01 : f32
    %135 = vector.broadcast %cst_105 : f32 to vector<64x1xf32>
    %136 = arith.divf %134, %135 : vector<64x1xf32>
    %cst_106 = arith.constant 9.99999974E-6 : f32
    %137 = vector.broadcast %cst_106 : f32 to vector<64x1xf32>
    %138 = arith.addf %136, %137 : vector<64x1xf32>
    %139 = math.rsqrt %138 : vector<64x1xf32>
    %140 = vector.broadcast %139 : vector<64x1xf32> to vector<64x16xf32>
    %141 = arith.mulf %131, %140 : vector<64x16xf32>
    %142 = vector.broadcast %13 : vector<1x16xf32> to vector<64x16xf32>
    %143 = arith.mulf %141, %142 : vector<64x16xf32>
    %144 = vector.broadcast %15 : vector<1x16xf32> to vector<64x16xf32>
    %145 = arith.addf %143, %144 : vector<64x16xf32>
    %146 = arith.truncf %145 : vector<64x16xf32> to vector<64x16xbf16>
    %cst_107 = arith.constant dense<0.000000e+00> : vector<64x64xf32>
    %147 = tpu.matmul %146, %17, %cst_107 {dimension_numbers = #tpu.dot_dimension_numbers<[1], [0], [0], [1], [0, 0, 1, 1], [], []>} : vector<64x16xbf16>, vector<16x64xbf16>, vector<64x64xf32> -> vector<64x64xf32>
    %148 = vector.broadcast %19 : vector<1x64xf32> to vector<64x64xf32>
    %149 = arith.addf %147, %148 : vector<64x64xf32>
    %cst_108 = arith.constant 5.000000e-01 : f32
    %150 = vector.broadcast %cst_108 : f32 to vector<64x64xf32>
    %151 = arith.mulf %150, %149 : vector<64x64xf32>
    %cst_109 = arith.constant 4.471500e-02 : f32
    %152 = vector.broadcast %cst_109 : f32 to vector<64x64xf32>
    %153 = arith.mulf %152, %149 : vector<64x64xf32>
    %154 = arith.mulf %153, %149 : vector<64x64xf32>
    %155 = arith.mulf %154, %149 : vector<64x64xf32>
    %156 = arith.addf %149, %155 : vector<64x64xf32>
    %cst_110 = arith.constant 0.797884583 : f32
    %157 = vector.broadcast %cst_110 : f32 to vector<64x64xf32>
    %158 = arith.mulf %157, %156 : vector<64x64xf32>
    %159 = math.tanh %158 : vector<64x64xf32>
    %cst_111 = arith.constant 1.000000e+00 : f32
    %160 = vector.broadcast %cst_111 : f32 to vector<64x64xf32>
    %161 = arith.addf %160, %159 : vector<64x64xf32>
    %162 = arith.mulf %151, %161 : vector<64x64xf32>
    %163 = arith.truncf %162 : vector<64x64xf32> to vector<64x64xbf16>
    %cst_112 = arith.constant dense<0.000000e+00> : vector<64x16xf32>
    %164 = tpu.matmul %163, %21, %cst_112 {dimension_numbers = #tpu.dot_dimension_numbers<[1], [0], [0], [1], [0, 0, 1, 1], [], []>} : vector<64x64xbf16>, vector<64x16xbf16>, vector<64x16xf32> -> vector<64x16xf32>
    %165 = arith.addf %125, %164 : vector<64x16xf32>
    %166 = vector.broadcast %23 : vector<1x16xf32> to vector<64x16xf32>
    %167 = arith.addf %165, %166 : vector<64x16xf32>
    %cst_113 = arith.constant dense<0.000000e+00> : vector<64xf32>
    %168 = vector.multi_reduction <add>, %167, %cst_113 [1] : vector<64x16xf32> to vector<64xf32>
    %169 = vector.shape_cast %168 : vector<64xf32> to vector<64x1xf32>
    %cst_114 = arith.constant 1.600000e+01 : f32
    %170 = vector.broadcast %cst_114 : f32 to vector<64x1xf32>
    %171 = arith.divf %169, %170 : vector<64x1xf32>
    %172 = vector.broadcast %171 : vector<64x1xf32> to vector<64x16xf32>
    %173 = arith.subf %167, %172 : vector<64x16xf32>
    %174 = arith.mulf %173, %173 : vector<64x16xf32>
    %cst_115 = arith.constant dense<0.000000e+00> : vector<64xf32>
    %175 = vector.multi_reduction <add>, %174, %cst_115 [1] : vector<64x16xf32> to vector<64xf32>
    %176 = vector.shape_cast %175 : vector<64xf32> to vector<64x1xf32>
    %cst_116 = arith.constant 1.600000e+01 : f32
    %177 = vector.broadcast %cst_116 : f32 to vector<64x1xf32>
    %178 = arith.divf %176, %177 : vector<64x1xf32>
    %cst_117 = arith.constant 9.99999974E-6 : f32
    %179 = vector.broadcast %cst_117 : f32 to vector<64x1xf32>
    %180 = arith.addf %178, %179 : vector<64x1xf32>
    %181 = math.rsqrt %180 : vector<64x1xf32>
    %182 = vector.broadcast %181 : vector<64x1xf32> to vector<64x16xf32>
    %183 = arith.mulf %173, %182 : vector<64x16xf32>
    %184 = vector.broadcast %25 : vector<1x16xf32> to vector<64x16xf32>
    %185 = arith.mulf %183, %184 : vector<64x16xf32>
    %186 = vector.broadcast %27 : vector<1x16xf32> to vector<64x16xf32>
    %187 = arith.addf %185, %186 : vector<64x16xf32>
    %188 = vector.shape_cast %187 : vector<64x16xf32> to vector<4x16x16xf32>
    %189 = arith.truncf %188 : vector<4x16x16xf32> to vector<4x16x16xbf16>
    %190 = vector.extract_strided_slice %189 {offsets = [0, 0, 0], sizes = [4, 1, 16], strides = [1, 1, 1]} : vector<4x16x16xbf16> to vector<4x1x16xbf16>
    %191 = vector.shape_cast %190 : vector<4x1x16xbf16> to vector<4x16xbf16>
    %192 = vector.extract_strided_slice %29 {offsets = [0, 0], sizes = [16, 32], strides = [1, 1]} : vector<256x32xbf16> to vector<16x32xbf16>
    %cst_118 = arith.constant dense<0.000000e+00> : vector<4x32xf32>
    %193 = tpu.matmul %191, %192, %cst_118 {dimension_numbers = #tpu.dot_dimension_numbers<[1], [0], [0], [1], [0, 0, 1, 1], [], []>} : vector<4x16xbf16>, vector<16x32xbf16>, vector<4x32xf32> -> vector<4x32xf32>
    %194 = vector.extract_strided_slice %189 {offsets = [0, 1, 0], sizes = [4, 1, 16], strides = [1, 1, 1]} : vector<4x16x16xbf16> to vector<4x1x16xbf16>
    %195 = vector.shape_cast %194 : vector<4x1x16xbf16> to vector<4x16xbf16>
    %196 = vector.extract_strided_slice %29 {offsets = [16, 0], sizes = [16, 32], strides = [1, 1]} : vector<256x32xbf16> to vector<16x32xbf16>
    %cst_119 = arith.constant dense<0.000000e+00> : vector<4x32xf32>
    %197 = tpu.matmul %195, %196, %cst_119 {dimension_numbers = #tpu.dot_dimension_numbers<[1], [0], [0], [1], [0, 0, 1, 1], [], []>} : vector<4x16xbf16>, vector<16x32xbf16>, vector<4x32xf32> -> vector<4x32xf32>
    %198 = arith.addf %193, %197 : vector<4x32xf32>
    %199 = vector.extract_strided_slice %189 {offsets = [0, 2, 0], sizes = [4, 1, 16], strides = [1, 1, 1]} : vector<4x16x16xbf16> to vector<4x1x16xbf16>
    %200 = vector.shape_cast %199 : vector<4x1x16xbf16> to vector<4x16xbf16>
    %201 = vector.extract_strided_slice %29 {offsets = [32, 0], sizes = [16, 32], strides = [1, 1]} : vector<256x32xbf16> to vector<16x32xbf16>
    %cst_120 = arith.constant dense<0.000000e+00> : vector<4x32xf32>
    %202 = tpu.matmul %200, %201, %cst_120 {dimension_numbers = #tpu.dot_dimension_numbers<[1], [0], [0], [1], [0, 0, 1, 1], [], []>} : vector<4x16xbf16>, vector<16x32xbf16>, vector<4x32xf32> -> vector<4x32xf32>
    %203 = arith.addf %198, %202 : vector<4x32xf32>
    %204 = vector.extract_strided_slice %189 {offsets = [0, 3, 0], sizes = [4, 1, 16], strides = [1, 1, 1]} : vector<4x16x16xbf16> to vector<4x1x16xbf16>
    %205 = vector.shape_cast %204 : vector<4x1x16xbf16> to vector<4x16xbf16>
    %206 = vector.extract_strided_slice %29 {offsets = [48, 0], sizes = [16, 32], strides = [1, 1]} : vector<256x32xbf16> to vector<16x32xbf16>
    %cst_121 = arith.constant dense<0.000000e+00> : vector<4x32xf32>
    %207 = tpu.matmul %205, %206, %cst_121 {dimension_numbers = #tpu.dot_dimension_numbers<[1], [0], [0], [1], [0, 0, 1, 1], [], []>} : vector<4x16xbf16>, vector<16x32xbf16>, vector<4x32xf32> -> vector<4x32xf32>
    %208 = arith.addf %203, %207 : vector<4x32xf32>
    %209 = vector.extract_strided_slice %189 {offsets = [0, 4, 0], sizes = [4, 1, 16], strides = [1, 1, 1]} : vector<4x16x16xbf16> to vector<4x1x16xbf16>
    %210 = vector.shape_cast %209 : vector<4x1x16xbf16> to vector<4x16xbf16>
    %211 = vector.extract_strided_slice %29 {offsets = [64, 0], sizes = [16, 32], strides = [1, 1]} : vector<256x32xbf16> to vector<16x32xbf16>
    %cst_122 = arith.constant dense<0.000000e+00> : vector<4x32xf32>
    %212 = tpu.matmul %210, %211, %cst_122 {dimension_numbers = #tpu.dot_dimension_numbers<[1], [0], [0], [1], [0, 0, 1, 1], [], []>} : vector<4x16xbf16>, vector<16x32xbf16>, vector<4x32xf32> -> vector<4x32xf32>
    %213 = arith.addf %208, %212 : vector<4x32xf32>
    %214 = vector.extract_strided_slice %189 {offsets = [0, 5, 0], sizes = [4, 1, 16], strides = [1, 1, 1]} : vector<4x16x16xbf16> to vector<4x1x16xbf16>
    %215 = vector.shape_cast %214 : vector<4x1x16xbf16> to vector<4x16xbf16>
    %216 = vector.extract_strided_slice %29 {offsets = [80, 0], sizes = [16, 32], strides = [1, 1]} : vector<256x32xbf16> to vector<16x32xbf16>
    %cst_123 = arith.constant dense<0.000000e+00> : vector<4x32xf32>
    %217 = tpu.matmul %215, %216, %cst_123 {dimension_numbers = #tpu.dot_dimension_numbers<[1], [0], [0], [1], [0, 0, 1, 1], [], []>} : vector<4x16xbf16>, vector<16x32xbf16>, vector<4x32xf32> -> vector<4x32xf32>
    %218 = arith.addf %213, %217 : vector<4x32xf32>
    %219 = vector.extract_strided_slice %189 {offsets = [0, 6, 0], sizes = [4, 1, 16], strides = [1, 1, 1]} : vector<4x16x16xbf16> to vector<4x1x16xbf16>
    %220 = vector.shape_cast %219 : vector<4x1x16xbf16> to vector<4x16xbf16>
    %221 = vector.extract_strided_slice %29 {offsets = [96, 0], sizes = [16, 32], strides = [1, 1]} : vector<256x32xbf16> to vector<16x32xbf16>
    %cst_124 = arith.constant dense<0.000000e+00> : vector<4x32xf32>
    %222 = tpu.matmul %220, %221, %cst_124 {dimension_numbers = #tpu.dot_dimension_numbers<[1], [0], [0], [1], [0, 0, 1, 1], [], []>} : vector<4x16xbf16>, vector<16x32xbf16>, vector<4x32xf32> -> vector<4x32xf32>
    %223 = arith.addf %218, %222 : vector<4x32xf32>
    %224 = vector.extract_strided_slice %189 {offsets = [0, 7, 0], sizes = [4, 1, 16], strides = [1, 1, 1]} : vector<4x16x16xbf16> to vector<4x1x16xbf16>
    %225 = vector.shape_cast %224 : vector<4x1x16xbf16> to vector<4x16xbf16>
    %226 = vector.extract_strided_slice %29 {offsets = [112, 0], sizes = [16, 32], strides = [1, 1]} : vector<256x32xbf16> to vector<16x32xbf16>
    %cst_125 = arith.constant dense<0.000000e+00> : vector<4x32xf32>
    %227 = tpu.matmul %225, %226, %cst_125 {dimension_numbers = #tpu.dot_dimension_numbers<[1], [0], [0], [1], [0, 0, 1, 1], [], []>} : vector<4x16xbf16>, vector<16x32xbf16>, vector<4x32xf32> -> vector<4x32xf32>
    %228 = arith.addf %223, %227 : vector<4x32xf32>
    %229 = vector.extract_strided_slice %189 {offsets = [0, 8, 0], sizes = [4, 1, 16], strides = [1, 1, 1]} : vector<4x16x16xbf16> to vector<4x1x16xbf16>
    %230 = vector.shape_cast %229 : vector<4x1x16xbf16> to vector<4x16xbf16>
    %231 = vector.extract_strided_slice %29 {offsets = [128, 0], sizes = [16, 32], strides = [1, 1]} : vector<256x32xbf16> to vector<16x32xbf16>
    %cst_126 = arith.constant dense<0.000000e+00> : vector<4x32xf32>
    %232 = tpu.matmul %230, %231, %cst_126 {dimension_numbers = #tpu.dot_dimension_numbers<[1], [0], [0], [1], [0, 0, 1, 1], [], []>} : vector<4x16xbf16>, vector<16x32xbf16>, vector<4x32xf32> -> vector<4x32xf32>
    %233 = arith.addf %228, %232 : vector<4x32xf32>
    %234 = vector.extract_strided_slice %189 {offsets = [0, 9, 0], sizes = [4, 1, 16], strides = [1, 1, 1]} : vector<4x16x16xbf16> to vector<4x1x16xbf16>
    %235 = vector.shape_cast %234 : vector<4x1x16xbf16> to vector<4x16xbf16>
    %236 = vector.extract_strided_slice %29 {offsets = [144, 0], sizes = [16, 32], strides = [1, 1]} : vector<256x32xbf16> to vector<16x32xbf16>
    %cst_127 = arith.constant dense<0.000000e+00> : vector<4x32xf32>
    %237 = tpu.matmul %235, %236, %cst_127 {dimension_numbers = #tpu.dot_dimension_numbers<[1], [0], [0], [1], [0, 0, 1, 1], [], []>} : vector<4x16xbf16>, vector<16x32xbf16>, vector<4x32xf32> -> vector<4x32xf32>
    %238 = arith.addf %233, %237 : vector<4x32xf32>
    %239 = vector.extract_strided_slice %189 {offsets = [0, 10, 0], sizes = [4, 1, 16], strides = [1, 1, 1]} : vector<4x16x16xbf16> to vector<4x1x16xbf16>
    %240 = vector.shape_cast %239 : vector<4x1x16xbf16> to vector<4x16xbf16>
    %241 = vector.extract_strided_slice %29 {offsets = [160, 0], sizes = [16, 32], strides = [1, 1]} : vector<256x32xbf16> to vector<16x32xbf16>
    %cst_128 = arith.constant dense<0.000000e+00> : vector<4x32xf32>
    %242 = tpu.matmul %240, %241, %cst_128 {dimension_numbers = #tpu.dot_dimension_numbers<[1], [0], [0], [1], [0, 0, 1, 1], [], []>} : vector<4x16xbf16>, vector<16x32xbf16>, vector<4x32xf32> -> vector<4x32xf32>
    %243 = arith.addf %238, %242 : vector<4x32xf32>
    %244 = vector.extract_strided_slice %189 {offsets = [0, 11, 0], sizes = [4, 1, 16], strides = [1, 1, 1]} : vector<4x16x16xbf16> to vector<4x1x16xbf16>
    %245 = vector.shape_cast %244 : vector<4x1x16xbf16> to vector<4x16xbf16>
    %246 = vector.extract_strided_slice %29 {offsets = [176, 0], sizes = [16, 32], strides = [1, 1]} : vector<256x32xbf16> to vector<16x32xbf16>
    %cst_129 = arith.constant dense<0.000000e+00> : vector<4x32xf32>
    %247 = tpu.matmul %245, %246, %cst_129 {dimension_numbers = #tpu.dot_dimension_numbers<[1], [0], [0], [1], [0, 0, 1, 1], [], []>} : vector<4x16xbf16>, vector<16x32xbf16>, vector<4x32xf32> -> vector<4x32xf32>
    %248 = arith.addf %243, %247 : vector<4x32xf32>
    %249 = vector.extract_strided_slice %189 {offsets = [0, 12, 0], sizes = [4, 1, 16], strides = [1, 1, 1]} : vector<4x16x16xbf16> to vector<4x1x16xbf16>
    %250 = vector.shape_cast %249 : vector<4x1x16xbf16> to vector<4x16xbf16>
    %251 = vector.extract_strided_slice %29 {offsets = [192, 0], sizes = [16, 32], strides = [1, 1]} : vector<256x32xbf16> to vector<16x32xbf16>
    %cst_130 = arith.constant dense<0.000000e+00> : vector<4x32xf32>
    %252 = tpu.matmul %250, %251, %cst_130 {dimension_numbers = #tpu.dot_dimension_numbers<[1], [0], [0], [1], [0, 0, 1, 1], [], []>} : vector<4x16xbf16>, vector<16x32xbf16>, vector<4x32xf32> -> vector<4x32xf32>
    %253 = arith.addf %248, %252 : vector<4x32xf32>
    %254 = vector.extract_strided_slice %189 {offsets = [0, 13, 0], sizes = [4, 1, 16], strides = [1, 1, 1]} : vector<4x16x16xbf16> to vector<4x1x16xbf16>
    %255 = vector.shape_cast %254 : vector<4x1x16xbf16> to vector<4x16xbf16>
    %256 = vector.extract_strided_slice %29 {offsets = [208, 0], sizes = [16, 32], strides = [1, 1]} : vector<256x32xbf16> to vector<16x32xbf16>
    %cst_131 = arith.constant dense<0.000000e+00> : vector<4x32xf32>
    %257 = tpu.matmul %255, %256, %cst_131 {dimension_numbers = #tpu.dot_dimension_numbers<[1], [0], [0], [1], [0, 0, 1, 1], [], []>} : vector<4x16xbf16>, vector<16x32xbf16>, vector<4x32xf32> -> vector<4x32xf32>
    %258 = arith.addf %253, %257 : vector<4x32xf32>
    %259 = vector.extract_strided_slice %189 {offsets = [0, 14, 0], sizes = [4, 1, 16], strides = [1, 1, 1]} : vector<4x16x16xbf16> to vector<4x1x16xbf16>
    %260 = vector.shape_cast %259 : vector<4x1x16xbf16> to vector<4x16xbf16>
    %261 = vector.extract_strided_slice %29 {offsets = [224, 0], sizes = [16, 32], strides = [1, 1]} : vector<256x32xbf16> to vector<16x32xbf16>
    %cst_132 = arith.constant dense<0.000000e+00> : vector<4x32xf32>
    %262 = tpu.matmul %260, %261, %cst_132 {dimension_numbers = #tpu.dot_dimension_numbers<[1], [0], [0], [1], [0, 0, 1, 1], [], []>} : vector<4x16xbf16>, vector<16x32xbf16>, vector<4x32xf32> -> vector<4x32xf32>
    %263 = arith.addf %258, %262 : vector<4x32xf32>
    %264 = vector.extract_strided_slice %189 {offsets = [0, 15, 0], sizes = [4, 1, 16], strides = [1, 1, 1]} : vector<4x16x16xbf16> to vector<4x1x16xbf16>
    %265 = vector.shape_cast %264 : vector<4x1x16xbf16> to vector<4x16xbf16>
    %266 = vector.extract_strided_slice %29 {offsets = [240, 0], sizes = [16, 32], strides = [1, 1]} : vector<256x32xbf16> to vector<16x32xbf16>
    %cst_133 = arith.constant dense<0.000000e+00> : vector<4x32xf32>
    %267 = tpu.matmul %265, %266, %cst_133 {dimension_numbers = #tpu.dot_dimension_numbers<[1], [0], [0], [1], [0, 0, 1, 1], [], []>} : vector<4x16xbf16>, vector<16x32xbf16>, vector<4x32xf32> -> vector<4x32xf32>
    %268 = arith.addf %263, %267 : vector<4x32xf32>
    %269 = vector.broadcast %31 : vector<1x32xf32> to vector<4x32xf32>
    %270 = arith.addf %268, %269 : vector<4x32xf32>
    %cst_134 = arith.constant 0.000000e+00 : f32
    %271 = vector.broadcast %cst_134 : f32 to vector<1x32xf32>
    %272 = tpu.concatenate %271, %270 in 0 : vector<1x32xf32>, vector<4x32xf32> -> vector<5x32xf32>
    %273 = arith.addf %60, %272 : vector<5x32xf32>
    %cst_135 = arith.constant dense<0.000000e+00> : vector<5xf32>
    %274 = vector.multi_reduction <add>, %273, %cst_135 [1] : vector<5x32xf32> to vector<5xf32>
    %275 = vector.shape_cast %274 : vector<5xf32> to vector<5x1xf32>
    %cst_136 = arith.constant 3.200000e+01 : f32
    %276 = vector.broadcast %cst_136 : f32 to vector<5x1xf32>
    %277 = arith.divf %275, %276 : vector<5x1xf32>
    %278 = vector.broadcast %277 : vector<5x1xf32> to vector<5x32xf32>
    %279 = arith.subf %273, %278 : vector<5x32xf32>
    %280 = arith.mulf %279, %279 : vector<5x32xf32>
    %cst_137 = arith.constant dense<0.000000e+00> : vector<5xf32>
    %281 = vector.multi_reduction <add>, %280, %cst_137 [1] : vector<5x32xf32> to vector<5xf32>
    %282 = vector.shape_cast %281 : vector<5xf32> to vector<5x1xf32>
    %cst_138 = arith.constant 3.200000e+01 : f32
    %283 = vector.broadcast %cst_138 : f32 to vector<5x1xf32>
    %284 = arith.divf %282, %283 : vector<5x1xf32>
    %cst_139 = arith.constant 9.99999974E-6 : f32
    %285 = vector.broadcast %cst_139 : f32 to vector<5x1xf32>
    %286 = arith.addf %284, %285 : vector<5x1xf32>
    %287 = math.rsqrt %286 : vector<5x1xf32>
    %288 = vector.broadcast %287 : vector<5x1xf32> to vector<5x32xf32>
    %289 = arith.mulf %279, %288 : vector<5x32xf32>
    %290 = vector.broadcast %33 : vector<1x32xf32> to vector<5x32xf32>
    %291 = arith.mulf %289, %290 : vector<5x32xf32>
    %292 = vector.broadcast %35 : vector<1x32xf32> to vector<5x32xf32>
    %293 = arith.addf %291, %292 : vector<5x32xf32>
    %294 = arith.truncf %293 : vector<5x32xf32> to vector<5x32xbf16>
    %cst_140 = arith.constant dense<0.000000e+00> : vector<5x96xf32>
    %295 = tpu.matmul %294, %37, %cst_140 {dimension_numbers = #tpu.dot_dimension_numbers<[1], [0], [0], [1], [0, 0, 1, 1], [], []>} : vector<5x32xbf16>, vector<32x96xbf16>, vector<5x96xf32> -> vector<5x96xf32>
    %296 = vector.broadcast %39 : vector<1x96xf32> to vector<5x96xf32>
    %297 = arith.addf %295, %296 : vector<5x96xf32>
    %298 = vector.shape_cast %297 : vector<5x96xf32> to vector<1x5x96xf32>
    %299 = arith.truncf %298 : vector<1x5x96xf32> to vector<1x5x96xbf16>
    %300 = vector.extract_strided_slice %299 {offsets = [0, 0, 0], sizes = [1, 5, 8], strides = [1, 1, 1]} : vector<1x5x96xbf16> to vector<1x5x8xbf16>
    %301 = vector.extract_strided_slice %299 {offsets = [0, 0, 32], sizes = [1, 5, 8], strides = [1, 1, 1]} : vector<1x5x96xbf16> to vector<1x5x8xbf16>
    %302 = vector.extract_strided_slice %299 {offsets = [0, 0, 64], sizes = [1, 5, 8], strides = [1, 1, 1]} : vector<1x5x96xbf16> to vector<1x5x8xbf16>
    "tpu.trace_start"() <{level = 10 : i32, message = "gid,gjd->gij"}> : () -> ()
    %cst_141 = arith.constant dense<0.000000e+00> : vector<1x5x5xf32>
    %303 = tpu.matmul %300, %301, %cst_141 {dimension_numbers = #tpu.dot_dimension_numbers<[2], [2], [1], [1], [0, 0, 0, 1, 1, 1], [0], [0]>} : vector<1x5x8xbf16>, vector<1x5x8xbf16>, vector<1x5x5xf32> -> vector<1x5x5xf32>
    "tpu.trace_stop"() : () -> ()
    %cst_142 = arith.constant dense<0xFF800000> : vector<1x5xf32>
    %304 = vector.multi_reduction <maximumf>, %303, %cst_142 [2] : vector<1x5x5xf32> to vector<1x5xf32>
    %305 = vector.shape_cast %304 : vector<1x5xf32> to vector<1x5x1xf32>
    %306 = vector.broadcast %305 : vector<1x5x1xf32> to vector<1x5x5xf32>
    %307 = arith.subf %303, %306 : vector<1x5x5xf32>
    %308 = math.exp %307 : vector<1x5x5xf32>
    %cst_143 = arith.constant dense<0.000000e+00> : vector<1x5xf32>
    %309 = vector.multi_reduction <add>, %308, %cst_143 [2] : vector<1x5x5xf32> to vector<1x5xf32>
    %310 = vector.shape_cast %309 : vector<1x5xf32> to vector<1x5x1xf32>
    %311 = tpu.reciprocal %310 {approx = true} : vector<1x5x1xf32> -> vector<1x5x1xf32>
    %312 = vector.broadcast %311 : vector<1x5x1xf32> to vector<1x5x5xf32>
    %313 = arith.mulf %308, %312 : vector<1x5x5xf32>
    %314 = arith.truncf %313 : vector<1x5x5xf32> to vector<1x5x5xbf16>
    "tpu.trace_start"() <{level = 10 : i32, message = "gij,gjd->gid"}> : () -> ()
    %cst_144 = arith.constant dense<0.000000e+00> : vector<1x5x8xf32>
    %315 = tpu.matmul %314, %302, %cst_144 {dimension_numbers = #tpu.dot_dimension_numbers<[2], [1], [1], [2], [0, 0, 0, 1, 1, 2], [0], [0]>} : vector<1x5x5xbf16>, vector<1x5x8xbf16>, vector<1x5x8xf32> -> vector<1x5x8xf32>
    "tpu.trace_stop"() : () -> ()
    %316 = vector.extract_strided_slice %299 {offsets = [0, 0, 8], sizes = [1, 5, 8], strides = [1, 1, 1]} : vector<1x5x96xbf16> to vector<1x5x8xbf16>
    %317 = vector.extract_strided_slice %299 {offsets = [0, 0, 40], sizes = [1, 5, 8], strides = [1, 1, 1]} : vector<1x5x96xbf16> to vector<1x5x8xbf16>
    %318 = vector.extract_strided_slice %299 {offsets = [0, 0, 72], sizes = [1, 5, 8], strides = [1, 1, 1]} : vector<1x5x96xbf16> to vector<1x5x8xbf16>
    "tpu.trace_start"() <{level = 10 : i32, message = "gid,gjd->gij"}> : () -> ()
    %cst_145 = arith.constant dense<0.000000e+00> : vector<1x5x5xf32>
    %319 = tpu.matmul %316, %317, %cst_145 {dimension_numbers = #tpu.dot_dimension_numbers<[2], [2], [1], [1], [0, 0, 0, 1, 1, 1], [0], [0]>} : vector<1x5x8xbf16>, vector<1x5x8xbf16>, vector<1x5x5xf32> -> vector<1x5x5xf32>
    "tpu.trace_stop"() : () -> ()
    %cst_146 = arith.constant dense<0xFF800000> : vector<1x5xf32>
    %320 = vector.multi_reduction <maximumf>, %319, %cst_146 [2] : vector<1x5x5xf32> to vector<1x5xf32>
    %321 = vector.shape_cast %320 : vector<1x5xf32> to vector<1x5x1xf32>
    %322 = vector.broadcast %321 : vector<1x5x1xf32> to vector<1x5x5xf32>
    %323 = arith.subf %319, %322 : vector<1x5x5xf32>
    %324 = math.exp %323 : vector<1x5x5xf32>
    %cst_147 = arith.constant dense<0.000000e+00> : vector<1x5xf32>
    %325 = vector.multi_reduction <add>, %324, %cst_147 [2] : vector<1x5x5xf32> to vector<1x5xf32>
    %326 = vector.shape_cast %325 : vector<1x5xf32> to vector<1x5x1xf32>
    %327 = tpu.reciprocal %326 {approx = true} : vector<1x5x1xf32> -> vector<1x5x1xf32>
    %328 = vector.broadcast %327 : vector<1x5x1xf32> to vector<1x5x5xf32>
    %329 = arith.mulf %324, %328 : vector<1x5x5xf32>
    %330 = arith.truncf %329 : vector<1x5x5xf32> to vector<1x5x5xbf16>
    "tpu.trace_start"() <{level = 10 : i32, message = "gij,gjd->gid"}> : () -> ()
    %cst_148 = arith.constant dense<0.000000e+00> : vector<1x5x8xf32>
    %331 = tpu.matmul %330, %318, %cst_148 {dimension_numbers = #tpu.dot_dimension_numbers<[2], [1], [1], [2], [0, 0, 0, 1, 1, 2], [0], [0]>} : vector<1x5x5xbf16>, vector<1x5x8xbf16>, vector<1x5x8xf32> -> vector<1x5x8xf32>
    "tpu.trace_stop"() : () -> ()
    %332 = vector.extract_strided_slice %299 {offsets = [0, 0, 16], sizes = [1, 5, 8], strides = [1, 1, 1]} : vector<1x5x96xbf16> to vector<1x5x8xbf16>
    %333 = vector.extract_strided_slice %299 {offsets = [0, 0, 48], sizes = [1, 5, 8], strides = [1, 1, 1]} : vector<1x5x96xbf16> to vector<1x5x8xbf16>
    %334 = vector.extract_strided_slice %299 {offsets = [0, 0, 80], sizes = [1, 5, 8], strides = [1, 1, 1]} : vector<1x5x96xbf16> to vector<1x5x8xbf16>
    "tpu.trace_start"() <{level = 10 : i32, message = "gid,gjd->gij"}> : () -> ()
    %cst_149 = arith.constant dense<0.000000e+00> : vector<1x5x5xf32>
    %335 = tpu.matmul %332, %333, %cst_149 {dimension_numbers = #tpu.dot_dimension_numbers<[2], [2], [1], [1], [0, 0, 0, 1, 1, 1], [0], [0]>} : vector<1x5x8xbf16>, vector<1x5x8xbf16>, vector<1x5x5xf32> -> vector<1x5x5xf32>
    "tpu.trace_stop"() : () -> ()
    %cst_150 = arith.constant dense<0xFF800000> : vector<1x5xf32>
    %336 = vector.multi_reduction <maximumf>, %335, %cst_150 [2] : vector<1x5x5xf32> to vector<1x5xf32>
    %337 = vector.shape_cast %336 : vector<1x5xf32> to vector<1x5x1xf32>
    %338 = vector.broadcast %337 : vector<1x5x1xf32> to vector<1x5x5xf32>
    %339 = arith.subf %335, %338 : vector<1x5x5xf32>
    %340 = math.exp %339 : vector<1x5x5xf32>
    %cst_151 = arith.constant dense<0.000000e+00> : vector<1x5xf32>
    %341 = vector.multi_reduction <add>, %340, %cst_151 [2] : vector<1x5x5xf32> to vector<1x5xf32>
    %342 = vector.shape_cast %341 : vector<1x5xf32> to vector<1x5x1xf32>
    %343 = tpu.reciprocal %342 {approx = true} : vector<1x5x1xf32> -> vector<1x5x1xf32>
    %344 = vector.broadcast %343 : vector<1x5x1xf32> to vector<1x5x5xf32>
    %345 = arith.mulf %340, %344 : vector<1x5x5xf32>
    %346 = arith.truncf %345 : vector<1x5x5xf32> to vector<1x5x5xbf16>
    "tpu.trace_start"() <{level = 10 : i32, message = "gij,gjd->gid"}> : () -> ()
    %cst_152 = arith.constant dense<0.000000e+00> : vector<1x5x8xf32>
    %347 = tpu.matmul %346, %334, %cst_152 {dimension_numbers = #tpu.dot_dimension_numbers<[2], [1], [1], [2], [0, 0, 0, 1, 1, 2], [0], [0]>} : vector<1x5x5xbf16>, vector<1x5x8xbf16>, vector<1x5x8xf32> -> vector<1x5x8xf32>
    "tpu.trace_stop"() : () -> ()
    %348 = vector.extract_strided_slice %299 {offsets = [0, 0, 24], sizes = [1, 5, 8], strides = [1, 1, 1]} : vector<1x5x96xbf16> to vector<1x5x8xbf16>
    %349 = vector.extract_strided_slice %299 {offsets = [0, 0, 56], sizes = [1, 5, 8], strides = [1, 1, 1]} : vector<1x5x96xbf16> to vector<1x5x8xbf16>
    %350 = vector.extract_strided_slice %299 {offsets = [0, 0, 88], sizes = [1, 5, 8], strides = [1, 1, 1]} : vector<1x5x96xbf16> to vector<1x5x8xbf16>
    "tpu.trace_start"() <{level = 10 : i32, message = "gid,gjd->gij"}> : () -> ()
    %cst_153 = arith.constant dense<0.000000e+00> : vector<1x5x5xf32>
    %351 = tpu.matmul %348, %349, %cst_153 {dimension_numbers = #tpu.dot_dimension_numbers<[2], [2], [1], [1], [0, 0, 0, 1, 1, 1], [0], [0]>} : vector<1x5x8xbf16>, vector<1x5x8xbf16>, vector<1x5x5xf32> -> vector<1x5x5xf32>
    "tpu.trace_stop"() : () -> ()
    %cst_154 = arith.constant dense<0xFF800000> : vector<1x5xf32>
    %352 = vector.multi_reduction <maximumf>, %351, %cst_154 [2] : vector<1x5x5xf32> to vector<1x5xf32>
    %353 = vector.shape_cast %352 : vector<1x5xf32> to vector<1x5x1xf32>
    %354 = vector.broadcast %353 : vector<1x5x1xf32> to vector<1x5x5xf32>
    %355 = arith.subf %351, %354 : vector<1x5x5xf32>
    %356 = math.exp %355 : vector<1x5x5xf32>
    %cst_155 = arith.constant dense<0.000000e+00> : vector<1x5xf32>
    %357 = vector.multi_reduction <add>, %356, %cst_155 [2] : vector<1x5x5xf32> to vector<1x5xf32>
    %358 = vector.shape_cast %357 : vector<1x5xf32> to vector<1x5x1xf32>
    %359 = tpu.reciprocal %358 {approx = true} : vector<1x5x1xf32> -> vector<1x5x1xf32>
    %360 = vector.broadcast %359 : vector<1x5x1xf32> to vector<1x5x5xf32>
    %361 = arith.mulf %356, %360 : vector<1x5x5xf32>
    %362 = arith.truncf %361 : vector<1x5x5xf32> to vector<1x5x5xbf16>
    "tpu.trace_start"() <{level = 10 : i32, message = "gij,gjd->gid"}> : () -> ()
    %cst_156 = arith.constant dense<0.000000e+00> : vector<1x5x8xf32>
    %363 = tpu.matmul %362, %350, %cst_156 {dimension_numbers = #tpu.dot_dimension_numbers<[2], [1], [1], [2], [0, 0, 0, 1, 1, 2], [0], [0]>} : vector<1x5x5xbf16>, vector<1x5x8xbf16>, vector<1x5x8xf32> -> vector<1x5x8xf32>
    "tpu.trace_stop"() : () -> ()
    %364 = tpu.concatenate %315, %331, %347, %363 in 2 : vector<1x5x8xf32>, vector<1x5x8xf32>, vector<1x5x8xf32>, vector<1x5x8xf32> -> vector<1x5x32xf32>
    %365 = vector.shape_cast %364 : vector<1x5x32xf32> to vector<5x32xf32>
    %366 = arith.truncf %365 : vector<5x32xf32> to vector<5x32xbf16>
    %cst_157 = arith.constant dense<0.000000e+00> : vector<5x32xf32>
    %367 = tpu.matmul %366, %41, %cst_157 {dimension_numbers = #tpu.dot_dimension_numbers<[1], [0], [0], [1], [0, 0, 1, 1], [], []>} : vector<5x32xbf16>, vector<32x32xbf16>, vector<5x32xf32> -> vector<5x32xf32>
    %368 = vector.broadcast %43 : vector<1x32xf32> to vector<5x32xf32>
    %369 = arith.addf %367, %368 : vector<5x32xf32>
    %370 = arith.addf %273, %369 : vector<5x32xf32>
    %cst_158 = arith.constant dense<0.000000e+00> : vector<5xf32>
    %371 = vector.multi_reduction <add>, %370, %cst_158 [1] : vector<5x32xf32> to vector<5xf32>
    %372 = vector.shape_cast %371 : vector<5xf32> to vector<5x1xf32>
    %cst_159 = arith.constant 3.200000e+01 : f32
    %373 = vector.broadcast %cst_159 : f32 to vector<5x1xf32>
    %374 = arith.divf %372, %373 : vector<5x1xf32>
    %375 = vector.broadcast %374 : vector<5x1xf32> to vector<5x32xf32>
    %376 = arith.subf %370, %375 : vector<5x32xf32>
    %377 = arith.mulf %376, %376 : vector<5x32xf32>
    %cst_160 = arith.constant dense<0.000000e+00> : vector<5xf32>
    %378 = vector.multi_reduction <add>, %377, %cst_160 [1] : vector<5x32xf32> to vector<5xf32>
    %379 = vector.shape_cast %378 : vector<5xf32> to vector<5x1xf32>
    %cst_161 = arith.constant 3.200000e+01 : f32
    %380 = vector.broadcast %cst_161 : f32 to vector<5x1xf32>
    %381 = arith.divf %379, %380 : vector<5x1xf32>
    %cst_162 = arith.constant 9.99999974E-6 : f32
    %382 = vector.broadcast %cst_162 : f32 to vector<5x1xf32>
    %383 = arith.addf %381, %382 : vector<5x1xf32>
    %384 = math.rsqrt %383 : vector<5x1xf32>
    %385 = vector.broadcast %384 : vector<5x1xf32> to vector<5x32xf32>
    %386 = arith.mulf %376, %385 : vector<5x32xf32>
    %387 = vector.broadcast %45 : vector<1x32xf32> to vector<5x32xf32>
    %388 = arith.mulf %386, %387 : vector<5x32xf32>
    %389 = vector.broadcast %47 : vector<1x32xf32> to vector<5x32xf32>
    %390 = arith.addf %388, %389 : vector<5x32xf32>
    %391 = arith.truncf %390 : vector<5x32xf32> to vector<5x32xbf16>
    %cst_163 = arith.constant dense<0.000000e+00> : vector<5x128xf32>
    %392 = tpu.matmul %391, %49, %cst_163 {dimension_numbers = #tpu.dot_dimension_numbers<[1], [0], [0], [1], [0, 0, 1, 1], [], []>} : vector<5x32xbf16>, vector<32x128xbf16>, vector<5x128xf32> -> vector<5x128xf32>
    %393 = vector.broadcast %51 : vector<1x128xf32> to vector<5x128xf32>
    %394 = arith.addf %392, %393 : vector<5x128xf32>
    %cst_164 = arith.constant 5.000000e-01 : f32
    %395 = vector.broadcast %cst_164 : f32 to vector<5x128xf32>
    %396 = arith.mulf %395, %394 : vector<5x128xf32>
    %cst_165 = arith.constant 4.471500e-02 : f32
    %397 = vector.broadcast %cst_165 : f32 to vector<5x128xf32>
    %398 = arith.mulf %397, %394 : vector<5x128xf32>
    %399 = arith.mulf %398, %394 : vector<5x128xf32>
    %400 = arith.mulf %399, %394 : vector<5x128xf32>
    %401 = arith.addf %394, %400 : vector<5x128xf32>
    %cst_166 = arith.constant 0.797884583 : f32
    %402 = vector.broadcast %cst_166 : f32 to vector<5x128xf32>
    %403 = arith.mulf %402, %401 : vector<5x128xf32>
    %404 = math.tanh %403 : vector<5x128xf32>
    %cst_167 = arith.constant 1.000000e+00 : f32
    %405 = vector.broadcast %cst_167 : f32 to vector<5x128xf32>
    %406 = arith.addf %405, %404 : vector<5x128xf32>
    %407 = arith.mulf %396, %406 : vector<5x128xf32>
    %408 = arith.truncf %407 : vector<5x128xf32> to vector<5x128xbf16>
    %cst_168 = arith.constant dense<0.000000e+00> : vector<5x32xf32>
    %409 = tpu.matmul %408, %53, %cst_168 {dimension_numbers = #tpu.dot_dimension_numbers<[1], [0], [0], [1], [0, 0, 1, 1], [], []>} : vector<5x128xbf16>, vector<128x32xbf16>, vector<5x32xf32> -> vector<5x32xf32>
    %410 = arith.addf %370, %409 : vector<5x32xf32>
    %411 = vector.broadcast %55 : vector<1x32xf32> to vector<5x32xf32>
    %412 = arith.addf %410, %411 : vector<5x32xf32>
    %c0_169 = arith.constant 0 : index
    %c0_170 = arith.constant 0 : index
    %413 = vector.load %arg40[%c0_169, %c0_170] : memref<64x16xf32, #tpu.memory_space<vmem>>, vector<64x16xf32>
    tpu.vector_store %arg40[%c0_169, %c0_170], %167 {strides = array<i32>} : memref<64x16xf32, #tpu.memory_space<vmem>>, vector<64x16xf32>,
    %c0_171 = arith.constant 0 : index
    %c0_172 = arith.constant 0 : index
    %414 = vector.load %arg41[%c0_171, %c0_172] : memref<5x32xf32, #tpu.memory_space<vmem>>, vector<5x32xf32>
    tpu.vector_store %arg41[%c0_171, %c0_172], %412 {strides = array<i32>} : memref<5x32xf32, #tpu.memory_space<vmem>>, vector<5x32xf32>,
    %c1_i32 = arith.constant 1 : i32
    %415 = arith.cmpi eq, %arg1, %c1_i32 : i32
    %416 = arith.extui %415 : i1 to i32
    %c0_i32_173 = arith.constant 0 : i32
    %417 = arith.cmpi ne, %416, %c0_i32_173 : i32
    scf.if %417 {
      %418 = vector.extract_strided_slice %412 {offsets = [0, 0], sizes = [1, 32], strides = [1, 1]} : vector<5x32xf32> to vector<1x32xf32>
      %c0_174 = arith.constant 0 : index
      %c0_175 = arith.constant 0 : index
      %419 = vector.load %arg35[%c0_174, %c0_175] : memref<1x32xf32, #tpu.memory_space<vmem>>, vector<1x32xf32>
      %c0_176 = arith.constant 0 : index
      %c0_177 = arith.constant 0 : index
      %420 = vector.load %arg36[%c0_176, %c0_177] : memref<1x32xf32, #tpu.memory_space<vmem>>, vector<1x32xf32>
      %cst_178 = arith.constant dense<0.000000e+00> : vector<1xf32>
      %421 = vector.multi_reduction <add>, %418, %cst_178 [1] : vector<1x32xf32> to vector<1xf32>
      %422 = vector.shape_cast %421 : vector<1xf32> to vector<1x1xf32>
      %cst_179 = arith.constant 3.200000e+01 : f32
      %423 = vector.broadcast %cst_179 : f32 to vector<1x1xf32>
      %424 = arith.divf %422, %423 : vector<1x1xf32>
      %425 = vector.broadcast %424 : vector<1x1xf32> to vector<1x32xf32>
      %426 = arith.subf %418, %425 : vector<1x32xf32>
      %427 = arith.mulf %426, %426 : vector<1x32xf32>
      %cst_180 = arith.constant dense<0.000000e+00> : vector<1xf32>
      %428 = vector.multi_reduction <add>, %427, %cst_180 [1] : vector<1x32xf32> to vector<1xf32>
      %429 = vector.shape_cast %428 : vector<1xf32> to vector<1x1xf32>
      %cst_181 = arith.constant 3.200000e+01 : f32
      %430 = vector.broadcast %cst_181 : f32 to vector<1x1xf32>
      %431 = arith.divf %429, %430 : vector<1x1xf32>
      %cst_182 = arith.constant 9.99999974E-6 : f32
      %432 = vector.broadcast %cst_182 : f32 to vector<1x1xf32>
      %433 = arith.addf %431, %432 : vector<1x1xf32>
      %434 = math.rsqrt %433 : vector<1x1xf32>
      %435 = vector.broadcast %434 : vector<1x1xf32> to vector<1x32xf32>
      %436 = arith.mulf %426, %435 : vector<1x32xf32>
      %437 = arith.mulf %436, %419 : vector<1x32xf32>
      %438 = arith.addf %437, %420 : vector<1x32xf32>
      %439 = arith.truncf %438 : vector<1x32xf32> to vector<1x32xbf16>
      %c0_183 = arith.constant 0 : index
      %c0_184 = arith.constant 0 : index
      %440 = vector.load %arg37[%c0_183, %c0_184] : memref<32x10xbf16, #tpu.memory_space<vmem>>, vector<32x10xbf16>
      %cst_185 = arith.constant dense<0.000000e+00> : vector<1x10xf32>
      %441 = tpu.matmul %439, %440, %cst_185 {dimension_numbers = #tpu.dot_dimension_numbers<[1], [0], [0], [1], [0, 0, 1, 1], [], []>} : vector<1x32xbf16>, vector<32x10xbf16>, vector<1x10xf32> -> vector<1x10xf32>
      %c0_186 = arith.constant 0 : index
      %c0_187 = arith.constant 0 : index
      %442 = vector.load %arg38[%c0_186, %c0_187] : memref<1x10xf32, #tpu.memory_space<vmem>>, vector<1x10xf32>
      %443 = arith.addf %441, %442 : vector<1x10xf32>
      %c0_188 = arith.constant 0 : index
      %c0_189 = arith.constant 0 : index
      %c0_190 = arith.constant 0 : index
      %444 = vector.load %arg39[%c0_188, %c0_189, %c0_190] : memref<1x1x10xf32, #tpu.memory_space<vmem>>, vector<1x1x10xf32>
      %445 = vector.shape_cast %444 : vector<1x1x10xf32> to vector<1x10xf32>
      %446 = vector.shape_cast %443 : vector<1x10xf32> to vector<1x1x10xf32>
      tpu.vector_store %arg39[%c0_188, %c0_189, %c0_190], %446 {strides = array<i32>} : memref<1x1x10xf32, #tpu.memory_space<vmem>>, vector<1x1x10xf32>,
    } else {
    }
    return
  }
  func.func @transform_0(%arg0: i32, %arg1: i32) -> (i32, i32, i32) {
    %c0_i32 = arith.constant 0 : i32
    %c0_i32_0 = arith.constant 0 : i32
    %c0_i32_1 = arith.constant 0 : i32
    return %arg0, %c0_i32, %c0_i32_0 : i32, i32, i32
  }
  func.func @transform_1(%arg0: i32, %arg1: i32) -> (i32, i32) {
    %c0_i32 = arith.constant 0 : i32
    %c0_i32_0 = arith.constant 0 : i32
    %c0_i32_1 = arith.constant 0 : i32
    return %c0_i32, %c0_i32_0 : i32, i32
  }
  func.func @transform_2(%arg0: i32, %arg1: i32) -> (i32, i32) {
    %c0_i32 = arith.constant 0 : i32
    %c0_i32_0 = arith.constant 0 : i32
    %c0_i32_1 = arith.constant 0 : i32
    return %c0_i32, %c0_i32_0 : i32, i32
  }
  func.func @transform_3(%arg0: i32, %arg1: i32) -> (i32, i32) {
    %c0_i32 = arith.constant 0 : i32
    %c0_i32_0 = arith.constant 0 : i32
    %c0_i32_1 = arith.constant 0 : i32
    return %c0_i32, %c0_i32_0 : i32, i32
  }
  func.func @transform_4(%arg0: i32, %arg1: i32) -> (i32, i32) {
    %c0_i32 = arith.constant 0 : i32
    %c0_i32_0 = arith.constant 0 : i32
    %c0_i32_1 = arith.constant 0 : i32
    return %c0_i32, %c0_i32_0 : i32, i32
  }
  func.func @transform_5(%arg0: i32, %arg1: i32) -> (i32, i32, i32) {
    %c0_i32 = arith.constant 0 : i32
    %c0_i32_0 = arith.constant 0 : i32
    %c0_i32_1 = arith.constant 0 : i32
    return %arg1, %c0_i32, %c0_i32_0 : i32, i32, i32
  }
  func.func @transform_6(%arg0: i32, %arg1: i32) -> (i32, i32, i32) {
    %c0_i32 = arith.constant 0 : i32
    %c0_i32_0 = arith.constant 0 : i32
    %c0_i32_1 = arith.constant 0 : i32
    return %arg1, %c0_i32, %c0_i32_0 : i32, i32, i32
  }
  func.func @transform_7(%arg0: i32, %arg1: i32) -> (i32, i32, i32) {
    %c0_i32 = arith.constant 0 : i32
    %c0_i32_0 = arith.constant 0 : i32
    %c0_i32_1 = arith.constant 0 : i32
    return %arg1, %c0_i32, %c0_i32_0 : i32, i32, i32
  }
  func.func @transform_8(%arg0: i32, %arg1: i32) -> (i32, i32, i32) {
    %c0_i32 = arith.constant 0 : i32
    %c0_i32_0 = arith.constant 0 : i32
    %c0_i32_1 = arith.constant 0 : i32
    return %arg1, %c0_i32, %c0_i32_0 : i32, i32, i32
  }
  func.func @transform_9(%arg0: i32, %arg1: i32) -> (i32, i32, i32) {
    %c0_i32 = arith.constant 0 : i32
    %c0_i32_0 = arith.constant 0 : i32
    %c0_i32_1 = arith.constant 0 : i32
    return %arg1, %c0_i32, %c0_i32_0 : i32, i32, i32
  }
  func.func @transform_10(%arg0: i32, %arg1: i32) -> (i32, i32, i32) {
    %c0_i32 = arith.constant 0 : i32
    %c0_i32_0 = arith.constant 0 : i32
    %c0_i32_1 = arith.constant 0 : i32
    return %arg1, %c0_i32, %c0_i32_0 : i32, i32, i32
  }
  func.func @transform_11(%arg0: i32, %arg1: i32) -> (i32, i32, i32) {
    %c0_i32 = arith.constant 0 : i32
    %c0_i32_0 = arith.constant 0 : i32
    %c0_i32_1 = arith.constant 0 : i32
    return %arg1, %c0_i32, %c0_i32_0 : i32, i32, i32
  }
  func.func @transform_12(%arg0: i32, %arg1: i32) -> (i32, i32, i32) {
    %c0_i32 = arith.constant 0 : i32
    %c0_i32_0 = arith.constant 0 : i32
    %c0_i32_1 = arith.constant 0 : i32
    return %arg1, %c0_i32, %c0_i32_0 : i32, i32, i32
  }
  func.func @transform_13(%arg0: i32, %arg1: i32) -> (i32, i32, i32) {
    %c0_i32 = arith.constant 0 : i32
    %c0_i32_0 = arith.constant 0 : i32
    %c0_i32_1 = arith.constant 0 : i32
    return %arg1, %c0_i32, %c0_i32_0 : i32, i32, i32
  }
  func.func @transform_14(%arg0: i32, %arg1: i32) -> (i32, i32, i32) {
    %c0_i32 = arith.constant 0 : i32
    %c0_i32_0 = arith.constant 0 : i32
    %c0_i32_1 = arith.constant 0 : i32
    return %arg1, %c0_i32, %c0_i32_0 : i32, i32, i32
  }
  func.func @transform_15(%arg0: i32, %arg1: i32) -> (i32, i32, i32) {
    %c0_i32 = arith.constant 0 : i32
    %c0_i32_0 = arith.constant 0 : i32
    %c0_i32_1 = arith.constant 0 : i32
    return %arg1, %c0_i32, %c0_i32_0 : i32, i32, i32
  }
  func.func @transform_16(%arg0: i32, %arg1: i32) -> (i32, i32, i32) {
    %c0_i32 = arith.constant 0 : i32
    %c0_i32_0 = arith.constant 0 : i32
    %c0_i32_1 = arith.constant 0 : i32
    return %arg1, %c0_i32, %c0_i32_0 : i32, i32, i32
  }
  func.func @transform_17(%arg0: i32, %arg1: i32) -> (i32, i32, i32) {
    %c0_i32 = arith.constant 0 : i32
    %c0_i32_0 = arith.constant 0 : i32
    %c0_i32_1 = arith.constant 0 : i32
    return %arg1, %c0_i32, %c0_i32_0 : i32, i32, i32
  }
  func.func @transform_18(%arg0: i32, %arg1: i32) -> (i32, i32, i32) {
    %c0_i32 = arith.constant 0 : i32
    %c0_i32_0 = arith.constant 0 : i32
    %c0_i32_1 = arith.constant 0 : i32
    return %arg1, %c0_i32, %c0_i32_0 : i32, i32, i32
  }
  func.func @transform_19(%arg0: i32, %arg1: i32) -> (i32, i32, i32) {
    %c0_i32 = arith.constant 0 : i32
    %c0_i32_0 = arith.constant 0 : i32
    %c0_i32_1 = arith.constant 0 : i32
    return %arg1, %c0_i32, %c0_i32_0 : i32, i32, i32
  }
  func.func @transform_20(%arg0: i32, %arg1: i32) -> (i32, i32, i32) {
    %c0_i32 = arith.constant 0 : i32
    %c0_i32_0 = arith.constant 0 : i32
    %c0_i32_1 = arith.constant 0 : i32
    return %arg1, %c0_i32, %c0_i32_0 : i32, i32, i32
  }
  func.func @transform_21(%arg0: i32, %arg1: i32) -> (i32, i32, i32) {
    %c0_i32 = arith.constant 0 : i32
    %c0_i32_0 = arith.constant 0 : i32
    %c0_i32_1 = arith.constant 0 : i32
    return %arg1, %c0_i32, %c0_i32_0 : i32, i32, i32
  }
  func.func @transform_22(%arg0: i32, %arg1: i32) -> (i32, i32, i32) {
    %c0_i32 = arith.constant 0 : i32
    %c0_i32_0 = arith.constant 0 : i32
    %c0_i32_1 = arith.constant 0 : i32
    return %arg1, %c0_i32, %c0_i32_0 : i32, i32, i32
  }
  func.func @transform_23(%arg0: i32, %arg1: i32) -> (i32, i32, i32) {
    %c0_i32 = arith.constant 0 : i32
    %c0_i32_0 = arith.constant 0 : i32
    %c0_i32_1 = arith.constant 0 : i32
    return %arg1, %c0_i32, %c0_i32_0 : i32, i32, i32
  }
  func.func @transform_24(%arg0: i32, %arg1: i32) -> (i32, i32, i32) {
    %c0_i32 = arith.constant 0 : i32
    %c0_i32_0 = arith.constant 0 : i32
    %c0_i32_1 = arith.constant 0 : i32
    return %arg1, %c0_i32, %c0_i32_0 : i32, i32, i32
  }
  func.func @transform_25(%arg0: i32, %arg1: i32) -> (i32, i32, i32) {
    %c0_i32 = arith.constant 0 : i32
    %c0_i32_0 = arith.constant 0 : i32
    %c0_i32_1 = arith.constant 0 : i32
    return %arg1, %c0_i32, %c0_i32_0 : i32, i32, i32
  }
  func.func @transform_26(%arg0: i32, %arg1: i32) -> (i32, i32, i32) {
    %c0_i32 = arith.constant 0 : i32
    %c0_i32_0 = arith.constant 0 : i32
    %c0_i32_1 = arith.constant 0 : i32
    return %arg1, %c0_i32, %c0_i32_0 : i32, i32, i32
  }
  func.func @transform_27(%arg0: i32, %arg1: i32) -> (i32, i32, i32) {
    %c0_i32 = arith.constant 0 : i32
    %c0_i32_0 = arith.constant 0 : i32
    %c0_i32_1 = arith.constant 0 : i32
    return %arg1, %c0_i32, %c0_i32_0 : i32, i32, i32
  }
  func.func @transform_28(%arg0: i32, %arg1: i32) -> (i32, i32, i32) {
    %c0_i32 = arith.constant 0 : i32
    %c0_i32_0 = arith.constant 0 : i32
    %c0_i32_1 = arith.constant 0 : i32
    return %arg1, %c0_i32, %c0_i32_0 : i32, i32, i32
  }
  func.func @transform_29(%arg0: i32, %arg1: i32) -> (i32, i32, i32) {
    %c0_i32 = arith.constant 0 : i32
    %c0_i32_0 = arith.constant 0 : i32
    %c0_i32_1 = arith.constant 0 : i32
    return %arg1, %c0_i32, %c0_i32_0 : i32, i32, i32
  }
  func.func @transform_30(%arg0: i32, %arg1: i32) -> (i32, i32, i32) {
    %c0_i32 = arith.constant 0 : i32
    %c0_i32_0 = arith.constant 0 : i32
    %c0_i32_1 = arith.constant 0 : i32
    return %arg1, %c0_i32, %c0_i32_0 : i32, i32, i32
  }
  func.func @transform_31(%arg0: i32, %arg1: i32) -> (i32, i32, i32) {
    %c0_i32 = arith.constant 0 : i32
    %c0_i32_0 = arith.constant 0 : i32
    %c0_i32_1 = arith.constant 0 : i32
    return %arg1, %c0_i32, %c0_i32_0 : i32, i32, i32
  }
  func.func @transform_32(%arg0: i32, %arg1: i32) -> (i32, i32, i32) {
    %c0_i32 = arith.constant 0 : i32
    %c0_i32_0 = arith.constant 0 : i32
    %c0_i32_1 = arith.constant 0 : i32
    return %arg1, %c0_i32, %c0_i32_0 : i32, i32, i32
  }
  func.func @transform_33(%arg0: i32, %arg1: i32) -> (i32, i32) {
    %c0_i32 = arith.constant 0 : i32
    %c0_i32_0 = arith.constant 0 : i32
    %c0_i32_1 = arith.constant 0 : i32
    return %c0_i32, %c0_i32_0 : i32, i32
  }
  func.func @transform_34(%arg0: i32, %arg1: i32) -> (i32, i32) {
    %c0_i32 = arith.constant 0 : i32
    %c0_i32_0 = arith.constant 0 : i32
    %c0_i32_1 = arith.constant 0 : i32
    return %c0_i32, %c0_i32_0 : i32, i32
  }
  func.func @transform_35(%arg0: i32, %arg1: i32) -> (i32, i32) {
    %c0_i32 = arith.constant 0 : i32
    %c0_i32_0 = arith.constant 0 : i32
    %c0_i32_1 = arith.constant 0 : i32
    return %c0_i32, %c0_i32_0 : i32, i32
  }
  func.func @transform_36(%arg0: i32, %arg1: i32) -> (i32, i32) {
    %c0_i32 = arith.constant 0 : i32
    %c0_i32_0 = arith.constant 0 : i32
    %c0_i32_1 = arith.constant 0 : i32
    return %c0_i32, %c0_i32_0 : i32, i32
  }
  func.func @transform_37(%arg0: i32, %arg1: i32) -> (i32, i32, i32) {
    %c0_i32 = arith.constant 0 : i32
    %c0_i32_0 = arith.constant 0 : i32
    %c0_i32_1 = arith.constant 0 : i32
    return %arg0, %c0_i32, %c0_i32_0 : i32, i32, i32
  }
}

</mosaic_0001>

<llo_original>
// kernel: tnt_forward.1
$region0: #{tnt_forward.1}
  #allocation0 [shape = 'u32[]', space=smem, size = 0x4, offset = 0x4, fixed_abs, tag = 'smem constant byte address 0x4 - core index']
  #allocation1 [shape = 'u32[144,128]{1,0:T(1,128)}', space=vmem, size = 0x12000, scoped, tag = 'internal scratch']
  #allocation2 [shape = 'f32[64,16]{1,0:T(8,128)}', space=vmem, size = 0x8000, scoped, tag = 'scratch operand']
  #allocation3 [shape = 'f32[5,32]{1,0:T(8,128)}', space=vmem, size = 0x1000, scoped, tag = 'scratch operand']
  %s0 = inlined_call_operand.smem [shape: u32[38], index: -1, kind: input, shape index: {}]
  %s1 = sld [smem:[%s0]]
  %s2 = scalar_lea.smem %s0, 1
  %s3 = sld [smem:[%s2]]
  %s4 = scalar_lea.smem %s0, 2
  %s5 = sld [smem:[%s4]]
  %s6 = scalar_lea.smem %s0, 3
  %s7 = sld [smem:[%s6]]
  %s8 = scalar_lea.smem %s0, 4
  %s9 = sld [smem:[%s8]]
  %s10 = scalar_lea.smem %s0, 5
  %s11 = sld [smem:[%s10]]
  %s12 = scalar_lea.smem %s0, 6
  %s13 = sld [smem:[%s12]]
  %s14 = scalar_lea.smem %s0, 7
  %s15 = sld [smem:[%s14]]
  %s16 = scalar_lea.smem %s0, 8
  %s17 = sld [smem:[%s16]]
  %s18 = scalar_lea.smem %s0, 9
  %s19 = sld [smem:[%s18]]
  %s20 = scalar_lea.smem %s0, 10
  %s21 = sld [smem:[%s20]]
  %s22 = scalar_lea.smem %s0, 11
  %s23 = sld [smem:[%s22]]
  %s24 = scalar_lea.smem %s0, 12
  %s25 = sld [smem:[%s24]]
  %s26 = scalar_lea.smem %s0, 13
  %s27 = sld [smem:[%s26]]
  %s28 = scalar_lea.smem %s0, 14
  %s29 = sld [smem:[%s28]]
  %s30 = scalar_lea.smem %s0, 15
  %s31 = sld [smem:[%s30]]
  %s32 = scalar_lea.smem %s0, 16
  %s33 = sld [smem:[%s32]]
  %s34 = scalar_lea.smem %s0, 17
  %s35 = sld [smem:[%s34]]
  %s36 = scalar_lea.smem %s0, 18
  %s37 = sld [smem:[%s36]]
  %s38 = scalar_lea.smem %s0, 19
  %s39 = sld [smem:[%s38]]
  %s40 = scalar_lea.smem %s0, 20
  %s41 = sld [smem:[%s40]]
  %s42 = scalar_lea.smem %s0, 21
  %s43 = sld [smem:[%s42]]
  %s44 = scalar_lea.smem %s0, 22
  %s45 = sld [smem:[%s44]]
  %s46 = scalar_lea.smem %s0, 23
  %s47 = sld [smem:[%s46]]
  %s48 = scalar_lea.smem %s0, 24
  %s49 = sld [smem:[%s48]]
  %s50 = scalar_lea.smem %s0, 25
  %s51 = sld [smem:[%s50]]
  %s52 = scalar_lea.smem %s0, 26
  %s53 = sld [smem:[%s52]]
  %s54 = scalar_lea.smem %s0, 27
  %s55 = sld [smem:[%s54]]
  %s56 = scalar_lea.smem %s0, 28
  %s57 = sld [smem:[%s56]]
  %s58 = scalar_lea.smem %s0, 29
  %s59 = sld [smem:[%s58]]
  %s60 = scalar_lea.smem %s0, 30
  %s61 = sld [smem:[%s60]]
  %s62 = scalar_lea.smem %s0, 31
  %s63 = sld [smem:[%s62]]
  %s64 = scalar_lea.smem %s0, 32
  %s65 = sld [smem:[%s64]]
  %s66 = scalar_lea.smem %s0, 33
  %s67 = sld [smem:[%s66]]
  %s68 = scalar_lea.smem %s0, 34
  %s69 = sld [smem:[%s68]]
  %s70 = scalar_lea.smem %s0, 35
  %s71 = sld [smem:[%s70]]
  %s72 = scalar_lea.smem %s0, 36
  %s73 = sld [smem:[%s72]]
  %s74 = scalar_lea.smem %s0, 37
  %s75 = sld [smem:[%s74]]
  %s76 = sld [smem:[#allocation0]]
  $region189: #{tnt_forward.1} parent=0
    _
  %s78 = ssub.s32 1, %s76
  %s79 = scalar_select 0, %s78, %s76
  $region1: #{tnt_forward.1} parent=0
    #allocation4 [shape = 'u8[1024]{0}', space=vmem, size = 0x400, scoped, tag = 'output window, operand 0']
    #allocation5 [shape = 's32[2]{0}', space=sflag, size = 0x8, scoped, tag = 'scoped memory for tnt_forward.1']
    %80 = vsyncpa [#allocation5], 0
    %s81 = scalar_lea.sflag [#allocation5], 1
    %82 = vsyncpa %s81, 0
    loop: start=0, step=1, limit=6
    $region2: #{tnt_forward.1} parent=1 // loop_pre_header
      _
    $region3: #{tnt_forward.1} parent=1 // loop_header
      %s84 = sphi 0, %s88
      %p85 = scmp.ge.s32.totalorder %s84, 6
      %s91 = sphi 0, %s103
      %s92 = sphi 0, %s99
      %s93 = sphi 0, %s91
      %s94 = sphi 0, %s92
      %s95 = sphi 0, %s93
      %s96 = sphi 0, %s94
      %s106 = sphi 0, %s108
      %s109 = sphi 0, %s106
      %s110 = sphi 0, %s109
      %s126 = sphi 0, %s110
      %s130 = sphi 0, %s130
      %s132 = sphi 0, %s130
      %s133 = sphi 0, %s132
      %s147 = sphi 0, %s133
      %s151 = sphi 0, %s151
      %s153 = sphi 0, %s151
      %s154 = sphi 0, %s153
      %s168 = sphi 0, %s154
      %s172 = sphi 0, %s172
      %s174 = sphi 0, %s172
      %s175 = sphi 0, %s174
      %s189 = sphi 0, %s175
      %s193 = sphi 0, %s193
      %s195 = sphi 0, %s193
      %s196 = sphi 0, %s195
      %s210 = sphi 0, %s196
      %s216 = sphi 0, %s218
      %s219 = sphi 0, %s216
      %s220 = sphi 0, %s219
      %s236 = sphi 0, %s220
      %s242 = sphi 0, %s244
      %s245 = sphi 0, %s242
      %s246 = sphi 0, %s245
      %s262 = sphi 0, %s246
      %s268 = sphi 0, %s270
      %s271 = sphi 0, %s268
      %s272 = sphi 0, %s271
      %s288 = sphi 0, %s272
      %s294 = sphi 0, %s296
      %s297 = sphi 0, %s294
      %s298 = sphi 0, %s297
      %s314 = sphi 0, %s298
      %s320 = sphi 0, %s322
      %s323 = sphi 0, %s320
      %s324 = sphi 0, %s323
      %s340 = sphi 0, %s324
      %s346 = sphi 0, %s348
      %s349 = sphi 0, %s346
      %s350 = sphi 0, %s349
      %s366 = sphi 0, %s350
      %s372 = sphi 0, %s374
      %s375 = sphi 0, %s372
      %s376 = sphi 0, %s375
      %s392 = sphi 0, %s376
      %s398 = sphi 0, %s400
      %s401 = sphi 0, %s398
      %s402 = sphi 0, %s401
      %s418 = sphi 0, %s402
      %s424 = sphi 0, %s426
      %s427 = sphi 0, %s424
      %s428 = sphi 0, %s427
      %s444 = sphi 0, %s428
      %s450 = sphi 0, %s452
      %s453 = sphi 0, %s450
      %s454 = sphi 0, %s453
      %s470 = sphi 0, %s454
      %s476 = sphi 0, %s478
      %s479 = sphi 0, %s476
      %s480 = sphi 0, %s479
      %s496 = sphi 0, %s480
      %s502 = sphi 0, %s504
      %s505 = sphi 0, %s502
      %s506 = sphi 0, %s505
      %s522 = sphi 0, %s506
      %s528 = sphi 0, %s530
      %s531 = sphi 0, %s528
      %s532 = sphi 0, %s531
      %s548 = sphi 0, %s532
      %s554 = sphi 0, %s556
      %s557 = sphi 0, %s554
      %s558 = sphi 0, %s557
      %s574 = sphi 0, %s558
      %s580 = sphi 0, %s582
      %s583 = sphi 0, %s580
      %s584 = sphi 0, %s583
      %s600 = sphi 0, %s584
      %s606 = sphi 0, %s608
      %s609 = sphi 0, %s606
      %s610 = sphi 0, %s609
      %s626 = sphi 0, %s610
      %s632 = sphi 0, %s634
      %s635 = sphi 0, %s632
      %s636 = sphi 0, %s635
      %s652 = sphi 0, %s636
      %s658 = sphi 0, %s660
      %s661 = sphi 0, %s658
      %s662 = sphi 0, %s661
      %s678 = sphi 0, %s662
      %s684 = sphi 0, %s686
      %s687 = sphi 0, %s684
      %s688 = sphi 0, %s687
      %s704 = sphi 0, %s688
      %s710 = sphi 0, %s712
      %s713 = sphi 0, %s710
      %s714 = sphi 0, %s713
      %s730 = sphi 0, %s714
      %s736 = sphi 0, %s738
      %s739 = sphi 0, %s736
      %s740 = sphi 0, %s739
      %s756 = sphi 0, %s740
      %s762 = sphi 0, %s764
      %s765 = sphi 0, %s762
      %s766 = sphi 0, %s765
      %s782 = sphi 0, %s766
      %s788 = sphi 0, %s790
      %s791 = sphi 0, %s788
      %s792 = sphi 0, %s791
      %s808 = sphi 0, %s792
      %s814 = sphi 0, %s816
      %s817 = sphi 0, %s814
      %s818 = sphi 0, %s817
      %s834 = sphi 0, %s818
      %s840 = sphi 0, %s842
      %s843 = sphi 0, %s840
      %s844 = sphi 0, %s843
      %s860 = sphi 0, %s844
      %s866 = sphi 0, %s868
      %s869 = sphi 0, %s866
      %s870 = sphi 0, %s869
      %s886 = sphi 0, %s870
      %s892 = sphi 0, %s894
      %s895 = sphi 0, %s892
      %s896 = sphi 0, %s895
      %s912 = sphi 0, %s896
      %s918 = sphi 0, %s920
      %s921 = sphi 0, %s918
      %s922 = sphi 0, %s921
      %s938 = sphi 0, %s922
      %s942 = sphi 0, %s942
      %s944 = sphi 0, %s942
      %s945 = sphi 0, %s944
      %s959 = sphi 0, %s945
      %s963 = sphi 0, %s963
      %s965 = sphi 0, %s963
      %s966 = sphi 0, %s965
      %s980 = sphi 0, %s966
      %s984 = sphi 0, %s984
      %s986 = sphi 0, %s984
      %s987 = sphi 0, %s986
      %s1001 = sphi 0, %s987
      %s1005 = sphi 0, %s1005
      %s1007 = sphi 0, %s1005
      %s1008 = sphi 0, %s1007
      %s1022 = sphi 0, %s1008
      %s1028 = sphi 0, %s1030
      %s1031 = sphi 0, %s1028
      %s1032 = sphi 0, %s1031
      %s1048 = sphi 0, %s1032
    $region4: #{tnt_forward.1} parent=1 // loop_header_branch
      %87 = sbr.rel (%p85) target = $region8
    $region5: #{tnt_forward.1} parent=1 // loop_body
      %s89 = ssub.s32 %s84, 1
      %s90 = ssub.s32 %s84, 2
      %s97 = sadd.s32 1, %s92
      %p98 = scmp.ge.s32.totalorder %s97, 2
      %s99 = scalar_select %p98, 0, %s97
      %s100 = sadd.s32 1, %s91
      %s101 = scalar_select %p98, %s100, %s91
      %p102 = scmp.ge.s32.totalorder %s101, 2
      %s103 = scalar_select %p102, 0, %s101
      %s104 = ssub.s32 %s91, %s103
      %p105 = scmp.eq.s32.totalorder %s104, 0
      %s107 = sadd.s32 %s106, 1
      %s108 = scalar_select %p105, %s106, %s107
      %p111 = pneg %p105
      %p112 = scmp.eq.s32.totalorder %s84, 3
      %p113 = por %p111, %p112
      %p114 = scmp.ne.s32.totalorder %s106, %s109
      %p115 = scmp.eq.s32.totalorder %s84, 0
      %p116 = por %p114, %p115
      %p117 = scmp.ne.s32.totalorder %s106, %s109
      %p118 = scmp.eq.s32.totalorder %s89, 3
      %p119 = por %p117, %p118
      %p120 = scmp.ne.s32.totalorder %s109, %s110
      %p121 = scmp.eq.s32.totalorder %s89, 0
      %p122 = por %p120, %p121
      %p123 = scmp.ne.s32.totalorder %s109, %s110
      %p124 = scmp.eq.s32.totalorder %s90, 3
      %p125 = por %p123, %p124
      %p127 = scmp.ne.s32.totalorder %s110, %s126
      %p128 = scmp.eq.s32.totalorder %s90, 0
      %p129 = por %p127, %p128
      %s131 = sadd.s32 %s130, 1
      %p134 = scmp.eq.s32.totalorder %s84, 3
      %p135 = scmp.ne.s32.totalorder %s130, %s132
      %p136 = scmp.eq.s32.totalorder %s84, 0
      %p137 = por %p135, %p136
      %p138 = scmp.ne.s32.totalorder %s130, %s132
      %p139 = scmp.eq.s32.totalorder %s89, 3
      %p140 = por %p138, %p139
      %p141 = scmp.ne.s32.totalorder %s132, %s133
      %p142 = scmp.eq.s32.totalorder %s89, 0
      %p143 = por %p141, %p142
      %p144 = scmp.ne.s32.totalorder %s132, %s133
      %p145 = scmp.eq.s32.totalorder %s90, 3
      %p146 = por %p144, %p145
      %p148 = scmp.ne.s32.totalorder %s133, %s147
      %p149 = scmp.eq.s32.totalorder %s90, 0
      %p150 = por %p148, %p149
      %s152 = sadd.s32 %s151, 1
      %p155 = scmp.eq.s32.totalorder %s84, 3
      %p156 = scmp.ne.s32.totalorder %s151, %s153
      %p157 = scmp.eq.s32.totalorder %s84, 0
      %p158 = por %p156, %p157
      %p159 = scmp.ne.s32.totalorder %s151, %s153
      %p160 = scmp.eq.s32.totalorder %s89, 3
      %p161 = por %p159, %p160
      %p162 = scmp.ne.s32.totalorder %s153, %s154
      %p163 = scmp.eq.s32.totalorder %s89, 0
      %p164 = por %p162, %p163
      %p165 = scmp.ne.s32.totalorder %s153, %s154
      %p166 = scmp.eq.s32.totalorder %s90, 3
      %p167 = por %p165, %p166
      %p169 = scmp.ne.s32.totalorder %s154, %s168
      %p170 = scmp.eq.s32.totalorder %s90, 0
      %p171 = por %p169, %p170
      %s173 = sadd.s32 %s172, 1
      %p176 = scmp.eq.s32.totalorder %s84, 3
      %p177 = scmp.ne.s32.totalorder %s172, %s174
      %p178 = scmp.eq.s32.totalorder %s84, 0
      %p179 = por %p177, %p178
      %p180 = scmp.ne.s32.totalorder %s172, %s174
      %p181 = scmp.eq.s32.totalorder %s89, 3
      %p182 = por %p180, %p181
      %p183 = scmp.ne.s32.totalorder %s174, %s175
      %p184 = scmp.eq.s32.totalorder %s89, 0
      %p185 = por %p183, %p184
      %p186 = scmp.ne.s32.totalorder %s174, %s175
      %p187 = scmp.eq.s32.totalorder %s90, 3
      %p188 = por %p186, %p187
      %p190 = scmp.ne.s32.totalorder %s175, %s189
      %p191 = scmp.eq.s32.totalorder %s90, 0
      %p192 = por %p190, %p191
      %s194 = sadd.s32 %s193, 1
      %p197 = scmp.eq.s32.totalorder %s84, 3
      %p198 = scmp.ne.s32.totalorder %s193, %s195
      %p199 = scmp.eq.s32.totalorder %s84, 0
      %p200 = por %p198, %p199
      %p201 = scmp.ne.s32.totalorder %s193, %s195
      %p202 = scmp.eq.s32.totalorder %s89, 3
      %p203 = por %p201, %p202
      %p204 = scmp.ne.s32.totalorder %s195, %s196
      %p205 = scmp.eq.s32.totalorder %s89, 0
      %p206 = por %p204, %p205
      %p207 = scmp.ne.s32.totalorder %s195, %s196
      %p208 = scmp.eq.s32.totalorder %s90, 3
      %p209 = por %p207, %p208
      %p211 = scmp.ne.s32.totalorder %s196, %s210
      %p212 = scmp.eq.s32.totalorder %s90, 0
      %p213 = por %p211, %p212
      %s214 = ssub.s32 %s92, %s99
      %p215 = scmp.eq.s32.totalorder %s214, 0
      %s217 = sadd.s32 %s216, 1
      %s218 = scalar_select %p215, %s216, %s217
      %p221 = pneg %p215
      %p222 = scmp.eq.s32.totalorder %s84, 3
      %p223 = por %p221, %p222
      %p224 = scmp.ne.s32.totalorder %s216, %s219
      %p225 = scmp.eq.s32.totalorder %s84, 0
      %p226 = por %p224, %p225
      %p227 = scmp.ne.s32.totalorder %s216, %s219
      %p228 = scmp.eq.s32.totalorder %s89, 3
      %p229 = por %p227, %p228
      %p230 = scmp.ne.s32.totalorder %s219, %s220
      %p231 = scmp.eq.s32.totalorder %s89, 0
      %p232 = por %p230, %p231
      %p233 = scmp.ne.s32.totalorder %s219, %s220
      %p234 = scmp.eq.s32.totalorder %s90, 3
      %p235 = por %p233, %p234
      %p237 = scmp.ne.s32.totalorder %s220, %s236
      %p238 = scmp.eq.s32.totalorder %s90, 0
      %p239 = por %p237, %p238
      %s240 = ssub.s32 %s92, %s99
      %p241 = scmp.eq.s32.totalorder %s240, 0
      %s243 = sadd.s32 %s242, 1
      %s244 = scalar_select %p241, %s242, %s243
      %p247 = pneg %p241
      %p248 = scmp.eq.s32.totalorder %s84, 3
      %p249 = por %p247, %p248
      %p250 = scmp.ne.s32.totalorder %s242, %s245
      %p251 = scmp.eq.s32.totalorder %s84, 0
      %p252 = por %p250, %p251
      %p253 = scmp.ne.s32.totalorder %s242, %s245
      %p254 = scmp.eq.s32.totalorder %s89, 3
      %p255 = por %p253, %p254
      %p256 = scmp.ne.s32.totalorder %s245, %s246
      %p257 = scmp.eq.s32.totalorder %s89, 0
      %p258 = por %p256, %p257
      %p259 = scmp.ne.s32.totalorder %s245, %s246
      %p260 = scmp.eq.s32.totalorder %s90, 3
      %p261 = por %p259, %p260
      %p263 = scmp.ne.s32.totalorder %s246, %s262
      %p264 = scmp.eq.s32.totalorder %s90, 0
      %p265 = por %p263, %p264
      %s266 = ssub.s32 %s92, %s99
      %p267 = scmp.eq.s32.totalorder %s266, 0
      %s269 = sadd.s32 %s268, 1
      %s270 = scalar_select %p267, %s268, %s269
      %p273 = pneg %p267
      %p274 = scmp.eq.s32.totalorder %s84, 3
      %p275 = por %p273, %p274
      %p276 = scmp.ne.s32.totalorder %s268, %s271
      %p277 = scmp.eq.s32.totalorder %s84, 0
      %p278 = por %p276, %p277
      %p279 = scmp.ne.s32.totalorder %s268, %s271
      %p280 = scmp.eq.s32.totalorder %s89, 3
      %p281 = por %p279, %p280
      %p282 = scmp.ne.s32.totalorder %s271, %s272
      %p283 = scmp.eq.s32.totalorder %s89, 0
      %p284 = por %p282, %p283
      %p285 = scmp.ne.s32.totalorder %s271, %s272
      %p286 = scmp.eq.s32.totalorder %s90, 3
      %p287 = por %p285, %p286
      %p289 = scmp.ne.s32.totalorder %s272, %s288
      %p290 = scmp.eq.s32.totalorder %s90, 0
      %p291 = por %p289, %p290
      %s292 = ssub.s32 %s92, %s99
      %p293 = scmp.eq.s32.totalorder %s292, 0
      %s295 = sadd.s32 %s294, 1
      %s296 = scalar_select %p293, %s294, %s295
      %p299 = pneg %p293
      %p300 = scmp.eq.s32.totalorder %s84, 3
      %p301 = por %p299, %p300
      %p302 = scmp.ne.s32.totalorder %s294, %s297
      %p303 = scmp.eq.s32.totalorder %s84, 0
      %p304 = por %p302, %p303
      %p305 = scmp.ne.s32.totalorder %s294, %s297
      %p306 = scmp.eq.s32.totalorder %s89, 3
      %p307 = por %p305, %p306
      %p308 = scmp.ne.s32.totalorder %s297, %s298
      %p309 = scmp.eq.s32.totalorder %s89, 0
      %p310 = por %p308, %p309
      %p311 = scmp.ne.s32.totalorder %s297, %s298
      %p312 = scmp.eq.s32.totalorder %s90, 3
      %p313 = por %p311, %p312
      %p315 = scmp.ne.s32.totalorder %s298, %s314
      %p316 = scmp.eq.s32.totalorder %s90, 0
      %p317 = por %p315, %p316
      %s318 = ssub.s32 %s92, %s99
      %p319 = scmp.eq.s32.totalorder %s318, 0
      %s321 = sadd.s32 %s320, 1
      %s322 = scalar_select %p319, %s320, %s321
      %p325 = pneg %p319
      %p326 = scmp.eq.s32.totalorder %s84, 3
      %p327 = por %p325, %p326
      %p328 = scmp.ne.s32.totalorder %s320, %s323
      %p329 = scmp.eq.s32.totalorder %s84, 0
      %p330 = por %p328, %p329
      %p331 = scmp.ne.s32.totalorder %s320, %s323
      %p332 = scmp.eq.s32.totalorder %s89, 3
      %p333 = por %p331, %p332
      %p334 = scmp.ne.s32.totalorder %s323, %s324
      %p335 = scmp.eq.s32.totalorder %s89, 0
      %p336 = por %p334, %p335
      %p337 = scmp.ne.s32.totalorder %s323, %s324
      %p338 = scmp.eq.s32.totalorder %s90, 3
      %p339 = por %p337, %p338
      %p341 = scmp.ne.s32.totalorder %s324, %s340
      %p342 = scmp.eq.s32.totalorder %s90, 0
      %p343 = por %p341, %p342
      %s344 = ssub.s32 %s92, %s99
      %p345 = scmp.eq.s32.totalorder %s344, 0
      %s347 = sadd.s32 %s346, 1
      %s348 = scalar_select %p345, %s346, %s347
      %p351 = pneg %p345
      %p352 = scmp.eq.s32.totalorder %s84, 3
      %p353 = por %p351, %p352
      %p354 = scmp.ne.s32.totalorder %s346, %s349
      %p355 = scmp.eq.s32.totalorder %s84, 0
      %p356 = por %p354, %p355
      %p357 = scmp.ne.s32.totalorder %s346, %s349
      %p358 = scmp.eq.s32.totalorder %s89, 3
      %p359 = por %p357, %p358
      %p360 = scmp.ne.s32.totalorder %s349, %s350
      %p361 = scmp.eq.s32.totalorder %s89, 0
      %p362 = por %p360, %p361
      %p363 = scmp.ne.s32.totalorder %s349, %s350
      %p364 = scmp.eq.s32.totalorder %s90, 3
      %p365 = por %p363, %p364
      %p367 = scmp.ne.s32.totalorder %s350, %s366
      %p368 = scmp.eq.s32.totalorder %s90, 0
      %p369 = por %p367, %p368
      %s370 = ssub.s32 %s92, %s99
      %p371 = scmp.eq.s32.totalorder %s370, 0
      %s373 = sadd.s32 %s372, 1
      %s374 = scalar_select %p371, %s372, %s373
      %p377 = pneg %p371
      %p378 = scmp.eq.s32.totalorder %s84, 3
      %p379 = por %p377, %p378
      %p380 = scmp.ne.s32.totalorder %s372, %s375
      %p381 = scmp.eq.s32.totalorder %s84, 0
      %p382 = por %p380, %p381
      %p383 = scmp.ne.s32.totalorder %s372, %s375
      %p384 = scmp.eq.s32.totalorder %s89, 3
      %p385 = por %p383, %p384
      %p386 = scmp.ne.s32.totalorder %s375, %s376
      %p387 = scmp.eq.s32.totalorder %s89, 0
      %p388 = por %p386, %p387
      %p389 = scmp.ne.s32.totalorder %s375, %s376
      %p390 = scmp.eq.s32.totalorder %s90, 3
      %p391 = por %p389, %p390
      %p393 = scmp.ne.s32.totalorder %s376, %s392
      %p394 = scmp.eq.s32.totalorder %s90, 0
      %p395 = por %p393, %p394
      %s396 = ssub.s32 %s92, %s99
      %p397 = scmp.eq.s32.totalorder %s396, 0
      %s399 = sadd.s32 %s398, 1
      %s400 = scalar_select %p397, %s398, %s399
      %p403 = pneg %p397
      %p404 = scmp.eq.s32.totalorder %s84, 3
      %p405 = por %p403, %p404
      %p406 = scmp.ne.s32.totalorder %s398, %s401
      %p407 = scmp.eq.s32.totalorder %s84, 0
      %p408 = por %p406, %p407
      %p409 = scmp.ne.s32.totalorder %s398, %s401
      %p410 = scmp.eq.s32.totalorder %s89, 3
      %p411 = por %p409, %p410
      %p412 = scmp.ne.s32.totalorder %s401, %s402
      %p413 = scmp.eq.s32.totalorder %s89, 0
      %p414 = por %p412, %p413
      %p415 = scmp.ne.s32.totalorder %s401, %s402
      %p416 = scmp.eq.s32.totalorder %s90, 3
      %p417 = por %p415, %p416
      %p419 = scmp.ne.s32.totalorder %s402, %s418
      %p420 = scmp.eq.s32.totalorder %s90, 0
      %p421 = por %p419, %p420
      %s422 = ssub.s32 %s92, %s99
      %p423 = scmp.eq.s32.totalorder %s422, 0
      %s425 = sadd.s32 %s424, 1
      %s426 = scalar_select %p423, %s424, %s425
      %p429 = pneg %p423
      %p430 = scmp.eq.s32.totalorder %s84, 3
      %p431 = por %p429, %p430
      %p432 = scmp.ne.s32.totalorder %s424, %s427
      %p433 = scmp.eq.s32.totalorder %s84, 0
      %p434 = por %p432, %p433
      %p435 = scmp.ne.s32.totalorder %s424, %s427
      %p436 = scmp.eq.s32.totalorder %s89, 3
      %p437 = por %p435, %p436
      %p438 = scmp.ne.s32.totalorder %s427, %s428
      %p439 = scmp.eq.s32.totalorder %s89, 0
      %p440 = por %p438, %p439
      %p441 = scmp.ne.s32.totalorder %s427, %s428
      %p442 = scmp.eq.s32.totalorder %s90, 3
      %p443 = por %p441, %p442
      %p445 = scmp.ne.s32.totalorder %s428, %s444
      %p446 = scmp.eq.s32.totalorder %s90, 0
      %p447 = por %p445, %p446
      %s448 = ssub.s32 %s92, %s99
      %p449 = scmp.eq.s32.totalorder %s448, 0
      %s451 = sadd.s32 %s450, 1
      %s452 = scalar_select %p449, %s450, %s451
      %p455 = pneg %p449
      %p456 = scmp.eq.s32.totalorder %s84, 3
      %p457 = por %p455, %p456
      %p458 = scmp.ne.s32.totalorder %s450, %s453
      %p459 = scmp.eq.s32.totalorder %s84, 0
      %p460 = por %p458, %p459
      %p461 = scmp.ne.s32.totalorder %s450, %s453
      %p462 = scmp.eq.s32.totalorder %s89, 3
      %p463 = por %p461, %p462
      %p464 = scmp.ne.s32.totalorder %s453, %s454
      %p465 = scmp.eq.s32.totalorder %s89, 0
      %p466 = por %p464, %p465
      %p467 = scmp.ne.s32.totalorder %s453, %s454
      %p468 = scmp.eq.s32.totalorder %s90, 3
      %p469 = por %p467, %p468
      %p471 = scmp.ne.s32.totalorder %s454, %s470
      %p472 = scmp.eq.s32.totalorder %s90, 0
      %p473 = por %p471, %p472
      %s474 = ssub.s32 %s92, %s99
      %p475 = scmp.eq.s32.totalorder %s474, 0
      %s477 = sadd.s32 %s476, 1
      %s478 = scalar_select %p475, %s476, %s477
      %p481 = pneg %p475
      %p482 = scmp.eq.s32.totalorder %s84, 3
      %p483 = por %p481, %p482
      %p484 = scmp.ne.s32.totalorder %s476, %s479
      %p485 = scmp.eq.s32.totalorder %s84, 0
      %p486 = por %p484, %p485
      %p487 = scmp.ne.s32.totalorder %s476, %s479
      %p488 = scmp.eq.s32.totalorder %s89, 3
      %p489 = por %p487, %p488
      %p490 = scmp.ne.s32.totalorder %s479, %s480
      %p491 = scmp.eq.s32.totalorder %s89, 0
      %p492 = por %p490, %p491
      %p493 = scmp.ne.s32.totalorder %s479, %s480
      %p494 = scmp.eq.s32.totalorder %s90, 3
      %p495 = por %p493, %p494
      %p497 = scmp.ne.s32.totalorder %s480, %s496
      %p498 = scmp.eq.s32.totalorder %s90, 0
      %p499 = por %p497, %p498
      %s500 = ssub.s32 %s92, %s99
      %p501 = scmp.eq.s32.totalorder %s500, 0
      %s503 = sadd.s32 %s502, 1
      %s504 = scalar_select %p501, %s502, %s503
      %p507 = pneg %p501
      %p508 = scmp.eq.s32.totalorder %s84, 3
      %p509 = por %p507, %p508
      %p510 = scmp.ne.s32.totalorder %s502, %s505
      %p511 = scmp.eq.s32.totalorder %s84, 0
      %p512 = por %p510, %p511
      %p513 = scmp.ne.s32.totalorder %s502, %s505
      %p514 = scmp.eq.s32.totalorder %s89, 3
      %p515 = por %p513, %p514
      %p516 = scmp.ne.s32.totalorder %s505, %s506
      %p517 = scmp.eq.s32.totalorder %s89, 0
      %p518 = por %p516, %p517
      %p519 = scmp.ne.s32.totalorder %s505, %s506
      %p520 = scmp.eq.s32.totalorder %s90, 3
      %p521 = por %p519, %p520
      %p523 = scmp.ne.s32.totalorder %s506, %s522
      %p524 = scmp.eq.s32.totalorder %s90, 0
      %p525 = por %p523, %p524
      %s526 = ssub.s32 %s92, %s99
      %p527 = scmp.eq.s32.totalorder %s526, 0
      %s529 = sadd.s32 %s528, 1
      %s530 = scalar_select %p527, %s528, %s529
      %p533 = pneg %p527
      %p534 = scmp.eq.s32.totalorder %s84, 3
      %p535 = por %p533, %p534
      %p536 = scmp.ne.s32.totalorder %s528, %s531
      %p537 = scmp.eq.s32.totalorder %s84, 0
      %p538 = por %p536, %p537
      %p539 = scmp.ne.s32.totalorder %s528, %s531
      %p540 = scmp.eq.s32.totalorder %s89, 3
      %p541 = por %p539, %p540
      %p542 = scmp.ne.s32.totalorder %s531, %s532
      %p543 = scmp.eq.s32.totalorder %s89, 0
      %p544 = por %p542, %p543
      %p545 = scmp.ne.s32.totalorder %s531, %s532
      %p546 = scmp.eq.s32.totalorder %s90, 3
      %p547 = por %p545, %p546
      %p549 = scmp.ne.s32.totalorder %s532, %s548
      %p550 = scmp.eq.s32.totalorder %s90, 0
      %p551 = por %p549, %p550
      %s552 = ssub.s32 %s92, %s99
      %p553 = scmp.eq.s32.totalorder %s552, 0
      %s555 = sadd.s32 %s554, 1
      %s556 = scalar_select %p553, %s554, %s555
      %p559 = pneg %p553
      %p560 = scmp.eq.s32.totalorder %s84, 3
      %p561 = por %p559, %p560
      %p562 = scmp.ne.s32.totalorder %s554, %s557
      %p563 = scmp.eq.s32.totalorder %s84, 0
      %p564 = por %p562, %p563
      %p565 = scmp.ne.s32.totalorder %s554, %s557
      %p566 = scmp.eq.s32.totalorder %s89, 3
      %p567 = por %p565, %p566
      %p568 = scmp.ne.s32.totalorder %s557, %s558
      %p569 = scmp.eq.s32.totalorder %s89, 0
      %p570 = por %p568, %p569
      %p571 = scmp.ne.s32.totalorder %s557, %s558
      %p572 = scmp.eq.s32.totalorder %s90, 3
      %p573 = por %p571, %p572
      %p575 = scmp.ne.s32.totalorder %s558, %s574
      %p576 = scmp.eq.s32.totalorder %s90, 0
      %p577 = por %p575, %p576
      %s578 = ssub.s32 %s92, %s99
      %p579 = scmp.eq.s32.totalorder %s578, 0
      %s581 = sadd.s32 %s580, 1
      %s582 = scalar_select %p579, %s580, %s581
      %p585 = pneg %p579
      %p586 = scmp.eq.s32.totalorder %s84, 3
      %p587 = por %p585, %p586
      %p588 = scmp.ne.s32.totalorder %s580, %s583
      %p589 = scmp.eq.s32.totalorder %s84, 0
      %p590 = por %p588, %p589
      %p591 = scmp.ne.s32.totalorder %s580, %s583
      %p592 = scmp.eq.s32.totalorder %s89, 3
      %p593 = por %p591, %p592
      %p594 = scmp.ne.s32.totalorder %s583, %s584
      %p595 = scmp.eq.s32.totalorder %s89, 0
      %p596 = por %p594, %p595
      %p597 = scmp.ne.s32.totalorder %s583, %s584
      %p598 = scmp.eq.s32.totalorder %s90, 3
      %p599 = por %p597, %p598
      %p601 = scmp.ne.s32.totalorder %s584, %s600
      %p602 = scmp.eq.s32.totalorder %s90, 0
      %p603 = por %p601, %p602
      %s604 = ssub.s32 %s92, %s99
      %p605 = scmp.eq.s32.totalorder %s604, 0
      %s607 = sadd.s32 %s606, 1
      %s608 = scalar_select %p605, %s606, %s607
      %p611 = pneg %p605
      %p612 = scmp.eq.s32.totalorder %s84, 3
      %p613 = por %p611, %p612
      %p614 = scmp.ne.s32.totalorder %s606, %s609
      %p615 = scmp.eq.s32.totalorder %s84, 0
      %p616 = por %p614, %p615
      %p617 = scmp.ne.s32.totalorder %s606, %s609
      %p618 = scmp.eq.s32.totalorder %s89, 3
      %p619 = por %p617, %p618
      %p620 = scmp.ne.s32.totalorder %s609, %s610
      %p621 = scmp.eq.s32.totalorder %s89, 0
      %p622 = por %p620, %p621
      %p623 = scmp.ne.s32.totalorder %s609, %s610
      %p624 = scmp.eq.s32.totalorder %s90, 3
      %p625 = por %p623, %p624
      %p627 = scmp.ne.s32.totalorder %s610, %s626
      %p628 = scmp.eq.s32.totalorder %s90, 0
      %p629 = por %p627, %p628
      %s630 = ssub.s32 %s92, %s99
      %p631 = scmp.eq.s32.totalorder %s630, 0
      %s633 = sadd.s32 %s632, 1
      %s634 = scalar_select %p631, %s632, %s633
      %p637 = pneg %p631
      %p638 = scmp.eq.s32.totalorder %s84, 3
      %p639 = por %p637, %p638
      %p640 = scmp.ne.s32.totalorder %s632, %s635
      %p641 = scmp.eq.s32.totalorder %s84, 0
      %p642 = por %p640, %p641
      %p643 = scmp.ne.s32.totalorder %s632, %s635
      %p644 = scmp.eq.s32.totalorder %s89, 3
      %p645 = por %p643, %p644
      %p646 = scmp.ne.s32.totalorder %s635, %s636
      %p647 = scmp.eq.s32.totalorder %s89, 0
      %p648 = por %p646, %p647
      %p649 = scmp.ne.s32.totalorder %s635, %s636
      %p650 = scmp.eq.s32.totalorder %s90, 3
      %p651 = por %p649, %p650
      %p653 = scmp.ne.s32.totalorder %s636, %s652
      %p654 = scmp.eq.s32.totalorder %s90, 0
      %p655 = por %p653, %p654
      %s656 = ssub.s32 %s92, %s99
      %p657 = scmp.eq.s32.totalorder %s656, 0
      %s659 = sadd.s32 %s658, 1
      %s660 = scalar_select %p657, %s658, %s659
      %p663 = pneg %p657
      %p664 = scmp.eq.s32.totalorder %s84, 3
      %p665 = por %p663, %p664
      %p666 = scmp.ne.s32.totalorder %s658, %s661
      %p667 = scmp.eq.s32.totalorder %s84, 0
      %p668 = por %p666, %p667
      %p669 = scmp.ne.s32.totalorder %s658, %s661
      %p670 = scmp.eq.s32.totalorder %s89, 3
      %p671 = por %p669, %p670
      %p672 = scmp.ne.s32.totalorder %s661, %s662
      %p673 = scmp.eq.s32.totalorder %s89, 0
      %p674 = por %p672, %p673
      %p675 = scmp.ne.s32.totalorder %s661, %s662
      %p676 = scmp.eq.s32.totalorder %s90, 3
      %p677 = por %p675, %p676
      %p679 = scmp.ne.s32.totalorder %s662, %s678
      %p680 = scmp.eq.s32.totalorder %s90, 0
      %p681 = por %p679, %p680
      %s682 = ssub.s32 %s92, %s99
      %p683 = scmp.eq.s32.totalorder %s682, 0
      %s685 = sadd.s32 %s684, 1
      %s686 = scalar_select %p683, %s684, %s685
      %p689 = pneg %p683
      %p690 = scmp.eq.s32.totalorder %s84, 3
      %p691 = por %p689, %p690
      %p692 = scmp.ne.s32.totalorder %s684, %s687
      %p693 = scmp.eq.s32.totalorder %s84, 0
      %p694 = por %p692, %p693
      %p695 = scmp.ne.s32.totalorder %s684, %s687
      %p696 = scmp.eq.s32.totalorder %s89, 3
      %p697 = por %p695, %p696
      %p698 = scmp.ne.s32.totalorder %s687, %s688
      %p699 = scmp.eq.s32.totalorder %s89, 0
      %p700 = por %p698, %p699
      %p701 = scmp.ne.s32.totalorder %s687, %s688
      %p702 = scmp.eq.s32.totalorder %s90, 3
      %p703 = por %p701, %p702
      %p705 = scmp.ne.s32.totalorder %s688, %s704
      %p706 = scmp.eq.s32.totalorder %s90, 0
      %p707 = por %p705, %p706
      %s708 = ssub.s32 %s92, %s99
      %p709 = scmp.eq.s32.totalorder %s708, 0
      %s711 = sadd.s32 %s710, 1
      %s712 = scalar_select %p709, %s710, %s711
      %p715 = pneg %p709
      %p716 = scmp.eq.s32.totalorder %s84, 3
      %p717 = por %p715, %p716
      %p718 = scmp.ne.s32.totalorder %s710, %s713
      %p719 = scmp.eq.s32.totalorder %s84, 0
      %p720 = por %p718, %p719
      %p721 = scmp.ne.s32.totalorder %s710, %s713
      %p722 = scmp.eq.s32.totalorder %s89, 3
      %p723 = por %p721, %p722
      %p724 = scmp.ne.s32.totalorder %s713, %s714
      %p725 = scmp.eq.s32.totalorder %s89, 0
      %p726 = por %p724, %p725
      %p727 = scmp.ne.s32.totalorder %s713, %s714
      %p728 = scmp.eq.s32.totalorder %s90, 3
      %p729 = por %p727, %p728
      %p731 = scmp.ne.s32.totalorder %s714, %s730
      %p732 = scmp.eq.s32.totalorder %s90, 0
      %p733 = por %p731, %p732
      %s734 = ssub.s32 %s92, %s99
      %p735 = scmp.eq.s32.totalorder %s734, 0
      %s737 = sadd.s32 %s736, 1
      %s738 = scalar_select %p735, %s736, %s737
      %p741 = pneg %p735
      %p742 = scmp.eq.s32.totalorder %s84, 3
      %p743 = por %p741, %p742
      %p744 = scmp.ne.s32.totalorder %s736, %s739
      %p745 = scmp.eq.s32.totalorder %s84, 0
      %p746 = por %p744, %p745
      %p747 = scmp.ne.s32.totalorder %s736, %s739
      %p748 = scmp.eq.s32.totalorder %s89, 3
      %p749 = por %p747, %p748
      %p750 = scmp.ne.s32.totalorder %s739, %s740
      %p751 = scmp.eq.s32.totalorder %s89, 0
      %p752 = por %p750, %p751
      %p753 = scmp.ne.s32.totalorder %s739, %s740
      %p754 = scmp.eq.s32.totalorder %s90, 3
      %p755 = por %p753, %p754
      %p757 = scmp.ne.s32.totalorder %s740, %s756
      %p758 = scmp.eq.s32.totalorder %s90, 0
      %p759 = por %p757, %p758
      %s760 = ssub.s32 %s92, %s99
      %p761 = scmp.eq.s32.totalorder %s760, 0
      %s763 = sadd.s32 %s762, 1
      %s764 = scalar_select %p761, %s762, %s763
      %p767 = pneg %p761
      %p768 = scmp.eq.s32.totalorder %s84, 3
      %p769 = por %p767, %p768
      %p770 = scmp.ne.s32.totalorder %s762, %s765
      %p771 = scmp.eq.s32.totalorder %s84, 0
      %p772 = por %p770, %p771
      %p773 = scmp.ne.s32.totalorder %s762, %s765
      %p774 = scmp.eq.s32.totalorder %s89, 3
      %p775 = por %p773, %p774
      %p776 = scmp.ne.s32.totalorder %s765, %s766
      %p777 = scmp.eq.s32.totalorder %s89, 0
      %p778 = por %p776, %p777
      %p779 = scmp.ne.s32.totalorder %s765, %s766
      %p780 = scmp.eq.s32.totalorder %s90, 3
      %p781 = por %p779, %p780
      %p783 = scmp.ne.s32.totalorder %s766, %s782
      %p784 = scmp.eq.s32.totalorder %s90, 0
      %p785 = por %p783, %p784
      %s786 = ssub.s32 %s92, %s99
      %p787 = scmp.eq.s32.totalorder %s786, 0
      %s789 = sadd.s32 %s788, 1
      %s790 = scalar_select %p787, %s788, %s789
      %p793 = pneg %p787
      %p794 = scmp.eq.s32.totalorder %s84, 3
      %p795 = por %p793, %p794
      %p796 = scmp.ne.s32.totalorder %s788, %s791
      %p797 = scmp.eq.s32.totalorder %s84, 0
      %p798 = por %p796, %p797
      %p799 = scmp.ne.s32.totalorder %s788, %s791
      %p800 = scmp.eq.s32.totalorder %s89, 3
      %p801 = por %p799, %p800
      %p802 = scmp.ne.s32.totalorder %s791, %s792
      %p803 = scmp.eq.s32.totalorder %s89, 0
      %p804 = por %p802, %p803
      %p805 = scmp.ne.s32.totalorder %s791, %s792
      %p806 = scmp.eq.s32.totalorder %s90, 3
      %p807 = por %p805, %p806
      %p809 = scmp.ne.s32.totalorder %s792, %s808
      %p810 = scmp.eq.s32.totalorder %s90, 0
      %p811 = por %p809, %p810
      %s812 = ssub.s32 %s92, %s99
      %p813 = scmp.eq.s32.totalorder %s812, 0
      %s815 = sadd.s32 %s814, 1
      %s816 = scalar_select %p813, %s814, %s815
      %p819 = pneg %p813
      %p820 = scmp.eq.s32.totalorder %s84, 3
      %p821 = por %p819, %p820
      %p822 = scmp.ne.s32.totalorder %s814, %s817
      %p823 = scmp.eq.s32.totalorder %s84, 0
      %p824 = por %p822, %p823
      %p825 = scmp.ne.s32.totalorder %s814, %s817
      %p826 = scmp.eq.s32.totalorder %s89, 3
      %p827 = por %p825, %p826
      %p828 = scmp.ne.s32.totalorder %s817, %s818
      %p829 = scmp.eq.s32.totalorder %s89, 0
      %p830 = por %p828, %p829
      %p831 = scmp.ne.s32.totalorder %s817, %s818
      %p832 = scmp.eq.s32.totalorder %s90, 3
      %p833 = por %p831, %p832
      %p835 = scmp.ne.s32.totalorder %s818, %s834
      %p836 = scmp.eq.s32.totalorder %s90, 0
      %p837 = por %p835, %p836
      %s838 = ssub.s32 %s92, %s99
      %p839 = scmp.eq.s32.totalorder %s838, 0
      %s841 = sadd.s32 %s840, 1
      %s842 = scalar_select %p839, %s840, %s841
      %p845 = pneg %p839
      %p846 = scmp.eq.s32.totalorder %s84, 3
      %p847 = por %p845, %p846
      %p848 = scmp.ne.s32.totalorder %s840, %s843
      %p849 = scmp.eq.s32.totalorder %s84, 0
      %p850 = por %p848, %p849
      %p851 = scmp.ne.s32.totalorder %s840, %s843
      %p852 = scmp.eq.s32.totalorder %s89, 3
      %p853 = por %p851, %p852
      %p854 = scmp.ne.s32.totalorder %s843, %s844
      %p855 = scmp.eq.s32.totalorder %s89, 0
      %p856 = por %p854, %p855
      %p857 = scmp.ne.s32.totalorder %s843, %s844
      %p858 = scmp.eq.s32.totalorder %s90, 3
      %p859 = por %p857, %p858
      %p861 = scmp.ne.s32.totalorder %s844, %s860
      %p862 = scmp.eq.s32.totalorder %s90, 0
      %p863 = por %p861, %p862
      %s864 = ssub.s32 %s92, %s99
      %p865 = scmp.eq.s32.totalorder %s864, 0
      %s867 = sadd.s32 %s866, 1
      %s868 = scalar_select %p865, %s866, %s867
      %p871 = pneg %p865
      %p872 = scmp.eq.s32.totalorder %s84, 3
      %p873 = por %p871, %p872
      %p874 = scmp.ne.s32.totalorder %s866, %s869
      %p875 = scmp.eq.s32.totalorder %s84, 0
      %p876 = por %p874, %p875
      %p877 = scmp.ne.s32.totalorder %s866, %s869
      %p878 = scmp.eq.s32.totalorder %s89, 3
      %p879 = por %p877, %p878
      %p880 = scmp.ne.s32.totalorder %s869, %s870
      %p881 = scmp.eq.s32.totalorder %s89, 0
      %p882 = por %p880, %p881
      %p883 = scmp.ne.s32.totalorder %s869, %s870
      %p884 = scmp.eq.s32.totalorder %s90, 3
      %p885 = por %p883, %p884
      %p887 = scmp.ne.s32.totalorder %s870, %s886
      %p888 = scmp.eq.s32.totalorder %s90, 0
      %p889 = por %p887, %p888
      %s890 = ssub.s32 %s92, %s99
      %p891 = scmp.eq.s32.totalorder %s890, 0
      %s893 = sadd.s32 %s892, 1
      %s894 = scalar_select %p891, %s892, %s893
      %p897 = pneg %p891
      %p898 = scmp.eq.s32.totalorder %s84, 3
      %p899 = por %p897, %p898
      %p900 = scmp.ne.s32.totalorder %s892, %s895
      %p901 = scmp.eq.s32.totalorder %s84, 0
      %p902 = por %p900, %p901
      %p903 = scmp.ne.s32.totalorder %s892, %s895
      %p904 = scmp.eq.s32.totalorder %s89, 3
      %p905 = por %p903, %p904
      %p906 = scmp.ne.s32.totalorder %s895, %s896
      %p907 = scmp.eq.s32.totalorder %s89, 0
      %p908 = por %p906, %p907
      %p909 = scmp.ne.s32.totalorder %s895, %s896
      %p910 = scmp.eq.s32.totalorder %s90, 3
      %p911 = por %p909, %p910
      %p913 = scmp.ne.s32.totalorder %s896, %s912
      %p914 = scmp.eq.s32.totalorder %s90, 0
      %p915 = por %p913, %p914
      %s916 = ssub.s32 %s92, %s99
      %p917 = scmp.eq.s32.totalorder %s916, 0
      %s919 = sadd.s32 %s918, 1
      %s920 = scalar_select %p917, %s918, %s919
      %p923 = pneg %p917
      %p924 = scmp.eq.s32.totalorder %s84, 3
      %p925 = por %p923, %p924
      %p926 = scmp.ne.s32.totalorder %s918, %s921
      %p927 = scmp.eq.s32.totalorder %s84, 0
      %p928 = por %p926, %p927
      %p929 = scmp.ne.s32.totalorder %s918, %s921
      %p930 = scmp.eq.s32.totalorder %s89, 3
      %p931 = por %p929, %p930
      %p932 = scmp.ne.s32.totalorder %s921, %s922
      %p933 = scmp.eq.s32.totalorder %s89, 0
      %p934 = por %p932, %p933
      %p935 = scmp.ne.s32.totalorder %s921, %s922
      %p936 = scmp.eq.s32.totalorder %s90, 3
      %p937 = por %p935, %p936
      %p939 = scmp.ne.s32.totalorder %s922, %s938
      %p940 = scmp.eq.s32.totalorder %s90, 0
      %p941 = por %p939, %p940
      %s943 = sadd.s32 %s942, 1
      %p946 = scmp.eq.s32.totalorder %s84, 3
      %p947 = scmp.ne.s32.totalorder %s942, %s944
      %p948 = scmp.eq.s32.totalorder %s84, 0
      %p949 = por %p947, %p948
      %p950 = scmp.ne.s32.totalorder %s942, %s944
      %p951 = scmp.eq.s32.totalorder %s89, 3
      %p952 = por %p950, %p951
      %p953 = scmp.ne.s32.totalorder %s944, %s945
      %p954 = scmp.eq.s32.totalorder %s89, 0
      %p955 = por %p953, %p954
      %p956 = scmp.ne.s32.totalorder %s944, %s945
      %p957 = scmp.eq.s32.totalorder %s90, 3
      %p958 = por %p956, %p957
      %p960 = scmp.ne.s32.totalorder %s945, %s959
      %p961 = scmp.eq.s32.totalorder %s90, 0
      %p962 = por %p960, %p961
      %s964 = sadd.s32 %s963, 1
      %p967 = scmp.eq.s32.totalorder %s84, 3
      %p968 = scmp.ne.s32.totalorder %s963, %s965
      %p969 = scmp.eq.s32.totalorder %s84, 0
      %p970 = por %p968, %p969
      %p971 = scmp.ne.s32.totalorder %s963, %s965
      %p972 = scmp.eq.s32.totalorder %s89, 3
      %p973 = por %p971, %p972
      %p974 = scmp.ne.s32.totalorder %s965, %s966
      %p975 = scmp.eq.s32.totalorder %s89, 0
      %p976 = por %p974, %p975
      %p977 = scmp.ne.s32.totalorder %s965, %s966
      %p978 = scmp.eq.s32.totalorder %s90, 3
      %p979 = por %p977, %p978
      %p981 = scmp.ne.s32.totalorder %s966, %s980
      %p982 = scmp.eq.s32.totalorder %s90, 0
      %p983 = por %p981, %p982
      %s985 = sadd.s32 %s984, 1
      %p988 = scmp.eq.s32.totalorder %s84, 3
      %p989 = scmp.ne.s32.totalorder %s984, %s986
      %p990 = scmp.eq.s32.totalorder %s84, 0
      %p991 = por %p989, %p990
      %p992 = scmp.ne.s32.totalorder %s984, %s986
      %p993 = scmp.eq.s32.totalorder %s89, 3
      %p994 = por %p992, %p993
      %p995 = scmp.ne.s32.totalorder %s986, %s987
      %p996 = scmp.eq.s32.totalorder %s89, 0
      %p997 = por %p995, %p996
      %p998 = scmp.ne.s32.totalorder %s986, %s987
      %p999 = scmp.eq.s32.totalorder %s90, 3
      %p1000 = por %p998, %p999
      %p1002 = scmp.ne.s32.totalorder %s987, %s1001
      %p1003 = scmp.eq.s32.totalorder %s90, 0
      %p1004 = por %p1002, %p1003
      %s1006 = sadd.s32 %s1005, 1
      %p1009 = scmp.eq.s32.totalorder %s84, 3
      %p1010 = scmp.ne.s32.totalorder %s1005, %s1007
      %p1011 = scmp.eq.s32.totalorder %s84, 0
      %p1012 = por %p1010, %p1011
      %p1013 = scmp.ne.s32.totalorder %s1005, %s1007
      %p1014 = scmp.eq.s32.totalorder %s89, 3
      %p1015 = por %p1013, %p1014
      %p1016 = scmp.ne.s32.totalorder %s1007, %s1008
      %p1017 = scmp.eq.s32.totalorder %s89, 0
      %p1018 = por %p1016, %p1017
      %p1019 = scmp.ne.s32.totalorder %s1007, %s1008
      %p1020 = scmp.eq.s32.totalorder %s90, 3
      %p1021 = por %p1019, %p1020
      %p1023 = scmp.ne.s32.totalorder %s1008, %s1022
      %p1024 = scmp.eq.s32.totalorder %s90, 0
      %p1025 = por %p1023, %p1024
      %s1026 = ssub.s32 %s91, %s103
      %p1027 = scmp.eq.s32.totalorder %s1026, 0
      %s1029 = sadd.s32 %s1028, 1
      %s1030 = scalar_select %p1027, %s1028, %s1029
      %p1033 = pneg %p1027
      %p1034 = scmp.eq.s32.totalorder %s84, 3
      %p1035 = por %p1033, %p1034
      %p1036 = scmp.ne.s32.totalorder %s1028, %s1031
      %p1037 = scmp.eq.s32.totalorder %s84, 0
      %p1038 = por %p1036, %p1037
      %p1039 = scmp.ne.s32.totalorder %s1028, %s1031
      %p1040 = scmp.eq.s32.totalorder %s89, 3
      %p1041 = por %p1039, %p1040
      %p1042 = scmp.ne.s32.totalorder %s1031, %s1032
      %p1043 = scmp.eq.s32.totalorder %s89, 0
      %p1044 = por %p1042, %p1043
      %p1045 = scmp.ne.s32.totalorder %s1031, %s1032
      %p1046 = scmp.eq.s32.totalorder %s90, 3
      %p1047 = por %p1045, %p1046
      %p1049 = scmp.ne.s32.totalorder %s1032, %s1048
      %p1050 = scmp.eq.s32.totalorder %s90, 0
      %p1051 = por %p1049, %p1050
      %p1052 = scmp.le.s32.totalorder 1, %s84
      %p1053 = scmp.lt.s32.totalorder %s84, 5
      %p1054 = pnand %p1052, %p1053
      %p1055 = pneg %p1054
      // Predicated region
      $region9: #{tnt_forward.1} parent=5 // pred_check
        _
      $region10: #{tnt_forward.1} parent=5 // pred_check_branch
        %1057 = sbr.rel (%p1054) target = $region12
      $region11: #{tnt_forward.1} parent=5 // pred_region
        %s1058 = ssub.s32 %s84, 1
        // Predicated region
        $region13: #{tnt_forward.1} parent=11 // pred_check
          %p1059 = pneg %p143
        $region14: #{tnt_forward.1} parent=11 // pred_check_branch
          %1061 = sbr.rel (%p1059) target = $region16
        $region15: #{tnt_forward.1} parent=11 // pred_region
          _
        $region16: #{tnt_forward.1} parent=11 // pred_fallthru
          _
        // Predicated region
        $region17: #{tnt_forward.1} parent=11 // pred_check
          %p1062 = pneg %p164
        $region18: #{tnt_forward.1} parent=11 // pred_check_branch
          %1064 = sbr.rel (%p1062) target = $region20
        $region19: #{tnt_forward.1} parent=11 // pred_region
          _
        $region20: #{tnt_forward.1} parent=11 // pred_fallthru
          _
        // Predicated region
        $region21: #{tnt_forward.1} parent=11 // pred_check
          %p1065 = pneg %p185
        $region22: #{tnt_forward.1} parent=11 // pred_check_branch
          %1067 = sbr.rel (%p1065) target = $region24
        $region23: #{tnt_forward.1} parent=11 // pred_region
          _
        $region24: #{tnt_forward.1} parent=11 // pred_fallthru
          _
        // Predicated region
        $region25: #{tnt_forward.1} parent=11 // pred_check
          %p1068 = pneg %p206
        $region26: #{tnt_forward.1} parent=11 // pred_check_branch
          %1070 = sbr.rel (%p1068) target = $region28
        $region27: #{tnt_forward.1} parent=11 // pred_region
          _
        $region28: #{tnt_forward.1} parent=11 // pred_fallthru
          _
        // Predicated region
        $region29: #{tnt_forward.1} parent=11 // pred_check
          %p1071 = pneg %p955
        $region30: #{tnt_forward.1} parent=11 // pred_check_branch
          %1073 = sbr.rel (%p1071) target = $region32
        $region31: #{tnt_forward.1} parent=11 // pred_region
          _
        $region32: #{tnt_forward.1} parent=11 // pred_fallthru
          _
        // Predicated region
        $region33: #{tnt_forward.1} parent=11 // pred_check
          %p1074 = pneg %p976
        $region34: #{tnt_forward.1} parent=11 // pred_check_branch
          %1076 = sbr.rel (%p1074) target = $region36
        $region35: #{tnt_forward.1} parent=11 // pred_region
          _
        $region36: #{tnt_forward.1} parent=11 // pred_fallthru
          _
        // Predicated region
        $region37: #{tnt_forward.1} parent=11 // pred_check
          %p1077 = pneg %p997
        $region38: #{tnt_forward.1} parent=11 // pred_check_branch
          %1079 = sbr.rel (%p1077) target = $region40
        $region39: #{tnt_forward.1} parent=11 // pred_region
          _
        $region40: #{tnt_forward.1} parent=11 // pred_fallthru
          _
        // Predicated region
        $region41: #{tnt_forward.1} parent=11 // pred_check
          %p1080 = pneg %p1018
        $region42: #{tnt_forward.1} parent=11 // pred_check_branch
          %1082 = sbr.rel (%p1080) target = $region44
        $region43: #{tnt_forward.1} parent=11 // pred_region
          _
        $region44: #{tnt_forward.1} parent=11 // pred_fallthru
          _
      $region12: #{tnt_forward.1} parent=5 // pred_fallthru
        _
      %p1083 = scmp.lt.s32.totalorder %s84, 4
      // Predicated region
      $region45: #{tnt_forward.1} parent=5 // pred_check
        %p1084 = pneg %p1083
      $region46: #{tnt_forward.1} parent=5 // pred_check_branch
        %1086 = sbr.rel (%p1084) target = $region48
      $region47: #{tnt_forward.1} parent=5 // pred_region
        // Predicated region
        $region49: #{tnt_forward.1} parent=47 // pred_check
          %p1087 = pneg %p116
        $region50: #{tnt_forward.1} parent=47 // pred_check_branch
          %1089 = sbr.rel (%p1087) target = $region52
        $region51: #{tnt_forward.1} parent=47 // pred_region
          %p1090 = scmp.lt.s32.totalorder %s91, 1
          %s1091 = scalar_select %p1090, %s91, 1
          %s1092 = smul.addr %s1091, 8
          %s1093 = smul.addr %s1092, 8
          %s1094 = scalar_lea.vmem %s1, %s1093
        $region52: #{tnt_forward.1} parent=47 // pred_fallthru
          _
        // Predicated region
        $region53: #{tnt_forward.1} parent=47 // pred_check
          %p1095 = pneg %p226
        $region54: #{tnt_forward.1} parent=47 // pred_check_branch
          %1097 = sbr.rel (%p1095) target = $region56
        $region55: #{tnt_forward.1} parent=47 // pred_region
          %p1098 = scmp.lt.s32.totalorder %s92, 1
          %s1099 = scalar_select %p1098, %s92, 1
          %s1100 = scalar_lea.vmem %s11, %s1099
        $region56: #{tnt_forward.1} parent=47 // pred_fallthru
          _
        // Predicated region
        $region57: #{tnt_forward.1} parent=47 // pred_check
          %p1101 = pneg %p252
        $region58: #{tnt_forward.1} parent=47 // pred_check_branch
          %1103 = sbr.rel (%p1101) target = $region60
        $region59: #{tnt_forward.1} parent=47 // pred_region
          %p1104 = scmp.lt.s32.totalorder %s92, 1
          %s1105 = scalar_select %p1104, %s92, 1
          %s1106 = scalar_lea.vmem %s13, %s1105
        $region60: #{tnt_forward.1} parent=47 // pred_fallthru
          _
        // Predicated region
        $region61: #{tnt_forward.1} parent=47 // pred_check
          %p1107 = pneg %p278
        $region62: #{tnt_forward.1} parent=47 // pred_check_branch
          %1109 = sbr.rel (%p1107) target = $region64
        $region63: #{tnt_forward.1} parent=47 // pred_region
          %p1110 = scmp.lt.s32.totalorder %s92, 1
          %s1111 = scalar_select %p1110, %s92, 1
          %s1112 = smul.addr %s1111, 2
          %s1113 = smul.addr %s1112, 4
          %s1114 = scalar_lea.vmem %s15, %s1113
        $region64: #{tnt_forward.1} parent=47 // pred_fallthru
          _
        // Predicated region
        $region65: #{tnt_forward.1} parent=47 // pred_check
          %p1115 = pneg %p304
        $region66: #{tnt_forward.1} parent=47 // pred_check_branch
          %1117 = sbr.rel (%p1115) target = $region68
        $region67: #{tnt_forward.1} parent=47 // pred_region
          %p1118 = scmp.lt.s32.totalorder %s92, 1
          %s1119 = scalar_select %p1118, %s92, 1
          %s1120 = scalar_lea.vmem %s17, %s1119
        $region68: #{tnt_forward.1} parent=47 // pred_fallthru
          _
        // Predicated region
        $region69: #{tnt_forward.1} parent=47 // pred_check
          %p1121 = pneg %p330
        $region70: #{tnt_forward.1} parent=47 // pred_check_branch
          %1123 = sbr.rel (%p1121) target = $region72
        $region71: #{tnt_forward.1} parent=47 // pred_region
          %p1124 = scmp.lt.s32.totalorder %s92, 1
          %s1125 = scalar_select %p1124, %s92, 1
          %s1126 = smul.addr %s1125, 2
          %s1127 = smul.addr %s1126, 4
          %s1128 = scalar_lea.vmem %s19, %s1127
        $region72: #{tnt_forward.1} parent=47 // pred_fallthru
          _
        // Predicated region
        $region73: #{tnt_forward.1} parent=47 // pred_check
          %p1129 = pneg %p356
        $region74: #{tnt_forward.1} parent=47 // pred_check_branch
          %1131 = sbr.rel (%p1129) target = $region76
        $region75: #{tnt_forward.1} parent=47 // pred_region
          %p1132 = scmp.lt.s32.totalorder %s92, 1
          %s1133 = scalar_select %p1132, %s92, 1
          %s1134 = scalar_lea.vmem %s21, %s1133
        $region76: #{tnt_forward.1} parent=47 // pred_fallthru
          _
        // Predicated region
        $region77: #{tnt_forward.1} parent=47 // pred_check
          %p1135 = pneg %p382
        $region78: #{tnt_forward.1} parent=47 // pred_check_branch
          %1137 = sbr.rel (%p1135) target = $region80
        $region79: #{tnt_forward.1} parent=47 // pred_region
          %p1138 = scmp.lt.s32.totalorder %s92, 1
          %s1139 = scalar_select %p1138, %s92, 1
          %s1140 = scalar_lea.vmem %s23, %s1139
        $region80: #{tnt_forward.1} parent=47 // pred_fallthru
          _
        // Predicated region
        $region81: #{tnt_forward.1} parent=47 // pred_check
          %p1141 = pneg %p408
        $region82: #{tnt_forward.1} parent=47 // pred_check_branch
          %1143 = sbr.rel (%p1141) target = $region84
        $region83: #{tnt_forward.1} parent=47 // pred_region
          %p1144 = scmp.lt.s32.totalorder %s92, 1
          %s1145 = scalar_select %p1144, %s92, 1
          %s1146 = scalar_lea.vmem %s25, %s1145
        $region84: #{tnt_forward.1} parent=47 // pred_fallthru
          _
        // Predicated region
        $region85: #{tnt_forward.1} parent=47 // pred_check
          %p1147 = pneg %p434
        $region86: #{tnt_forward.1} parent=47 // pred_check_branch
          %1149 = sbr.rel (%p1147) target = $region88
        $region87: #{tnt_forward.1} parent=47 // pred_region
          %p1150 = scmp.lt.s32.totalorder %s92, 1
          %s1151 = scalar_select %p1150, %s92, 1
          %s1152 = smul.addr %s1151, 2
          %s1153 = smul.addr %s1152, 4
          %s1154 = scalar_lea.vmem %s27, %s1153
        $region88: #{tnt_forward.1} parent=47 // pred_fallthru
          _
        // Predicated region
        $region89: #{tnt_forward.1} parent=47 // pred_check
          %p1155 = pneg %p460
        $region90: #{tnt_forward.1} parent=47 // pred_check_branch
          %1157 = sbr.rel (%p1155) target = $region92
        $region91: #{tnt_forward.1} parent=47 // pred_region
          %p1158 = scmp.lt.s32.totalorder %s92, 1
          %s1159 = scalar_select %p1158, %s92, 1
          %s1160 = scalar_lea.vmem %s29, %s1159
        $region92: #{tnt_forward.1} parent=47 // pred_fallthru
          _
        // Predicated region
        $region93: #{tnt_forward.1} parent=47 // pred_check
          %p1161 = pneg %p486
        $region94: #{tnt_forward.1} parent=47 // pred_check_branch
          %1163 = sbr.rel (%p1161) target = $region96
        $region95: #{tnt_forward.1} parent=47 // pred_region
          %p1164 = scmp.lt.s32.totalorder %s92, 1
          %s1165 = scalar_select %p1164, %s92, 1
          %s1166 = smul.addr %s1165, 8
          %s1167 = smul.addr %s1166, 4
          %s1168 = scalar_lea.vmem %s31, %s1167
        $region96: #{tnt_forward.1} parent=47 // pred_fallthru
          _
        // Predicated region
        $region97: #{tnt_forward.1} parent=47 // pred_check
          %p1169 = pneg %p512
        $region98: #{tnt_forward.1} parent=47 // pred_check_branch
          %1171 = sbr.rel (%p1169) target = $region100
        $region99: #{tnt_forward.1} parent=47 // pred_region
          %p1172 = scmp.lt.s32.totalorder %s92, 1
          %s1173 = scalar_select %p1172, %s92, 1
          %s1174 = scalar_lea.vmem %s33, %s1173
        $region100: #{tnt_forward.1} parent=47 // pred_fallthru
          _
        // Predicated region
        $region101: #{tnt_forward.1} parent=47 // pred_check
          %p1175 = pneg %p538
        $region102: #{tnt_forward.1} parent=47 // pred_check_branch
          %1177 = sbr.rel (%p1175) target = $region104
        $region103: #{tnt_forward.1} parent=47 // pred_region
          %p1178 = scmp.lt.s32.totalorder %s92, 1
          %s1179 = scalar_select %p1178, %s92, 1
          %s1180 = scalar_lea.vmem %s35, %s1179
        $region104: #{tnt_forward.1} parent=47 // pred_fallthru
          _
        // Predicated region
        $region105: #{tnt_forward.1} parent=47 // pred_check
          %p1181 = pneg %p564
        $region106: #{tnt_forward.1} parent=47 // pred_check_branch
          %1183 = sbr.rel (%p1181) target = $region108
        $region107: #{tnt_forward.1} parent=47 // pred_region
          %p1184 = scmp.lt.s32.totalorder %s92, 1
          %s1185 = scalar_select %p1184, %s92, 1
          %s1186 = scalar_lea.vmem %s37, %s1185
        $region108: #{tnt_forward.1} parent=47 // pred_fallthru
          _
        // Predicated region
        $region109: #{tnt_forward.1} parent=47 // pred_check
          %p1187 = pneg %p590
        $region110: #{tnt_forward.1} parent=47 // pred_check_branch
          %1189 = sbr.rel (%p1187) target = $region112
        $region111: #{tnt_forward.1} parent=47 // pred_region
          %p1190 = scmp.lt.s32.totalorder %s92, 1
          %s1191 = scalar_select %p1190, %s92, 1
          %s1192 = smul.addr %s1191, 32
          %s1193 = smul.addr %s1192, 4
          %s1194 = scalar_lea.vmem %s39, %s1193
        $region112: #{tnt_forward.1} parent=47 // pred_fallthru
          _
        // Predicated region
        $region113: #{tnt_forward.1} parent=47 // pred_check
          %p1195 = pneg %p616
        $region114: #{tnt_forward.1} parent=47 // pred_check_branch
          %1197 = sbr.rel (%p1195) target = $region116
        $region115: #{tnt_forward.1} parent=47 // pred_region
          %p1198 = scmp.lt.s32.totalorder %s92, 1
          %s1199 = scalar_select %p1198, %s92, 1
          %s1200 = scalar_lea.vmem %s41, %s1199
        $region116: #{tnt_forward.1} parent=47 // pred_fallthru
          _
        // Predicated region
        $region117: #{tnt_forward.1} parent=47 // pred_check
          %p1201 = pneg %p642
        $region118: #{tnt_forward.1} parent=47 // pred_check_branch
          %1203 = sbr.rel (%p1201) target = $region120
        $region119: #{tnt_forward.1} parent=47 // pred_region
          %p1204 = scmp.lt.s32.totalorder %s92, 1
          %s1205 = scalar_select %p1204, %s92, 1
          %s1206 = scalar_lea.vmem %s43, %s1205
        $region120: #{tnt_forward.1} parent=47 // pred_fallthru
          _
        // Predicated region
        $region121: #{tnt_forward.1} parent=47 // pred_check
          %p1207 = pneg %p668
        $region122: #{tnt_forward.1} parent=47 // pred_check_branch
          %1209 = sbr.rel (%p1207) target = $region124
        $region123: #{tnt_forward.1} parent=47 // pred_region
          %p1210 = scmp.lt.s32.totalorder %s92, 1
          %s1211 = scalar_select %p1210, %s92, 1
          %s1212 = scalar_lea.vmem %s45, %s1211
        $region124: #{tnt_forward.1} parent=47 // pred_fallthru
          _
        // Predicated region
        $region125: #{tnt_forward.1} parent=47 // pred_check
          %p1213 = pneg %p694
        $region126: #{tnt_forward.1} parent=47 // pred_check_branch
          %1215 = sbr.rel (%p1213) target = $region128
        $region127: #{tnt_forward.1} parent=47 // pred_region
          %p1216 = scmp.lt.s32.totalorder %s92, 1
          %s1217 = scalar_select %p1216, %s92, 1
          %s1218 = smul.addr %s1217, 4
          %s1219 = smul.addr %s1218, 4
          %s1220 = scalar_lea.vmem %s47, %s1219
        $region128: #{tnt_forward.1} parent=47 // pred_fallthru
          _
        // Predicated region
        $region129: #{tnt_forward.1} parent=47 // pred_check
          %p1221 = pneg %p720
        $region130: #{tnt_forward.1} parent=47 // pred_check_branch
          %1223 = sbr.rel (%p1221) target = $region132
        $region131: #{tnt_forward.1} parent=47 // pred_region
          %p1224 = scmp.lt.s32.totalorder %s92, 1
          %s1225 = scalar_select %p1224, %s92, 1
          %s1226 = scalar_lea.vmem %s49, %s1225
        $region132: #{tnt_forward.1} parent=47 // pred_fallthru
          _
        // Predicated region
        $region133: #{tnt_forward.1} parent=47 // pred_check
          %p1227 = pneg %p746
        $region134: #{tnt_forward.1} parent=47 // pred_check_branch
          %1229 = sbr.rel (%p1227) target = $region136
        $region135: #{tnt_forward.1} parent=47 // pred_region
          %p1230 = scmp.lt.s32.totalorder %s92, 1
          %s1231 = scalar_select %p1230, %s92, 1
          %s1232 = smul.addr %s1231, 4
          %s1233 = smul.addr %s1232, 4
          %s1234 = scalar_lea.vmem %s51, %s1233
        $region136: #{tnt_forward.1} parent=47 // pred_fallthru
          _
        // Predicated region
        $region137: #{tnt_forward.1} parent=47 // pred_check
          %p1235 = pneg %p772
        $region138: #{tnt_forward.1} parent=47 // pred_check_branch
          %1237 = sbr.rel (%p1235) target = $region140
        $region139: #{tnt_forward.1} parent=47 // pred_region
          %p1238 = scmp.lt.s32.totalorder %s92, 1
          %s1239 = scalar_select %p1238, %s92, 1
          %s1240 = scalar_lea.vmem %s53, %s1239
        $region140: #{tnt_forward.1} parent=47 // pred_fallthru
          _
        // Predicated region
        $region141: #{tnt_forward.1} parent=47 // pred_check
          %p1241 = pneg %p798
        $region142: #{tnt_forward.1} parent=47 // pred_check_branch
          %1243 = sbr.rel (%p1241) target = $region144
        $region143: #{tnt_forward.1} parent=47 // pred_region
          %p1244 = scmp.lt.s32.totalorder %s92, 1
          %s1245 = scalar_select %p1244, %s92, 1
          %s1246 = scalar_lea.vmem %s55, %s1245
        $region144: #{tnt_forward.1} parent=47 // pred_fallthru
          _
        // Predicated region
        $region145: #{tnt_forward.1} parent=47 // pred_check
          %p1247 = pneg %p824
        $region146: #{tnt_forward.1} parent=47 // pred_check_branch
          %1249 = sbr.rel (%p1247) target = $region148
        $region147: #{tnt_forward.1} parent=47 // pred_region
          %p1250 = scmp.lt.s32.totalorder %s92, 1
          %s1251 = scalar_select %p1250, %s92, 1
          %s1252 = scalar_lea.vmem %s57, %s1251
        $region148: #{tnt_forward.1} parent=47 // pred_fallthru
          _
        // Predicated region
        $region149: #{tnt_forward.1} parent=47 // pred_check
          %p1253 = pneg %p850
        $region150: #{tnt_forward.1} parent=47 // pred_check_branch
          %1255 = sbr.rel (%p1253) target = $region152
        $region151: #{tnt_forward.1} parent=47 // pred_region
          %p1256 = scmp.lt.s32.totalorder %s92, 1
          %s1257 = scalar_select %p1256, %s92, 1
          %s1258 = smul.addr %s1257, 4
          %s1259 = smul.addr %s1258, 4
          %s1260 = scalar_lea.vmem %s59, %s1259
        $region152: #{tnt_forward.1} parent=47 // pred_fallthru
          _
        // Predicated region
        $region153: #{tnt_forward.1} parent=47 // pred_check
          %p1261 = pneg %p876
        $region154: #{tnt_forward.1} parent=47 // pred_check_branch
          %1263 = sbr.rel (%p1261) target = $region156
        $region155: #{tnt_forward.1} parent=47 // pred_region
          %p1264 = scmp.lt.s32.totalorder %s92, 1
          %s1265 = scalar_select %p1264, %s92, 1
          %s1266 = scalar_lea.vmem %s61, %s1265
        $region156: #{tnt_forward.1} parent=47 // pred_fallthru
          _
        // Predicated region
        $region157: #{tnt_forward.1} parent=47 // pred_check
          %p1267 = pneg %p902
        $region158: #{tnt_forward.1} parent=47 // pred_check_branch
          %1269 = sbr.rel (%p1267) target = $region160
        $region159: #{tnt_forward.1} parent=47 // pred_region
          %p1270 = scmp.lt.s32.totalorder %s92, 1
          %s1271 = scalar_select %p1270, %s92, 1
          %s1272 = smul.addr %s1271, 16
          %s1273 = smul.addr %s1272, 4
          %s1274 = scalar_lea.vmem %s63, %s1273
        $region160: #{tnt_forward.1} parent=47 // pred_fallthru
          _
        // Predicated region
        $region161: #{tnt_forward.1} parent=47 // pred_check
          %p1275 = pneg %p928
        $region162: #{tnt_forward.1} parent=47 // pred_check_branch
          %1277 = sbr.rel (%p1275) target = $region164
        $region163: #{tnt_forward.1} parent=47 // pred_region
          %p1278 = scmp.lt.s32.totalorder %s92, 1
          %s1279 = scalar_select %p1278, %s92, 1
          %s1280 = scalar_lea.vmem %s65, %s1279
        $region164: #{tnt_forward.1} parent=47 // pred_fallthru
          _
      $region48: #{tnt_forward.1} parent=5 // pred_fallthru
        _
      %p1281 = scmp.le.s32.totalorder 1, %s84
      %p1282 = scmp.lt.s32.totalorder %s84, 5
      %p1283 = pnand %p1281, %p1282
      %p1284 = pneg %p1283
      // Predicated region
      $region165: #{tnt_forward.1} parent=5 // pred_check
        _
      $region166: #{tnt_forward.1} parent=5 // pred_check_branch
        %1286 = sbr.rel (%p1283) target = $region168
      $region167: #{tnt_forward.1} parent=5 // pred_region
        %s1287 = ssub.s32 %s84, 1
        %p1288 = scmp.lt.s32.totalorder %s93, 1
        %s1289 = scalar_select %p1288, %s93, 1
        %s1290 = smul.addr %s1289, 8
        %s1291 = smul.addr %s1290, 8
        %s1292 = scalar_lea.vmem %s1, %s1291
        %p1293 = pneg %p122
        %p1294 = pneg %p119
        %p1295 = pneg %p143
        %p1296 = pneg %p140
        %p1297 = pneg %p164
        %p1298 = pneg %p161
        %p1299 = pneg %p185
        %p1300 = pneg %p182
        %p1301 = pneg %p206
        %p1302 = pneg %p203
        %p1303 = scmp.lt.s32.totalorder %s94, 1
        %s1304 = scalar_select %p1303, %s94, 1
        %s1305 = scalar_lea.vmem %s11, %s1304
        %p1306 = pneg %p232
        %p1307 = pneg %p229
        %p1308 = scmp.lt.s32.totalorder %s94, 1
        %s1309 = scalar_select %p1308, %s94, 1
        %s1310 = scalar_lea.vmem %s13, %s1309
        %p1311 = pneg %p258
        %p1312 = pneg %p255
        %p1313 = scmp.lt.s32.totalorder %s94, 1
        %s1314 = scalar_select %p1313, %s94, 1
        %s1315 = smul.addr %s1314, 2
        %s1316 = smul.addr %s1315, 4
        %s1317 = scalar_lea.vmem %s15, %s1316
        %p1318 = pneg %p284
        %p1319 = pneg %p281
        %p1320 = scmp.lt.s32.totalorder %s94, 1
        %s1321 = scalar_select %p1320, %s94, 1
        %s1322 = scalar_lea.vmem %s17, %s1321
        %p1323 = pneg %p310
        %p1324 = pneg %p307
        %p1325 = scmp.lt.s32.totalorder %s94, 1
        %s1326 = scalar_select %p1325, %s94, 1
        %s1327 = smul.addr %s1326, 2
        %s1328 = smul.addr %s1327, 4
        %s1329 = scalar_lea.vmem %s19, %s1328
        %p1330 = pneg %p336
        %p1331 = pneg %p333
        %p1332 = scmp.lt.s32.totalorder %s94, 1
        %s1333 = scalar_select %p1332, %s94, 1
        %s1334 = scalar_lea.vmem %s21, %s1333
        %p1335 = pneg %p362
        %p1336 = pneg %p359
        %p1337 = scmp.lt.s32.totalorder %s94, 1
        %s1338 = scalar_select %p1337, %s94, 1
        %s1339 = scalar_lea.vmem %s23, %s1338
        %p1340 = pneg %p388
        %p1341 = pneg %p385
        %p1342 = scmp.lt.s32.totalorder %s94, 1
        %s1343 = scalar_select %p1342, %s94, 1
        %s1344 = scalar_lea.vmem %s25, %s1343
        %p1345 = pneg %p414
        %p1346 = pneg %p411
        %p1347 = scmp.lt.s32.totalorder %s94, 1
        %s1348 = scalar_select %p1347, %s94, 1
        %s1349 = smul.addr %s1348, 2
        %s1350 = smul.addr %s1349, 4
        %s1351 = scalar_lea.vmem %s27, %s1350
        %p1352 = pneg %p440
        %p1353 = pneg %p437
        %p1354 = scmp.lt.s32.totalorder %s94, 1
        %s1355 = scalar_select %p1354, %s94, 1
        %s1356 = scalar_lea.vmem %s29, %s1355
        %p1357 = pneg %p466
        %p1358 = pneg %p463
        %p1359 = scmp.lt.s32.totalorder %s94, 1
        %s1360 = scalar_select %p1359, %s94, 1
        %s1361 = smul.addr %s1360, 8
        %s1362 = smul.addr %s1361, 4
        %s1363 = scalar_lea.vmem %s31, %s1362
        %p1364 = pneg %p492
        %p1365 = pneg %p489
        %p1366 = scmp.lt.s32.totalorder %s94, 1
        %s1367 = scalar_select %p1366, %s94, 1
        %s1368 = scalar_lea.vmem %s33, %s1367
        %p1369 = pneg %p518
        %p1370 = pneg %p515
        %p1371 = scmp.lt.s32.totalorder %s94, 1
        %s1372 = scalar_select %p1371, %s94, 1
        %s1373 = scalar_lea.vmem %s35, %s1372
        %p1374 = pneg %p544
        %p1375 = pneg %p541
        %p1376 = scmp.lt.s32.totalorder %s94, 1
        %s1377 = scalar_select %p1376, %s94, 1
        %s1378 = scalar_lea.vmem %s37, %s1377
        %p1379 = pneg %p570
        %p1380 = pneg %p567
        %p1381 = scmp.lt.s32.totalorder %s94, 1
        %s1382 = scalar_select %p1381, %s94, 1
        %s1383 = smul.addr %s1382, 32
        %s1384 = smul.addr %s1383, 4
        %s1385 = scalar_lea.vmem %s39, %s1384
        %p1386 = pneg %p596
        %p1387 = pneg %p593
        %p1388 = scmp.lt.s32.totalorder %s94, 1
        %s1389 = scalar_select %p1388, %s94, 1
        %s1390 = scalar_lea.vmem %s41, %s1389
        %p1391 = pneg %p622
        %p1392 = pneg %p619
        %p1393 = scmp.lt.s32.totalorder %s94, 1
        %s1394 = scalar_select %p1393, %s94, 1
        %s1395 = scalar_lea.vmem %s43, %s1394
        %p1396 = pneg %p648
        %p1397 = pneg %p645
        %p1398 = scmp.lt.s32.totalorder %s94, 1
        %s1399 = scalar_select %p1398, %s94, 1
        %s1400 = scalar_lea.vmem %s45, %s1399
        %p1401 = pneg %p674
        %p1402 = pneg %p671
        %p1403 = scmp.lt.s32.totalorder %s94, 1
        %s1404 = scalar_select %p1403, %s94, 1
        %s1405 = smul.addr %s1404, 4
        %s1406 = smul.addr %s1405, 4
        %s1407 = scalar_lea.vmem %s47, %s1406
        %p1408 = pneg %p700
        %p1409 = pneg %p697
        %p1410 = scmp.lt.s32.totalorder %s94, 1
        %s1411 = scalar_select %p1410, %s94, 1
        %s1412 = scalar_lea.vmem %s49, %s1411
        %p1413 = pneg %p726
        %p1414 = pneg %p723
        %p1415 = scmp.lt.s32.totalorder %s94, 1
        %s1416 = scalar_select %p1415, %s94, 1
        %s1417 = smul.addr %s1416, 4
        %s1418 = smul.addr %s1417, 4
        %s1419 = scalar_lea.vmem %s51, %s1418
        %p1420 = pneg %p752
        %p1421 = pneg %p749
        %p1422 = scmp.lt.s32.totalorder %s94, 1
        %s1423 = scalar_select %p1422, %s94, 1
        %s1424 = scalar_lea.vmem %s53, %s1423
        %p1425 = pneg %p778
        %p1426 = pneg %p775
        %p1427 = scmp.lt.s32.totalorder %s94, 1
        %s1428 = scalar_select %p1427, %s94, 1
        %s1429 = scalar_lea.vmem %s55, %s1428
        %p1430 = pneg %p804
        %p1431 = pneg %p801
        %p1432 = scmp.lt.s32.totalorder %s94, 1
        %s1433 = scalar_select %p1432, %s94, 1
        %s1434 = scalar_lea.vmem %s57, %s1433
        %p1435 = pneg %p830
        %p1436 = pneg %p827
        %p1437 = scmp.lt.s32.totalorder %s94, 1
        %s1438 = scalar_select %p1437, %s94, 1
        %s1439 = smul.addr %s1438, 4
        %s1440 = smul.addr %s1439, 4
        %s1441 = scalar_lea.vmem %s59, %s1440
        %p1442 = pneg %p856
        %p1443 = pneg %p853
        %p1444 = scmp.lt.s32.totalorder %s94, 1
        %s1445 = scalar_select %p1444, %s94, 1
        %s1446 = scalar_lea.vmem %s61, %s1445
        %p1447 = pneg %p882
        %p1448 = pneg %p879
        %p1449 = scmp.lt.s32.totalorder %s94, 1
        %s1450 = scalar_select %p1449, %s94, 1
        %s1451 = smul.addr %s1450, 16
        %s1452 = smul.addr %s1451, 4
        %s1453 = scalar_lea.vmem %s63, %s1452
        %p1454 = pneg %p908
        %p1455 = pneg %p905
        %p1456 = scmp.lt.s32.totalorder %s94, 1
        %s1457 = scalar_select %p1456, %s94, 1
        %s1458 = scalar_lea.vmem %s65, %s1457
        %p1459 = pneg %p934
        %p1460 = pneg %p931
        %p1461 = pneg %p955
        %p1462 = pneg %p952
        %p1463 = pneg %p976
        %p1464 = pneg %p973
        %p1465 = pneg %p997
        %p1466 = pneg %p994
        %p1467 = pneg %p1018
        %p1468 = pneg %p1015
        %p1469 = pneg %p1044
        %p1470 = pneg %p1041
        %s1471 = sand.u32 %s1031, 1
        %s1472 = scalar_lea.sflag [#allocation5], %s1471
        %s1473 = sand.u32 %s1031, 1
        %s1474 = scalar_lea.vmem [#allocation4], %s1473
        %p1475 = scmp.lt.s32.totalorder %s93, 1
        %s1476 = scalar_select %p1475, %s93, 1
        %s1477 = smul.addr %s1476, 8
        %s1478 = smul.addr %s1477, 8
        %s1479 = scalar_lea.vmem %s1, %s1478
        %p1480 = scmp.lt.s32.totalorder %s94, 1
        %s1481 = scalar_select %p1480, %s94, 1
        %s1482 = scalar_lea.vmem %s11, %s1481
        %p1483 = scmp.lt.s32.totalorder %s94, 1
        %s1484 = scalar_select %p1483, %s94, 1
        %s1485 = scalar_lea.vmem %s13, %s1484
        %p1486 = scmp.lt.s32.totalorder %s94, 1
        %s1487 = scalar_select %p1486, %s94, 1
        %s1488 = smul.addr %s1487, 2
        %s1489 = smul.addr %s1488, 4
        %s1490 = scalar_lea.vmem %s15, %s1489
        %p1491 = scmp.lt.s32.totalorder %s94, 1
        %s1492 = scalar_select %p1491, %s94, 1
        %s1493 = scalar_lea.vmem %s17, %s1492
        %p1494 = scmp.lt.s32.totalorder %s94, 1
        %s1495 = scalar_select %p1494, %s94, 1
        %s1496 = smul.addr %s1495, 2
        %s1497 = smul.addr %s1496, 4
        %s1498 = scalar_lea.vmem %s19, %s1497
        %p1499 = scmp.lt.s32.totalorder %s94, 1
        %s1500 = scalar_select %p1499, %s94, 1
        %s1501 = scalar_lea.vmem %s21, %s1500
        %p1502 = scmp.lt.s32.totalorder %s94, 1
        %s1503 = scalar_select %p1502, %s94, 1
        %s1504 = scalar_lea.vmem %s23, %s1503
        %p1505 = scmp.lt.s32.totalorder %s94, 1
        %s1506 = scalar_select %p1505, %s94, 1
        %s1507 = scalar_lea.vmem %s25, %s1506
        %p1508 = scmp.lt.s32.totalorder %s94, 1
        %s1509 = scalar_select %p1508, %s94, 1
        %s1510 = smul.addr %s1509, 2
        %s1511 = smul.addr %s1510, 4
        %s1512 = scalar_lea.vmem %s27, %s1511
        %p1513 = scmp.lt.s32.totalorder %s94, 1
        %s1514 = scalar_select %p1513, %s94, 1
        %s1515 = scalar_lea.vmem %s29, %s1514
        %p1516 = scmp.lt.s32.totalorder %s94, 1
        %s1517 = scalar_select %p1516, %s94, 1
        %s1518 = smul.addr %s1517, 8
        %s1519 = smul.addr %s1518, 4
        %s1520 = scalar_lea.vmem %s31, %s1519
        %p1521 = scmp.lt.s32.totalorder %s94, 1
        %s1522 = scalar_select %p1521, %s94, 1
        %s1523 = scalar_lea.vmem %s33, %s1522
        %p1524 = scmp.lt.s32.totalorder %s94, 1
        %s1525 = scalar_select %p1524, %s94, 1
        %s1526 = scalar_lea.vmem %s35, %s1525
        %p1527 = scmp.lt.s32.totalorder %s94, 1
        %s1528 = scalar_select %p1527, %s94, 1
        %s1529 = scalar_lea.vmem %s37, %s1528
        %p1530 = scmp.lt.s32.totalorder %s94, 1
        %s1531 = scalar_select %p1530, %s94, 1
        %s1532 = smul.addr %s1531, 32
        %s1533 = smul.addr %s1532, 4
        %s1534 = scalar_lea.vmem %s39, %s1533
        %p1535 = scmp.lt.s32.totalorder %s94, 1
        %s1536 = scalar_select %p1535, %s94, 1
        %s1537 = scalar_lea.vmem %s41, %s1536
        %p1538 = scmp.lt.s32.totalorder %s94, 1
        %s1539 = scalar_select %p1538, %s94, 1
        %s1540 = scalar_lea.vmem %s43, %s1539
        %p1541 = scmp.lt.s32.totalorder %s94, 1
        %s1542 = scalar_select %p1541, %s94, 1
        %s1543 = scalar_lea.vmem %s45, %s1542
        %p1544 = scmp.lt.s32.totalorder %s94, 1
        %s1545 = scalar_select %p1544, %s94, 1
        %s1546 = smul.addr %s1545, 4
        %s1547 = smul.addr %s1546, 4
        %s1548 = scalar_lea.vmem %s47, %s1547
        %p1549 = scmp.lt.s32.totalorder %s94, 1
        %s1550 = scalar_select %p1549, %s94, 1
        %s1551 = scalar_lea.vmem %s49, %s1550
        %p1552 = scmp.lt.s32.totalorder %s94, 1
        %s1553 = scalar_select %p1552, %s94, 1
        %s1554 = smul.addr %s1553, 4
        %s1555 = smul.addr %s1554, 4
        %s1556 = scalar_lea.vmem %s51, %s1555
        %p1557 = scmp.lt.s32.totalorder %s94, 1
        %s1558 = scalar_select %p1557, %s94, 1
        %s1559 = scalar_lea.vmem %s53, %s1558
        %p1560 = scmp.lt.s32.totalorder %s94, 1
        %s1561 = scalar_select %p1560, %s94, 1
        %s1562 = scalar_lea.vmem %s55, %s1561
        %p1563 = scmp.lt.s32.totalorder %s94, 1
        %s1564 = scalar_select %p1563, %s94, 1
        %s1565 = scalar_lea.vmem %s57, %s1564
        %p1566 = scmp.lt.s32.totalorder %s94, 1
        %s1567 = scalar_select %p1566, %s94, 1
        %s1568 = smul.addr %s1567, 4
        %s1569 = smul.addr %s1568, 4
        %s1570 = scalar_lea.vmem %s59, %s1569
        %p1571 = scmp.lt.s32.totalorder %s94, 1
        %s1572 = scalar_select %p1571, %s94, 1
        %s1573 = scalar_lea.vmem %s61, %s1572
        %p1574 = scmp.lt.s32.totalorder %s94, 1
        %s1575 = scalar_select %p1574, %s94, 1
        %s1576 = smul.addr %s1575, 16
        %s1577 = smul.addr %s1576, 4
        %s1578 = scalar_lea.vmem %s63, %s1577
        %p1579 = scmp.lt.s32.totalorder %s94, 1
        %s1580 = scalar_select %p1579, %s94, 1
        %s1581 = scalar_lea.vmem %s65, %s1580
        %v1583 = vld [vmem:[%s1482] sm:$0x1]
        %v1584 = vld [vmem:[%s1485] sm:$0x1]
        %v1585 = vld [vmem:[%s1490] sm:$0xf]
        %v1586 = vld [vmem:[%s1490 + $0x4] sm:$0xf]
        %v1587 = vld [vmem:[%s1493] sm:$0x1]
        %v1588 = vld [vmem:[%s1498] sm:$0xf]
        %v1589 = vld [vmem:[%s1498 + $0x4] sm:$0xf]
        %v1590 = vld [vmem:[%s1501] sm:$0x1]
        %v1591 = vld [vmem:[%s1504] sm:$0x1]
        %v1592 = vld [vmem:[%s1507] sm:$0x1]
        %v1593 = vld [vmem:[%s1512] sm:$0xf]
        %v1594 = vld [vmem:[%s1512 + $0x4] sm:$0xf]
        %v1595 = vld [vmem:[%s1515] sm:$0x1]
        %v1596 = vld [vmem:[%s1520] sm:$0xf]
        %v1597 = vld [vmem:[%s1520 + $0x4] sm:$0xf]
        %v1598 = vld [vmem:[%s1520 + $0x8] sm:$0xf]
        %v1599 = vld [vmem:[%s1520 + $0xc] sm:$0xf]
        %v1600 = vld [vmem:[%s1520 + $0x10] sm:$0xf]
        %v1601 = vld [vmem:[%s1520 + $0x14] sm:$0xf]
        %v1602 = vld [vmem:[%s1520 + $0x18] sm:$0xf]
        %v1603 = vld [vmem:[%s1520 + $0x1c] sm:$0xf]
        %v1604 = vld [vmem:[%s1523] sm:$0x1]
        %v1605 = vld [vmem:[%s1526] sm:$0x1]
        %v1606 = vld [vmem:[%s1529] sm:$0x1]
        %v1607 = vld [vmem:[%s1534] sm:$0xf]
        %v1608 = vld [vmem:[%s1534 + $0x4] sm:$0xf]
        %v1609 = vld [vmem:[%s1534 + $0x8] sm:$0xf]
        %v1610 = vld [vmem:[%s1534 + $0xc] sm:$0xf]
        %v1611 = vld [vmem:[%s1534 + $0x10] sm:$0xf]
        %v1612 = vld [vmem:[%s1534 + $0x14] sm:$0xf]
        %v1613 = vld [vmem:[%s1534 + $0x18] sm:$0xf]
        %v1614 = vld [vmem:[%s1534 + $0x1c] sm:$0xf]
        %v1615 = vld [vmem:[%s1534 + $0x20] sm:$0xf]
        %v1616 = vld [vmem:[%s1534 + $0x24] sm:$0xf]
        %v1617 = vld [vmem:[%s1534 + $0x28] sm:$0xf]
        %v1618 = vld [vmem:[%s1534 + $0x2c] sm:$0xf]
        %v1619 = vld [vmem:[%s1534 + $0x30] sm:$0xf]
        %v1620 = vld [vmem:[%s1534 + $0x34] sm:$0xf]
        %v1621 = vld [vmem:[%s1534 + $0x38] sm:$0xf]
        %v1622 = vld [vmem:[%s1534 + $0x3c] sm:$0xf]
        %v1623 = vld [vmem:[%s1534 + $0x40] sm:$0xf]
        %v1624 = vld [vmem:[%s1534 + $0x44] sm:$0xf]
        %v1625 = vld [vmem:[%s1534 + $0x48] sm:$0xf]
        %v1626 = vld [vmem:[%s1534 + $0x4c] sm:$0xf]
        %v1627 = vld [vmem:[%s1534 + $0x50] sm:$0xf]
        %v1628 = vld [vmem:[%s1534 + $0x54] sm:$0xf]
        %v1629 = vld [vmem:[%s1534 + $0x58] sm:$0xf]
        %v1630 = vld [vmem:[%s1534 + $0x5c] sm:$0xf]
        %v1631 = vld [vmem:[%s1534 + $0x60] sm:$0xf]
        %v1632 = vld [vmem:[%s1534 + $0x64] sm:$0xf]
        %v1633 = vld [vmem:[%s1534 + $0x68] sm:$0xf]
        %v1634 = vld [vmem:[%s1534 + $0x6c] sm:$0xf]
        %v1635 = vld [vmem:[%s1534 + $0x70] sm:$0xf]
        %v1636 = vld [vmem:[%s1534 + $0x74] sm:$0xf]
        %v1637 = vld [vmem:[%s1534 + $0x78] sm:$0xf]
        %v1638 = vld [vmem:[%s1534 + $0x7c] sm:$0xf]
        %v1639 = vld [vmem:[%s1537] sm:$0x1]
        %v1640 = vld [vmem:[%s1540] sm:$0x1]
        %v1641 = vld [vmem:[%s1543] sm:$0x1]
        %v1642 = vld [vmem:[%s1548] sm:$0xf]
        %v1643 = vld [vmem:[%s1548 + $0x4] sm:$0xf]
        %v1644 = vld [vmem:[%s1548 + $0x8] sm:$0xf]
        %v1645 = vld [vmem:[%s1548 + $0xc] sm:$0xf]
        %v1646 = vld [vmem:[%s1551] sm:$0x1]
        %v1647 = vld [vmem:[%s1556] sm:$0xf]
        %v1648 = vld [vmem:[%s1556 + $0x4] sm:$0xf]
        %v1649 = vld [vmem:[%s1556 + $0x8] sm:$0xf]
        %v1650 = vld [vmem:[%s1556 + $0xc] sm:$0xf]
        %v1651 = vld [vmem:[%s1559] sm:$0x1]
        %v1652 = vld [vmem:[%s1562] sm:$0x1]
        %v1653 = vld [vmem:[%s1565] sm:$0x1]
        %v1654 = vld [vmem:[%s1570] sm:$0xf]
        %v1655 = vld [vmem:[%s1570 + $0x4] sm:$0xf]
        %v1656 = vld [vmem:[%s1570 + $0x8] sm:$0xf]
        %v1657 = vld [vmem:[%s1570 + $0xc] sm:$0xf]
        %v1658 = vld [vmem:[%s1573] sm:$0x1]
        %v1659 = vld [vmem:[%s1578] sm:$0xf]
        %v1660 = vld [vmem:[%s1578 + $0x4] sm:$0xf]
        %v1661 = vld [vmem:[%s1578 + $0x8] sm:$0xf]
        %v1662 = vld [vmem:[%s1578 + $0xc] sm:$0xf]
        %v1663 = vld [vmem:[%s1578 + $0x10] sm:$0xf]
        %v1664 = vld [vmem:[%s1578 + $0x14] sm:$0xf]
        %v1665 = vld [vmem:[%s1578 + $0x18] sm:$0xf]
        %v1666 = vld [vmem:[%s1578 + $0x1c] sm:$0xf]
        %v1667 = vld [vmem:[%s1578 + $0x20] sm:$0xf]
        %v1668 = vld [vmem:[%s1578 + $0x24] sm:$0xf]
        %v1669 = vld [vmem:[%s1578 + $0x28] sm:$0xf]
        %v1670 = vld [vmem:[%s1578 + $0x2c] sm:$0xf]
        %v1671 = vld [vmem:[%s1578 + $0x30] sm:$0xf]
        %v1672 = vld [vmem:[%s1578 + $0x34] sm:$0xf]
        %v1673 = vld [vmem:[%s1578 + $0x38] sm:$0xf]
        %v1674 = vld [vmem:[%s1578 + $0x3c] sm:$0xf]
        %v1675 = vld [vmem:[%s1581] sm:$0x1]
        %p1676 = scmp.eq.s32.totalorder %s94, 0
        // Predicated region
        $region169: #{tnt_forward.1} parent=167 // pred_check
          %p1677 = pneg %p1676
        $region170: #{tnt_forward.1} parent=167 // pred_check_branch
          %1679 = sbr.rel (%p1677) target = $region172
        $region171: #{tnt_forward.1} parent=167 // pred_region
          %v1680 = vld [vmem:[%s1479] sm:$0xff]
          %v1681 = vld [vmem:[%s1479 + $0x8] sm:$0xff]
          %v1682 = vld [vmem:[%s1479 + $0x10] sm:$0xff]
          %v1683 = vld [vmem:[%s1479 + $0x18] sm:$0xff]
          %v1684 = vld [vmem:[%s1479 + $0x20] sm:$0xff]
          %v1685 = vld [vmem:[%s1479 + $0x28] sm:$0xff]
          %v1686 = vld [vmem:[%s1479 + $0x30] sm:$0xff]
          %v1687 = vld [vmem:[%s1479 + $0x38] sm:$0xff]
          %v1688 = vpack.c.bf16 %v1681, %v1680
          %v1689 = vpack.c.bf16 %v1683, %v1682
          %v1690 = vpack.c.bf16 %v1685, %v1684
          %v1691 = vpack.c.bf16 %v1687, %v1686
          %v1692 = vld [vmem:[%s3] sm:$0xf]
          %v1693 = vld [vmem:[%s3 + $0x4] sm:$0x3]
          %v1694 = vld [vmem:[%s5] sm:$0x1]
          %v1696 = vlaneseq
          %v1697 = vshrl.u32 %v1696, 7
          %v1698 = vsub.s32 0, %v1697
          %v1699 = vrot.slane %v1694, %v1698
          %v1703 = vunpack.c.l.b16 %v1692
          %v1704 = vunpack.c.l.b16 %v1693
          %v1705 = vpack.c.b16 %v1704, %v1703
          %vm1706 = vcmask 97280
          %v1708 = vsel %vm1706, %v1688, 0
          %v1711 = vsel %vm1706, %v1689, 0
          %v1714 = vsel %vm1706, %v1690, 0
          %v1717 = vsel %vm1706, %v1691, 0
          %vm1719 = vcmask 1045504
          %v1721 = vsel %vm1719, %v1705, 0
          %1723 = vmatprep.subr.bf16.mxu0 0
          %1724 = vmatpush1.bf16.msra.mxu0 %v1721
          %1725 = vmatprep.subr.bf16.mxu0 0
          %1726 = vmatpush1.bf16.msra.mxu0 0
          %1727 = vmatprep.subr.bf16.mxu0 0
          %1728 = vmatpush1.bf16.msra.mxu0 0
          %1729 = vmatprep.subr.bf16.mxu0 0
          %1730 = vmatpush1.bf16.msra.mxu0 0
          %1731 = vmatprep.subr.bf16.mxu0 0
          %1732 = vmatpush1.bf16.msra.mxu0 0
          %1733 = vmatprep.subr.bf16.mxu0 0
          %1734 = vmatpush1.bf16.msra.mxu0 0
          %1735 = vmatprep.subr.bf16.mxu0 0
          %1736 = vmatpush1.bf16.msra.mxu0 0
          %1737 = vmatprep.subr.bf16.mxu0 0
          %1738 = vmatpush1.bf16.msra.mxu0 0
          %1739 = vmatprep.subr.bf16.mxu0 0
          %1740 = vmatpush1.bf16.msra.mxu0 0
          %1741 = vmatprep.subr.bf16.mxu0 0
          %1742 = vmatpush1.bf16.msra.mxu0 0
          %1743 = vmatprep.subr.bf16.mxu0 0
          %1744 = vmatpush1.bf16.msra.mxu0 0
          %1745 = vmatprep.subr.bf16.mxu0 0
          %1746 = vmatpush1.bf16.msra.mxu0 0
          %1747 = vmatprep.subr.bf16.mxu0 0
          %1748 = vmatpush1.bf16.msra.mxu0 0
          %1749 = vmatprep.subr.bf16.mxu0 0
          %1750 = vmatpush1.bf16.msra.mxu0 0
          %1751 = vmatprep.subr.bf16.mxu0 0
          %1752 = vmatpush1.bf16.msra.mxu0 0
          %1753 = vmatprep.subr.bf16.mxu0 0
          %1754 = vmatpush1.bf16.msra.mxu0 0
          %1755 = vmatprep.mubr.bf16.mxu0 0
          %1756 = vmatmul.mubr.bf16.gmra.mrb[0].mxu0 %v1708
          %v1757 = vpop.f32.mrb[0].mxu0
          %v1758 = vadd.f32 %v1699, %v1757
          %v1759 = vpop.f32.mrb[0].mxu0
          %v1760 = vpop.f32.mrb[0].mxu0
          %v1761 = vadd.f32 %v1699, %v1760
          %v1762 = vpop.f32.mrb[0].mxu0
          %1763 = vmatprep.mubr.bf16.mxu0 0
          %1764 = vmatmul.mubr.bf16.gmra.mrb[0].mxu0 %v1711
          %v1765 = vpop.f32.mrb[0].mxu0
          %v1766 = vadd.f32 %v1699, %v1765
          %v1767 = vpop.f32.mrb[0].mxu0
          %v1768 = vpop.f32.mrb[0].mxu0
          %v1769 = vadd.f32 %v1699, %v1768
          %v1770 = vpop.f32.mrb[0].mxu0
          %1771 = vmatprep.mubr.bf16.mxu0 0
          %1772 = vmatmul.mubr.bf16.gmra.mrb[0].mxu0 %v1714
          %v1773 = vpop.f32.mrb[0].mxu0
          %v1774 = vadd.f32 %v1699, %v1773
          %v1775 = vpop.f32.mrb[0].mxu0
          %v1776 = vpop.f32.mrb[0].mxu0
          %v1777 = vadd.f32 %v1699, %v1776
          %v1778 = vpop.f32.mrb[0].mxu0
          %1779 = vmatprep.mubr.bf16.mxu0 0
          %1780 = vmatmul.mubr.bf16.gmra.mrb[0].mxu0 %v1717
          %v1781 = vpop.f32.mrb[0].mxu0
          %v1782 = vadd.f32 %v1699, %v1781
          %v1783 = vpop.f32.mrb[0].mxu0
          %v1784 = vpop.f32.mrb[0].mxu0
          %v1785 = vadd.f32 %v1699, %v1784
          %v1786 = vpop.f32.mrb[0].mxu0
          %1787 = vdwg.mxu0
          %v1788 = vld [vmem:[%s7] sm:$0xff]
          %v1789 = vld [vmem:[%s7 + $0x8] sm:$0xff]
          %v1790 = vld [vmem:[%s7 + $0x10] sm:$0xff]
          %v1791 = vld [vmem:[%s7 + $0x18] sm:$0xff]
          %v1792 = vld [vmem:[%s7 + $0x20] sm:$0xff]
          %v1793 = vld [vmem:[%s7 + $0x28] sm:$0xff]
          %v1794 = vld [vmem:[%s7 + $0x30] sm:$0xff]
          %v1795 = vld [vmem:[%s7 + $0x38] sm:$0xff]
          %v1796 = vadd.f32 %v1758, %v1788
          %v1797 = vadd.f32 %v1761, %v1789
          %v1798 = vadd.f32 %v1766, %v1790
          %v1799 = vadd.f32 %v1769, %v1791
          %v1800 = vadd.f32 %v1774, %v1792
          %v1801 = vadd.f32 %v1777, %v1793
          %v1802 = vadd.f32 %v1782, %v1794
          %v1803 = vadd.f32 %v1785, %v1795
          %vm1804 = vcmask 130048
          %1805 = vst.msk [vmem:[#allocation2] sm:$0xff] %vm1804, %v1796
          %1806 = vst.msk [vmem:[#allocation2 + $0x8] sm:$0xff] %vm1804, %v1797
          %1807 = vst.msk [vmem:[#allocation2 + $0x10] sm:$0xff] %vm1804, %v1798
          %1808 = vst.msk [vmem:[#allocation2 + $0x18] sm:$0xff] %vm1804, %v1799
          %1809 = vst.msk [vmem:[#allocation2 + $0x20] sm:$0xff] %vm1804, %v1800
          %1810 = vst.msk [vmem:[#allocation2 + $0x28] sm:$0xff] %vm1804, %v1801
          %1811 = vst.msk [vmem:[#allocation2 + $0x30] sm:$0xff] %vm1804, %v1802
          %1812 = vst.msk [vmem:[#allocation2 + $0x38] sm:$0xff] %vm1804, %v1803
          %v1813 = vld [vmem:[%s9] sm:$0x1f]
          %vm1814 = vcmask 258048
          %1815 = vst.msk [vmem:[#allocation3] sm:$0x1f] %vm1814, %v1813
        $region172: #{tnt_forward.1} parent=167 // pred_fallthru
          _
        %v1816 = vld [vmem:[#allocation2] sm:$0xff]
        %v1817 = vld [vmem:[#allocation2 + $0x8] sm:$0xff]
        %v1818 = vld [vmem:[#allocation2 + $0x10] sm:$0xff]
        %v1819 = vld [vmem:[#allocation2 + $0x18] sm:$0xff]
        %v1820 = vld [vmem:[#allocation2 + $0x20] sm:$0xff]
        %v1821 = vld [vmem:[#allocation2 + $0x28] sm:$0xff]
        %v1822 = vld [vmem:[#allocation2 + $0x30] sm:$0xff]
        %v1823 = vld [vmem:[#allocation2 + $0x38] sm:$0xff]
        %v1824 = vld [vmem:[#allocation3] sm:$0x1f]
        %vm1825 = vcmask 130048
        %v1826 = vsel %vm1825, %v1816, 0.0
        %1827 = vadd.xlane.f32.xlu0 %v1826
        %v1828 = vpop.xlane.xlu0 %1827
        %v1829 = vsel %vm1825, %v1817, 0.0
        %1830 = vadd.xlane.f32.xlu0 %v1829
        %v1831 = vpop.xlane.xlu0 %1830
        %v1832 = vsel %vm1825, %v1818, 0.0
        %1833 = vadd.xlane.f32.xlu0 %v1832
        %v1834 = vpop.xlane.xlu0 %1833
        %v1835 = vsel %vm1825, %v1819, 0.0
        %1836 = vadd.xlane.f32.xlu0 %v1835
        %v1837 = vpop.xlane.xlu0 %1836
        %v1838 = vsel %vm1825, %v1820, 0.0
        %1839 = vadd.xlane.f32.xlu0 %v1838
        %v1840 = vpop.xlane.xlu0 %1839
        %v1841 = vsel %vm1825, %v1821, 0.0
        %1842 = vadd.xlane.f32.xlu0 %v1841
        %v1843 = vpop.xlane.xlu0 %1842
        %v1844 = vsel %vm1825, %v1822, 0.0
        %1845 = vadd.xlane.f32.xlu0 %v1844
        %v1846 = vpop.xlane.xlu0 %1845
        %v1847 = vsel %vm1825, %v1823, 0.0
        %1848 = vadd.xlane.f32.xlu0 %v1847
        %v1849 = vpop.xlane.xlu0 %1848
        %v1850 = vrcp.pop 16.0
        %v1851 = vmul.f32 %v1828, %v1850
        %v1852 = vmul.f32 %v1831, %v1850
        %v1853 = vmul.f32 %v1834, %v1850
        %v1854 = vmul.f32 %v1837, %v1850
        %v1855 = vmul.f32 %v1840, %v1850
        %v1856 = vmul.f32 %v1843, %v1850
        %v1857 = vmul.f32 %v1846, %v1850
        %v1858 = vmul.f32 %v1849, %v1850
        %v1859 = vsub.f32 %v1816, %v1851
        %v1860 = vsub.f32 %v1817, %v1852
        %v1861 = vsub.f32 %v1818, %v1853
        %v1862 = vsub.f32 %v1819, %v1854
        %v1863 = vsub.f32 %v1820, %v1855
        %v1864 = vsub.f32 %v1821, %v1856
        %v1865 = vsub.f32 %v1822, %v1857
        %v1866 = vsub.f32 %v1823, %v1858
        %v1867 = vmul.f32 %v1859, %v1859
        %v1868 = vmul.f32 %v1860, %v1860
        %v1869 = vmul.f32 %v1861, %v1861
        %v1870 = vmul.f32 %v1862, %v1862
        %v1871 = vmul.f32 %v1863, %v1863
        %v1872 = vmul.f32 %v1864, %v1864
        %v1873 = vmul.f32 %v1865, %v1865
        %v1874 = vmul.f32 %v1866, %v1866
        %v1875 = vsel %vm1825, %v1867, 0.0
        %1876 = vadd.xlane.f32.xlu0 %v1875
        %v1877 = vpop.xlane.xlu0 %1876
        %v1878 = vsel %vm1825, %v1868, 0.0
        %1879 = vadd.xlane.f32.xlu0 %v1878
        %v1880 = vpop.xlane.xlu0 %1879
        %v1881 = vsel %vm1825, %v1869, 0.0
        %1882 = vadd.xlane.f32.xlu0 %v1881
        %v1883 = vpop.xlane.xlu0 %1882
        %v1884 = vsel %vm1825, %v1870, 0.0
        %1885 = vadd.xlane.f32.xlu0 %v1884
        %v1886 = vpop.xlane.xlu0 %1885
        %v1887 = vsel %vm1825, %v1871, 0.0
        %1888 = vadd.xlane.f32.xlu0 %v1887
        %v1889 = vpop.xlane.xlu0 %1888
        %v1890 = vsel %vm1825, %v1872, 0.0
        %1891 = vadd.xlane.f32.xlu0 %v1890
        %v1892 = vpop.xlane.xlu0 %1891
        %v1893 = vsel %vm1825, %v1873, 0.0
        %1894 = vadd.xlane.f32.xlu0 %v1893
        %v1895 = vpop.xlane.xlu0 %1894
        %v1896 = vsel %vm1825, %v1874, 0.0
        %1897 = vadd.xlane.f32.xlu0 %v1896
        %v1898 = vpop.xlane.xlu0 %1897
        %v1899 = vmul.f32 %v1877, %v1850
        %v1900 = vmul.f32 %v1880, %v1850
        %v1901 = vmul.f32 %v1883, %v1850
        %v1902 = vmul.f32 %v1886, %v1850
        %v1903 = vmul.f32 %v1889, %v1850
        %v1904 = vmul.f32 %v1892, %v1850
        %v1905 = vmul.f32 %v1895, %v1850
        %v1906 = vmul.f32 %v1898, %v1850
        %v1907 = vadd.f32 %v1899, 1e-05
        %v1908 = vadd.f32 %v1900, 1e-05
        %v1909 = vadd.f32 %v1901, 1e-05
        %v1910 = vadd.f32 %v1902, 1e-05
        %v1911 = vadd.f32 %v1903, 1e-05
        %v1912 = vadd.f32 %v1904, 1e-05
        %v1913 = vadd.f32 %v1905, 1e-05
        %v1914 = vadd.f32 %v1906, 1e-05
        %v1915 = vrsqrt.pop %v1907
        %v1916 = vrsqrt.pop %v1908
        %v1917 = vrsqrt.pop %v1909
        %v1918 = vrsqrt.pop %v1910
        %v1919 = vrsqrt.pop %v1911
        %v1920 = vrsqrt.pop %v1912
        %v1921 = vrsqrt.pop %v1913
        %v1922 = vrsqrt.pop %v1914
        %v1923 = vmul.f32 %v1859, %v1915
        %v1924 = vmul.f32 %v1860, %v1916
        %v1925 = vmul.f32 %v1861, %v1917
        %v1926 = vmul.f32 %v1862, %v1918
        %v1927 = vmul.f32 %v1863, %v1919
        %v1928 = vmul.f32 %v1864, %v1920
        %v1929 = vmul.f32 %v1865, %v1921
        %v1930 = vmul.f32 %v1866, %v1922
        %v1932 = vlaneseq
        %v1933 = vshrl.u32 %v1932, 7
        %v1934 = vsub.s32 0, %v1933
        %v1935 = vrot.slane %v1583, %v1934
        %v1937 = vmul.f32 %v1923, %v1935
        %v1938 = vmul.f32 %v1924, %v1935
        %v1939 = vmul.f32 %v1925, %v1935
        %v1940 = vmul.f32 %v1926, %v1935
        %v1941 = vmul.f32 %v1927, %v1935
        %v1942 = vmul.f32 %v1928, %v1935
        %v1943 = vmul.f32 %v1929, %v1935
        %v1944 = vmul.f32 %v1930, %v1935
        %v1946 = vlaneseq
        %v1947 = vshrl.u32 %v1946, 7
        %v1948 = vsub.s32 0, %v1947
        %v1949 = vrot.slane %v1584, %v1948
        %v1951 = vadd.f32 %v1937, %v1949
        %v1952 = vadd.f32 %v1938, %v1949
        %v1953 = vadd.f32 %v1939, %v1949
        %v1954 = vadd.f32 %v1940, %v1949
        %v1955 = vadd.f32 %v1941, %v1949
        %v1956 = vadd.f32 %v1942, %v1949
        %v1957 = vadd.f32 %v1943, %v1949
        %v1958 = vadd.f32 %v1944, %v1949
        %v1959 = vpack.c.bf16 %v1952, %v1951
        %v1960 = vpack.c.bf16 %v1954, %v1953
        %v1961 = vpack.c.bf16 %v1956, %v1955
        %v1962 = vpack.c.bf16 %v1958, %v1957
        %v1964 = vlaneseq
        %v1965 = vshrl.u32 %v1964, 7
        %v1966 = vsub.s32 0, %v1965
        %v1967 = vrot.slane %v1587, %v1966
        %v1971 = vunpack.c.l.b16 %v1585
        %v1972 = vunpack.c.l.b16 %v1586
        %v1973 = vpack.c.b16 %v1972, %v1971
        %v1976 = vsel %vm1825, %v1959, 0
        %v1979 = vsel %vm1825, %v1960, 0
        %v1982 = vsel %vm1825, %v1961, 0
        %v1985 = vsel %vm1825, %v1962, 0
        %1987 = vmatprep.subr.bf16.mxu0 0
        %1988 = vmatpush1.bf16.msra.mxu0 %v1973
        %1989 = vmatprep.subr.bf16.mxu0 0
        %1990 = vmatpush1.bf16.msra.mxu0 0
        %1991 = vmatprep.subr.bf16.mxu0 0
        %1992 = vmatpush1.bf16.msra.mxu0 0
        %1993 = vmatprep.subr.bf16.mxu0 0
        %1994 = vmatpush1.bf16.msra.mxu0 0
        %1995 = vmatprep.subr.bf16.mxu0 0
        %1996 = vmatpush1.bf16.msra.mxu0 0
        %1997 = vmatprep.subr.bf16.mxu0 0
        %1998 = vmatpush1.bf16.msra.mxu0 0
        %1999 = vmatprep.subr.bf16.mxu0 0
        %2000 = vmatpush1.bf16.msra.mxu0 0
        %2001 = vmatprep.subr.bf16.mxu0 0
        %2002 = vmatpush1.bf16.msra.mxu0 0
        %2003 = vmatprep.subr.bf16.mxu0 0
        %2004 = vmatpush1.bf16.msra.mxu0 0
        %2005 = vmatprep.subr.bf16.mxu0 0
        %2006 = vmatpush1.bf16.msra.mxu0 0
        %2007 = vmatprep.subr.bf16.mxu0 0
        %2008 = vmatpush1.bf16.msra.mxu0 0
        %2009 = vmatprep.subr.bf16.mxu0 0
        %2010 = vmatpush1.bf16.msra.mxu0 0
        %2011 = vmatprep.subr.bf16.mxu0 0
        %2012 = vmatpush1.bf16.msra.mxu0 0
        %2013 = vmatprep.subr.bf16.mxu0 0
        %2014 = vmatpush1.bf16.msra.mxu0 0
        %2015 = vmatprep.subr.bf16.mxu0 0
        %2016 = vmatpush1.bf16.msra.mxu0 0
        %2017 = vmatprep.subr.bf16.mxu0 0
        %2018 = vmatpush1.bf16.msra.mxu0 0
        %2019 = vmatprep.mubr.bf16.mxu0 0
        %2020 = vmatmul.mubr.bf16.gmra.mrb[0].mxu0 %v1976
        %v2021 = vpop.f32.mrb[0].mxu0
        %v2022 = vadd.f32 %v1967, %v2021
        %v2023 = vpop.f32.mrb[0].mxu0
        %v2024 = vpop.f32.mrb[0].mxu0
        %v2025 = vadd.f32 %v1967, %v2024
        %v2026 = vpop.f32.mrb[0].mxu0
        %2027 = vmatprep.mubr.bf16.mxu0 0
        %2028 = vmatmul.mubr.bf16.gmra.mrb[0].mxu0 %v1979
        %v2029 = vpop.f32.mrb[0].mxu0
        %v2030 = vadd.f32 %v1967, %v2029
        %v2031 = vpop.f32.mrb[0].mxu0
        %v2032 = vpop.f32.mrb[0].mxu0
        %v2033 = vadd.f32 %v1967, %v2032
        %v2034 = vpop.f32.mrb[0].mxu0
        %2035 = vmatprep.mubr.bf16.mxu0 0
        %2036 = vmatmul.mubr.bf16.gmra.mrb[0].mxu0 %v1982
        %v2037 = vpop.f32.mrb[0].mxu0
        %v2038 = vadd.f32 %v1967, %v2037
        %v2039 = vpop.f32.mrb[0].mxu0
        %v2040 = vpop.f32.mrb[0].mxu0
        %v2041 = vadd.f32 %v1967, %v2040
        %v2042 = vpop.f32.mrb[0].mxu0
        %2043 = vmatprep.mubr.bf16.mxu0 0
        %2044 = vmatmul.mubr.bf16.gmra.mrb[0].mxu0 %v1985
        %v2045 = vpop.f32.mrb[0].mxu0
        %v2046 = vadd.f32 %v1967, %v2045
        %v2047 = vpop.f32.mrb[0].mxu0
        %v2048 = vpop.f32.mrb[0].mxu0
        %v2049 = vadd.f32 %v1967, %v2048
        %v2050 = vpop.f32.mrb[0].mxu0
        %2051 = vdwg.mxu0
        %v2052 = vpack.c.bf16 %v2025, %v2022
        %v2053 = vpack.c.bf16 %v2033, %v2030
        %v2054 = vpack.c.bf16 %v2041, %v2038
        %v2055 = vpack.c.bf16 %v2049, %v2046
        %2057 = vrot.lane.b32.xlu0 %v2052, 112
        %v2058 = vpop.permute.xlu0 %2057
        %vm2059 = vcmask 64512
        %v2061 = vsel %vm2059, %v2052, 0
        %v2064 = vsel %vm2059, %v2058, 0
        %2066 = vmatprep.subr.bf16.mxu0 0
        %2067 = vmatpush1.bf16.xpose.msra.mxu0 %v2064
        %2068 = vmatprep.subr.bf16.mxu0 0
        %2069 = vmatpush1.bf16.xpose.msra.mxu0 0
        %2070 = vmatprep.subr.bf16.mxu0 0
        %2071 = vmatpush1.bf16.xpose.msra.mxu0 0
        %2072 = vmatprep.subr.bf16.mxu0 0
        %2073 = vmatpush1.bf16.xpose.msra.mxu0 0
        %2074 = vmatprep.subr.bf16.mxu0 0
        %2075 = vmatpush1.bf16.xpose.msra.mxu0 0
        %2076 = vmatprep.subr.bf16.mxu0 0
        %2077 = vmatpush1.bf16.xpose.msra.mxu0 0
        %2078 = vmatprep.subr.bf16.mxu0 0
        %2079 = vmatpush1.bf16.xpose.msra.mxu0 0
        %2080 = vmatprep.subr.bf16.mxu0 0
        %2081 = vmatpush1.bf16.xpose.msra.mxu0 0
        %2082 = vmatprep.subr.bf16.mxu0 0
        %2083 = vmatpush1.bf16.xpose.msra.mxu0 0
        %2084 = vmatprep.subr.bf16.mxu0 0
        %2085 = vmatpush1.bf16.xpose.msra.mxu0 0
        %2086 = vmatprep.subr.bf16.mxu0 0
        %2087 = vmatpush1.bf16.xpose.msra.mxu0 0
        %2088 = vmatprep.subr.bf16.mxu0 0
        %2089 = vmatpush1.bf16.xpose.msra.mxu0 0
        %2090 = vmatprep.subr.bf16.mxu0 0
        %2091 = vmatpush1.bf16.xpose.msra.mxu0 0
        %2092 = vmatprep.subr.bf16.mxu0 0
        %2093 = vmatpush1.bf16.xpose.msra.mxu0 0
        %2094 = vmatprep.subr.bf16.mxu0 0
        %2095 = vmatpush1.bf16.xpose.msra.mxu0 0
        %2096 = vmatprep.subr.bf16.mxu0 0
        %2097 = vmatpush1.bf16.xpose.msra.mxu0 0
        %2098 = vmatprep.mubr.bf16.mxu0 0
        %2099 = vmatmul.mubr.bf16.gmra.mrb[0].mxu0 %v2061
        %v2100 = vpop.f32.mrb[0].mxu0
        %v2101 = vadd.f32 0.0, %v2100
        %v2102 = vpop.f32.mrb[0].mxu0
        %v2103 = vpop.f32.mrb[0].mxu0
        %v2104 = vadd.f32 0.0, %v2103
        %v2105 = vpop.f32.mrb[0].mxu0
        %2106 = vdwg.mxu0
        %2108 = vrot.lane.b32.xlu0 %v2053, 112
        %v2109 = vpop.permute.xlu0 %2108
        %v2111 = vsel %vm2059, %v2053, 0
        %v2114 = vsel %vm2059, %v2109, 0
        %2116 = vmatprep.subr.bf16.mxu0 0
        %2117 = vmatpush1.bf16.xpose.msra.mxu0 %v2114
        %2118 = vmatprep.subr.bf16.mxu0 0
        %2119 = vmatpush1.bf16.xpose.msra.mxu0 0
        %2120 = vmatprep.subr.bf16.mxu0 0
        %2121 = vmatpush1.bf16.xpose.msra.mxu0 0
        %2122 = vmatprep.subr.bf16.mxu0 0
        %2123 = vmatpush1.bf16.xpose.msra.mxu0 0
        %2124 = vmatprep.subr.bf16.mxu0 0
        %2125 = vmatpush1.bf16.xpose.msra.mxu0 0
        %2126 = vmatprep.subr.bf16.mxu0 0
        %2127 = vmatpush1.bf16.xpose.msra.mxu0 0
        %2128 = vmatprep.subr.bf16.mxu0 0
        %2129 = vmatpush1.bf16.xpose.msra.mxu0 0
        %2130 = vmatprep.subr.bf16.mxu0 0
        %2131 = vmatpush1.bf16.xpose.msra.mxu0 0
        %2132 = vmatprep.subr.bf16.mxu0 0
        %2133 = vmatpush1.bf16.xpose.msra.mxu0 0
        %2134 = vmatprep.subr.bf16.mxu0 0
        %2135 = vmatpush1.bf16.xpose.msra.mxu0 0
        %2136 = vmatprep.subr.bf16.mxu0 0
        %2137 = vmatpush1.bf16.xpose.msra.mxu0 0
        %2138 = vmatprep.subr.bf16.mxu0 0
        %2139 = vmatpush1.bf16.xpose.msra.mxu0 0
        %2140 = vmatprep.subr.bf16.mxu0 0
        %2141 = vmatpush1.bf16.xpose.msra.mxu0 0
        %2142 = vmatprep.subr.bf16.mxu0 0
        %2143 = vmatpush1.bf16.xpose.msra.mxu0 0
        %2144 = vmatprep.subr.bf16.mxu0 0
        %2145 = vmatpush1.bf16.xpose.msra.mxu0 0
        %2146 = vmatprep.subr.bf16.mxu0 0
        %2147 = vmatpush1.bf16.xpose.msra.mxu0 0
        %2148 = vmatprep.mubr.bf16.mxu0 0
        %2149 = vmatmul.mubr.bf16.gmra.mrb[0].mxu0 %v2111
        %v2150 = vpop.f32.mrb[0].mxu0
        %v2151 = vadd.f32 0.0, %v2150
        %v2152 = vpop.f32.mrb[0].mxu0
        %v2153 = vpop.f32.mrb[0].mxu0
        %v2154 = vadd.f32 0.0, %v2153
        %v2155 = vpop.f32.mrb[0].mxu0
        %2156 = vdwg.mxu0
        %2158 = vrot.lane.b32.xlu0 %v2054, 112
        %v2159 = vpop.permute.xlu0 %2158
        %v2161 = vsel %vm2059, %v2054, 0
        %v2164 = vsel %vm2059, %v2159, 0
        %2166 = vmatprep.subr.bf16.mxu0 0
        %2167 = vmatpush1.bf16.xpose.msra.mxu0 %v2164
        %2168 = vmatprep.subr.bf16.mxu0 0
        %2169 = vmatpush1.bf16.xpose.msra.mxu0 0
        %2170 = vmatprep.subr.bf16.mxu0 0
        %2171 = vmatpush1.bf16.xpose.msra.mxu0 0
        %2172 = vmatprep.subr.bf16.mxu0 0
        %2173 = vmatpush1.bf16.xpose.msra.mxu0 0
        %2174 = vmatprep.subr.bf16.mxu0 0
        %2175 = vmatpush1.bf16.xpose.msra.mxu0 0
        %2176 = vmatprep.subr.bf16.mxu0 0
        %2177 = vmatpush1.bf16.xpose.msra.mxu0 0
        %2178 = vmatprep.subr.bf16.mxu0 0
        %2179 = vmatpush1.bf16.xpose.msra.mxu0 0
        %2180 = vmatprep.subr.bf16.mxu0 0
        %2181 = vmatpush1.bf16.xpose.msra.mxu0 0
        %2182 = vmatprep.subr.bf16.mxu0 0
        %2183 = vmatpush1.bf16.xpose.msra.mxu0 0
        %2184 = vmatprep.subr.bf16.mxu0 0
        %2185 = vmatpush1.bf16.xpose.msra.mxu0 0
        %2186 = vmatprep.subr.bf16.mxu0 0
        %2187 = vmatpush1.bf16.xpose.msra.mxu0 0
        %2188 = vmatprep.subr.bf16.mxu0 0
        %2189 = vmatpush1.bf16.xpose.msra.mxu0 0
        %2190 = vmatprep.subr.bf16.mxu0 0
        %2191 = vmatpush1.bf16.xpose.msra.mxu0 0
        %2192 = vmatprep.subr.bf16.mxu0 0
        %2193 = vmatpush1.bf16.xpose.msra.mxu0 0
        %2194 = vmatprep.subr.bf16.mxu0 0
        %2195 = vmatpush1.bf16.xpose.msra.mxu0 0
        %2196 = vmatprep.subr.bf16.mxu0 0
        %2197 = vmatpush1.bf16.xpose.msra.mxu0 0
        %2198 = vmatprep.mubr.bf16.mxu0 0
        %2199 = vmatmul.mubr.bf16.gmra.mrb[0].mxu0 %v2161
        %v2200 = vpop.f32.mrb[0].mxu0
        %v2201 = vadd.f32 0.0, %v2200
        %v2202 = vpop.f32.mrb[0].mxu0
        %v2203 = vpop.f32.mrb[0].mxu0
        %v2204 = vadd.f32 0.0, %v2203
        %v2205 = vpop.f32.mrb[0].mxu0
        %2206 = vdwg.mxu0
        %2208 = vrot.lane.b32.xlu0 %v2055, 112
        %v2209 = vpop.permute.xlu0 %2208
        %v2211 = vsel %vm2059, %v2055, 0
        %v2214 = vsel %vm2059, %v2209, 0
        %2216 = vmatprep.subr.bf16.mxu0 0
        %2217 = vmatpush1.bf16.xpose.msra.mxu0 %v2214
        %2218 = vmatprep.subr.bf16.mxu0 0
        %2219 = vmatpush1.bf16.xpose.msra.mxu0 0
        %2220 = vmatprep.subr.bf16.mxu0 0
        %2221 = vmatpush1.bf16.xpose.msra.mxu0 0
        %2222 = vmatprep.subr.bf16.mxu0 0
        %2223 = vmatpush1.bf16.xpose.msra.mxu0 0
        %2224 = vmatprep.subr.bf16.mxu0 0
        %2225 = vmatpush1.bf16.xpose.msra.mxu0 0
        %2226 = vmatprep.subr.bf16.mxu0 0
        %2227 = vmatpush1.bf16.xpose.msra.mxu0 0
        %2228 = vmatprep.subr.bf16.mxu0 0
        %2229 = vmatpush1.bf16.xpose.msra.mxu0 0
        %2230 = vmatprep.subr.bf16.mxu0 0
        %2231 = vmatpush1.bf16.xpose.msra.mxu0 0
        %2232 = vmatprep.subr.bf16.mxu0 0
        %2233 = vmatpush1.bf16.xpose.msra.mxu0 0
        %2234 = vmatprep.subr.bf16.mxu0 0
        %2235 = vmatpush1.bf16.xpose.msra.mxu0 0
        %2236 = vmatprep.subr.bf16.mxu0 0
        %2237 = vmatpush1.bf16.xpose.msra.mxu0 0
        %2238 = vmatprep.subr.bf16.mxu0 0
        %2239 = vmatpush1.bf16.xpose.msra.mxu0 0
        %2240 = vmatprep.subr.bf16.mxu0 0
        %2241 = vmatpush1.bf16.xpose.msra.mxu0 0
        %2242 = vmatprep.subr.bf16.mxu0 0
        %2243 = vmatpush1.bf16.xpose.msra.mxu0 0
        %2244 = vmatprep.subr.bf16.mxu0 0
        %2245 = vmatpush1.bf16.xpose.msra.mxu0 0
        %2246 = vmatprep.subr.bf16.mxu0 0
        %2247 = vmatpush1.bf16.xpose.msra.mxu0 0
        %2248 = vmatprep.mubr.bf16.mxu0 0
        %2249 = vmatmul.mubr.bf16.gmra.mrb[0].mxu0 %v2211
        %v2250 = vpop.f32.mrb[0].mxu0
        %v2251 = vadd.f32 0.0, %v2250
        %v2252 = vpop.f32.mrb[0].mxu0
        %v2253 = vpop.f32.mrb[0].mxu0
        %v2254 = vadd.f32 0.0, %v2253
        %v2255 = vpop.f32.mrb[0].mxu0
        %2256 = vdwg.mxu0
        %v2257 = vsel %vm1825, %v2101, -inf
        %2258 = vmax.xlane.f32.xlu0 %v2257
        %v2259 = vpop.xlane.xlu0 %2258
        %v2260 = vsel %vm1825, %v2104, -inf
        %2261 = vmax.xlane.f32.xlu0 %v2260
        %v2262 = vpop.xlane.xlu0 %2261
        %v2263 = vsel %vm1825, %v2151, -inf
        %2264 = vmax.xlane.f32.xlu0 %v2263
        %v2265 = vpop.xlane.xlu0 %2264
        %v2266 = vsel %vm1825, %v2154, -inf
        %2267 = vmax.xlane.f32.xlu0 %v2266
        %v2268 = vpop.xlane.xlu0 %2267
        %v2269 = vsel %vm1825, %v2201, -inf
        %2270 = vmax.xlane.f32.xlu0 %v2269
        %v2271 = vpop.xlane.xlu0 %2270
        %v2272 = vsel %vm1825, %v2204, -inf
        %2273 = vmax.xlane.f32.xlu0 %v2272
        %v2274 = vpop.xlane.xlu0 %2273
        %v2275 = vsel %vm1825, %v2251, -inf
        %2276 = vmax.xlane.f32.xlu0 %v2275
        %v2277 = vpop.xlane.xlu0 %2276
        %v2278 = vsel %vm1825, %v2254, -inf
        %2279 = vmax.xlane.f32.xlu0 %v2278
        %v2280 = vpop.xlane.xlu0 %2279
        %v2281 = vsub.f32 %v2101, %v2259
        %v2282 = vsub.f32 %v2104, %v2262
        %v2283 = vsub.f32 %v2151, %v2265
        %v2284 = vsub.f32 %v2154, %v2268
        %v2285 = vsub.f32 %v2201, %v2271
        %v2286 = vsub.f32 %v2204, %v2274
        %v2287 = vsub.f32 %v2251, %v2277
        %v2288 = vsub.f32 %v2254, %v2280
        %v2289 = vmul.f32 %v2281, 1.442695
        %v2290 = vpow.pop %v2289
        %v2291 = vmul.f32 %v2282, 1.442695
        %v2292 = vpow.pop %v2291
        %v2293 = vmul.f32 %v2283, 1.442695
        %v2294 = vpow.pop %v2293
        %v2295 = vmul.f32 %v2284, 1.442695
        %v2296 = vpow.pop %v2295
        %v2297 = vmul.f32 %v2285, 1.442695
        %v2298 = vpow.pop %v2297
        %v2299 = vmul.f32 %v2286, 1.442695
        %v2300 = vpow.pop %v2299
        %v2301 = vmul.f32 %v2287, 1.442695
        %v2302 = vpow.pop %v2301
        %v2303 = vmul.f32 %v2288, 1.442695
        %v2304 = vpow.pop %v2303
        %v2305 = vsel %vm1825, %v2290, 0.0
        %2306 = vadd.xlane.f32.xlu0 %v2305
        %v2307 = vpop.xlane.xlu0 %2306
        %v2308 = vsel %vm1825, %v2292, 0.0
        %2309 = vadd.xlane.f32.xlu0 %v2308
        %v2310 = vpop.xlane.xlu0 %2309
        %v2311 = vsel %vm1825, %v2294, 0.0
        %2312 = vadd.xlane.f32.xlu0 %v2311
        %v2313 = vpop.xlane.xlu0 %2312
        %v2314 = vsel %vm1825, %v2296, 0.0
        %2315 = vadd.xlane.f32.xlu0 %v2314
        %v2316 = vpop.xlane.xlu0 %2315
        %v2317 = vsel %vm1825, %v2298, 0.0
        %2318 = vadd.xlane.f32.xlu0 %v2317
        %v2319 = vpop.xlane.xlu0 %2318
        %v2320 = vsel %vm1825, %v2300, 0.0
        %2321 = vadd.xlane.f32.xlu0 %v2320
        %v2322 = vpop.xlane.xlu0 %2321
        %v2323 = vsel %vm1825, %v2302, 0.0
        %2324 = vadd.xlane.f32.xlu0 %v2323
        %v2325 = vpop.xlane.xlu0 %2324
        %v2326 = vsel %vm1825, %v2304, 0.0
        %2327 = vadd.xlane.f32.xlu0 %v2326
        %v2328 = vpop.xlane.xlu0 %2327
        %v2329 = vrcp.pop %v2307
        %v2330 = vrcp.pop %v2310
        %v2331 = vrcp.pop %v2313
        %v2332 = vrcp.pop %v2316
        %v2333 = vrcp.pop %v2319
        %v2334 = vrcp.pop %v2322
        %v2335 = vrcp.pop %v2325
        %v2336 = vrcp.pop %v2328
        %v2337 = vmul.f32 %v2290, %v2329
        %v2338 = vmul.f32 %v2292, %v2330
        %v2339 = vmul.f32 %v2294, %v2331
        %v2340 = vmul.f32 %v2296, %v2332
        %v2341 = vmul.f32 %v2298, %v2333
        %v2342 = vmul.f32 %v2300, %v2334
        %v2343 = vmul.f32 %v2302, %v2335
        %v2344 = vmul.f32 %v2304, %v2336
        %v2345 = vpack.c.bf16 %v2338, %v2337
        %v2346 = vpack.c.bf16 %v2340, %v2339
        %v2347 = vpack.c.bf16 %v2342, %v2341
        %v2348 = vpack.c.bf16 %v2344, %v2343
        %2349 = vrot.lane.b32.xlu0 %v2052, 96
        %v2350 = vpop.permute.xlu0 %2349
        %v2353 = vsel %vm1825, %v2345, 0
        %2355 = vmatprep.subr.bf16.mxu0 0
        %2356 = vmatpush1.bf16.msra.mxu0 %v2350
        %2357 = vmatprep.subr.bf16.mxu0 0
        %2358 = vmatpush1.bf16.msra.mxu0 0
        %2359 = vmatprep.subr.bf16.mxu0 0
        %2360 = vmatpush1.bf16.msra.mxu0 0
        %2361 = vmatprep.subr.bf16.mxu0 0
        %2362 = vmatpush1.bf16.msra.mxu0 0
        %2363 = vmatprep.subr.bf16.mxu0 0
        %2364 = vmatpush1.bf16.msra.mxu0 0
        %2365 = vmatprep.subr.bf16.mxu0 0
        %2366 = vmatpush1.bf16.msra.mxu0 0
        %2367 = vmatprep.subr.bf16.mxu0 0
        %2368 = vmatpush1.bf16.msra.mxu0 0
        %2369 = vmatprep.subr.bf16.mxu0 0
        %2370 = vmatpush1.bf16.msra.mxu0 0
        %2371 = vmatprep.subr.bf16.mxu0 0
        %2372 = vmatpush1.bf16.msra.mxu0 0
        %2373 = vmatprep.subr.bf16.mxu0 0
        %2374 = vmatpush1.bf16.msra.mxu0 0
        %2375 = vmatprep.subr.bf16.mxu0 0
        %2376 = vmatpush1.bf16.msra.mxu0 0
        %2377 = vmatprep.subr.bf16.mxu0 0
        %2378 = vmatpush1.bf16.msra.mxu0 0
        %2379 = vmatprep.subr.bf16.mxu0 0
        %2380 = vmatpush1.bf16.msra.mxu0 0
        %2381 = vmatprep.subr.bf16.mxu0 0
        %2382 = vmatpush1.bf16.msra.mxu0 0
        %2383 = vmatprep.subr.bf16.mxu0 0
        %2384 = vmatpush1.bf16.msra.mxu0 0
        %2385 = vmatprep.subr.bf16.mxu0 0
        %2386 = vmatpush1.bf16.msra.mxu0 0
        %2387 = vmatprep.mubr.bf16.mxu0 0
        %2388 = vmatmul.mubr.bf16.gmra.mrb[0].mxu0 %v2353
        %v2389 = vpop.f32.mrb[0].mxu0
        %v2390 = vadd.f32 0.0, %v2389
        %v2391 = vpop.f32.mrb[0].mxu0
        %v2392 = vpop.f32.mrb[0].mxu0
        %v2393 = vadd.f32 0.0, %v2392
        %v2394 = vpop.f32.mrb[0].mxu0
        %2395 = vdwg.mxu0
        %2396 = vrot.lane.b32.xlu0 %v2053, 96
        %v2397 = vpop.permute.xlu0 %2396
        %v2400 = vsel %vm1825, %v2346, 0
        %2402 = vmatprep.subr.bf16.mxu0 0
        %2403 = vmatpush1.bf16.msra.mxu0 %v2397
        %2404 = vmatprep.subr.bf16.mxu0 0
        %2405 = vmatpush1.bf16.msra.mxu0 0
        %2406 = vmatprep.subr.bf16.mxu0 0
        %2407 = vmatpush1.bf16.msra.mxu0 0
        %2408 = vmatprep.subr.bf16.mxu0 0
        %2409 = vmatpush1.bf16.msra.mxu0 0
        %2410 = vmatprep.subr.bf16.mxu0 0
        %2411 = vmatpush1.bf16.msra.mxu0 0
        %2412 = vmatprep.subr.bf16.mxu0 0
        %2413 = vmatpush1.bf16.msra.mxu0 0
        %2414 = vmatprep.subr.bf16.mxu0 0
        %2415 = vmatpush1.bf16.msra.mxu0 0
        %2416 = vmatprep.subr.bf16.mxu0 0
        %2417 = vmatpush1.bf16.msra.mxu0 0
        %2418 = vmatprep.subr.bf16.mxu0 0
        %2419 = vmatpush1.bf16.msra.mxu0 0
        %2420 = vmatprep.subr.bf16.mxu0 0
        %2421 = vmatpush1.bf16.msra.mxu0 0
        %2422 = vmatprep.subr.bf16.mxu0 0
        %2423 = vmatpush1.bf16.msra.mxu0 0
        %2424 = vmatprep.subr.bf16.mxu0 0
        %2425 = vmatpush1.bf16.msra.mxu0 0
        %2426 = vmatprep.subr.bf16.mxu0 0
        %2427 = vmatpush1.bf16.msra.mxu0 0
        %2428 = vmatprep.subr.bf16.mxu0 0
        %2429 = vmatpush1.bf16.msra.mxu0 0
        %2430 = vmatprep.subr.bf16.mxu0 0
        %2431 = vmatpush1.bf16.msra.mxu0 0
        %2432 = vmatprep.subr.bf16.mxu0 0
        %2433 = vmatpush1.bf16.msra.mxu0 0
        %2434 = vmatprep.mubr.bf16.mxu0 0
        %2435 = vmatmul.mubr.bf16.gmra.mrb[0].mxu0 %v2400
        %v2436 = vpop.f32.mrb[0].mxu0
        %v2437 = vadd.f32 0.0, %v2436
        %v2438 = vpop.f32.mrb[0].mxu0
        %v2439 = vpop.f32.mrb[0].mxu0
        %v2440 = vadd.f32 0.0, %v2439
        %v2441 = vpop.f32.mrb[0].mxu0
        %2442 = vdwg.mxu0
        %2443 = vrot.lane.b32.xlu0 %v2054, 96
        %v2444 = vpop.permute.xlu0 %2443
        %v2447 = vsel %vm1825, %v2347, 0
        %2449 = vmatprep.subr.bf16.mxu0 0
        %2450 = vmatpush1.bf16.msra.mxu0 %v2444
        %2451 = vmatprep.subr.bf16.mxu0 0
        %2452 = vmatpush1.bf16.msra.mxu0 0
        %2453 = vmatprep.subr.bf16.mxu0 0
        %2454 = vmatpush1.bf16.msra.mxu0 0
        %2455 = vmatprep.subr.bf16.mxu0 0
        %2456 = vmatpush1.bf16.msra.mxu0 0
        %2457 = vmatprep.subr.bf16.mxu0 0
        %2458 = vmatpush1.bf16.msra.mxu0 0
        %2459 = vmatprep.subr.bf16.mxu0 0
        %2460 = vmatpush1.bf16.msra.mxu0 0
        %2461 = vmatprep.subr.bf16.mxu0 0
        %2462 = vmatpush1.bf16.msra.mxu0 0
        %2463 = vmatprep.subr.bf16.mxu0 0
        %2464 = vmatpush1.bf16.msra.mxu0 0
        %2465 = vmatprep.subr.bf16.mxu0 0
        %2466 = vmatpush1.bf16.msra.mxu0 0
        %2467 = vmatprep.subr.bf16.mxu0 0
        %2468 = vmatpush1.bf16.msra.mxu0 0
        %2469 = vmatprep.subr.bf16.mxu0 0
        %2470 = vmatpush1.bf16.msra.mxu0 0
        %2471 = vmatprep.subr.bf16.mxu0 0
        %2472 = vmatpush1.bf16.msra.mxu0 0
        %2473 = vmatprep.subr.bf16.mxu0 0
        %2474 = vmatpush1.bf16.msra.mxu0 0
        %2475 = vmatprep.subr.bf16.mxu0 0
        %2476 = vmatpush1.bf16.msra.mxu0 0
        %2477 = vmatprep.subr.bf16.mxu0 0
        %2478 = vmatpush1.bf16.msra.mxu0 0
        %2479 = vmatprep.subr.bf16.mxu0 0
        %2480 = vmatpush1.bf16.msra.mxu0 0
        %2481 = vmatprep.mubr.bf16.mxu0 0
        %2482 = vmatmul.mubr.bf16.gmra.mrb[0].mxu0 %v2447
        %v2483 = vpop.f32.mrb[0].mxu0
        %v2484 = vadd.f32 0.0, %v2483
        %v2485 = vpop.f32.mrb[0].mxu0
        %v2486 = vpop.f32.mrb[0].mxu0
        %v2487 = vadd.f32 0.0, %v2486
        %v2488 = vpop.f32.mrb[0].mxu0
        %2489 = vdwg.mxu0
        %2490 = vrot.lane.b32.xlu0 %v2055, 96
        %v2491 = vpop.permute.xlu0 %2490
        %v2494 = vsel %vm1825, %v2348, 0
        %2496 = vmatprep.subr.bf16.mxu0 0
        %2497 = vmatpush1.bf16.msra.mxu0 %v2491
        %2498 = vmatprep.subr.bf16.mxu0 0
        %2499 = vmatpush1.bf16.msra.mxu0 0
        %2500 = vmatprep.subr.bf16.mxu0 0
        %2501 = vmatpush1.bf16.msra.mxu0 0
        %2502 = vmatprep.subr.bf16.mxu0 0
        %2503 = vmatpush1.bf16.msra.mxu0 0
        %2504 = vmatprep.subr.bf16.mxu0 0
        %2505 = vmatpush1.bf16.msra.mxu0 0
        %2506 = vmatprep.subr.bf16.mxu0 0
        %2507 = vmatpush1.bf16.msra.mxu0 0
        %2508 = vmatprep.subr.bf16.mxu0 0
        %2509 = vmatpush1.bf16.msra.mxu0 0
        %2510 = vmatprep.subr.bf16.mxu0 0
        %2511 = vmatpush1.bf16.msra.mxu0 0
        %2512 = vmatprep.subr.bf16.mxu0 0
        %2513 = vmatpush1.bf16.msra.mxu0 0
        %2514 = vmatprep.subr.bf16.mxu0 0
        %2515 = vmatpush1.bf16.msra.mxu0 0
        %2516 = vmatprep.subr.bf16.mxu0 0
        %2517 = vmatpush1.bf16.msra.mxu0 0
        %2518 = vmatprep.subr.bf16.mxu0 0
        %2519 = vmatpush1.bf16.msra.mxu0 0
        %2520 = vmatprep.subr.bf16.mxu0 0
        %2521 = vmatpush1.bf16.msra.mxu0 0
        %2522 = vmatprep.subr.bf16.mxu0 0
        %2523 = vmatpush1.bf16.msra.mxu0 0
        %2524 = vmatprep.subr.bf16.mxu0 0
        %2525 = vmatpush1.bf16.msra.mxu0 0
        %2526 = vmatprep.subr.bf16.mxu0 0
        %2527 = vmatpush1.bf16.msra.mxu0 0
        %2528 = vmatprep.mubr.bf16.mxu0 0
        %2529 = vmatmul.mubr.bf16.gmra.mrb[0].mxu0 %v2494
        %v2530 = vpop.f32.mrb[0].mxu0
        %v2531 = vadd.f32 0.0, %v2530
        %v2532 = vpop.f32.mrb[0].mxu0
        %v2533 = vpop.f32.mrb[0].mxu0
        %v2534 = vadd.f32 0.0, %v2533
        %v2535 = vpop.f32.mrb[0].mxu0
        %2536 = vdwg.mxu0
        %2537 = vrot.lane.b32.xlu0 %v2052, 120
        %v2538 = vpop.permute.xlu0 %2537
        %2539 = vrot.lane.b32.xlu0 %v2052, 104
        %v2540 = vpop.permute.xlu0 %2539
        %v2542 = vsel %vm2059, %v2538, 0
        %v2545 = vsel %vm2059, %v2540, 0
        %2547 = vmatprep.subr.bf16.mxu0 0
        %2548 = vmatpush1.bf16.xpose.msra.mxu0 %v2545
        %2549 = vmatprep.subr.bf16.mxu0 0
        %2550 = vmatpush1.bf16.xpose.msra.mxu0 0
        %2551 = vmatprep.subr.bf16.mxu0 0
        %2552 = vmatpush1.bf16.xpose.msra.mxu0 0
        %2553 = vmatprep.subr.bf16.mxu0 0
        %2554 = vmatpush1.bf16.xpose.msra.mxu0 0
        %2555 = vmatprep.subr.bf16.mxu0 0
        %2556 = vmatpush1.bf16.xpose.msra.mxu0 0
        %2557 = vmatprep.subr.bf16.mxu0 0
        %2558 = vmatpush1.bf16.xpose.msra.mxu0 0
        %2559 = vmatprep.subr.bf16.mxu0 0
        %2560 = vmatpush1.bf16.xpose.msra.mxu0 0
        %2561 = vmatprep.subr.bf16.mxu0 0
        %2562 = vmatpush1.bf16.xpose.msra.mxu0 0
        %2563 = vmatprep.subr.bf16.mxu0 0
        %2564 = vmatpush1.bf16.xpose.msra.mxu0 0
        %2565 = vmatprep.subr.bf16.mxu0 0
        %2566 = vmatpush1.bf16.xpose.msra.mxu0 0
        %2567 = vmatprep.subr.bf16.mxu0 0
        %2568 = vmatpush1.bf16.xpose.msra.mxu0 0
        %2569 = vmatprep.subr.bf16.mxu0 0
        %2570 = vmatpush1.bf16.xpose.msra.mxu0 0
        %2571 = vmatprep.subr.bf16.mxu0 0
        %2572 = vmatpush1.bf16.xpose.msra.mxu0 0
        %2573 = vmatprep.subr.bf16.mxu0 0
        %2574 = vmatpush1.bf16.xpose.msra.mxu0 0
        %2575 = vmatprep.subr.bf16.mxu0 0
        %2576 = vmatpush1.bf16.xpose.msra.mxu0 0
        %2577 = vmatprep.subr.bf16.mxu0 0
        %2578 = vmatpush1.bf16.xpose.msra.mxu0 0
        %2579 = vmatprep.mubr.bf16.mxu0 0
        %2580 = vmatmul.mubr.bf16.gmra.mrb[0].mxu0 %v2542
        %v2581 = vpop.f32.mrb[0].mxu0
        %v2582 = vadd.f32 0.0, %v2581
        %v2583 = vpop.f32.mrb[0].mxu0
        %v2584 = vpop.f32.mrb[0].mxu0
        %v2585 = vadd.f32 0.0, %v2584
        %v2586 = vpop.f32.mrb[0].mxu0
        %2587 = vdwg.mxu0
        %2588 = vrot.lane.b32.xlu0 %v2053, 120
        %v2589 = vpop.permute.xlu0 %2588
        %2590 = vrot.lane.b32.xlu0 %v2053, 104
        %v2591 = vpop.permute.xlu0 %2590
        %v2593 = vsel %vm2059, %v2589, 0
        %v2596 = vsel %vm2059, %v2591, 0
        %2598 = vmatprep.subr.bf16.mxu0 0
        %2599 = vmatpush1.bf16.xpose.msra.mxu0 %v2596
        %2600 = vmatprep.subr.bf16.mxu0 0
        %2601 = vmatpush1.bf16.xpose.msra.mxu0 0
        %2602 = vmatprep.subr.bf16.mxu0 0
        %2603 = vmatpush1.bf16.xpose.msra.mxu0 0
        %2604 = vmatprep.subr.bf16.mxu0 0
        %2605 = vmatpush1.bf16.xpose.msra.mxu0 0
        %2606 = vmatprep.subr.bf16.mxu0 0
        %2607 = vmatpush1.bf16.xpose.msra.mxu0 0
        %2608 = vmatprep.subr.bf16.mxu0 0
        %2609 = vmatpush1.bf16.xpose.msra.mxu0 0
        %2610 = vmatprep.subr.bf16.mxu0 0
        %2611 = vmatpush1.bf16.xpose.msra.mxu0 0
        %2612 = vmatprep.subr.bf16.mxu0 0
        %2613 = vmatpush1.bf16.xpose.msra.mxu0 0
        %2614 = vmatprep.subr.bf16.mxu0 0
        %2615 = vmatpush1.bf16.xpose.msra.mxu0 0
        %2616 = vmatprep.subr.bf16.mxu0 0
        %2617 = vmatpush1.bf16.xpose.msra.mxu0 0
        %2618 = vmatprep.subr.bf16.mxu0 0
        %2619 = vmatpush1.bf16.xpose.msra.mxu0 0
        %2620 = vmatprep.subr.bf16.mxu0 0
        %2621 = vmatpush1.bf16.xpose.msra.mxu0 0
        %2622 = vmatprep.subr.bf16.mxu0 0
        %2623 = vmatpush1.bf16.xpose.msra.mxu0 0
        %2624 = vmatprep.subr.bf16.mxu0 0
        %2625 = vmatpush1.bf16.xpose.msra.mxu0 0
        %2626 = vmatprep.subr.bf16.mxu0 0
        %2627 = vmatpush1.bf16.xpose.msra.mxu0 0
        %2628 = vmatprep.subr.bf16.mxu0 0
        %2629 = vmatpush1.bf16.xpose.msra.mxu0 0
        %2630 = vmatprep.mubr.bf16.mxu0 0
        %2631 = vmatmul.mubr.bf16.gmra.mrb[0].mxu0 %v2593
        %v2632 = vpop.f32.mrb[0].mxu0
        %v2633 = vadd.f32 0.0, %v2632
        %v2634 = vpop.f32.mrb[0].mxu0
        %v2635 = vpop.f32.mrb[0].mxu0
        %v2636 = vadd.f32 0.0, %v2635
        %v2637 = vpop.f32.mrb[0].mxu0
        %2638 = vdwg.mxu0
        %2639 = vrot.lane.b32.xlu0 %v2054, 120
        %v2640 = vpop.permute.xlu0 %2639
        %2641 = vrot.lane.b32.xlu0 %v2054, 104
        %v2642 = vpop.permute.xlu0 %2641
        %v2644 = vsel %vm2059, %v2640, 0
        %v2647 = vsel %vm2059, %v2642, 0
        %2649 = vmatprep.subr.bf16.mxu0 0
        %2650 = vmatpush1.bf16.xpose.msra.mxu0 %v2647
        %2651 = vmatprep.subr.bf16.mxu0 0
        %2652 = vmatpush1.bf16.xpose.msra.mxu0 0
        %2653 = vmatprep.subr.bf16.mxu0 0
        %2654 = vmatpush1.bf16.xpose.msra.mxu0 0
        %2655 = vmatprep.subr.bf16.mxu0 0
        %2656 = vmatpush1.bf16.xpose.msra.mxu0 0
        %2657 = vmatprep.subr.bf16.mxu0 0
        %2658 = vmatpush1.bf16.xpose.msra.mxu0 0
        %2659 = vmatprep.subr.bf16.mxu0 0
        %2660 = vmatpush1.bf16.xpose.msra.mxu0 0
        %2661 = vmatprep.subr.bf16.mxu0 0
        %2662 = vmatpush1.bf16.xpose.msra.mxu0 0
        %2663 = vmatprep.subr.bf16.mxu0 0
        %2664 = vmatpush1.bf16.xpose.msra.mxu0 0
        %2665 = vmatprep.subr.bf16.mxu0 0
        %2666 = vmatpush1.bf16.xpose.msra.mxu0 0
        %2667 = vmatprep.subr.bf16.mxu0 0
        %2668 = vmatpush1.bf16.xpose.msra.mxu0 0
        %2669 = vmatprep.subr.bf16.mxu0 0
        %2670 = vmatpush1.bf16.xpose.msra.mxu0 0
        %2671 = vmatprep.subr.bf16.mxu0 0
        %2672 = vmatpush1.bf16.xpose.msra.mxu0 0
        %2673 = vmatprep.subr.bf16.mxu0 0
        %2674 = vmatpush1.bf16.xpose.msra.mxu0 0
        %2675 = vmatprep.subr.bf16.mxu0 0
        %2676 = vmatpush1.bf16.xpose.msra.mxu0 0
        %2677 = vmatprep.subr.bf16.mxu0 0
        %2678 = vmatpush1.bf16.xpose.msra.mxu0 0
        %2679 = vmatprep.subr.bf16.mxu0 0
        %2680 = vmatpush1.bf16.xpose.msra.mxu0 0
        %2681 = vmatprep.mubr.bf16.mxu0 0
        %2682 = vmatmul.mubr.bf16.gmra.mrb[0].mxu0 %v2644
        %v2683 = vpop.f32.mrb[0].mxu0
        %v2684 = vadd.f32 0.0, %v2683
        %v2685 = vpop.f32.mrb[0].mxu0
        %v2686 = vpop.f32.mrb[0].mxu0
        %v2687 = vadd.f32 0.0, %v2686
        %v2688 = vpop.f32.mrb[0].mxu0
        %2689 = vdwg.mxu0
        %2690 = vrot.lane.b32.xlu0 %v2055, 120
        %v2691 = vpop.permute.xlu0 %2690
        %2692 = vrot.lane.b32.xlu0 %v2055, 104
        %v2693 = vpop.permute.xlu0 %2692
        %v2695 = vsel %vm2059, %v2691, 0
        %v2698 = vsel %vm2059, %v2693, 0
        %2700 = vmatprep.subr.bf16.mxu0 0
        %2701 = vmatpush1.bf16.xpose.msra.mxu0 %v2698
        %2702 = vmatprep.subr.bf16.mxu0 0
        %2703 = vmatpush1.bf16.xpose.msra.mxu0 0
        %2704 = vmatprep.subr.bf16.mxu0 0
        %2705 = vmatpush1.bf16.xpose.msra.mxu0 0
        %2706 = vmatprep.subr.bf16.mxu0 0
        %2707 = vmatpush1.bf16.xpose.msra.mxu0 0
        %2708 = vmatprep.subr.bf16.mxu0 0
        %2709 = vmatpush1.bf16.xpose.msra.mxu0 0
        %2710 = vmatprep.subr.bf16.mxu0 0
        %2711 = vmatpush1.bf16.xpose.msra.mxu0 0
        %2712 = vmatprep.subr.bf16.mxu0 0
        %2713 = vmatpush1.bf16.xpose.msra.mxu0 0
        %2714 = vmatprep.subr.bf16.mxu0 0
        %2715 = vmatpush1.bf16.xpose.msra.mxu0 0
        %2716 = vmatprep.subr.bf16.mxu0 0
        %2717 = vmatpush1.bf16.xpose.msra.mxu0 0
        %2718 = vmatprep.subr.bf16.mxu0 0
        %2719 = vmatpush1.bf16.xpose.msra.mxu0 0
        %2720 = vmatprep.subr.bf16.mxu0 0
        %2721 = vmatpush1.bf16.xpose.msra.mxu0 0
        %2722 = vmatprep.subr.bf16.mxu0 0
        %2723 = vmatpush1.bf16.xpose.msra.mxu0 0
        %2724 = vmatprep.subr.bf16.mxu0 0
        %2725 = vmatpush1.bf16.xpose.msra.mxu0 0
        %2726 = vmatprep.subr.bf16.mxu0 0
        %2727 = vmatpush1.bf16.xpose.msra.mxu0 0
        %2728 = vmatprep.subr.bf16.mxu0 0
        %2729 = vmatpush1.bf16.xpose.msra.mxu0 0
        %2730 = vmatprep.subr.bf16.mxu0 0
        %2731 = vmatpush1.bf16.xpose.msra.mxu0 0
        %2732 = vmatprep.mubr.bf16.mxu0 0
        %2733 = vmatmul.mubr.bf16.gmra.mrb[0].mxu0 %v2695
        %v2734 = vpop.f32.mrb[0].mxu0
        %v2735 = vadd.f32 0.0, %v2734
        %v2736 = vpop.f32.mrb[0].mxu0
        %v2737 = vpop.f32.mrb[0].mxu0
        %v2738 = vadd.f32 0.0, %v2737
        %v2739 = vpop.f32.mrb[0].mxu0
        %2740 = vdwg.mxu0
        %v2741 = vsel %vm1825, %v2582, -inf
        %2742 = vmax.xlane.f32.xlu0 %v2741
        %v2743 = vpop.xlane.xlu0 %2742
        %v2744 = vsel %vm1825, %v2585, -inf
        %2745 = vmax.xlane.f32.xlu0 %v2744
        %v2746 = vpop.xlane.xlu0 %2745
        %v2747 = vsel %vm1825, %v2633, -inf
        %2748 = vmax.xlane.f32.xlu0 %v2747
        %v2749 = vpop.xlane.xlu0 %2748
        %v2750 = vsel %vm1825, %v2636, -inf
        %2751 = vmax.xlane.f32.xlu0 %v2750
        %v2752 = vpop.xlane.xlu0 %2751
        %v2753 = vsel %vm1825, %v2684, -inf
        %2754 = vmax.xlane.f32.xlu0 %v2753
        %v2755 = vpop.xlane.xlu0 %2754
        %v2756 = vsel %vm1825, %v2687, -inf
        %2757 = vmax.xlane.f32.xlu0 %v2756
        %v2758 = vpop.xlane.xlu0 %2757
        %v2759 = vsel %vm1825, %v2735, -inf
        %2760 = vmax.xlane.f32.xlu0 %v2759
        %v2761 = vpop.xlane.xlu0 %2760
        %v2762 = vsel %vm1825, %v2738, -inf
        %2763 = vmax.xlane.f32.xlu0 %v2762
        %v2764 = vpop.xlane.xlu0 %2763
        %v2765 = vsub.f32 %v2582, %v2743
        %v2766 = vsub.f32 %v2585, %v2746
        %v2767 = vsub.f32 %v2633, %v2749
        %v2768 = vsub.f32 %v2636, %v2752
        %v2769 = vsub.f32 %v2684, %v2755
        %v2770 = vsub.f32 %v2687, %v2758
        %v2771 = vsub.f32 %v2735, %v2761
        %v2772 = vsub.f32 %v2738, %v2764
        %v2773 = vmul.f32 %v2765, 1.442695
        %v2774 = vpow.pop %v2773
        %v2775 = vmul.f32 %v2766, 1.442695
        %v2776 = vpow.pop %v2775
        %v2777 = vmul.f32 %v2767, 1.442695
        %v2778 = vpow.pop %v2777
        %v2779 = vmul.f32 %v2768, 1.442695
        %v2780 = vpow.pop %v2779
        %v2781 = vmul.f32 %v2769, 1.442695
        %v2782 = vpow.pop %v2781
        %v2783 = vmul.f32 %v2770, 1.442695
        %v2784 = vpow.pop %v2783
        %v2785 = vmul.f32 %v2771, 1.442695
        %v2786 = vpow.pop %v2785
        %v2787 = vmul.f32 %v2772, 1.442695
        %v2788 = vpow.pop %v2787
        %v2789 = vsel %vm1825, %v2774, 0.0
        %2790 = vadd.xlane.f32.xlu0 %v2789
        %v2791 = vpop.xlane.xlu0 %2790
        %v2792 = vsel %vm1825, %v2776, 0.0
        %2793 = vadd.xlane.f32.xlu0 %v2792
        %v2794 = vpop.xlane.xlu0 %2793
        %v2795 = vsel %vm1825, %v2778, 0.0
        %2796 = vadd.xlane.f32.xlu0 %v2795
        %v2797 = vpop.xlane.xlu0 %2796
        %v2798 = vsel %vm1825, %v2780, 0.0
        %2799 = vadd.xlane.f32.xlu0 %v2798
        %v2800 = vpop.xlane.xlu0 %2799
        %v2801 = vsel %vm1825, %v2782, 0.0
        %2802 = vadd.xlane.f32.xlu0 %v2801
        %v2803 = vpop.xlane.xlu0 %2802
        %v2804 = vsel %vm1825, %v2784, 0.0
        %2805 = vadd.xlane.f32.xlu0 %v2804
        %v2806 = vpop.xlane.xlu0 %2805
        %v2807 = vsel %vm1825, %v2786, 0.0
        %2808 = vadd.xlane.f32.xlu0 %v2807
        %v2809 = vpop.xlane.xlu0 %2808
        %v2810 = vsel %vm1825, %v2788, 0.0
        %2811 = vadd.xlane.f32.xlu0 %v2810
        %v2812 = vpop.xlane.xlu0 %2811
        %v2813 = vrcp.pop %v2791
        %v2814 = vrcp.pop %v2794
        %v2815 = vrcp.pop %v2797
        %v2816 = vrcp.pop %v2800
        %v2817 = vrcp.pop %v2803
        %v2818 = vrcp.pop %v2806
        %v2819 = vrcp.pop %v2809
        %v2820 = vrcp.pop %v2812
        %v2821 = vmul.f32 %v2774, %v2813
        %v2822 = vmul.f32 %v2776, %v2814
        %v2823 = vmul.f32 %v2778, %v2815
        %v2824 = vmul.f32 %v2780, %v2816
        %v2825 = vmul.f32 %v2782, %v2817
        %v2826 = vmul.f32 %v2784, %v2818
        %v2827 = vmul.f32 %v2786, %v2819
        %v2828 = vmul.f32 %v2788, %v2820
        %v2829 = vpack.c.bf16 %v2822, %v2821
        %v2830 = vpack.c.bf16 %v2824, %v2823
        %v2831 = vpack.c.bf16 %v2826, %v2825
        %v2832 = vpack.c.bf16 %v2828, %v2827
        %2833 = vrot.lane.b32.xlu0 %v2052, 88
        %v2834 = vpop.permute.xlu0 %2833
        %v2837 = vsel %vm1825, %v2829, 0
        %2839 = vmatprep.subr.bf16.mxu0 0
        %2840 = vmatpush1.bf16.msra.mxu0 %v2834
        %2841 = vmatprep.subr.bf16.mxu0 0
        %2842 = vmatpush1.bf16.msra.mxu0 0
        %2843 = vmatprep.subr.bf16.mxu0 0
        %2844 = vmatpush1.bf16.msra.mxu0 0
        %2845 = vmatprep.subr.bf16.mxu0 0
        %2846 = vmatpush1.bf16.msra.mxu0 0
        %2847 = vmatprep.subr.bf16.mxu0 0
        %2848 = vmatpush1.bf16.msra.mxu0 0
        %2849 = vmatprep.subr.bf16.mxu0 0
        %2850 = vmatpush1.bf16.msra.mxu0 0
        %2851 = vmatprep.subr.bf16.mxu0 0
        %2852 = vmatpush1.bf16.msra.mxu0 0
        %2853 = vmatprep.subr.bf16.mxu0 0
        %2854 = vmatpush1.bf16.msra.mxu0 0
        %2855 = vmatprep.subr.bf16.mxu0 0
        %2856 = vmatpush1.bf16.msra.mxu0 0
        %2857 = vmatprep.subr.bf16.mxu0 0
        %2858 = vmatpush1.bf16.msra.mxu0 0
        %2859 = vmatprep.subr.bf16.mxu0 0
        %2860 = vmatpush1.bf16.msra.mxu0 0
        %2861 = vmatprep.subr.bf16.mxu0 0
        %2862 = vmatpush1.bf16.msra.mxu0 0
        %2863 = vmatprep.subr.bf16.mxu0 0
        %2864 = vmatpush1.bf16.msra.mxu0 0
        %2865 = vmatprep.subr.bf16.mxu0 0
        %2866 = vmatpush1.bf16.msra.mxu0 0
        %2867 = vmatprep.subr.bf16.mxu0 0
        %2868 = vmatpush1.bf16.msra.mxu0 0
        %2869 = vmatprep.subr.bf16.mxu0 0
        %2870 = vmatpush1.bf16.msra.mxu0 0
        %2871 = vmatprep.mubr.bf16.mxu0 0
        %2872 = vmatmul.mubr.bf16.gmra.mrb[0].mxu0 %v2837
        %v2873 = vpop.f32.mrb[0].mxu0
        %v2874 = vadd.f32 0.0, %v2873
        %v2875 = vpop.f32.mrb[0].mxu0
        %v2876 = vpop.f32.mrb[0].mxu0
        %v2877 = vadd.f32 0.0, %v2876
        %v2878 = vpop.f32.mrb[0].mxu0
        %2879 = vdwg.mxu0
        %2880 = vrot.lane.b32.xlu0 %v2053, 88
        %v2881 = vpop.permute.xlu0 %2880
        %v2884 = vsel %vm1825, %v2830, 0
        %2886 = vmatprep.subr.bf16.mxu0 0
        %2887 = vmatpush1.bf16.msra.mxu0 %v2881
        %2888 = vmatprep.subr.bf16.mxu0 0
        %2889 = vmatpush1.bf16.msra.mxu0 0
        %2890 = vmatprep.subr.bf16.mxu0 0
        %2891 = vmatpush1.bf16.msra.mxu0 0
        %2892 = vmatprep.subr.bf16.mxu0 0
        %2893 = vmatpush1.bf16.msra.mxu0 0
        %2894 = vmatprep.subr.bf16.mxu0 0
        %2895 = vmatpush1.bf16.msra.mxu0 0
        %2896 = vmatprep.subr.bf16.mxu0 0
        %2897 = vmatpush1.bf16.msra.mxu0 0
        %2898 = vmatprep.subr.bf16.mxu0 0
        %2899 = vmatpush1.bf16.msra.mxu0 0
        %2900 = vmatprep.subr.bf16.mxu0 0
        %2901 = vmatpush1.bf16.msra.mxu0 0
        %2902 = vmatprep.subr.bf16.mxu0 0
        %2903 = vmatpush1.bf16.msra.mxu0 0
        %2904 = vmatprep.subr.bf16.mxu0 0
        %2905 = vmatpush1.bf16.msra.mxu0 0
        %2906 = vmatprep.subr.bf16.mxu0 0
        %2907 = vmatpush1.bf16.msra.mxu0 0
        %2908 = vmatprep.subr.bf16.mxu0 0
        %2909 = vmatpush1.bf16.msra.mxu0 0
        %2910 = vmatprep.subr.bf16.mxu0 0
        %2911 = vmatpush1.bf16.msra.mxu0 0
        %2912 = vmatprep.subr.bf16.mxu0 0
        %2913 = vmatpush1.bf16.msra.mxu0 0
        %2914 = vmatprep.subr.bf16.mxu0 0
        %2915 = vmatpush1.bf16.msra.mxu0 0
        %2916 = vmatprep.subr.bf16.mxu0 0
        %2917 = vmatpush1.bf16.msra.mxu0 0
        %2918 = vmatprep.mubr.bf16.mxu0 0
        %2919 = vmatmul.mubr.bf16.gmra.mrb[0].mxu0 %v2884
        %v2920 = vpop.f32.mrb[0].mxu0
        %v2921 = vadd.f32 0.0, %v2920
        %v2922 = vpop.f32.mrb[0].mxu0
        %v2923 = vpop.f32.mrb[0].mxu0
        %v2924 = vadd.f32 0.0, %v2923
        %v2925 = vpop.f32.mrb[0].mxu0
        %2926 = vdwg.mxu0
        %2927 = vrot.lane.b32.xlu0 %v2054, 88
        %v2928 = vpop.permute.xlu0 %2927
        %v2931 = vsel %vm1825, %v2831, 0
        %2933 = vmatprep.subr.bf16.mxu0 0
        %2934 = vmatpush1.bf16.msra.mxu0 %v2928
        %2935 = vmatprep.subr.bf16.mxu0 0
        %2936 = vmatpush1.bf16.msra.mxu0 0
        %2937 = vmatprep.subr.bf16.mxu0 0
        %2938 = vmatpush1.bf16.msra.mxu0 0
        %2939 = vmatprep.subr.bf16.mxu0 0
        %2940 = vmatpush1.bf16.msra.mxu0 0
        %2941 = vmatprep.subr.bf16.mxu0 0
        %2942 = vmatpush1.bf16.msra.mxu0 0
        %2943 = vmatprep.subr.bf16.mxu0 0
        %2944 = vmatpush1.bf16.msra.mxu0 0
        %2945 = vmatprep.subr.bf16.mxu0 0
        %2946 = vmatpush1.bf16.msra.mxu0 0
        %2947 = vmatprep.subr.bf16.mxu0 0
        %2948 = vmatpush1.bf16.msra.mxu0 0
        %2949 = vmatprep.subr.bf16.mxu0 0
        %2950 = vmatpush1.bf16.msra.mxu0 0
        %2951 = vmatprep.subr.bf16.mxu0 0
        %2952 = vmatpush1.bf16.msra.mxu0 0
        %2953 = vmatprep.subr.bf16.mxu0 0
        %2954 = vmatpush1.bf16.msra.mxu0 0
        %2955 = vmatprep.subr.bf16.mxu0 0
        %2956 = vmatpush1.bf16.msra.mxu0 0
        %2957 = vmatprep.subr.bf16.mxu0 0
        %2958 = vmatpush1.bf16.msra.mxu0 0
        %2959 = vmatprep.subr.bf16.mxu0 0
        %2960 = vmatpush1.bf16.msra.mxu0 0
        %2961 = vmatprep.subr.bf16.mxu0 0
        %2962 = vmatpush1.bf16.msra.mxu0 0
        %2963 = vmatprep.subr.bf16.mxu0 0
        %2964 = vmatpush1.bf16.msra.mxu0 0
        %2965 = vmatprep.mubr.bf16.mxu0 0
        %2966 = vmatmul.mubr.bf16.gmra.mrb[0].mxu0 %v2931
        %v2967 = vpop.f32.mrb[0].mxu0
        %v2968 = vadd.f32 0.0, %v2967
        %v2969 = vpop.f32.mrb[0].mxu0
        %v2970 = vpop.f32.mrb[0].mxu0
        %v2971 = vadd.f32 0.0, %v2970
        %v2972 = vpop.f32.mrb[0].mxu0
        %2973 = vdwg.mxu0
        %2974 = vrot.lane.b32.xlu0 %v2055, 88
        %v2975 = vpop.permute.xlu0 %2974
        %v2978 = vsel %vm1825, %v2832, 0
        %2980 = vmatprep.subr.bf16.mxu0 0
        %2981 = vmatpush1.bf16.msra.mxu0 %v2975
        %2982 = vmatprep.subr.bf16.mxu0 0
        %2983 = vmatpush1.bf16.msra.mxu0 0
        %2984 = vmatprep.subr.bf16.mxu0 0
        %2985 = vmatpush1.bf16.msra.mxu0 0
        %2986 = vmatprep.subr.bf16.mxu0 0
        %2987 = vmatpush1.bf16.msra.mxu0 0
        %2988 = vmatprep.subr.bf16.mxu0 0
        %2989 = vmatpush1.bf16.msra.mxu0 0
        %2990 = vmatprep.subr.bf16.mxu0 0
        %2991 = vmatpush1.bf16.msra.mxu0 0
        %2992 = vmatprep.subr.bf16.mxu0 0
        %2993 = vmatpush1.bf16.msra.mxu0 0
        %2994 = vmatprep.subr.bf16.mxu0 0
        %2995 = vmatpush1.bf16.msra.mxu0 0
        %2996 = vmatprep.subr.bf16.mxu0 0
        %2997 = vmatpush1.bf16.msra.mxu0 0
        %2998 = vmatprep.subr.bf16.mxu0 0
        %2999 = vmatpush1.bf16.msra.mxu0 0
        %3000 = vmatprep.subr.bf16.mxu0 0
        %3001 = vmatpush1.bf16.msra.mxu0 0
        %3002 = vmatprep.subr.bf16.mxu0 0
        %3003 = vmatpush1.bf16.msra.mxu0 0
        %3004 = vmatprep.subr.bf16.mxu0 0
        %3005 = vmatpush1.bf16.msra.mxu0 0
        %3006 = vmatprep.subr.bf16.mxu0 0
        %3007 = vmatpush1.bf16.msra.mxu0 0
        %3008 = vmatprep.subr.bf16.mxu0 0
        %3009 = vmatpush1.bf16.msra.mxu0 0
        %3010 = vmatprep.subr.bf16.mxu0 0
        %3011 = vmatpush1.bf16.msra.mxu0 0
        %3012 = vmatprep.mubr.bf16.mxu0 0
        %3013 = vmatmul.mubr.bf16.gmra.mrb[0].mxu0 %v2978
        %v3014 = vpop.f32.mrb[0].mxu0
        %v3015 = vadd.f32 0.0, %v3014
        %v3016 = vpop.f32.mrb[0].mxu0
        %v3017 = vpop.f32.mrb[0].mxu0
        %v3018 = vadd.f32 0.0, %v3017
        %v3019 = vpop.f32.mrb[0].mxu0
        %3020 = vdwg.mxu0
        %3029 = vrot.lane.b32.xlu0 %v2874, 8
        %v3030 = vpop.permute.xlu0 %3029
        %3031 = vrot.lane.b32.xlu0 %v2877, 8
        %v3032 = vpop.permute.xlu0 %3031
        %3033 = vrot.lane.b32.xlu0 %v2921, 8
        %v3034 = vpop.permute.xlu0 %3033
        %3035 = vrot.lane.b32.xlu0 %v2924, 8
        %v3036 = vpop.permute.xlu0 %3035
        %3037 = vrot.lane.b32.xlu0 %v2968, 8
        %v3038 = vpop.permute.xlu0 %3037
        %3039 = vrot.lane.b32.xlu0 %v2971, 8
        %v3040 = vpop.permute.xlu0 %3039
        %3041 = vrot.lane.b32.xlu0 %v3015, 8
        %v3042 = vpop.permute.xlu0 %3041
        %3043 = vrot.lane.b32.xlu0 %v3018, 8
        %v3044 = vpop.permute.xlu0 %3043
        %v3053 = vsel %vm2059, %v2390, %v3030
        %v3054 = vsel %vm2059, %v2393, %v3032
        %v3055 = vsel %vm2059, %v2437, %v3034
        %v3056 = vsel %vm2059, %v2440, %v3036
        %v3057 = vsel %vm2059, %v2484, %v3038
        %v3058 = vsel %vm2059, %v2487, %v3040
        %v3059 = vsel %vm2059, %v2531, %v3042
        %v3060 = vsel %vm2059, %v2534, %v3044
        %v3061 = vpack.c.bf16 %v3054, %v3053
        %v3062 = vpack.c.bf16 %v3056, %v3055
        %v3063 = vpack.c.bf16 %v3058, %v3057
        %v3064 = vpack.c.bf16 %v3060, %v3059
        %v3066 = vlaneseq
        %v3067 = vshrl.u32 %v3066, 7
        %v3068 = vsub.s32 0, %v3067
        %v3069 = vrot.slane %v1590, %v3068
        %v3073 = vunpack.c.l.b16 %v1588
        %v3074 = vunpack.c.l.b16 %v1589
        %v3075 = vpack.c.b16 %v3074, %v3073
        %v3078 = vsel %vm1825, %v3061, 0
        %v3081 = vsel %vm1825, %v3062, 0
        %v3084 = vsel %vm1825, %v3063, 0
        %v3087 = vsel %vm1825, %v3064, 0
        %3089 = vmatprep.subr.bf16.mxu0 0
        %3090 = vmatpush1.bf16.msra.mxu0 %v3075
        %3091 = vmatprep.subr.bf16.mxu0 0
        %3092 = vmatpush1.bf16.msra.mxu0 0
        %3093 = vmatprep.subr.bf16.mxu0 0
        %3094 = vmatpush1.bf16.msra.mxu0 0
        %3095 = vmatprep.subr.bf16.mxu0 0
        %3096 = vmatpush1.bf16.msra.mxu0 0
        %3097 = vmatprep.subr.bf16.mxu0 0
        %3098 = vmatpush1.bf16.msra.mxu0 0
        %3099 = vmatprep.subr.bf16.mxu0 0
        %3100 = vmatpush1.bf16.msra.mxu0 0
        %3101 = vmatprep.subr.bf16.mxu0 0
        %3102 = vmatpush1.bf16.msra.mxu0 0
        %3103 = vmatprep.subr.bf16.mxu0 0
        %3104 = vmatpush1.bf16.msra.mxu0 0
        %3105 = vmatprep.subr.bf16.mxu0 0
        %3106 = vmatpush1.bf16.msra.mxu0 0
        %3107 = vmatprep.subr.bf16.mxu0 0
        %3108 = vmatpush1.bf16.msra.mxu0 0
        %3109 = vmatprep.subr.bf16.mxu0 0
        %3110 = vmatpush1.bf16.msra.mxu0 0
        %3111 = vmatprep.subr.bf16.mxu0 0
        %3112 = vmatpush1.bf16.msra.mxu0 0
        %3113 = vmatprep.subr.bf16.mxu0 0
        %3114 = vmatpush1.bf16.msra.mxu0 0
        %3115 = vmatprep.subr.bf16.mxu0 0
        %3116 = vmatpush1.bf16.msra.mxu0 0
        %3117 = vmatprep.subr.bf16.mxu0 0
        %3118 = vmatpush1.bf16.msra.mxu0 0
        %3119 = vmatprep.subr.bf16.mxu0 0
        %3120 = vmatpush1.bf16.msra.mxu0 0
        %3121 = vmatprep.mubr.bf16.mxu0 0
        %3122 = vmatmul.mubr.bf16.gmra.mrb[0].mxu0 %v3078
        %v3123 = vpop.f32.mrb[0].mxu0
        %v3124 = vadd.f32 %v3069, %v3123
        %v3125 = vpop.f32.mrb[0].mxu0
        %v3126 = vpop.f32.mrb[0].mxu0
        %v3127 = vadd.f32 %v3069, %v3126
        %v3128 = vpop.f32.mrb[0].mxu0
        %3129 = vmatprep.mubr.bf16.mxu0 0
        %3130 = vmatmul.mubr.bf16.gmra.mrb[0].mxu0 %v3081
        %v3131 = vpop.f32.mrb[0].mxu0
        %v3132 = vadd.f32 %v3069, %v3131
        %v3133 = vpop.f32.mrb[0].mxu0
        %v3134 = vpop.f32.mrb[0].mxu0
        %v3135 = vadd.f32 %v3069, %v3134
        %v3136 = vpop.f32.mrb[0].mxu0
        %3137 = vmatprep.mubr.bf16.mxu0 0
        %3138 = vmatmul.mubr.bf16.gmra.mrb[0].mxu0 %v3084
        %v3139 = vpop.f32.mrb[0].mxu0
        %v3140 = vadd.f32 %v3069, %v3139
        %v3141 = vpop.f32.mrb[0].mxu0
        %v3142 = vpop.f32.mrb[0].mxu0
        %v3143 = vadd.f32 %v3069, %v3142
        %v3144 = vpop.f32.mrb[0].mxu0
        %3145 = vmatprep.mubr.bf16.mxu0 0
        %3146 = vmatmul.mubr.bf16.gmra.mrb[0].mxu0 %v3087
        %v3147 = vpop.f32.mrb[0].mxu0
        %v3148 = vadd.f32 %v3069, %v3147
        %v3149 = vpop.f32.mrb[0].mxu0
        %v3150 = vpop.f32.mrb[0].mxu0
        %v3151 = vadd.f32 %v3069, %v3150
        %v3152 = vpop.f32.mrb[0].mxu0
        %3153 = vdwg.mxu0
        %v3154 = vadd.f32 %v1816, %v3124
        %v3155 = vadd.f32 %v1817, %v3127
        %v3156 = vadd.f32 %v1818, %v3132
        %v3157 = vadd.f32 %v1819, %v3135
        %v3158 = vadd.f32 %v1820, %v3140
        %v3159 = vadd.f32 %v1821, %v3143
        %v3160 = vadd.f32 %v1822, %v3148
        %v3161 = vadd.f32 %v1823, %v3151
        %v3162 = vsel %vm1825, %v3154, 0.0
        %3163 = vadd.xlane.f32.xlu0 %v3162
        %v3164 = vpop.xlane.xlu0 %3163
        %v3165 = vsel %vm1825, %v3155, 0.0
        %3166 = vadd.xlane.f32.xlu0 %v3165
        %v3167 = vpop.xlane.xlu0 %3166
        %v3168 = vsel %vm1825, %v3156, 0.0
        %3169 = vadd.xlane.f32.xlu0 %v3168
        %v3170 = vpop.xlane.xlu0 %3169
        %v3171 = vsel %vm1825, %v3157, 0.0
        %3172 = vadd.xlane.f32.xlu0 %v3171
        %v3173 = vpop.xlane.xlu0 %3172
        %v3174 = vsel %vm1825, %v3158, 0.0
        %3175 = vadd.xlane.f32.xlu0 %v3174
        %v3176 = vpop.xlane.xlu0 %3175
        %v3177 = vsel %vm1825, %v3159, 0.0
        %3178 = vadd.xlane.f32.xlu0 %v3177
        %v3179 = vpop.xlane.xlu0 %3178
        %v3180 = vsel %vm1825, %v3160, 0.0
        %3181 = vadd.xlane.f32.xlu0 %v3180
        %v3182 = vpop.xlane.xlu0 %3181
        %v3183 = vsel %vm1825, %v3161, 0.0
        %3184 = vadd.xlane.f32.xlu0 %v3183
        %v3185 = vpop.xlane.xlu0 %3184
        %v3186 = vmul.f32 %v3164, %v1850
        %v3187 = vmul.f32 %v3167, %v1850
        %v3188 = vmul.f32 %v3170, %v1850
        %v3189 = vmul.f32 %v3173, %v1850
        %v3190 = vmul.f32 %v3176, %v1850
        %v3191 = vmul.f32 %v3179, %v1850
        %v3192 = vmul.f32 %v3182, %v1850
        %v3193 = vmul.f32 %v3185, %v1850
        %v3194 = vsub.f32 %v3154, %v3186
        %v3195 = vsub.f32 %v3155, %v3187
        %v3196 = vsub.f32 %v3156, %v3188
        %v3197 = vsub.f32 %v3157, %v3189
        %v3198 = vsub.f32 %v3158, %v3190
        %v3199 = vsub.f32 %v3159, %v3191
        %v3200 = vsub.f32 %v3160, %v3192
        %v3201 = vsub.f32 %v3161, %v3193
        %v3202 = vmul.f32 %v3194, %v3194
        %v3203 = vmul.f32 %v3195, %v3195
        %v3204 = vmul.f32 %v3196, %v3196
        %v3205 = vmul.f32 %v3197, %v3197
        %v3206 = vmul.f32 %v3198, %v3198
        %v3207 = vmul.f32 %v3199, %v3199
        %v3208 = vmul.f32 %v3200, %v3200
        %v3209 = vmul.f32 %v3201, %v3201
        %v3210 = vsel %vm1825, %v3202, 0.0
        %3211 = vadd.xlane.f32.xlu0 %v3210
        %v3212 = vpop.xlane.xlu0 %3211
        %v3213 = vsel %vm1825, %v3203, 0.0
        %3214 = vadd.xlane.f32.xlu0 %v3213
        %v3215 = vpop.xlane.xlu0 %3214
        %v3216 = vsel %vm1825, %v3204, 0.0
        %3217 = vadd.xlane.f32.xlu0 %v3216
        %v3218 = vpop.xlane.xlu0 %3217
        %v3219 = vsel %vm1825, %v3205, 0.0
        %3220 = vadd.xlane.f32.xlu0 %v3219
        %v3221 = vpop.xlane.xlu0 %3220
        %v3222 = vsel %vm1825, %v3206, 0.0
        %3223 = vadd.xlane.f32.xlu0 %v3222
        %v3224 = vpop.xlane.xlu0 %3223
        %v3225 = vsel %vm1825, %v3207, 0.0
        %3226 = vadd.xlane.f32.xlu0 %v3225
        %v3227 = vpop.xlane.xlu0 %3226
        %v3228 = vsel %vm1825, %v3208, 0.0
        %3229 = vadd.xlane.f32.xlu0 %v3228
        %v3230 = vpop.xlane.xlu0 %3229
        %v3231 = vsel %vm1825, %v3209, 0.0
        %3232 = vadd.xlane.f32.xlu0 %v3231
        %v3233 = vpop.xlane.xlu0 %3232
        %v3234 = vmul.f32 %v3212, %v1850
        %v3235 = vmul.f32 %v3215, %v1850
        %v3236 = vmul.f32 %v3218, %v1850
        %v3237 = vmul.f32 %v3221, %v1850
        %v3238 = vmul.f32 %v3224, %v1850
        %v3239 = vmul.f32 %v3227, %v1850
        %v3240 = vmul.f32 %v3230, %v1850
        %v3241 = vmul.f32 %v3233, %v1850
        %v3242 = vadd.f32 %v3234, 1e-05
        %v3243 = vadd.f32 %v3235, 1e-05
        %v3244 = vadd.f32 %v3236, 1e-05
        %v3245 = vadd.f32 %v3237, 1e-05
        %v3246 = vadd.f32 %v3238, 1e-05
        %v3247 = vadd.f32 %v3239, 1e-05
        %v3248 = vadd.f32 %v3240, 1e-05
        %v3249 = vadd.f32 %v3241, 1e-05
        %v3250 = vrsqrt.pop %v3242
        %v3251 = vrsqrt.pop %v3243
        %v3252 = vrsqrt.pop %v3244
        %v3253 = vrsqrt.pop %v3245
        %v3254 = vrsqrt.pop %v3246
        %v3255 = vrsqrt.pop %v3247
        %v3256 = vrsqrt.pop %v3248
        %v3257 = vrsqrt.pop %v3249
        %v3258 = vmul.f32 %v3194, %v3250
        %v3259 = vmul.f32 %v3195, %v3251
        %v3260 = vmul.f32 %v3196, %v3252
        %v3261 = vmul.f32 %v3197, %v3253
        %v3262 = vmul.f32 %v3198, %v3254
        %v3263 = vmul.f32 %v3199, %v3255
        %v3264 = vmul.f32 %v3200, %v3256
        %v3265 = vmul.f32 %v3201, %v3257
        %v3267 = vlaneseq
        %v3268 = vshrl.u32 %v3267, 7
        %v3269 = vsub.s32 0, %v3268
        %v3270 = vrot.slane %v1591, %v3269
        %v3272 = vmul.f32 %v3258, %v3270
        %v3273 = vmul.f32 %v3259, %v3270
        %v3274 = vmul.f32 %v3260, %v3270
        %v3275 = vmul.f32 %v3261, %v3270
        %v3276 = vmul.f32 %v3262, %v3270
        %v3277 = vmul.f32 %v3263, %v3270
        %v3278 = vmul.f32 %v3264, %v3270
        %v3279 = vmul.f32 %v3265, %v3270
        %v3281 = vlaneseq
        %v3282 = vshrl.u32 %v3281, 7
        %v3283 = vsub.s32 0, %v3282
        %v3284 = vrot.slane %v1592, %v3283
        %v3286 = vadd.f32 %v3272, %v3284
        %v3287 = vadd.f32 %v3273, %v3284
        %v3288 = vadd.f32 %v3274, %v3284
        %v3289 = vadd.f32 %v3275, %v3284
        %v3290 = vadd.f32 %v3276, %v3284
        %v3291 = vadd.f32 %v3277, %v3284
        %v3292 = vadd.f32 %v3278, %v3284
        %v3293 = vadd.f32 %v3279, %v3284
        %v3294 = vpack.c.bf16 %v3287, %v3286
        %v3295 = vpack.c.bf16 %v3289, %v3288
        %v3296 = vpack.c.bf16 %v3291, %v3290
        %v3297 = vpack.c.bf16 %v3293, %v3292
        %v3299 = vlaneseq
        %v3300 = vshrl.u32 %v3299, 7
        %v3301 = vsub.s32 0, %v3300
        %v3302 = vrot.slane %v1595, %v3301
        %v3306 = vunpack.c.l.b16 %v1593
        %v3307 = vunpack.c.l.b16 %v1594
        %v3308 = vpack.c.b16 %v3307, %v3306
        %v3311 = vsel %vm1825, %v3294, 0
        %v3314 = vsel %vm1825, %v3295, 0
        %v3317 = vsel %vm1825, %v3296, 0
        %v3320 = vsel %vm1825, %v3297, 0
        %3322 = vmatprep.subr.bf16.mxu0 0
        %3323 = vmatpush1.bf16.msra.mxu0 %v3308
        %3324 = vmatprep.subr.bf16.mxu0 0
        %3325 = vmatpush1.bf16.msra.mxu0 0
        %3326 = vmatprep.subr.bf16.mxu0 0
        %3327 = vmatpush1.bf16.msra.mxu0 0
        %3328 = vmatprep.subr.bf16.mxu0 0
        %3329 = vmatpush1.bf16.msra.mxu0 0
        %3330 = vmatprep.subr.bf16.mxu0 0
        %3331 = vmatpush1.bf16.msra.mxu0 0
        %3332 = vmatprep.subr.bf16.mxu0 0
        %3333 = vmatpush1.bf16.msra.mxu0 0
        %3334 = vmatprep.subr.bf16.mxu0 0
        %3335 = vmatpush1.bf16.msra.mxu0 0
        %3336 = vmatprep.subr.bf16.mxu0 0
        %3337 = vmatpush1.bf16.msra.mxu0 0
        %3338 = vmatprep.subr.bf16.mxu0 0
        %3339 = vmatpush1.bf16.msra.mxu0 0
        %3340 = vmatprep.subr.bf16.mxu0 0
        %3341 = vmatpush1.bf16.msra.mxu0 0
        %3342 = vmatprep.subr.bf16.mxu0 0
        %3343 = vmatpush1.bf16.msra.mxu0 0
        %3344 = vmatprep.subr.bf16.mxu0 0
        %3345 = vmatpush1.bf16.msra.mxu0 0
        %3346 = vmatprep.subr.bf16.mxu0 0
        %3347 = vmatpush1.bf16.msra.mxu0 0
        %3348 = vmatprep.subr.bf16.mxu0 0
        %3349 = vmatpush1.bf16.msra.mxu0 0
        %3350 = vmatprep.subr.bf16.mxu0 0
        %3351 = vmatpush1.bf16.msra.mxu0 0
        %3352 = vmatprep.subr.bf16.mxu0 0
        %3353 = vmatpush1.bf16.msra.mxu0 0
        %3354 = vmatprep.mubr.bf16.mxu0 0
        %3355 = vmatmul.mubr.bf16.gmra.mrb[0].mxu0 %v3311
        %v3356 = vpop.f32.mrb[0].mxu0
        %v3357 = vadd.f32 %v3302, %v3356
        %v3358 = vpop.f32.mrb[0].mxu0
        %v3359 = vpop.f32.mrb[0].mxu0
        %v3360 = vadd.f32 %v3302, %v3359
        %v3361 = vpop.f32.mrb[0].mxu0
        %3362 = vmatprep.mubr.bf16.mxu0 0
        %3363 = vmatmul.mubr.bf16.gmra.mrb[0].mxu0 %v3314
        %v3364 = vpop.f32.mrb[0].mxu0
        %v3365 = vadd.f32 %v3302, %v3364
        %v3366 = vpop.f32.mrb[0].mxu0
        %v3367 = vpop.f32.mrb[0].mxu0
        %v3368 = vadd.f32 %v3302, %v3367
        %v3369 = vpop.f32.mrb[0].mxu0
        %3370 = vmatprep.mubr.bf16.mxu0 0
        %3371 = vmatmul.mubr.bf16.gmra.mrb[0].mxu0 %v3317
        %v3372 = vpop.f32.mrb[0].mxu0
        %v3373 = vadd.f32 %v3302, %v3372
        %v3374 = vpop.f32.mrb[0].mxu0
        %v3375 = vpop.f32.mrb[0].mxu0
        %v3376 = vadd.f32 %v3302, %v3375
        %v3377 = vpop.f32.mrb[0].mxu0
        %3378 = vmatprep.mubr.bf16.mxu0 0
        %3379 = vmatmul.mubr.bf16.gmra.mrb[0].mxu0 %v3320
        %v3380 = vpop.f32.mrb[0].mxu0
        %v3381 = vadd.f32 %v3302, %v3380
        %v3382 = vpop.f32.mrb[0].mxu0
        %v3383 = vpop.f32.mrb[0].mxu0
        %v3384 = vadd.f32 %v3302, %v3383
        %v3385 = vpop.f32.mrb[0].mxu0
        %3386 = vdwg.mxu0
        %v3387 = vmul.f32 %v3357, 0.5
        %v3388 = vmul.f32 %v3360, 0.5
        %v3389 = vmul.f32 %v3365, 0.5
        %v3390 = vmul.f32 %v3368, 0.5
        %v3391 = vmul.f32 %v3373, 0.5
        %v3392 = vmul.f32 %v3376, 0.5
        %v3393 = vmul.f32 %v3381, 0.5
        %v3394 = vmul.f32 %v3384, 0.5
        %v3395 = vmul.f32 %v3357, 0.044715
        %v3396 = vmul.f32 %v3360, 0.044715
        %v3397 = vmul.f32 %v3365, 0.044715
        %v3398 = vmul.f32 %v3368, 0.044715
        %v3399 = vmul.f32 %v3373, 0.044715
        %v3400 = vmul.f32 %v3376, 0.044715
        %v3401 = vmul.f32 %v3381, 0.044715
        %v3402 = vmul.f32 %v3384, 0.044715
        %v3403 = vmul.f32 %v3395, %v3357
        %v3404 = vmul.f32 %v3396, %v3360
        %v3405 = vmul.f32 %v3397, %v3365
        %v3406 = vmul.f32 %v3398, %v3368
        %v3407 = vmul.f32 %v3399, %v3373
        %v3408 = vmul.f32 %v3400, %v3376
        %v3409 = vmul.f32 %v3401, %v3381
        %v3410 = vmul.f32 %v3402, %v3384
        %v3411 = vmul.f32 %v3403, %v3357
        %v3412 = vmul.f32 %v3404, %v3360
        %v3413 = vmul.f32 %v3405, %v3365
        %v3414 = vmul.f32 %v3406, %v3368
        %v3415 = vmul.f32 %v3407, %v3373
        %v3416 = vmul.f32 %v3408, %v3376
        %v3417 = vmul.f32 %v3409, %v3381
        %v3418 = vmul.f32 %v3410, %v3384
        %v3419 = vadd.f32 %v3357, %v3411
        %v3420 = vadd.f32 %v3360, %v3412
        %v3421 = vadd.f32 %v3365, %v3413
        %v3422 = vadd.f32 %v3368, %v3414
        %v3423 = vadd.f32 %v3373, %v3415
        %v3424 = vadd.f32 %v3376, %v3416
        %v3425 = vadd.f32 %v3381, %v3417
        %v3426 = vadd.f32 %v3384, %v3418
        %v3427 = vmul.f32 %v3419, 0.7978846
        %v3428 = vmul.f32 %v3420, 0.7978846
        %v3429 = vmul.f32 %v3421, 0.7978846
        %v3430 = vmul.f32 %v3422, 0.7978846
        %v3431 = vmul.f32 %v3423, 0.7978846
        %v3432 = vmul.f32 %v3424, 0.7978846
        %v3433 = vmul.f32 %v3425, 0.7978846
        %v3434 = vmul.f32 %v3426, 0.7978846
        %v3435 = vtanh.pop %v3427
        %v3436 = vtanh.pop %v3428
        %v3437 = vtanh.pop %v3429
        %v3438 = vtanh.pop %v3430
        %v3439 = vtanh.pop %v3431
        %v3440 = vtanh.pop %v3432
        %v3441 = vtanh.pop %v3433
        %v3442 = vtanh.pop %v3434
        %v3443 = vadd.f32 %v3435, 1.0
        %v3444 = vadd.f32 %v3436, 1.0
        %v3445 = vadd.f32 %v3437, 1.0
        %v3446 = vadd.f32 %v3438, 1.0
        %v3447 = vadd.f32 %v3439, 1.0
        %v3448 = vadd.f32 %v3440, 1.0
        %v3449 = vadd.f32 %v3441, 1.0
        %v3450 = vadd.f32 %v3442, 1.0
        %v3451 = vmul.f32 %v3387, %v3443
        %v3452 = vmul.f32 %v3388, %v3444
        %v3453 = vmul.f32 %v3389, %v3445
        %v3454 = vmul.f32 %v3390, %v3446
        %v3455 = vmul.f32 %v3391, %v3447
        %v3456 = vmul.f32 %v3392, %v3448
        %v3457 = vmul.f32 %v3393, %v3449
        %v3458 = vmul.f32 %v3394, %v3450
        %v3459 = vpack.c.bf16 %v3452, %v3451
        %v3460 = vpack.c.bf16 %v3454, %v3453
        %v3461 = vpack.c.bf16 %v3456, %v3455
        %v3462 = vpack.c.bf16 %v3458, %v3457
        %v3471 = vunpack.c.l.b16 %v1596
        %v3472 = vunpack.c.l.b16 %v1597
        %v3473 = vunpack.c.l.b16 %v1598
        %v3474 = vunpack.c.l.b16 %v1599
        %v3475 = vunpack.c.l.b16 %v1600
        %v3476 = vunpack.c.l.b16 %v1601
        %v3477 = vunpack.c.l.b16 %v1602
        %v3478 = vunpack.c.l.b16 %v1603
        %v3479 = vpack.c.b16 %v3472, %v3471
        %v3480 = vpack.c.b16 %v3474, %v3473
        %v3481 = vpack.c.b16 %v3476, %v3475
        %v3482 = vpack.c.b16 %v3478, %v3477
        %vm3487 = vcmask 523264
        %v3489 = vsel %vm3487, %v3459, 0
        %v3492 = vsel %vm3487, %v3460, 0
        %v3495 = vsel %vm3487, %v3461, 0
        %v3498 = vsel %vm3487, %v3462, 0
        %3500 = vmatprep.subr.bf16.mxu0 0
        %3501 = vmatpush1.bf16.msra.mxu0 %v3479
        %3502 = vmatprep.subr.bf16.mxu0 0
        %3503 = vmatpush1.bf16.msra.mxu0 %v3480
        %3504 = vmatprep.subr.bf16.mxu0 0
        %3505 = vmatpush1.bf16.msra.mxu0 %v3481
        %3506 = vmatprep.subr.bf16.mxu0 0
        %3507 = vmatpush1.bf16.msra.mxu0 %v3482
        %3508 = vmatprep.subr.bf16.mxu0 0
        %3509 = vmatpush1.bf16.msra.mxu0 0
        %3510 = vmatprep.subr.bf16.mxu0 0
        %3511 = vmatpush1.bf16.msra.mxu0 0
        %3512 = vmatprep.subr.bf16.mxu0 0
        %3513 = vmatpush1.bf16.msra.mxu0 0
        %3514 = vmatprep.subr.bf16.mxu0 0
        %3515 = vmatpush1.bf16.msra.mxu0 0
        %3516 = vmatprep.subr.bf16.mxu0 0
        %3517 = vmatpush1.bf16.msra.mxu0 0
        %3518 = vmatprep.subr.bf16.mxu0 0
        %3519 = vmatpush1.bf16.msra.mxu0 0
        %3520 = vmatprep.subr.bf16.mxu0 0
        %3521 = vmatpush1.bf16.msra.mxu0 0
        %3522 = vmatprep.subr.bf16.mxu0 0
        %3523 = vmatpush1.bf16.msra.mxu0 0
        %3524 = vmatprep.subr.bf16.mxu0 0
        %3525 = vmatpush1.bf16.msra.mxu0 0
        %3526 = vmatprep.subr.bf16.mxu0 0
        %3527 = vmatpush1.bf16.msra.mxu0 0
        %3528 = vmatprep.subr.bf16.mxu0 0
        %3529 = vmatpush1.bf16.msra.mxu0 0
        %3530 = vmatprep.subr.bf16.mxu0 0
        %3531 = vmatpush1.bf16.msra.mxu0 0
        %3532 = vmatprep.mubr.bf16.mxu0 0
        %3533 = vmatmul.mubr.bf16.gmra.mrb[0].mxu0 %v3489
        %v3534 = vpop.f32.mrb[0].mxu0
        %v3535 = vadd.f32 0.0, %v3534
        %v3536 = vpop.f32.mrb[0].mxu0
        %v3537 = vpop.f32.mrb[0].mxu0
        %v3538 = vadd.f32 0.0, %v3537
        %v3539 = vpop.f32.mrb[0].mxu0
        %3540 = vmatprep.mubr.bf16.mxu0 0
        %3541 = vmatmul.mubr.bf16.gmra.mrb[0].mxu0 %v3492
        %v3542 = vpop.f32.mrb[0].mxu0
        %v3543 = vadd.f32 0.0, %v3542
        %v3544 = vpop.f32.mrb[0].mxu0
        %v3545 = vpop.f32.mrb[0].mxu0
        %v3546 = vadd.f32 0.0, %v3545
        %v3547 = vpop.f32.mrb[0].mxu0
        %3548 = vmatprep.mubr.bf16.mxu0 0
        %3549 = vmatmul.mubr.bf16.gmra.mrb[0].mxu0 %v3495
        %v3550 = vpop.f32.mrb[0].mxu0
        %v3551 = vadd.f32 0.0, %v3550
        %v3552 = vpop.f32.mrb[0].mxu0
        %v3553 = vpop.f32.mrb[0].mxu0
        %v3554 = vadd.f32 0.0, %v3553
        %v3555 = vpop.f32.mrb[0].mxu0
        %3556 = vmatprep.mubr.bf16.mxu0 0
        %3557 = vmatmul.mubr.bf16.gmra.mrb[0].mxu0 %v3498
        %v3558 = vpop.f32.mrb[0].mxu0
        %v3559 = vadd.f32 0.0, %v3558
        %v3560 = vpop.f32.mrb[0].mxu0
        %v3561 = vpop.f32.mrb[0].mxu0
        %v3562 = vadd.f32 0.0, %v3561
        %v3563 = vpop.f32.mrb[0].mxu0
        %3564 = vdwg.mxu0
        %v3565 = vadd.f32 %v3154, %v3535
        %v3566 = vadd.f32 %v3155, %v3538
        %v3567 = vadd.f32 %v3156, %v3543
        %v3568 = vadd.f32 %v3157, %v3546
        %v3569 = vadd.f32 %v3158, %v3551
        %v3570 = vadd.f32 %v3159, %v3554
        %v3571 = vadd.f32 %v3160, %v3559
        %v3572 = vadd.f32 %v3161, %v3562
        %v3574 = vlaneseq
        %v3575 = vshrl.u32 %v3574, 7
        %v3576 = vsub.s32 0, %v3575
        %v3577 = vrot.slane %v1604, %v3576
        %v3579 = vadd.f32 %v3565, %v3577
        %v3580 = vadd.f32 %v3566, %v3577
        %v3581 = vadd.f32 %v3567, %v3577
        %v3582 = vadd.f32 %v3568, %v3577
        %v3583 = vadd.f32 %v3569, %v3577
        %v3584 = vadd.f32 %v3570, %v3577
        %v3585 = vadd.f32 %v3571, %v3577
        %v3586 = vadd.f32 %v3572, %v3577
        %v3587 = vsel %vm1825, %v3579, 0.0
        %3588 = vadd.xlane.f32.xlu0 %v3587
        %v3589 = vpop.xlane.xlu0 %3588
        %v3590 = vsel %vm1825, %v3580, 0.0
        %3591 = vadd.xlane.f32.xlu0 %v3590
        %v3592 = vpop.xlane.xlu0 %3591
        %v3593 = vsel %vm1825, %v3581, 0.0
        %3594 = vadd.xlane.f32.xlu0 %v3593
        %v3595 = vpop.xlane.xlu0 %3594
        %v3596 = vsel %vm1825, %v3582, 0.0
        %3597 = vadd.xlane.f32.xlu0 %v3596
        %v3598 = vpop.xlane.xlu0 %3597
        %v3599 = vsel %vm1825, %v3583, 0.0
        %3600 = vadd.xlane.f32.xlu0 %v3599
        %v3601 = vpop.xlane.xlu0 %3600
        %v3602 = vsel %vm1825, %v3584, 0.0
        %3603 = vadd.xlane.f32.xlu0 %v3602
        %v3604 = vpop.xlane.xlu0 %3603
        %v3605 = vsel %vm1825, %v3585, 0.0
        %3606 = vadd.xlane.f32.xlu0 %v3605
        %v3607 = vpop.xlane.xlu0 %3606
        %v3608 = vsel %vm1825, %v3586, 0.0
        %3609 = vadd.xlane.f32.xlu0 %v3608
        %v3610 = vpop.xlane.xlu0 %3609
        %v3611 = vmul.f32 %v3589, %v1850
        %v3612 = vmul.f32 %v3592, %v1850
        %v3613 = vmul.f32 %v3595, %v1850
        %v3614 = vmul.f32 %v3598, %v1850
        %v3615 = vmul.f32 %v3601, %v1850
        %v3616 = vmul.f32 %v3604, %v1850
        %v3617 = vmul.f32 %v3607, %v1850
        %v3618 = vmul.f32 %v3610, %v1850
        %v3619 = vsub.f32 %v3579, %v3611
        %v3620 = vsub.f32 %v3580, %v3612
        %v3621 = vsub.f32 %v3581, %v3613
        %v3622 = vsub.f32 %v3582, %v3614
        %v3623 = vsub.f32 %v3583, %v3615
        %v3624 = vsub.f32 %v3584, %v3616
        %v3625 = vsub.f32 %v3585, %v3617
        %v3626 = vsub.f32 %v3586, %v3618
        %v3627 = vmul.f32 %v3619, %v3619
        %v3628 = vmul.f32 %v3620, %v3620
        %v3629 = vmul.f32 %v3621, %v3621
        %v3630 = vmul.f32 %v3622, %v3622
        %v3631 = vmul.f32 %v3623, %v3623
        %v3632 = vmul.f32 %v3624, %v3624
        %v3633 = vmul.f32 %v3625, %v3625
        %v3634 = vmul.f32 %v3626, %v3626
        %v3635 = vsel %vm1825, %v3627, 0.0
        %3636 = vadd.xlane.f32.xlu0 %v3635
        %v3637 = vpop.xlane.xlu0 %3636
        %v3638 = vsel %vm1825, %v3628, 0.0
        %3639 = vadd.xlane.f32.xlu0 %v3638
        %v3640 = vpop.xlane.xlu0 %3639
        %v3641 = vsel %vm1825, %v3629, 0.0
        %3642 = vadd.xlane.f32.xlu0 %v3641
        %v3643 = vpop.xlane.xlu0 %3642
        %v3644 = vsel %vm1825, %v3630, 0.0
        %3645 = vadd.xlane.f32.xlu0 %v3644
        %v3646 = vpop.xlane.xlu0 %3645
        %v3647 = vsel %vm1825, %v3631, 0.0
        %3648 = vadd.xlane.f32.xlu0 %v3647
        %v3649 = vpop.xlane.xlu0 %3648
        %v3650 = vsel %vm1825, %v3632, 0.0
        %3651 = vadd.xlane.f32.xlu0 %v3650
        %v3652 = vpop.xlane.xlu0 %3651
        %v3653 = vsel %vm1825, %v3633, 0.0
        %3654 = vadd.xlane.f32.xlu0 %v3653
        %v3655 = vpop.xlane.xlu0 %3654
        %v3656 = vsel %vm1825, %v3634, 0.0
        %3657 = vadd.xlane.f32.xlu0 %v3656
        %v3658 = vpop.xlane.xlu0 %3657
        %v3659 = vmul.f32 %v3637, %v1850
        %v3660 = vmul.f32 %v3640, %v1850
        %v3661 = vmul.f32 %v3643, %v1850
        %v3662 = vmul.f32 %v3646, %v1850
        %v3663 = vmul.f32 %v3649, %v1850
        %v3664 = vmul.f32 %v3652, %v1850
        %v3665 = vmul.f32 %v3655, %v1850
        %v3666 = vmul.f32 %v3658, %v1850
        %v3667 = vadd.f32 %v3659, 1e-05
        %v3668 = vadd.f32 %v3660, 1e-05
        %v3669 = vadd.f32 %v3661, 1e-05
        %v3670 = vadd.f32 %v3662, 1e-05
        %v3671 = vadd.f32 %v3663, 1e-05
        %v3672 = vadd.f32 %v3664, 1e-05
        %v3673 = vadd.f32 %v3665, 1e-05
        %v3674 = vadd.f32 %v3666, 1e-05
        %v3675 = vrsqrt.pop %v3667
        %v3676 = vrsqrt.pop %v3668
        %v3677 = vrsqrt.pop %v3669
        %v3678 = vrsqrt.pop %v3670
        %v3679 = vrsqrt.pop %v3671
        %v3680 = vrsqrt.pop %v3672
        %v3681 = vrsqrt.pop %v3673
        %v3682 = vrsqrt.pop %v3674
        %v3683 = vmul.f32 %v3619, %v3675
        %v3684 = vmul.f32 %v3620, %v3676
        %v3685 = vmul.f32 %v3621, %v3677
        %v3686 = vmul.f32 %v3622, %v3678
        %v3687 = vmul.f32 %v3623, %v3679
        %v3688 = vmul.f32 %v3624, %v3680
        %v3689 = vmul.f32 %v3625, %v3681
        %v3690 = vmul.f32 %v3626, %v3682
        %v3692 = vlaneseq
        %v3693 = vshrl.u32 %v3692, 7
        %v3694 = vsub.s32 0, %v3693
        %v3695 = vrot.slane %v1605, %v3694
        %v3697 = vmul.f32 %v3683, %v3695
        %v3698 = vmul.f32 %v3684, %v3695
        %v3699 = vmul.f32 %v3685, %v3695
        %v3700 = vmul.f32 %v3686, %v3695
        %v3701 = vmul.f32 %v3687, %v3695
        %v3702 = vmul.f32 %v3688, %v3695
        %v3703 = vmul.f32 %v3689, %v3695
        %v3704 = vmul.f32 %v3690, %v3695
        %v3706 = vlaneseq
        %v3707 = vshrl.u32 %v3706, 7
        %v3708 = vsub.s32 0, %v3707
        %v3709 = vrot.slane %v1606, %v3708
        %v3711 = vadd.f32 %v3697, %v3709
        %v3712 = vadd.f32 %v3698, %v3709
        %v3713 = vadd.f32 %v3699, %v3709
        %v3714 = vadd.f32 %v3700, %v3709
        %v3715 = vadd.f32 %v3701, %v3709
        %v3716 = vadd.f32 %v3702, %v3709
        %v3717 = vadd.f32 %v3703, %v3709
        %v3718 = vadd.f32 %v3704, %v3709
        %v3719 = vpack.c.bf16 %v3712, %v3711
        %v3720 = vpack.c.bf16 %v3714, %v3713
        %v3721 = vpack.c.bf16 %v3716, %v3715
        %v3722 = vpack.c.bf16 %v3718, %v3717
        %v3727 = vunpack.c.l.b16 %v3719
        %v3728 = vunpack.c.l.b16 %v3720
        %v3729 = vunpack.c.l.b16 %v3721
        %v3730 = vunpack.c.l.b16 %v3722
        %v3731 = vrot.slane %v3727, 1
        %vm3732 = vcmask 1041409
        %v3733 = vsel %vm3732, %v3728, %v3731
        %v3734 = vrot.slane %v3729, 7
        %vm3735 = vcmask 1042434
        %v3736 = vsel %vm3735, %v3734, %v3733
        %v3737 = vrot.slane %v3730, 6
        %vm3738 = vcmask 1043459
        %v3739 = vsel %vm3738, %v3737, %v3736
        %v3740 = vpack.c.b16 %v3739, %v3739
        %v3743 = vunpack.c.l.b16 %v1609
        %v3744 = vunpack.c.l.b16 %v1610
        %v3745 = vpack.c.b16 %v3744, %v3743
        %v3748 = vsel %vm1825, %v3740, 0
        %3750 = vmatprep.subr.bf16.mxu0 0
        %3751 = vmatpush1.bf16.msra.mxu0 %v3745
        %3752 = vmatprep.subr.bf16.mxu0 0
        %3753 = vmatpush1.bf16.msra.mxu0 0
        %3754 = vmatprep.subr.bf16.mxu0 0
        %3755 = vmatpush1.bf16.msra.mxu0 0
        %3756 = vmatprep.subr.bf16.mxu0 0
        %3757 = vmatpush1.bf16.msra.mxu0 0
        %3758 = vmatprep.subr.bf16.mxu0 0
        %3759 = vmatpush1.bf16.msra.mxu0 0
        %3760 = vmatprep.subr.bf16.mxu0 0
        %3761 = vmatpush1.bf16.msra.mxu0 0
        %3762 = vmatprep.subr.bf16.mxu0 0
        %3763 = vmatpush1.bf16.msra.mxu0 0
        %3764 = vmatprep.subr.bf16.mxu0 0
        %3765 = vmatpush1.bf16.msra.mxu0 0
        %3766 = vmatprep.subr.bf16.mxu0 0
        %3767 = vmatpush1.bf16.msra.mxu0 0
        %3768 = vmatprep.subr.bf16.mxu0 0
        %3769 = vmatpush1.bf16.msra.mxu0 0
        %3770 = vmatprep.subr.bf16.mxu0 0
        %3771 = vmatpush1.bf16.msra.mxu0 0
        %3772 = vmatprep.subr.bf16.mxu0 0
        %3773 = vmatpush1.bf16.msra.mxu0 0
        %3774 = vmatprep.subr.bf16.mxu0 0
        %3775 = vmatpush1.bf16.msra.mxu0 0
        %3776 = vmatprep.subr.bf16.mxu0 0
        %3777 = vmatpush1.bf16.msra.mxu0 0
        %3778 = vmatprep.subr.bf16.mxu0 0
        %3779 = vmatpush1.bf16.msra.mxu0 0
        %3780 = vmatprep.subr.bf16.mxu0 0
        %3781 = vmatpush1.bf16.msra.mxu0 0
        %3782 = vmatprep.mubr.bf16.mxu0 0
        %3783 = vmatmul.mubr.bf16.gmra.mrb[0].mxu0 %v3748
        %v3784 = vpop.f32.mrb[0].mxu0
        %v3785 = vadd.f32 0.0, %v3784
        %v3786 = vpop.f32.mrb[0].mxu0
        %v3787 = vpop.f32.mrb[0].mxu0
        %v3788 = vpop.f32.mrb[0].mxu0
        %3789 = vdwg.mxu0
        %v3790 = vrot.slane %v3728, 7
        %v3791 = vsel %vm3732, %v3790, %v3727
        %v3792 = vrot.slane %v3729, 6
        %v3793 = vsel %vm3735, %v3792, %v3791
        %v3794 = vrot.slane %v3730, 5
        %v3795 = vsel %vm3738, %v3794, %v3793
        %v3796 = vpack.c.b16 %v3795, %v3795
        %v3799 = vunpack.c.l.b16 %v1607
        %v3800 = vunpack.c.l.b16 %v1608
        %v3801 = vpack.c.b16 %v3800, %v3799
        %v3804 = vsel %vm1825, %v3796, 0
        %3806 = vmatprep.subr.bf16.mxu0 0
        %3807 = vmatpush1.bf16.msra.mxu0 %v3801
        %3808 = vmatprep.subr.bf16.mxu0 0
        %3809 = vmatpush1.bf16.msra.mxu0 0
        %3810 = vmatprep.subr.bf16.mxu0 0
        %3811 = vmatpush1.bf16.msra.mxu0 0
        %3812 = vmatprep.subr.bf16.mxu0 0
        %3813 = vmatpush1.bf16.msra.mxu0 0
        %3814 = vmatprep.subr.bf16.mxu0 0
        %3815 = vmatpush1.bf16.msra.mxu0 0
        %3816 = vmatprep.subr.bf16.mxu0 0
        %3817 = vmatpush1.bf16.msra.mxu0 0
        %3818 = vmatprep.subr.bf16.mxu0 0
        %3819 = vmatpush1.bf16.msra.mxu0 0
        %3820 = vmatprep.subr.bf16.mxu0 0
        %3821 = vmatpush1.bf16.msra.mxu0 0
        %3822 = vmatprep.subr.bf16.mxu0 0
        %3823 = vmatpush1.bf16.msra.mxu0 0
        %3824 = vmatprep.subr.bf16.mxu0 0
        %3825 = vmatpush1.bf16.msra.mxu0 0
        %3826 = vmatprep.subr.bf16.mxu0 0
        %3827 = vmatpush1.bf16.msra.mxu0 0
        %3828 = vmatprep.subr.bf16.mxu0 0
        %3829 = vmatpush1.bf16.msra.mxu0 0
        %3830 = vmatprep.subr.bf16.mxu0 0
        %3831 = vmatpush1.bf16.msra.mxu0 0
        %3832 = vmatprep.subr.bf16.mxu0 0
        %3833 = vmatpush1.bf16.msra.mxu0 0
        %3834 = vmatprep.subr.bf16.mxu0 0
        %3835 = vmatpush1.bf16.msra.mxu0 0
        %3836 = vmatprep.subr.bf16.mxu0 0
        %3837 = vmatpush1.bf16.msra.mxu0 0
        %3838 = vmatprep.mubr.bf16.mxu0 0
        %3839 = vmatmul.mubr.bf16.gmra.mrb[0].mxu0 %v3804
        %v3840 = vpop.f32.mrb[0].mxu0
        %v3841 = vadd.f32 %v3785, %v3840
        %v3842 = vpop.f32.mrb[0].mxu0
        %v3843 = vpop.f32.mrb[0].mxu0
        %v3844 = vpop.f32.mrb[0].mxu0
        %3845 = vdwg.mxu0
        %v3846 = vrot.slane %v3727, 2
        %v3847 = vrot.slane %v3728, 1
        %v3848 = vsel %vm3732, %v3847, %v3846
        %v3849 = vsel %vm3735, %v3729, %v3848
        %v3850 = vrot.slane %v3730, 7
        %v3851 = vsel %vm3738, %v3850, %v3849
        %v3852 = vpack.c.b16 %v3851, %v3851
        %v3855 = vunpack.c.l.b16 %v1611
        %v3856 = vunpack.c.l.b16 %v1612
        %v3857 = vpack.c.b16 %v3856, %v3855
        %v3860 = vsel %vm1825, %v3852, 0
        %3862 = vmatprep.subr.bf16.mxu0 0
        %3863 = vmatpush1.bf16.msra.mxu0 %v3857
        %3864 = vmatprep.subr.bf16.mxu0 0
        %3865 = vmatpush1.bf16.msra.mxu0 0
        %3866 = vmatprep.subr.bf16.mxu0 0
        %3867 = vmatpush1.bf16.msra.mxu0 0
        %3868 = vmatprep.subr.bf16.mxu0 0
        %3869 = vmatpush1.bf16.msra.mxu0 0
        %3870 = vmatprep.subr.bf16.mxu0 0
        %3871 = vmatpush1.bf16.msra.mxu0 0
        %3872 = vmatprep.subr.bf16.mxu0 0
        %3873 = vmatpush1.bf16.msra.mxu0 0
        %3874 = vmatprep.subr.bf16.mxu0 0
        %3875 = vmatpush1.bf16.msra.mxu0 0
        %3876 = vmatprep.subr.bf16.mxu0 0
        %3877 = vmatpush1.bf16.msra.mxu0 0
        %3878 = vmatprep.subr.bf16.mxu0 0
        %3879 = vmatpush1.bf16.msra.mxu0 0
        %3880 = vmatprep.subr.bf16.mxu0 0
        %3881 = vmatpush1.bf16.msra.mxu0 0
        %3882 = vmatprep.subr.bf16.mxu0 0
        %3883 = vmatpush1.bf16.msra.mxu0 0
        %3884 = vmatprep.subr.bf16.mxu0 0
        %3885 = vmatpush1.bf16.msra.mxu0 0
        %3886 = vmatprep.subr.bf16.mxu0 0
        %3887 = vmatpush1.bf16.msra.mxu0 0
        %3888 = vmatprep.subr.bf16.mxu0 0
        %3889 = vmatpush1.bf16.msra.mxu0 0
        %3890 = vmatprep.subr.bf16.mxu0 0
        %3891 = vmatpush1.bf16.msra.mxu0 0
        %3892 = vmatprep.subr.bf16.mxu0 0
        %3893 = vmatpush1.bf16.msra.mxu0 0
        %3894 = vmatprep.mubr.bf16.mxu0 0
        %3895 = vmatmul.mubr.bf16.gmra.mrb[0].mxu0 %v3860
        %v3896 = vpop.f32.mrb[0].mxu0
        %v3897 = vadd.f32 0.0, %v3896
        %v3898 = vpop.f32.mrb[0].mxu0
        %v3899 = vpop.f32.mrb[0].mxu0
        %v3900 = vpop.f32.mrb[0].mxu0
        %3901 = vdwg.mxu0
        %v3902 = vadd.f32 %v3841, %v3897
        %v3903 = vrot.slane %v3727, 3
        %v3904 = vrot.slane %v3728, 2
        %v3905 = vsel %vm3732, %v3904, %v3903
        %v3906 = vrot.slane %v3729, 1
        %v3907 = vsel %vm3735, %v3906, %v3905
        %v3908 = vsel %vm3738, %v3730, %v3907
        %v3909 = vpack.c.b16 %v3908, %v3908
        %v3912 = vunpack.c.l.b16 %v1613
        %v3913 = vunpack.c.l.b16 %v1614
        %v3914 = vpack.c.b16 %v3913, %v3912
        %v3917 = vsel %vm1825, %v3909, 0
        %3919 = vmatprep.subr.bf16.mxu0 0
        %3920 = vmatpush1.bf16.msra.mxu0 %v3914
        %3921 = vmatprep.subr.bf16.mxu0 0
        %3922 = vmatpush1.bf16.msra.mxu0 0
        %3923 = vmatprep.subr.bf16.mxu0 0
        %3924 = vmatpush1.bf16.msra.mxu0 0
        %3925 = vmatprep.subr.bf16.mxu0 0
        %3926 = vmatpush1.bf16.msra.mxu0 0
        %3927 = vmatprep.subr.bf16.mxu0 0
        %3928 = vmatpush1.bf16.msra.mxu0 0
        %3929 = vmatprep.subr.bf16.mxu0 0
        %3930 = vmatpush1.bf16.msra.mxu0 0
        %3931 = vmatprep.subr.bf16.mxu0 0
        %3932 = vmatpush1.bf16.msra.mxu0 0
        %3933 = vmatprep.subr.bf16.mxu0 0
        %3934 = vmatpush1.bf16.msra.mxu0 0
        %3935 = vmatprep.subr.bf16.mxu0 0
        %3936 = vmatpush1.bf16.msra.mxu0 0
        %3937 = vmatprep.subr.bf16.mxu0 0
        %3938 = vmatpush1.bf16.msra.mxu0 0
        %3939 = vmatprep.subr.bf16.mxu0 0
        %3940 = vmatpush1.bf16.msra.mxu0 0
        %3941 = vmatprep.subr.bf16.mxu0 0
        %3942 = vmatpush1.bf16.msra.mxu0 0
        %3943 = vmatprep.subr.bf16.mxu0 0
        %3944 = vmatpush1.bf16.msra.mxu0 0
        %3945 = vmatprep.subr.bf16.mxu0 0
        %3946 = vmatpush1.bf16.msra.mxu0 0
        %3947 = vmatprep.subr.bf16.mxu0 0
        %3948 = vmatpush1.bf16.msra.mxu0 0
        %3949 = vmatprep.subr.bf16.mxu0 0
        %3950 = vmatpush1.bf16.msra.mxu0 0
        %3951 = vmatprep.mubr.bf16.mxu0 0
        %3952 = vmatmul.mubr.bf16.gmra.mrb[0].mxu0 %v3917
        %v3953 = vpop.f32.mrb[0].mxu0
        %v3954 = vadd.f32 0.0, %v3953
        %v3955 = vpop.f32.mrb[0].mxu0
        %v3956 = vpop.f32.mrb[0].mxu0
        %v3957 = vpop.f32.mrb[0].mxu0
        %3958 = vdwg.mxu0
        %v3959 = vadd.f32 %v3902, %v3954
        %v3960 = vrot.slane %v3727, 4
        %v3961 = vrot.slane %v3728, 3
        %v3962 = vsel %vm3732, %v3961, %v3960
        %v3963 = vrot.slane %v3729, 2
        %v3964 = vsel %vm3735, %v3963, %v3962
        %v3965 = vrot.slane %v3730, 1
        %v3966 = vsel %vm3738, %v3965, %v3964
        %v3967 = vpack.c.b16 %v3966, %v3966
        %v3970 = vunpack.c.l.b16 %v1615
        %v3971 = vunpack.c.l.b16 %v1616
        %v3972 = vpack.c.b16 %v3971, %v3970
        %v3975 = vsel %vm1825, %v3967, 0
        %3977 = vmatprep.subr.bf16.mxu0 0
        %3978 = vmatpush1.bf16.msra.mxu0 %v3972
        %3979 = vmatprep.subr.bf16.mxu0 0
        %3980 = vmatpush1.bf16.msra.mxu0 0
        %3981 = vmatprep.subr.bf16.mxu0 0
        %3982 = vmatpush1.bf16.msra.mxu0 0
        %3983 = vmatprep.subr.bf16.mxu0 0
        %3984 = vmatpush1.bf16.msra.mxu0 0
        %3985 = vmatprep.subr.bf16.mxu0 0
        %3986 = vmatpush1.bf16.msra.mxu0 0
        %3987 = vmatprep.subr.bf16.mxu0 0
        %3988 = vmatpush1.bf16.msra.mxu0 0
        %3989 = vmatprep.subr.bf16.mxu0 0
        %3990 = vmatpush1.bf16.msra.mxu0 0
        %3991 = vmatprep.subr.bf16.mxu0 0
        %3992 = vmatpush1.bf16.msra.mxu0 0
        %3993 = vmatprep.subr.bf16.mxu0 0
        %3994 = vmatpush1.bf16.msra.mxu0 0
        %3995 = vmatprep.subr.bf16.mxu0 0
        %3996 = vmatpush1.bf16.msra.mxu0 0
        %3997 = vmatprep.subr.bf16.mxu0 0
        %3998 = vmatpush1.bf16.msra.mxu0 0
        %3999 = vmatprep.subr.bf16.mxu0 0
        %4000 = vmatpush1.bf16.msra.mxu0 0
        %4001 = vmatprep.subr.bf16.mxu0 0
        %4002 = vmatpush1.bf16.msra.mxu0 0
        %4003 = vmatprep.subr.bf16.mxu0 0
        %4004 = vmatpush1.bf16.msra.mxu0 0
        %4005 = vmatprep.subr.bf16.mxu0 0
        %4006 = vmatpush1.bf16.msra.mxu0 0
        %4007 = vmatprep.subr.bf16.mxu0 0
        %4008 = vmatpush1.bf16.msra.mxu0 0
        %4009 = vmatprep.mubr.bf16.mxu0 0
        %4010 = vmatmul.mubr.bf16.gmra.mrb[0].mxu0 %v3975
        %v4011 = vpop.f32.mrb[0].mxu0
        %v4012 = vadd.f32 0.0, %v4011
        %v4013 = vpop.f32.mrb[0].mxu0
        %v4014 = vpop.f32.mrb[0].mxu0
        %v4015 = vpop.f32.mrb[0].mxu0
        %4016 = vdwg.mxu0
        %v4017 = vadd.f32 %v3959, %v4012
        %v4018 = vrot.slane %v3727, 5
        %v4019 = vrot.slane %v3728, 4
        %v4020 = vsel %vm3732, %v4019, %v4018
        %v4021 = vrot.slane %v3729, 3
        %v4022 = vsel %vm3735, %v4021, %v4020
        %v4023 = vrot.slane %v3730, 2
        %v4024 = vsel %vm3738, %v4023, %v4022
        %v4025 = vpack.c.b16 %v4024, %v4024
        %v4028 = vunpack.c.l.b16 %v1617
        %v4029 = vunpack.c.l.b16 %v1618
        %v4030 = vpack.c.b16 %v4029, %v4028
        %v4033 = vsel %vm1825, %v4025, 0
        %4035 = vmatprep.subr.bf16.mxu0 0
        %4036 = vmatpush1.bf16.msra.mxu0 %v4030
        %4037 = vmatprep.subr.bf16.mxu0 0
        %4038 = vmatpush1.bf16.msra.mxu0 0
        %4039 = vmatprep.subr.bf16.mxu0 0
        %4040 = vmatpush1.bf16.msra.mxu0 0
        %4041 = vmatprep.subr.bf16.mxu0 0
        %4042 = vmatpush1.bf16.msra.mxu0 0
        %4043 = vmatprep.subr.bf16.mxu0 0
        %4044 = vmatpush1.bf16.msra.mxu0 0
        %4045 = vmatprep.subr.bf16.mxu0 0
        %4046 = vmatpush1.bf16.msra.mxu0 0
        %4047 = vmatprep.subr.bf16.mxu0 0
        %4048 = vmatpush1.bf16.msra.mxu0 0
        %4049 = vmatprep.subr.bf16.mxu0 0
        %4050 = vmatpush1.bf16.msra.mxu0 0
        %4051 = vmatprep.subr.bf16.mxu0 0
        %4052 = vmatpush1.bf16.msra.mxu0 0
        %4053 = vmatprep.subr.bf16.mxu0 0
        %4054 = vmatpush1.bf16.msra.mxu0 0
        %4055 = vmatprep.subr.bf16.mxu0 0
        %4056 = vmatpush1.bf16.msra.mxu0 0
        %4057 = vmatprep.subr.bf16.mxu0 0
        %4058 = vmatpush1.bf16.msra.mxu0 0
        %4059 = vmatprep.subr.bf16.mxu0 0
        %4060 = vmatpush1.bf16.msra.mxu0 0
        %4061 = vmatprep.subr.bf16.mxu0 0
        %4062 = vmatpush1.bf16.msra.mxu0 0
        %4063 = vmatprep.subr.bf16.mxu0 0
        %4064 = vmatpush1.bf16.msra.mxu0 0
        %4065 = vmatprep.subr.bf16.mxu0 0
        %4066 = vmatpush1.bf16.msra.mxu0 0
        %4067 = vmatprep.mubr.bf16.mxu0 0
        %4068 = vmatmul.mubr.bf16.gmra.mrb[0].mxu0 %v4033
        %v4069 = vpop.f32.mrb[0].mxu0
        %v4070 = vadd.f32 0.0, %v4069
        %v4071 = vpop.f32.mrb[0].mxu0
        %v4072 = vpop.f32.mrb[0].mxu0
        %v4073 = vpop.f32.mrb[0].mxu0
        %4074 = vdwg.mxu0
        %v4075 = vadd.f32 %v4017, %v4070
        %v4076 = vrot.slane %v3727, 6
        %v4077 = vrot.slane %v3728, 5
        %v4078 = vsel %vm3732, %v4077, %v4076
        %v4079 = vrot.slane %v3729, 4
        %v4080 = vsel %vm3735, %v4079, %v4078
        %v4081 = vrot.slane %v3730, 3
        %v4082 = vsel %vm3738, %v4081, %v4080
        %v4083 = vpack.c.b16 %v4082, %v4082
        %v4086 = vunpack.c.l.b16 %v1619
        %v4087 = vunpack.c.l.b16 %v1620
        %v4088 = vpack.c.b16 %v4087, %v4086
        %v4091 = vsel %vm1825, %v4083, 0
        %4093 = vmatprep.subr.bf16.mxu0 0
        %4094 = vmatpush1.bf16.msra.mxu0 %v4088
        %4095 = vmatprep.subr.bf16.mxu0 0
        %4096 = vmatpush1.bf16.msra.mxu0 0
        %4097 = vmatprep.subr.bf16.mxu0 0
        %4098 = vmatpush1.bf16.msra.mxu0 0
        %4099 = vmatprep.subr.bf16.mxu0 0
        %4100 = vmatpush1.bf16.msra.mxu0 0
        %4101 = vmatprep.subr.bf16.mxu0 0
        %4102 = vmatpush1.bf16.msra.mxu0 0
        %4103 = vmatprep.subr.bf16.mxu0 0
        %4104 = vmatpush1.bf16.msra.mxu0 0
        %4105 = vmatprep.subr.bf16.mxu0 0
        %4106 = vmatpush1.bf16.msra.mxu0 0
        %4107 = vmatprep.subr.bf16.mxu0 0
        %4108 = vmatpush1.bf16.msra.mxu0 0
        %4109 = vmatprep.subr.bf16.mxu0 0
        %4110 = vmatpush1.bf16.msra.mxu0 0
        %4111 = vmatprep.subr.bf16.mxu0 0
        %4112 = vmatpush1.bf16.msra.mxu0 0
        %4113 = vmatprep.subr.bf16.mxu0 0
        %4114 = vmatpush1.bf16.msra.mxu0 0
        %4115 = vmatprep.subr.bf16.mxu0 0
        %4116 = vmatpush1.bf16.msra.mxu0 0
        %4117 = vmatprep.subr.bf16.mxu0 0
        %4118 = vmatpush1.bf16.msra.mxu0 0
        %4119 = vmatprep.subr.bf16.mxu0 0
        %4120 = vmatpush1.bf16.msra.mxu0 0
        %4121 = vmatprep.subr.bf16.mxu0 0
        %4122 = vmatpush1.bf16.msra.mxu0 0
        %4123 = vmatprep.subr.bf16.mxu0 0
        %4124 = vmatpush1.bf16.msra.mxu0 0
        %4125 = vmatprep.mubr.bf16.mxu0 0
        %4126 = vmatmul.mubr.bf16.gmra.mrb[0].mxu0 %v4091
        %v4127 = vpop.f32.mrb[0].mxu0
        %v4128 = vadd.f32 0.0, %v4127
        %v4129 = vpop.f32.mrb[0].mxu0
        %v4130 = vpop.f32.mrb[0].mxu0
        %v4131 = vpop.f32.mrb[0].mxu0
        %4132 = vdwg.mxu0
        %v4133 = vadd.f32 %v4075, %v4128
        %v4134 = vrot.slane %v3727, 7
        %v4135 = vrot.slane %v3728, 6
        %v4136 = vsel %vm3732, %v4135, %v4134
        %v4137 = vrot.slane %v3729, 5
        %v4138 = vsel %vm3735, %v4137, %v4136
        %v4139 = vrot.slane %v3730, 4
        %v4140 = vsel %vm3738, %v4139, %v4138
        %v4141 = vpack.c.b16 %v4140, %v4140
        %v4144 = vunpack.c.l.b16 %v1621
        %v4145 = vunpack.c.l.b16 %v1622
        %v4146 = vpack.c.b16 %v4145, %v4144
        %v4149 = vsel %vm1825, %v4141, 0
        %4151 = vmatprep.subr.bf16.mxu0 0
        %4152 = vmatpush1.bf16.msra.mxu0 %v4146
        %4153 = vmatprep.subr.bf16.mxu0 0
        %4154 = vmatpush1.bf16.msra.mxu0 0
        %4155 = vmatprep.subr.bf16.mxu0 0
        %4156 = vmatpush1.bf16.msra.mxu0 0
        %4157 = vmatprep.subr.bf16.mxu0 0
        %4158 = vmatpush1.bf16.msra.mxu0 0
        %4159 = vmatprep.subr.bf16.mxu0 0
        %4160 = vmatpush1.bf16.msra.mxu0 0
        %4161 = vmatprep.subr.bf16.mxu0 0
        %4162 = vmatpush1.bf16.msra.mxu0 0
        %4163 = vmatprep.subr.bf16.mxu0 0
        %4164 = vmatpush1.bf16.msra.mxu0 0
        %4165 = vmatprep.subr.bf16.mxu0 0
        %4166 = vmatpush1.bf16.msra.mxu0 0
        %4167 = vmatprep.subr.bf16.mxu0 0
        %4168 = vmatpush1.bf16.msra.mxu0 0
        %4169 = vmatprep.subr.bf16.mxu0 0
        %4170 = vmatpush1.bf16.msra.mxu0 0
        %4171 = vmatprep.subr.bf16.mxu0 0
        %4172 = vmatpush1.bf16.msra.mxu0 0
        %4173 = vmatprep.subr.bf16.mxu0 0
        %4174 = vmatpush1.bf16.msra.mxu0 0
        %4175 = vmatprep.subr.bf16.mxu0 0
        %4176 = vmatpush1.bf16.msra.mxu0 0
        %4177 = vmatprep.subr.bf16.mxu0 0
        %4178 = vmatpush1.bf16.msra.mxu0 0
        %4179 = vmatprep.subr.bf16.mxu0 0
        %4180 = vmatpush1.bf16.msra.mxu0 0
        %4181 = vmatprep.subr.bf16.mxu0 0
        %4182 = vmatpush1.bf16.msra.mxu0 0
        %4183 = vmatprep.mubr.bf16.mxu0 0
        %4184 = vmatmul.mubr.bf16.gmra.mrb[0].mxu0 %v4149
        %v4185 = vpop.f32.mrb[0].mxu0
        %v4186 = vadd.f32 0.0, %v4185
        %v4187 = vpop.f32.mrb[0].mxu0
        %v4188 = vpop.f32.mrb[0].mxu0
        %v4189 = vpop.f32.mrb[0].mxu0
        %4190 = vdwg.mxu0
        %v4191 = vadd.f32 %v4133, %v4186
        %v4192 = vunpack.c.h.b16 %v3719
        %v4193 = vunpack.c.h.b16 %v3720
        %v4194 = vunpack.c.h.b16 %v3721
        %v4195 = vunpack.c.h.b16 %v3722
        %v4196 = vrot.slane %v4193, 7
        %v4197 = vsel %vm3732, %v4196, %v4192
        %v4198 = vrot.slane %v4194, 6
        %v4199 = vsel %vm3735, %v4198, %v4197
        %v4200 = vrot.slane %v4195, 5
        %v4201 = vsel %vm3738, %v4200, %v4199
        %v4202 = vpack.c.b16 %v4201, %v4201
        %v4205 = vunpack.c.l.b16 %v1623
        %v4206 = vunpack.c.l.b16 %v1624
        %v4207 = vpack.c.b16 %v4206, %v4205
        %v4210 = vsel %vm1825, %v4202, 0
        %4212 = vmatprep.subr.bf16.mxu0 0
        %4213 = vmatpush1.bf16.msra.mxu0 %v4207
        %4214 = vmatprep.subr.bf16.mxu0 0
        %4215 = vmatpush1.bf16.msra.mxu0 0
        %4216 = vmatprep.subr.bf16.mxu0 0
        %4217 = vmatpush1.bf16.msra.mxu0 0
        %4218 = vmatprep.subr.bf16.mxu0 0
        %4219 = vmatpush1.bf16.msra.mxu0 0
        %4220 = vmatprep.subr.bf16.mxu0 0
        %4221 = vmatpush1.bf16.msra.mxu0 0
        %4222 = vmatprep.subr.bf16.mxu0 0
        %4223 = vmatpush1.bf16.msra.mxu0 0
        %4224 = vmatprep.subr.bf16.mxu0 0
        %4225 = vmatpush1.bf16.msra.mxu0 0
        %4226 = vmatprep.subr.bf16.mxu0 0
        %4227 = vmatpush1.bf16.msra.mxu0 0
        %4228 = vmatprep.subr.bf16.mxu0 0
        %4229 = vmatpush1.bf16.msra.mxu0 0
        %4230 = vmatprep.subr.bf16.mxu0 0
        %4231 = vmatpush1.bf16.msra.mxu0 0
        %4232 = vmatprep.subr.bf16.mxu0 0
        %4233 = vmatpush1.bf16.msra.mxu0 0
        %4234 = vmatprep.subr.bf16.mxu0 0
        %4235 = vmatpush1.bf16.msra.mxu0 0
        %4236 = vmatprep.subr.bf16.mxu0 0
        %4237 = vmatpush1.bf16.msra.mxu0 0
        %4238 = vmatprep.subr.bf16.mxu0 0
        %4239 = vmatpush1.bf16.msra.mxu0 0
        %4240 = vmatprep.subr.bf16.mxu0 0
        %4241 = vmatpush1.bf16.msra.mxu0 0
        %4242 = vmatprep.subr.bf16.mxu0 0
        %4243 = vmatpush1.bf16.msra.mxu0 0
        %4244 = vmatprep.mubr.bf16.mxu0 0
        %4245 = vmatmul.mubr.bf16.gmra.mrb[0].mxu0 %v4210
        %v4246 = vpop.f32.mrb[0].mxu0
        %v4247 = vadd.f32 0.0, %v4246
        %v4248 = vpop.f32.mrb[0].mxu0
        %v4249 = vpop.f32.mrb[0].mxu0
        %v4250 = vpop.f32.mrb[0].mxu0
        %4251 = vdwg.mxu0
        %v4252 = vadd.f32 %v4191, %v4247
        %v4253 = vrot.slane %v4192, 1
        %v4254 = vsel %vm3732, %v4193, %v4253
        %v4255 = vrot.slane %v4194, 7
        %v4256 = vsel %vm3735, %v4255, %v4254
        %v4257 = vrot.slane %v4195, 6
        %v4258 = vsel %vm3738, %v4257, %v4256
        %v4259 = vpack.c.b16 %v4258, %v4258
        %v4262 = vunpack.c.l.b16 %v1625
        %v4263 = vunpack.c.l.b16 %v1626
        %v4264 = vpack.c.b16 %v4263, %v4262
        %v4267 = vsel %vm1825, %v4259, 0
        %4269 = vmatprep.subr.bf16.mxu0 0
        %4270 = vmatpush1.bf16.msra.mxu0 %v4264
        %4271 = vmatprep.subr.bf16.mxu0 0
        %4272 = vmatpush1.bf16.msra.mxu0 0
        %4273 = vmatprep.subr.bf16.mxu0 0
        %4274 = vmatpush1.bf16.msra.mxu0 0
        %4275 = vmatprep.subr.bf16.mxu0 0
        %4276 = vmatpush1.bf16.msra.mxu0 0
        %4277 = vmatprep.subr.bf16.mxu0 0
        %4278 = vmatpush1.bf16.msra.mxu0 0
        %4279 = vmatprep.subr.bf16.mxu0 0
        %4280 = vmatpush1.bf16.msra.mxu0 0
        %4281 = vmatprep.subr.bf16.mxu0 0
        %4282 = vmatpush1.bf16.msra.mxu0 0
        %4283 = vmatprep.subr.bf16.mxu0 0
        %4284 = vmatpush1.bf16.msra.mxu0 0
        %4285 = vmatprep.subr.bf16.mxu0 0
        %4286 = vmatpush1.bf16.msra.mxu0 0
        %4287 = vmatprep.subr.bf16.mxu0 0
        %4288 = vmatpush1.bf16.msra.mxu0 0
        %4289 = vmatprep.subr.bf16.mxu0 0
        %4290 = vmatpush1.bf16.msra.mxu0 0
        %4291 = vmatprep.subr.bf16.mxu0 0
        %4292 = vmatpush1.bf16.msra.mxu0 0
        %4293 = vmatprep.subr.bf16.mxu0 0
        %4294 = vmatpush1.bf16.msra.mxu0 0
        %4295 = vmatprep.subr.bf16.mxu0 0
        %4296 = vmatpush1.bf16.msra.mxu0 0
        %4297 = vmatprep.subr.bf16.mxu0 0
        %4298 = vmatpush1.bf16.msra.mxu0 0
        %4299 = vmatprep.subr.bf16.mxu0 0
        %4300 = vmatpush1.bf16.msra.mxu0 0
        %4301 = vmatprep.mubr.bf16.mxu0 0
        %4302 = vmatmul.mubr.bf16.gmra.mrb[0].mxu0 %v4267
        %v4303 = vpop.f32.mrb[0].mxu0
        %v4304 = vadd.f32 0.0, %v4303
        %v4305 = vpop.f32.mrb[0].mxu0
        %v4306 = vpop.f32.mrb[0].mxu0
        %v4307 = vpop.f32.mrb[0].mxu0
        %4308 = vdwg.mxu0
        %v4309 = vadd.f32 %v4252, %v4304
        %v4310 = vrot.slane %v4192, 2
        %v4311 = vrot.slane %v4193, 1
        %v4312 = vsel %vm3732, %v4311, %v4310
        %v4313 = vsel %vm3735, %v4194, %v4312
        %v4314 = vrot.slane %v4195, 7
        %v4315 = vsel %vm3738, %v4314, %v4313
        %v4316 = vpack.c.b16 %v4315, %v4315
        %v4319 = vunpack.c.l.b16 %v1627
        %v4320 = vunpack.c.l.b16 %v1628
        %v4321 = vpack.c.b16 %v4320, %v4319
        %v4324 = vsel %vm1825, %v4316, 0
        %4326 = vmatprep.subr.bf16.mxu0 0
        %4327 = vmatpush1.bf16.msra.mxu0 %v4321
        %4328 = vmatprep.subr.bf16.mxu0 0
        %4329 = vmatpush1.bf16.msra.mxu0 0
        %4330 = vmatprep.subr.bf16.mxu0 0
        %4331 = vmatpush1.bf16.msra.mxu0 0
        %4332 = vmatprep.subr.bf16.mxu0 0
        %4333 = vmatpush1.bf16.msra.mxu0 0
        %4334 = vmatprep.subr.bf16.mxu0 0
        %4335 = vmatpush1.bf16.msra.mxu0 0
        %4336 = vmatprep.subr.bf16.mxu0 0
        %4337 = vmatpush1.bf16.msra.mxu0 0
        %4338 = vmatprep.subr.bf16.mxu0 0
        %4339 = vmatpush1.bf16.msra.mxu0 0
        %4340 = vmatprep.subr.bf16.mxu0 0
        %4341 = vmatpush1.bf16.msra.mxu0 0
        %4342 = vmatprep.subr.bf16.mxu0 0
        %4343 = vmatpush1.bf16.msra.mxu0 0
        %4344 = vmatprep.subr.bf16.mxu0 0
        %4345 = vmatpush1.bf16.msra.mxu0 0
        %4346 = vmatprep.subr.bf16.mxu0 0
        %4347 = vmatpush1.bf16.msra.mxu0 0
        %4348 = vmatprep.subr.bf16.mxu0 0
        %4349 = vmatpush1.bf16.msra.mxu0 0
        %4350 = vmatprep.subr.bf16.mxu0 0
        %4351 = vmatpush1.bf16.msra.mxu0 0
        %4352 = vmatprep.subr.bf16.mxu0 0
        %4353 = vmatpush1.bf16.msra.mxu0 0
        %4354 = vmatprep.subr.bf16.mxu0 0
        %4355 = vmatpush1.bf16.msra.mxu0 0
        %4356 = vmatprep.subr.bf16.mxu0 0
        %4357 = vmatpush1.bf16.msra.mxu0 0
        %4358 = vmatprep.mubr.bf16.mxu0 0
        %4359 = vmatmul.mubr.bf16.gmra.mrb[0].mxu0 %v4324
        %v4360 = vpop.f32.mrb[0].mxu0
        %v4361 = vadd.f32 0.0, %v4360
        %v4362 = vpop.f32.mrb[0].mxu0
        %v4363 = vpop.f32.mrb[0].mxu0
        %v4364 = vpop.f32.mrb[0].mxu0
        %4365 = vdwg.mxu0
        %v4366 = vadd.f32 %v4309, %v4361
        %v4367 = vrot.slane %v4192, 3
        %v4368 = vrot.slane %v4193, 2
        %v4369 = vsel %vm3732, %v4368, %v4367
        %v4370 = vrot.slane %v4194, 1
        %v4371 = vsel %vm3735, %v4370, %v4369
        %v4372 = vsel %vm3738, %v4195, %v4371
        %v4373 = vpack.c.b16 %v4372, %v4372
        %v4376 = vunpack.c.l.b16 %v1629
        %v4377 = vunpack.c.l.b16 %v1630
        %v4378 = vpack.c.b16 %v4377, %v4376
        %v4381 = vsel %vm1825, %v4373, 0
        %4383 = vmatprep.subr.bf16.mxu0 0
        %4384 = vmatpush1.bf16.msra.mxu0 %v4378
        %4385 = vmatprep.subr.bf16.mxu0 0
        %4386 = vmatpush1.bf16.msra.mxu0 0
        %4387 = vmatprep.subr.bf16.mxu0 0
        %4388 = vmatpush1.bf16.msra.mxu0 0
        %4389 = vmatprep.subr.bf16.mxu0 0
        %4390 = vmatpush1.bf16.msra.mxu0 0
        %4391 = vmatprep.subr.bf16.mxu0 0
        %4392 = vmatpush1.bf16.msra.mxu0 0
        %4393 = vmatprep.subr.bf16.mxu0 0
        %4394 = vmatpush1.bf16.msra.mxu0 0
        %4395 = vmatprep.subr.bf16.mxu0 0
        %4396 = vmatpush1.bf16.msra.mxu0 0
        %4397 = vmatprep.subr.bf16.mxu0 0
        %4398 = vmatpush1.bf16.msra.mxu0 0
        %4399 = vmatprep.subr.bf16.mxu0 0
        %4400 = vmatpush1.bf16.msra.mxu0 0
        %4401 = vmatprep.subr.bf16.mxu0 0
        %4402 = vmatpush1.bf16.msra.mxu0 0
        %4403 = vmatprep.subr.bf16.mxu0 0
        %4404 = vmatpush1.bf16.msra.mxu0 0
        %4405 = vmatprep.subr.bf16.mxu0 0
        %4406 = vmatpush1.bf16.msra.mxu0 0
        %4407 = vmatprep.subr.bf16.mxu0 0
        %4408 = vmatpush1.bf16.msra.mxu0 0
        %4409 = vmatprep.subr.bf16.mxu0 0
        %4410 = vmatpush1.bf16.msra.mxu0 0
        %4411 = vmatprep.subr.bf16.mxu0 0
        %4412 = vmatpush1.bf16.msra.mxu0 0
        %4413 = vmatprep.subr.bf16.mxu0 0
        %4414 = vmatpush1.bf16.msra.mxu0 0
        %4415 = vmatprep.mubr.bf16.mxu0 0
        %4416 = vmatmul.mubr.bf16.gmra.mrb[0].mxu0 %v4381
        %v4417 = vpop.f32.mrb[0].mxu0
        %v4418 = vadd.f32 0.0, %v4417
        %v4419 = vpop.f32.mrb[0].mxu0
        %v4420 = vpop.f32.mrb[0].mxu0
        %v4421 = vpop.f32.mrb[0].mxu0
        %4422 = vdwg.mxu0
        %v4423 = vadd.f32 %v4366, %v4418
        %v4424 = vrot.slane %v4192, 4
        %v4425 = vrot.slane %v4193, 3
        %v4426 = vsel %vm3732, %v4425, %v4424
        %v4427 = vrot.slane %v4194, 2
        %v4428 = vsel %vm3735, %v4427, %v4426
        %v4429 = vrot.slane %v4195, 1
        %v4430 = vsel %vm3738, %v4429, %v4428
        %v4431 = vpack.c.b16 %v4430, %v4430
        %v4434 = vunpack.c.l.b16 %v1631
        %v4435 = vunpack.c.l.b16 %v1632
        %v4436 = vpack.c.b16 %v4435, %v4434
        %v4439 = vsel %vm1825, %v4431, 0
        %4441 = vmatprep.subr.bf16.mxu0 0
        %4442 = vmatpush1.bf16.msra.mxu0 %v4436
        %4443 = vmatprep.subr.bf16.mxu0 0
        %4444 = vmatpush1.bf16.msra.mxu0 0
        %4445 = vmatprep.subr.bf16.mxu0 0
        %4446 = vmatpush1.bf16.msra.mxu0 0
        %4447 = vmatprep.subr.bf16.mxu0 0
        %4448 = vmatpush1.bf16.msra.mxu0 0
        %4449 = vmatprep.subr.bf16.mxu0 0
        %4450 = vmatpush1.bf16.msra.mxu0 0
        %4451 = vmatprep.subr.bf16.mxu0 0
        %4452 = vmatpush1.bf16.msra.mxu0 0
        %4453 = vmatprep.subr.bf16.mxu0 0
        %4454 = vmatpush1.bf16.msra.mxu0 0
        %4455 = vmatprep.subr.bf16.mxu0 0
        %4456 = vmatpush1.bf16.msra.mxu0 0
        %4457 = vmatprep.subr.bf16.mxu0 0
        %4458 = vmatpush1.bf16.msra.mxu0 0
        %4459 = vmatprep.subr.bf16.mxu0 0
        %4460 = vmatpush1.bf16.msra.mxu0 0
        %4461 = vmatprep.subr.bf16.mxu0 0
        %4462 = vmatpush1.bf16.msra.mxu0 0
        %4463 = vmatprep.subr.bf16.mxu0 0
        %4464 = vmatpush1.bf16.msra.mxu0 0
        %4465 = vmatprep.subr.bf16.mxu0 0
        %4466 = vmatpush1.bf16.msra.mxu0 0
        %4467 = vmatprep.subr.bf16.mxu0 0
        %4468 = vmatpush1.bf16.msra.mxu0 0
        %4469 = vmatprep.subr.bf16.mxu0 0
        %4470 = vmatpush1.bf16.msra.mxu0 0
        %4471 = vmatprep.subr.bf16.mxu0 0
        %4472 = vmatpush1.bf16.msra.mxu0 0
        %4473 = vmatprep.mubr.bf16.mxu0 0
        %4474 = vmatmul.mubr.bf16.gmra.mrb[0].mxu0 %v4439
        %v4475 = vpop.f32.mrb[0].mxu0
        %v4476 = vadd.f32 0.0, %v4475
        %v4477 = vpop.f32.mrb[0].mxu0
        %v4478 = vpop.f32.mrb[0].mxu0
        %v4479 = vpop.f32.mrb[0].mxu0
        %4480 = vdwg.mxu0
        %v4481 = vadd.f32 %v4423, %v4476
        %v4482 = vrot.slane %v4192, 5
        %v4483 = vrot.slane %v4193, 4
        %v4484 = vsel %vm3732, %v4483, %v4482
        %v4485 = vrot.slane %v4194, 3
        %v4486 = vsel %vm3735, %v4485, %v4484
        %v4487 = vrot.slane %v4195, 2
        %v4488 = vsel %vm3738, %v4487, %v4486
        %v4489 = vpack.c.b16 %v4488, %v4488
        %v4492 = vunpack.c.l.b16 %v1633
        %v4493 = vunpack.c.l.b16 %v1634
        %v4494 = vpack.c.b16 %v4493, %v4492
        %v4497 = vsel %vm1825, %v4489, 0
        %4499 = vmatprep.subr.bf16.mxu0 0
        %4500 = vmatpush1.bf16.msra.mxu0 %v4494
        %4501 = vmatprep.subr.bf16.mxu0 0
        %4502 = vmatpush1.bf16.msra.mxu0 0
        %4503 = vmatprep.subr.bf16.mxu0 0
        %4504 = vmatpush1.bf16.msra.mxu0 0
        %4505 = vmatprep.subr.bf16.mxu0 0
        %4506 = vmatpush1.bf16.msra.mxu0 0
        %4507 = vmatprep.subr.bf16.mxu0 0
        %4508 = vmatpush1.bf16.msra.mxu0 0
        %4509 = vmatprep.subr.bf16.mxu0 0
        %4510 = vmatpush1.bf16.msra.mxu0 0
        %4511 = vmatprep.subr.bf16.mxu0 0
        %4512 = vmatpush1.bf16.msra.mxu0 0
        %4513 = vmatprep.subr.bf16.mxu0 0
        %4514 = vmatpush1.bf16.msra.mxu0 0
        %4515 = vmatprep.subr.bf16.mxu0 0
        %4516 = vmatpush1.bf16.msra.mxu0 0
        %4517 = vmatprep.subr.bf16.mxu0 0
        %4518 = vmatpush1.bf16.msra.mxu0 0
        %4519 = vmatprep.subr.bf16.mxu0 0
        %4520 = vmatpush1.bf16.msra.mxu0 0
        %4521 = vmatprep.subr.bf16.mxu0 0
        %4522 = vmatpush1.bf16.msra.mxu0 0
        %4523 = vmatprep.subr.bf16.mxu0 0
        %4524 = vmatpush1.bf16.msra.mxu0 0
        %4525 = vmatprep.subr.bf16.mxu0 0
        %4526 = vmatpush1.bf16.msra.mxu0 0
        %4527 = vmatprep.subr.bf16.mxu0 0
        %4528 = vmatpush1.bf16.msra.mxu0 0
        %4529 = vmatprep.subr.bf16.mxu0 0
        %4530 = vmatpush1.bf16.msra.mxu0 0
        %4531 = vmatprep.mubr.bf16.mxu0 0
        %4532 = vmatmul.mubr.bf16.gmra.mrb[0].mxu0 %v4497
        %v4533 = vpop.f32.mrb[0].mxu0
        %v4534 = vadd.f32 0.0, %v4533
        %v4535 = vpop.f32.mrb[0].mxu0
        %v4536 = vpop.f32.mrb[0].mxu0
        %v4537 = vpop.f32.mrb[0].mxu0
        %4538 = vdwg.mxu0
        %v4539 = vadd.f32 %v4481, %v4534
        %v4540 = vrot.slane %v4192, 6
        %v4541 = vrot.slane %v4193, 5
        %v4542 = vsel %vm3732, %v4541, %v4540
        %v4543 = vrot.slane %v4194, 4
        %v4544 = vsel %vm3735, %v4543, %v4542
        %v4545 = vrot.slane %v4195, 3
        %v4546 = vsel %vm3738, %v4545, %v4544
        %v4547 = vpack.c.b16 %v4546, %v4546
        %v4550 = vunpack.c.l.b16 %v1635
        %v4551 = vunpack.c.l.b16 %v1636
        %v4552 = vpack.c.b16 %v4551, %v4550
        %v4555 = vsel %vm1825, %v4547, 0
        %4557 = vmatprep.subr.bf16.mxu0 0
        %4558 = vmatpush1.bf16.msra.mxu0 %v4552
        %4559 = vmatprep.subr.bf16.mxu0 0
        %4560 = vmatpush1.bf16.msra.mxu0 0
        %4561 = vmatprep.subr.bf16.mxu0 0
        %4562 = vmatpush1.bf16.msra.mxu0 0
        %4563 = vmatprep.subr.bf16.mxu0 0
        %4564 = vmatpush1.bf16.msra.mxu0 0
        %4565 = vmatprep.subr.bf16.mxu0 0
        %4566 = vmatpush1.bf16.msra.mxu0 0
        %4567 = vmatprep.subr.bf16.mxu0 0
        %4568 = vmatpush1.bf16.msra.mxu0 0
        %4569 = vmatprep.subr.bf16.mxu0 0
        %4570 = vmatpush1.bf16.msra.mxu0 0
        %4571 = vmatprep.subr.bf16.mxu0 0
        %4572 = vmatpush1.bf16.msra.mxu0 0
        %4573 = vmatprep.subr.bf16.mxu0 0
        %4574 = vmatpush1.bf16.msra.mxu0 0
        %4575 = vmatprep.subr.bf16.mxu0 0
        %4576 = vmatpush1.bf16.msra.mxu0 0
        %4577 = vmatprep.subr.bf16.mxu0 0
        %4578 = vmatpush1.bf16.msra.mxu0 0
        %4579 = vmatprep.subr.bf16.mxu0 0
        %4580 = vmatpush1.bf16.msra.mxu0 0
        %4581 = vmatprep.subr.bf16.mxu0 0
        %4582 = vmatpush1.bf16.msra.mxu0 0
        %4583 = vmatprep.subr.bf16.mxu0 0
        %4584 = vmatpush1.bf16.msra.mxu0 0
        %4585 = vmatprep.subr.bf16.mxu0 0
        %4586 = vmatpush1.bf16.msra.mxu0 0
        %4587 = vmatprep.subr.bf16.mxu0 0
        %4588 = vmatpush1.bf16.msra.mxu0 0
        %4589 = vmatprep.mubr.bf16.mxu0 0
        %4590 = vmatmul.mubr.bf16.gmra.mrb[0].mxu0 %v4555
        %v4591 = vpop.f32.mrb[0].mxu0
        %v4592 = vadd.f32 0.0, %v4591
        %v4593 = vpop.f32.mrb[0].mxu0
        %v4594 = vpop.f32.mrb[0].mxu0
        %v4595 = vpop.f32.mrb[0].mxu0
        %4596 = vdwg.mxu0
        %v4597 = vadd.f32 %v4539, %v4592
        %v4598 = vrot.slane %v4192, 7
        %v4599 = vrot.slane %v4193, 6
        %v4600 = vsel %vm3732, %v4599, %v4598
        %v4601 = vrot.slane %v4194, 5
        %v4602 = vsel %vm3735, %v4601, %v4600
        %v4603 = vrot.slane %v4195, 4
        %v4604 = vsel %vm3738, %v4603, %v4602
        %v4605 = vpack.c.b16 %v4604, %v4604
        %v4608 = vunpack.c.l.b16 %v1637
        %v4609 = vunpack.c.l.b16 %v1638
        %v4610 = vpack.c.b16 %v4609, %v4608
        %v4613 = vsel %vm1825, %v4605, 0
        %4615 = vmatprep.subr.bf16.mxu0 0
        %4616 = vmatpush1.bf16.msra.mxu0 %v4610
        %4617 = vmatprep.subr.bf16.mxu0 0
        %4618 = vmatpush1.bf16.msra.mxu0 0
        %4619 = vmatprep.subr.bf16.mxu0 0
        %4620 = vmatpush1.bf16.msra.mxu0 0
        %4621 = vmatprep.subr.bf16.mxu0 0
        %4622 = vmatpush1.bf16.msra.mxu0 0
        %4623 = vmatprep.subr.bf16.mxu0 0
        %4624 = vmatpush1.bf16.msra.mxu0 0
        %4625 = vmatprep.subr.bf16.mxu0 0
        %4626 = vmatpush1.bf16.msra.mxu0 0
        %4627 = vmatprep.subr.bf16.mxu0 0
        %4628 = vmatpush1.bf16.msra.mxu0 0
        %4629 = vmatprep.subr.bf16.mxu0 0
        %4630 = vmatpush1.bf16.msra.mxu0 0
        %4631 = vmatprep.subr.bf16.mxu0 0
        %4632 = vmatpush1.bf16.msra.mxu0 0
        %4633 = vmatprep.subr.bf16.mxu0 0
        %4634 = vmatpush1.bf16.msra.mxu0 0
        %4635 = vmatprep.subr.bf16.mxu0 0
        %4636 = vmatpush1.bf16.msra.mxu0 0
        %4637 = vmatprep.subr.bf16.mxu0 0
        %4638 = vmatpush1.bf16.msra.mxu0 0
        %4639 = vmatprep.subr.bf16.mxu0 0
        %4640 = vmatpush1.bf16.msra.mxu0 0
        %4641 = vmatprep.subr.bf16.mxu0 0
        %4642 = vmatpush1.bf16.msra.mxu0 0
        %4643 = vmatprep.subr.bf16.mxu0 0
        %4644 = vmatpush1.bf16.msra.mxu0 0
        %4645 = vmatprep.subr.bf16.mxu0 0
        %4646 = vmatpush1.bf16.msra.mxu0 0
        %4647 = vmatprep.mubr.bf16.mxu0 0
        %4648 = vmatmul.mubr.bf16.gmra.mrb[0].mxu0 %v4613
        %v4649 = vpop.f32.mrb[0].mxu0
        %v4650 = vadd.f32 0.0, %v4649
        %v4651 = vpop.f32.mrb[0].mxu0
        %v4652 = vpop.f32.mrb[0].mxu0
        %v4653 = vpop.f32.mrb[0].mxu0
        %4654 = vdwg.mxu0
        %v4655 = vadd.f32 %v4597, %v4650
        %v4657 = vlaneseq
        %v4658 = vshrl.u32 %v4657, 7
        %v4659 = vsub.s32 0, %v4658
        %v4660 = vrot.slane %v1639, %v4659
        %v4662 = vadd.f32 %v4655, %v4660
        %v4664 = vrot.slane %v4662, 7
        %vm4666 = vcmask 1040384
        %v4667 = vsel %vm4666, 0.0, %v4664
        %v4668 = vadd.f32 %v1824, %v4667
        %vm4669 = vcmask 258048
        %v4670 = vsel %vm4669, %v4668, 0.0
        %4671 = vadd.xlane.f32.xlu0 %v4670
        %v4672 = vpop.xlane.xlu0 %4671
        %v4673 = vrcp.pop 32.0
        %v4674 = vmul.f32 %v4672, %v4673
        %v4675 = vsub.f32 %v4668, %v4674
        %v4676 = vmul.f32 %v4675, %v4675
        %v4677 = vsel %vm4669, %v4676, 0.0
        %4678 = vadd.xlane.f32.xlu0 %v4677
        %v4679 = vpop.xlane.xlu0 %4678
        %v4680 = vmul.f32 %v4679, %v4673
        %v4681 = vadd.f32 %v4680, 1e-05
        %v4682 = vrsqrt.pop %v4681
        %v4683 = vmul.f32 %v4675, %v4682
        %v4685 = vlaneseq
        %v4686 = vshrl.u32 %v4685, 7
        %v4687 = vsub.s32 0, %v4686
        %v4688 = vrot.slane %v1640, %v4687
        %v4690 = vmul.f32 %v4683, %v4688
        %v4692 = vlaneseq
        %v4693 = vshrl.u32 %v4692, 7
        %v4694 = vsub.s32 0, %v4693
        %v4695 = vrot.slane %v1641, %v4694
        %v4697 = vadd.f32 %v4690, %v4695
        %v4698 = vpack.c.bf16 %v4697, %v4697
        %v4700 = vlaneseq
        %v4701 = vshrl.u32 %v4700, 7
        %v4702 = vsub.s32 0, %v4701
        %v4703 = vrot.slane %v1646, %v4702
        %v4709 = vunpack.c.l.b16 %v1642
        %v4710 = vunpack.c.l.b16 %v1643
        %v4711 = vunpack.c.l.b16 %v1644
        %v4712 = vunpack.c.l.b16 %v1645
        %v4713 = vpack.c.b16 %v4710, %v4709
        %v4714 = vpack.c.b16 %v4712, %v4711
        %vm4717 = vcmask 261120
        %v4719 = vsel %vm4717, %v4698, 0
        %4721 = vmatprep.subr.bf16.mxu0 0
        %4722 = vmatpush1.bf16.msra.mxu0 %v4713
        %4723 = vmatprep.subr.bf16.mxu0 0
        %4724 = vmatpush1.bf16.msra.mxu0 %v4714
        %4725 = vmatprep.subr.bf16.mxu0 0
        %4726 = vmatpush1.bf16.msra.mxu0 0
        %4727 = vmatprep.subr.bf16.mxu0 0
        %4728 = vmatpush1.bf16.msra.mxu0 0
        %4729 = vmatprep.subr.bf16.mxu0 0
        %4730 = vmatpush1.bf16.msra.mxu0 0
        %4731 = vmatprep.subr.bf16.mxu0 0
        %4732 = vmatpush1.bf16.msra.mxu0 0
        %4733 = vmatprep.subr.bf16.mxu0 0
        %4734 = vmatpush1.bf16.msra.mxu0 0
        %4735 = vmatprep.subr.bf16.mxu0 0
        %4736 = vmatpush1.bf16.msra.mxu0 0
        %4737 = vmatprep.subr.bf16.mxu0 0
        %4738 = vmatpush1.bf16.msra.mxu0 0
        %4739 = vmatprep.subr.bf16.mxu0 0
        %4740 = vmatpush1.bf16.msra.mxu0 0
        %4741 = vmatprep.subr.bf16.mxu0 0
        %4742 = vmatpush1.bf16.msra.mxu0 0
        %4743 = vmatprep.subr.bf16.mxu0 0
        %4744 = vmatpush1.bf16.msra.mxu0 0
        %4745 = vmatprep.subr.bf16.mxu0 0
        %4746 = vmatpush1.bf16.msra.mxu0 0
        %4747 = vmatprep.subr.bf16.mxu0 0
        %4748 = vmatpush1.bf16.msra.mxu0 0
        %4749 = vmatprep.subr.bf16.mxu0 0
        %4750 = vmatpush1.bf16.msra.mxu0 0
        %4751 = vmatprep.subr.bf16.mxu0 0
        %4752 = vmatpush1.bf16.msra.mxu0 0
        %4753 = vmatprep.mubr.bf16.mxu0 0
        %4754 = vmatmul.mubr.bf16.gmra.mrb[0].mxu0 %v4719
        %v4755 = vpop.f32.mrb[0].mxu0
        %v4756 = vadd.f32 %v4703, %v4755
        %v4757 = vpop.f32.mrb[0].mxu0
        %v4758 = vpop.f32.mrb[0].mxu0
        %v4759 = vpop.f32.mrb[0].mxu0
        %4760 = vdwg.mxu0
        %v4761 = vpack.c.bf16 %v4756, %v4756
        %4763 = vrot.lane.b32.xlu0 %v4761, 96
        %v4764 = vpop.permute.xlu0 %4763
        %v4766 = vsel %vm2059, %v4761, 0
        %v4769 = vsel %vm2059, %v4764, 0
        %4771 = vmatprep.subr.bf16.mxu0 0
        %4772 = vmatpush1.bf16.xpose.msra.mxu0 %v4769
        %4773 = vmatprep.subr.bf16.mxu0 0
        %4774 = vmatpush1.bf16.xpose.msra.mxu0 0
        %4775 = vmatprep.subr.bf16.mxu0 0
        %4776 = vmatpush1.bf16.xpose.msra.mxu0 0
        %4777 = vmatprep.subr.bf16.mxu0 0
        %4778 = vmatpush1.bf16.xpose.msra.mxu0 0
        %4779 = vmatprep.subr.bf16.mxu0 0
        %4780 = vmatpush1.bf16.xpose.msra.mxu0 0
        %4781 = vmatprep.subr.bf16.mxu0 0
        %4782 = vmatpush1.bf16.xpose.msra.mxu0 0
        %4783 = vmatprep.subr.bf16.mxu0 0
        %4784 = vmatpush1.bf16.xpose.msra.mxu0 0
        %4785 = vmatprep.subr.bf16.mxu0 0
        %4786 = vmatpush1.bf16.xpose.msra.mxu0 0
        %4787 = vmatprep.subr.bf16.mxu0 0
        %4788 = vmatpush1.bf16.xpose.msra.mxu0 0
        %4789 = vmatprep.subr.bf16.mxu0 0
        %4790 = vmatpush1.bf16.xpose.msra.mxu0 0
        %4791 = vmatprep.subr.bf16.mxu0 0
        %4792 = vmatpush1.bf16.xpose.msra.mxu0 0
        %4793 = vmatprep.subr.bf16.mxu0 0
        %4794 = vmatpush1.bf16.xpose.msra.mxu0 0
        %4795 = vmatprep.subr.bf16.mxu0 0
        %4796 = vmatpush1.bf16.xpose.msra.mxu0 0
        %4797 = vmatprep.subr.bf16.mxu0 0
        %4798 = vmatpush1.bf16.xpose.msra.mxu0 0
        %4799 = vmatprep.subr.bf16.mxu0 0
        %4800 = vmatpush1.bf16.xpose.msra.mxu0 0
        %4801 = vmatprep.subr.bf16.mxu0 0
        %4802 = vmatpush1.bf16.xpose.msra.mxu0 0
        %4803 = vmatprep.mubr.bf16.mxu0 0
        %4804 = vmatmul.mubr.bf16.gmra.mrb[0].mxu0 %v4766
        %v4805 = vpop.f32.mrb[0].mxu0
        %v4806 = vadd.f32 0.0, %v4805
        %v4807 = vpop.f32.mrb[0].mxu0
        %v4808 = vpop.f32.mrb[0].mxu0
        %v4809 = vpop.f32.mrb[0].mxu0
        %4810 = vdwg.mxu0
        %vm4811 = vcmask 36864
        %v4812 = vsel %vm4811, %v4806, -inf
        %4813 = vmax.xlane.f32.xlu0 %v4812
        %v4814 = vpop.xlane.xlu0 %4813
        %v4815 = vsub.f32 %v4806, %v4814
        %v4816 = vmul.f32 %v4815, 1.442695
        %v4817 = vpow.pop %v4816
        %v4818 = vsel %vm4811, %v4817, 0.0
        %4819 = vadd.xlane.f32.xlu0 %v4818
        %v4820 = vpop.xlane.xlu0 %4819
        %v4821 = vrcp.pop %v4820
        %v4822 = vmul.f32 %v4817, %v4821
        %v4823 = vpack.c.bf16 %v4822, %v4822
        %4824 = vrot.lane.b32.xlu0 %v4761, 64
        %v4825 = vpop.permute.xlu0 %4824
        %vm4826 = vcmask 39936
        %v4828 = vsel %vm4826, %v4823, 0
        %vm4830 = vcmask 1041408
        %vm4831 = vcmask 1042432
        %v4832 = vsel %vm4830, 4294967295, 65535
        %v4833 = vsel %vm4831, %v4832, 0
        %v4835 = vand.u32 %v4825, %v4833
        %4837 = vmatprep.subr.bf16.mxu0 0
        %4838 = vmatpush1.bf16.msra.mxu0 %v4835
        %4839 = vmatprep.subr.bf16.mxu0 0
        %4840 = vmatpush1.bf16.msra.mxu0 0
        %4841 = vmatprep.subr.bf16.mxu0 0
        %4842 = vmatpush1.bf16.msra.mxu0 0
        %4843 = vmatprep.subr.bf16.mxu0 0
        %4844 = vmatpush1.bf16.msra.mxu0 0
        %4845 = vmatprep.subr.bf16.mxu0 0
        %4846 = vmatpush1.bf16.msra.mxu0 0
        %4847 = vmatprep.subr.bf16.mxu0 0
        %4848 = vmatpush1.bf16.msra.mxu0 0
        %4849 = vmatprep.subr.bf16.mxu0 0
        %4850 = vmatpush1.bf16.msra.mxu0 0
        %4851 = vmatprep.subr.bf16.mxu0 0
        %4852 = vmatpush1.bf16.msra.mxu0 0
        %4853 = vmatprep.subr.bf16.mxu0 0
        %4854 = vmatpush1.bf16.msra.mxu0 0
        %4855 = vmatprep.subr.bf16.mxu0 0
        %4856 = vmatpush1.bf16.msra.mxu0 0
        %4857 = vmatprep.subr.bf16.mxu0 0
        %4858 = vmatpush1.bf16.msra.mxu0 0
        %4859 = vmatprep.subr.bf16.mxu0 0
        %4860 = vmatpush1.bf16.msra.mxu0 0
        %4861 = vmatprep.subr.bf16.mxu0 0
        %4862 = vmatpush1.bf16.msra.mxu0 0
        %4863 = vmatprep.subr.bf16.mxu0 0
        %4864 = vmatpush1.bf16.msra.mxu0 0
        %4865 = vmatprep.subr.bf16.mxu0 0
        %4866 = vmatpush1.bf16.msra.mxu0 0
        %4867 = vmatprep.subr.bf16.mxu0 0
        %4868 = vmatpush1.bf16.msra.mxu0 0
        %4869 = vmatprep.mubr.bf16.mxu0 0
        %4870 = vmatmul.mubr.bf16.gmra.mrb[0].mxu0 %v4828
        %v4871 = vpop.f32.mrb[0].mxu0
        %v4872 = vadd.f32 0.0, %v4871
        %v4873 = vpop.f32.mrb[0].mxu0
        %v4874 = vpop.f32.mrb[0].mxu0
        %v4875 = vpop.f32.mrb[0].mxu0
        %4876 = vdwg.mxu0
        %4877 = vrot.lane.b32.xlu0 %v4761, 120
        %v4878 = vpop.permute.xlu0 %4877
        %4879 = vrot.lane.b32.xlu0 %v4761, 88
        %v4880 = vpop.permute.xlu0 %4879
        %v4882 = vsel %vm2059, %v4878, 0
        %v4885 = vsel %vm2059, %v4880, 0
        %4887 = vmatprep.subr.bf16.mxu0 0
        %4888 = vmatpush1.bf16.xpose.msra.mxu0 %v4885
        %4889 = vmatprep.subr.bf16.mxu0 0
        %4890 = vmatpush1.bf16.xpose.msra.mxu0 0
        %4891 = vmatprep.subr.bf16.mxu0 0
        %4892 = vmatpush1.bf16.xpose.msra.mxu0 0
        %4893 = vmatprep.subr.bf16.mxu0 0
        %4894 = vmatpush1.bf16.xpose.msra.mxu0 0
        %4895 = vmatprep.subr.bf16.mxu0 0
        %4896 = vmatpush1.bf16.xpose.msra.mxu0 0
        %4897 = vmatprep.subr.bf16.mxu0 0
        %4898 = vmatpush1.bf16.xpose.msra.mxu0 0
        %4899 = vmatprep.subr.bf16.mxu0 0
        %4900 = vmatpush1.bf16.xpose.msra.mxu0 0
        %4901 = vmatprep.subr.bf16.mxu0 0
        %4902 = vmatpush1.bf16.xpose.msra.mxu0 0
        %4903 = vmatprep.subr.bf16.mxu0 0
        %4904 = vmatpush1.bf16.xpose.msra.mxu0 0
        %4905 = vmatprep.subr.bf16.mxu0 0
        %4906 = vmatpush1.bf16.xpose.msra.mxu0 0
        %4907 = vmatprep.subr.bf16.mxu0 0
        %4908 = vmatpush1.bf16.xpose.msra.mxu0 0
        %4909 = vmatprep.subr.bf16.mxu0 0
        %4910 = vmatpush1.bf16.xpose.msra.mxu0 0
        %4911 = vmatprep.subr.bf16.mxu0 0
        %4912 = vmatpush1.bf16.xpose.msra.mxu0 0
        %4913 = vmatprep.subr.bf16.mxu0 0
        %4914 = vmatpush1.bf16.xpose.msra.mxu0 0
        %4915 = vmatprep.subr.bf16.mxu0 0
        %4916 = vmatpush1.bf16.xpose.msra.mxu0 0
        %4917 = vmatprep.subr.bf16.mxu0 0
        %4918 = vmatpush1.bf16.xpose.msra.mxu0 0
        %4919 = vmatprep.mubr.bf16.mxu0 0
        %4920 = vmatmul.mubr.bf16.gmra.mrb[0].mxu0 %v4882
        %v4921 = vpop.f32.mrb[0].mxu0
        %v4922 = vadd.f32 0.0, %v4921
        %v4923 = vpop.f32.mrb[0].mxu0
        %v4924 = vpop.f32.mrb[0].mxu0
        %v4925 = vpop.f32.mrb[0].mxu0
        %4926 = vdwg.mxu0
        %v4927 = vsel %vm4811, %v4922, -inf
        %4928 = vmax.xlane.f32.xlu0 %v4927
        %v4929 = vpop.xlane.xlu0 %4928
        %v4930 = vsub.f32 %v4922, %v4929
        %v4931 = vmul.f32 %v4930, 1.442695
        %v4932 = vpow.pop %v4931
        %v4933 = vsel %vm4811, %v4932, 0.0
        %4934 = vadd.xlane.f32.xlu0 %v4933
        %v4935 = vpop.xlane.xlu0 %4934
        %v4936 = vrcp.pop %v4935
        %v4937 = vmul.f32 %v4932, %v4936
        %v4938 = vpack.c.bf16 %v4937, %v4937
        %4939 = vrot.lane.b32.xlu0 %v4761, 56
        %v4940 = vpop.permute.xlu0 %4939
        %v4942 = vsel %vm4826, %v4938, 0
        %v4945 = vand.u32 %v4940, %v4833
        %4947 = vmatprep.subr.bf16.mxu0 0
        %4948 = vmatpush1.bf16.msra.mxu0 %v4945
        %4949 = vmatprep.subr.bf16.mxu0 0
        %4950 = vmatpush1.bf16.msra.mxu0 0
        %4951 = vmatprep.subr.bf16.mxu0 0
        %4952 = vmatpush1.bf16.msra.mxu0 0
        %4953 = vmatprep.subr.bf16.mxu0 0
        %4954 = vmatpush1.bf16.msra.mxu0 0
        %4955 = vmatprep.subr.bf16.mxu0 0
        %4956 = vmatpush1.bf16.msra.mxu0 0
        %4957 = vmatprep.subr.bf16.mxu0 0
        %4958 = vmatpush1.bf16.msra.mxu0 0
        %4959 = vmatprep.subr.bf16.mxu0 0
        %4960 = vmatpush1.bf16.msra.mxu0 0
        %4961 = vmatprep.subr.bf16.mxu0 0
        %4962 = vmatpush1.bf16.msra.mxu0 0
        %4963 = vmatprep.subr.bf16.mxu0 0
        %4964 = vmatpush1.bf16.msra.mxu0 0
        %4965 = vmatprep.subr.bf16.mxu0 0
        %4966 = vmatpush1.bf16.msra.mxu0 0
        %4967 = vmatprep.subr.bf16.mxu0 0
        %4968 = vmatpush1.bf16.msra.mxu0 0
        %4969 = vmatprep.subr.bf16.mxu0 0
        %4970 = vmatpush1.bf16.msra.mxu0 0
        %4971 = vmatprep.subr.bf16.mxu0 0
        %4972 = vmatpush1.bf16.msra.mxu0 0
        %4973 = vmatprep.subr.bf16.mxu0 0
        %4974 = vmatpush1.bf16.msra.mxu0 0
        %4975 = vmatprep.subr.bf16.mxu0 0
        %4976 = vmatpush1.bf16.msra.mxu0 0
        %4977 = vmatprep.subr.bf16.mxu0 0
        %4978 = vmatpush1.bf16.msra.mxu0 0
        %4979 = vmatprep.mubr.bf16.mxu0 0
        %4980 = vmatmul.mubr.bf16.gmra.mrb[0].mxu0 %v4942
        %v4981 = vpop.f32.mrb[0].mxu0
        %v4982 = vadd.f32 0.0, %v4981
        %v4983 = vpop.f32.mrb[0].mxu0
        %v4984 = vpop.f32.mrb[0].mxu0
        %v4985 = vpop.f32.mrb[0].mxu0
        %4986 = vdwg.mxu0
        %4987 = vrot.lane.b32.xlu0 %v4761, 112
        %v4988 = vpop.permute.xlu0 %4987
        %4989 = vrot.lane.b32.xlu0 %v4761, 80
        %v4990 = vpop.permute.xlu0 %4989
        %v4992 = vsel %vm2059, %v4988, 0
        %v4995 = vsel %vm2059, %v4990, 0
        %4997 = vmatprep.subr.bf16.mxu0 0
        %4998 = vmatpush1.bf16.xpose.msra.mxu0 %v4995
        %4999 = vmatprep.subr.bf16.mxu0 0
        %5000 = vmatpush1.bf16.xpose.msra.mxu0 0
        %5001 = vmatprep.subr.bf16.mxu0 0
        %5002 = vmatpush1.bf16.xpose.msra.mxu0 0
        %5003 = vmatprep.subr.bf16.mxu0 0
        %5004 = vmatpush1.bf16.xpose.msra.mxu0 0
        %5005 = vmatprep.subr.bf16.mxu0 0
        %5006 = vmatpush1.bf16.xpose.msra.mxu0 0
        %5007 = vmatprep.subr.bf16.mxu0 0
        %5008 = vmatpush1.bf16.xpose.msra.mxu0 0
        %5009 = vmatprep.subr.bf16.mxu0 0
        %5010 = vmatpush1.bf16.xpose.msra.mxu0 0
        %5011 = vmatprep.subr.bf16.mxu0 0
        %5012 = vmatpush1.bf16.xpose.msra.mxu0 0
        %5013 = vmatprep.subr.bf16.mxu0 0
        %5014 = vmatpush1.bf16.xpose.msra.mxu0 0
        %5015 = vmatprep.subr.bf16.mxu0 0
        %5016 = vmatpush1.bf16.xpose.msra.mxu0 0
        %5017 = vmatprep.subr.bf16.mxu0 0
        %5018 = vmatpush1.bf16.xpose.msra.mxu0 0
        %5019 = vmatprep.subr.bf16.mxu0 0
        %5020 = vmatpush1.bf16.xpose.msra.mxu0 0
        %5021 = vmatprep.subr.bf16.mxu0 0
        %5022 = vmatpush1.bf16.xpose.msra.mxu0 0
        %5023 = vmatprep.subr.bf16.mxu0 0
        %5024 = vmatpush1.bf16.xpose.msra.mxu0 0
        %5025 = vmatprep.subr.bf16.mxu0 0
        %5026 = vmatpush1.bf16.xpose.msra.mxu0 0
        %5027 = vmatprep.subr.bf16.mxu0 0
        %5028 = vmatpush1.bf16.xpose.msra.mxu0 0
        %5029 = vmatprep.mubr.bf16.mxu0 0
        %5030 = vmatmul.mubr.bf16.gmra.mrb[0].mxu0 %v4992
        %v5031 = vpop.f32.mrb[0].mxu0
        %v5032 = vadd.f32 0.0, %v5031
        %v5033 = vpop.f32.mrb[0].mxu0
        %v5034 = vpop.f32.mrb[0].mxu0
        %v5035 = vpop.f32.mrb[0].mxu0
        %5036 = vdwg.mxu0
        %v5037 = vsel %vm4811, %v5032, -inf
        %5038 = vmax.xlane.f32.xlu0 %v5037
        %v5039 = vpop.xlane.xlu0 %5038
        %v5040 = vsub.f32 %v5032, %v5039
        %v5041 = vmul.f32 %v5040, 1.442695
        %v5042 = vpow.pop %v5041
        %v5043 = vsel %vm4811, %v5042, 0.0
        %5044 = vadd.xlane.f32.xlu0 %v5043
        %v5045 = vpop.xlane.xlu0 %5044
        %v5046 = vrcp.pop %v5045
        %v5047 = vmul.f32 %v5042, %v5046
        %v5048 = vpack.c.bf16 %v5047, %v5047
        %5049 = vrot.lane.b32.xlu0 %v4761, 48
        %v5050 = vpop.permute.xlu0 %5049
        %v5052 = vsel %vm4826, %v5048, 0
        %v5055 = vand.u32 %v5050, %v4833
        %5057 = vmatprep.subr.bf16.mxu0 0
        %5058 = vmatpush1.bf16.msra.mxu0 %v5055
        %5059 = vmatprep.subr.bf16.mxu0 0
        %5060 = vmatpush1.bf16.msra.mxu0 0
        %5061 = vmatprep.subr.bf16.mxu0 0
        %5062 = vmatpush1.bf16.msra.mxu0 0
        %5063 = vmatprep.subr.bf16.mxu0 0
        %5064 = vmatpush1.bf16.msra.mxu0 0
        %5065 = vmatprep.subr.bf16.mxu0 0
        %5066 = vmatpush1.bf16.msra.mxu0 0
        %5067 = vmatprep.subr.bf16.mxu0 0
        %5068 = vmatpush1.bf16.msra.mxu0 0
        %5069 = vmatprep.subr.bf16.mxu0 0
        %5070 = vmatpush1.bf16.msra.mxu0 0
        %5071 = vmatprep.subr.bf16.mxu0 0
        %5072 = vmatpush1.bf16.msra.mxu0 0
        %5073 = vmatprep.subr.bf16.mxu0 0
        %5074 = vmatpush1.bf16.msra.mxu0 0
        %5075 = vmatprep.subr.bf16.mxu0 0
        %5076 = vmatpush1.bf16.msra.mxu0 0
        %5077 = vmatprep.subr.bf16.mxu0 0
        %5078 = vmatpush1.bf16.msra.mxu0 0
        %5079 = vmatprep.subr.bf16.mxu0 0
        %5080 = vmatpush1.bf16.msra.mxu0 0
        %5081 = vmatprep.subr.bf16.mxu0 0
        %5082 = vmatpush1.bf16.msra.mxu0 0
        %5083 = vmatprep.subr.bf16.mxu0 0
        %5084 = vmatpush1.bf16.msra.mxu0 0
        %5085 = vmatprep.subr.bf16.mxu0 0
        %5086 = vmatpush1.bf16.msra.mxu0 0
        %5087 = vmatprep.subr.bf16.mxu0 0
        %5088 = vmatpush1.bf16.msra.mxu0 0
        %5089 = vmatprep.mubr.bf16.mxu0 0
        %5090 = vmatmul.mubr.bf16.gmra.mrb[0].mxu0 %v5052
        %v5091 = vpop.f32.mrb[0].mxu0
        %v5092 = vadd.f32 0.0, %v5091
        %v5093 = vpop.f32.mrb[0].mxu0
        %v5094 = vpop.f32.mrb[0].mxu0
        %v5095 = vpop.f32.mrb[0].mxu0
        %5096 = vdwg.mxu0
        %5097 = vrot.lane.b32.xlu0 %v4761, 104
        %v5098 = vpop.permute.xlu0 %5097
        %5099 = vrot.lane.b32.xlu0 %v4761, 72
        %v5100 = vpop.permute.xlu0 %5099
        %v5102 = vsel %vm2059, %v5098, 0
        %v5105 = vsel %vm2059, %v5100, 0
        %5107 = vmatprep.subr.bf16.mxu0 0
        %5108 = vmatpush1.bf16.xpose.msra.mxu0 %v5105
        %5109 = vmatprep.subr.bf16.mxu0 0
        %5110 = vmatpush1.bf16.xpose.msra.mxu0 0
        %5111 = vmatprep.subr.bf16.mxu0 0
        %5112 = vmatpush1.bf16.xpose.msra.mxu0 0
        %5113 = vmatprep.subr.bf16.mxu0 0
        %5114 = vmatpush1.bf16.xpose.msra.mxu0 0
        %5115 = vmatprep.subr.bf16.mxu0 0
        %5116 = vmatpush1.bf16.xpose.msra.mxu0 0
        %5117 = vmatprep.subr.bf16.mxu0 0
        %5118 = vmatpush1.bf16.xpose.msra.mxu0 0
        %5119 = vmatprep.subr.bf16.mxu0 0
        %5120 = vmatpush1.bf16.xpose.msra.mxu0 0
        %5121 = vmatprep.subr.bf16.mxu0 0
        %5122 = vmatpush1.bf16.xpose.msra.mxu0 0
        %5123 = vmatprep.subr.bf16.mxu0 0
        %5124 = vmatpush1.bf16.xpose.msra.mxu0 0
        %5125 = vmatprep.subr.bf16.mxu0 0
        %5126 = vmatpush1.bf16.xpose.msra.mxu0 0
        %5127 = vmatprep.subr.bf16.mxu0 0
        %5128 = vmatpush1.bf16.xpose.msra.mxu0 0
        %5129 = vmatprep.subr.bf16.mxu0 0
        %5130 = vmatpush1.bf16.xpose.msra.mxu0 0
        %5131 = vmatprep.subr.bf16.mxu0 0
        %5132 = vmatpush1.bf16.xpose.msra.mxu0 0
        %5133 = vmatprep.subr.bf16.mxu0 0
        %5134 = vmatpush1.bf16.xpose.msra.mxu0 0
        %5135 = vmatprep.subr.bf16.mxu0 0
        %5136 = vmatpush1.bf16.xpose.msra.mxu0 0
        %5137 = vmatprep.subr.bf16.mxu0 0
        %5138 = vmatpush1.bf16.xpose.msra.mxu0 0
        %5139 = vmatprep.mubr.bf16.mxu0 0
        %5140 = vmatmul.mubr.bf16.gmra.mrb[0].mxu0 %v5102
        %v5141 = vpop.f32.mrb[0].mxu0
        %v5142 = vadd.f32 0.0, %v5141
        %v5143 = vpop.f32.mrb[0].mxu0
        %v5144 = vpop.f32.mrb[0].mxu0
        %v5145 = vpop.f32.mrb[0].mxu0
        %5146 = vdwg.mxu0
        %v5147 = vsel %vm4811, %v5142, -inf
        %5148 = vmax.xlane.f32.xlu0 %v5147
        %v5149 = vpop.xlane.xlu0 %5148
        %v5150 = vsub.f32 %v5142, %v5149
        %v5151 = vmul.f32 %v5150, 1.442695
        %v5152 = vpow.pop %v5151
        %v5153 = vsel %vm4811, %v5152, 0.0
        %5154 = vadd.xlane.f32.xlu0 %v5153
        %v5155 = vpop.xlane.xlu0 %5154
        %v5156 = vrcp.pop %v5155
        %v5157 = vmul.f32 %v5152, %v5156
        %v5158 = vpack.c.bf16 %v5157, %v5157
        %5159 = vrot.lane.b32.xlu0 %v4761, 40
        %v5160 = vpop.permute.xlu0 %5159
        %v5162 = vsel %vm4826, %v5158, 0
        %v5165 = vand.u32 %v5160, %v4833
        %5167 = vmatprep.subr.bf16.mxu0 0
        %5168 = vmatpush1.bf16.msra.mxu0 %v5165
        %5169 = vmatprep.subr.bf16.mxu0 0
        %5170 = vmatpush1.bf16.msra.mxu0 0
        %5171 = vmatprep.subr.bf16.mxu0 0
        %5172 = vmatpush1.bf16.msra.mxu0 0
        %5173 = vmatprep.subr.bf16.mxu0 0
        %5174 = vmatpush1.bf16.msra.mxu0 0
        %5175 = vmatprep.subr.bf16.mxu0 0
        %5176 = vmatpush1.bf16.msra.mxu0 0
        %5177 = vmatprep.subr.bf16.mxu0 0
        %5178 = vmatpush1.bf16.msra.mxu0 0
        %5179 = vmatprep.subr.bf16.mxu0 0
        %5180 = vmatpush1.bf16.msra.mxu0 0
        %5181 = vmatprep.subr.bf16.mxu0 0
        %5182 = vmatpush1.bf16.msra.mxu0 0
        %5183 = vmatprep.subr.bf16.mxu0 0
        %5184 = vmatpush1.bf16.msra.mxu0 0
        %5185 = vmatprep.subr.bf16.mxu0 0
        %5186 = vmatpush1.bf16.msra.mxu0 0
        %5187 = vmatprep.subr.bf16.mxu0 0
        %5188 = vmatpush1.bf16.msra.mxu0 0
        %5189 = vmatprep.subr.bf16.mxu0 0
        %5190 = vmatpush1.bf16.msra.mxu0 0
        %5191 = vmatprep.subr.bf16.mxu0 0
        %5192 = vmatpush1.bf16.msra.mxu0 0
        %5193 = vmatprep.subr.bf16.mxu0 0
        %5194 = vmatpush1.bf16.msra.mxu0 0
        %5195 = vmatprep.subr.bf16.mxu0 0
        %5196 = vmatpush1.bf16.msra.mxu0 0
        %5197 = vmatprep.subr.bf16.mxu0 0
        %5198 = vmatpush1.bf16.msra.mxu0 0
        %5199 = vmatprep.mubr.bf16.mxu0 0
        %5200 = vmatmul.mubr.bf16.gmra.mrb[0].mxu0 %v5162
        %v5201 = vpop.f32.mrb[0].mxu0
        %v5202 = vadd.f32 0.0, %v5201
        %v5203 = vpop.f32.mrb[0].mxu0
        %v5204 = vpop.f32.mrb[0].mxu0
        %v5205 = vpop.f32.mrb[0].mxu0
        %5206 = vdwg.mxu0
        %5208 = vrot.lane.b32.xlu0 %v4982, 8
        %v5209 = vpop.permute.xlu0 %5208
        %5212 = vrot.lane.b32.xlu0 %v5092, 16
        %v5213 = vpop.permute.xlu0 %5212
        %5216 = vrot.lane.b32.xlu0 %v5202, 24
        %v5217 = vpop.permute.xlu0 %5216
        %v5219 = vsel %vm2059, %v4872, %v5209
        %v5220 = vsel %vm1825, %v5219, %v5213
        %vm5221 = vcmask 195584
        %v5222 = vsel %vm5221, %v5220, %v5217
        %v5223 = vpack.c.bf16 %v5222, %v5222
        %v5225 = vlaneseq
        %v5226 = vshrl.u32 %v5225, 7
        %v5227 = vsub.s32 0, %v5226
        %v5228 = vrot.slane %v1651, %v5227
        %v5234 = vunpack.c.l.b16 %v1647
        %v5235 = vunpack.c.l.b16 %v1648
        %v5236 = vunpack.c.l.b16 %v1649
        %v5237 = vunpack.c.l.b16 %v1650
        %v5238 = vpack.c.b16 %v5235, %v5234
        %v5239 = vpack.c.b16 %v5237, %v5236
        %v5243 = vsel %vm4717, %v5223, 0
        %5245 = vmatprep.subr.bf16.mxu0 0
        %5246 = vmatpush1.bf16.msra.mxu0 %v5238
        %5247 = vmatprep.subr.bf16.mxu0 0
        %5248 = vmatpush1.bf16.msra.mxu0 %v5239
        %5249 = vmatprep.subr.bf16.mxu0 0
        %5250 = vmatpush1.bf16.msra.mxu0 0
        %5251 = vmatprep.subr.bf16.mxu0 0
        %5252 = vmatpush1.bf16.msra.mxu0 0
        %5253 = vmatprep.subr.bf16.mxu0 0
        %5254 = vmatpush1.bf16.msra.mxu0 0
        %5255 = vmatprep.subr.bf16.mxu0 0
        %5256 = vmatpush1.bf16.msra.mxu0 0
        %5257 = vmatprep.subr.bf16.mxu0 0
        %5258 = vmatpush1.bf16.msra.mxu0 0
        %5259 = vmatprep.subr.bf16.mxu0 0
        %5260 = vmatpush1.bf16.msra.mxu0 0
        %5261 = vmatprep.subr.bf16.mxu0 0
        %5262 = vmatpush1.bf16.msra.mxu0 0
        %5263 = vmatprep.subr.bf16.mxu0 0
        %5264 = vmatpush1.bf16.msra.mxu0 0
        %5265 = vmatprep.subr.bf16.mxu0 0
        %5266 = vmatpush1.bf16.msra.mxu0 0
        %5267 = vmatprep.subr.bf16.mxu0 0
        %5268 = vmatpush1.bf16.msra.mxu0 0
        %5269 = vmatprep.subr.bf16.mxu0 0
        %5270 = vmatpush1.bf16.msra.mxu0 0
        %5271 = vmatprep.subr.bf16.mxu0 0
        %5272 = vmatpush1.bf16.msra.mxu0 0
        %5273 = vmatprep.subr.bf16.mxu0 0
        %5274 = vmatpush1.bf16.msra.mxu0 0
        %5275 = vmatprep.subr.bf16.mxu0 0
        %5276 = vmatpush1.bf16.msra.mxu0 0
        %5277 = vmatprep.mubr.bf16.mxu0 0
        %5278 = vmatmul.mubr.bf16.gmra.mrb[0].mxu0 %v5243
        %v5279 = vpop.f32.mrb[0].mxu0
        %v5280 = vadd.f32 %v5228, %v5279
        %v5281 = vpop.f32.mrb[0].mxu0
        %v5282 = vpop.f32.mrb[0].mxu0
        %v5283 = vpop.f32.mrb[0].mxu0
        %5284 = vdwg.mxu0
        %v5285 = vadd.f32 %v4668, %v5280
        %v5286 = vsel %vm4669, %v5285, 0.0
        %5287 = vadd.xlane.f32.xlu0 %v5286
        %v5288 = vpop.xlane.xlu0 %5287
        %v5289 = vmul.f32 %v5288, %v4673
        %v5290 = vsub.f32 %v5285, %v5289
        %v5291 = vmul.f32 %v5290, %v5290
        %v5292 = vsel %vm4669, %v5291, 0.0
        %5293 = vadd.xlane.f32.xlu0 %v5292
        %v5294 = vpop.xlane.xlu0 %5293
        %v5295 = vmul.f32 %v5294, %v4673
        %v5296 = vadd.f32 %v5295, 1e-05
        %v5297 = vrsqrt.pop %v5296
        %v5298 = vmul.f32 %v5290, %v5297
        %v5300 = vlaneseq
        %v5301 = vshrl.u32 %v5300, 7
        %v5302 = vsub.s32 0, %v5301
        %v5303 = vrot.slane %v1652, %v5302
        %v5305 = vmul.f32 %v5298, %v5303
        %v5307 = vlaneseq
        %v5308 = vshrl.u32 %v5307, 7
        %v5309 = vsub.s32 0, %v5308
        %v5310 = vrot.slane %v1653, %v5309
        %v5312 = vadd.f32 %v5305, %v5310
        %v5313 = vpack.c.bf16 %v5312, %v5312
        %v5315 = vlaneseq
        %v5316 = vshrl.u32 %v5315, 7
        %v5317 = vsub.s32 0, %v5316
        %v5318 = vrot.slane %v1658, %v5317
        %v5324 = vunpack.c.l.b16 %v1654
        %v5325 = vunpack.c.l.b16 %v1655
        %v5326 = vunpack.c.l.b16 %v1656
        %v5327 = vunpack.c.l.b16 %v1657
        %v5328 = vpack.c.b16 %v5325, %v5324
        %v5329 = vpack.c.b16 %v5327, %v5326
        %v5333 = vsel %vm4717, %v5313, 0
        %5335 = vmatprep.subr.bf16.mxu0 0
        %5336 = vmatpush1.bf16.msra.mxu0 %v5328
        %5337 = vmatprep.subr.bf16.mxu0 0
        %5338 = vmatpush1.bf16.msra.mxu0 %v5329
        %5339 = vmatprep.subr.bf16.mxu0 0
        %5340 = vmatpush1.bf16.msra.mxu0 0
        %5341 = vmatprep.subr.bf16.mxu0 0
        %5342 = vmatpush1.bf16.msra.mxu0 0
        %5343 = vmatprep.subr.bf16.mxu0 0
        %5344 = vmatpush1.bf16.msra.mxu0 0
        %5345 = vmatprep.subr.bf16.mxu0 0
        %5346 = vmatpush1.bf16.msra.mxu0 0
        %5347 = vmatprep.subr.bf16.mxu0 0
        %5348 = vmatpush1.bf16.msra.mxu0 0
        %5349 = vmatprep.subr.bf16.mxu0 0
        %5350 = vmatpush1.bf16.msra.mxu0 0
        %5351 = vmatprep.subr.bf16.mxu0 0
        %5352 = vmatpush1.bf16.msra.mxu0 0
        %5353 = vmatprep.subr.bf16.mxu0 0
        %5354 = vmatpush1.bf16.msra.mxu0 0
        %5355 = vmatprep.subr.bf16.mxu0 0
        %5356 = vmatpush1.bf16.msra.mxu0 0
        %5357 = vmatprep.subr.bf16.mxu0 0
        %5358 = vmatpush1.bf16.msra.mxu0 0
        %5359 = vmatprep.subr.bf16.mxu0 0
        %5360 = vmatpush1.bf16.msra.mxu0 0
        %5361 = vmatprep.subr.bf16.mxu0 0
        %5362 = vmatpush1.bf16.msra.mxu0 0
        %5363 = vmatprep.subr.bf16.mxu0 0
        %5364 = vmatpush1.bf16.msra.mxu0 0
        %5365 = vmatprep.subr.bf16.mxu0 0
        %5366 = vmatpush1.bf16.msra.mxu0 0
        %5367 = vmatprep.mubr.bf16.mxu0 0
        %5368 = vmatmul.mubr.bf16.gmra.mrb[0].mxu0 %v5333
        %v5369 = vpop.f32.mrb[0].mxu0
        %v5370 = vadd.f32 %v5318, %v5369
        %v5371 = vpop.f32.mrb[0].mxu0
        %v5372 = vpop.f32.mrb[0].mxu0
        %v5373 = vpop.f32.mrb[0].mxu0
        %5374 = vdwg.mxu0
        %v5375 = vmul.f32 %v5370, 0.5
        %v5376 = vmul.f32 %v5370, 0.044715
        %v5377 = vmul.f32 %v5376, %v5370
        %v5378 = vmul.f32 %v5377, %v5370
        %v5379 = vadd.f32 %v5370, %v5378
        %v5380 = vmul.f32 %v5379, 0.7978846
        %v5381 = vtanh.pop %v5380
        %v5382 = vadd.f32 %v5381, 1.0
        %v5383 = vmul.f32 %v5375, %v5382
        %v5384 = vpack.c.bf16 %v5383, %v5383
        %v5401 = vunpack.c.l.b16 %v1659
        %v5402 = vunpack.c.l.b16 %v1660
        %v5403 = vunpack.c.l.b16 %v1661
        %v5404 = vunpack.c.l.b16 %v1662
        %v5405 = vunpack.c.l.b16 %v1663
        %v5406 = vunpack.c.l.b16 %v1664
        %v5407 = vunpack.c.l.b16 %v1665
        %v5408 = vunpack.c.l.b16 %v1666
        %v5409 = vunpack.c.l.b16 %v1667
        %v5410 = vunpack.c.l.b16 %v1668
        %v5411 = vunpack.c.l.b16 %v1669
        %v5412 = vunpack.c.l.b16 %v1670
        %v5413 = vunpack.c.l.b16 %v1671
        %v5414 = vunpack.c.l.b16 %v1672
        %v5415 = vunpack.c.l.b16 %v1673
        %v5416 = vunpack.c.l.b16 %v1674
        %v5417 = vpack.c.b16 %v5402, %v5401
        %v5418 = vpack.c.b16 %v5404, %v5403
        %v5419 = vpack.c.b16 %v5406, %v5405
        %v5420 = vpack.c.b16 %v5408, %v5407
        %v5421 = vpack.c.b16 %v5410, %v5409
        %v5422 = vpack.c.b16 %v5412, %v5411
        %v5423 = vpack.c.b16 %v5414, %v5413
        %v5424 = vpack.c.b16 %v5416, %v5415
        %5433 = vmatprep.subr.bf16.mxu0 0
        %5434 = vmatpush1.bf16.msra.mxu0 %v5417
        %5435 = vmatprep.subr.bf16.mxu0 0
        %5436 = vmatpush1.bf16.msra.mxu0 %v5418
        %5437 = vmatprep.subr.bf16.mxu0 0
        %5438 = vmatpush1.bf16.msra.mxu0 %v5419
        %5439 = vmatprep.subr.bf16.mxu0 0
        %5440 = vmatpush1.bf16.msra.mxu0 %v5420
        %5441 = vmatprep.subr.bf16.mxu0 0
        %5442 = vmatpush1.bf16.msra.mxu0 %v5421
        %5443 = vmatprep.subr.bf16.mxu0 0
        %5444 = vmatpush1.bf16.msra.mxu0 %v5422
        %5445 = vmatprep.subr.bf16.mxu0 0
        %5446 = vmatpush1.bf16.msra.mxu0 %v5423
        %5447 = vmatprep.subr.bf16.mxu0 0
        %5448 = vmatpush1.bf16.msra.mxu0 %v5424
        %5449 = vmatprep.subr.bf16.mxu0 0
        %5450 = vmatpush1.bf16.msra.mxu0 0
        %5451 = vmatprep.subr.bf16.mxu0 0
        %5452 = vmatpush1.bf16.msra.mxu0 0
        %5453 = vmatprep.subr.bf16.mxu0 0
        %5454 = vmatpush1.bf16.msra.mxu0 0
        %5455 = vmatprep.subr.bf16.mxu0 0
        %5456 = vmatpush1.bf16.msra.mxu0 0
        %5457 = vmatprep.subr.bf16.mxu0 0
        %5458 = vmatpush1.bf16.msra.mxu0 0
        %5459 = vmatprep.subr.bf16.mxu0 0
        %5460 = vmatpush1.bf16.msra.mxu0 0
        %5461 = vmatprep.subr.bf16.mxu0 0
        %5462 = vmatpush1.bf16.msra.mxu0 0
        %5463 = vmatprep.subr.bf16.mxu0 0
        %5464 = vmatpush1.bf16.msra.mxu0 0
        %5465 = vmatprep.mubr.bf16.mxu0 0
        %5466 = vmatmul.mubr.bf16.gmra.mrb[0].mxu0 %v5384
        %v5467 = vpop.f32.mrb[0].mxu0
        %v5468 = vadd.f32 0.0, %v5467
        %v5469 = vpop.f32.mrb[0].mxu0
        %v5470 = vpop.f32.mrb[0].mxu0
        %v5471 = vpop.f32.mrb[0].mxu0
        %5472 = vdwg.mxu0
        %v5473 = vadd.f32 %v5285, %v5468
        %v5475 = vlaneseq
        %v5476 = vshrl.u32 %v5475, 7
        %v5477 = vsub.s32 0, %v5476
        %v5478 = vrot.slane %v1675, %v5477
        %v5480 = vadd.f32 %v5473, %v5478
        %5481 = vst.msk [vmem:[#allocation2] sm:$0xff] %vm1825, %v3579
        %5482 = vst.msk [vmem:[#allocation2 + $0x8] sm:$0xff] %vm1825, %v3580
        %5483 = vst.msk [vmem:[#allocation2 + $0x10] sm:$0xff] %vm1825, %v3581
        %5484 = vst.msk [vmem:[#allocation2 + $0x18] sm:$0xff] %vm1825, %v3582
        %5485 = vst.msk [vmem:[#allocation2 + $0x20] sm:$0xff] %vm1825, %v3583
        %5486 = vst.msk [vmem:[#allocation2 + $0x28] sm:$0xff] %vm1825, %v3584
        %5487 = vst.msk [vmem:[#allocation2 + $0x30] sm:$0xff] %vm1825, %v3585
        %5488 = vst.msk [vmem:[#allocation2 + $0x38] sm:$0xff] %vm1825, %v3586
        %5489 = vst.msk [vmem:[#allocation3] sm:$0x1f] %vm4669, %v5480
        %p5490 = scmp.eq.s32.totalorder %s94, 1
        // Predicated region
        $region173: #{tnt_forward.1} parent=167 // pred_check
          %p5491 = pneg %p5490
        $region174: #{tnt_forward.1} parent=167 // pred_check_branch
          %5493 = sbr.rel (%p5491) target = $region176
        $region175: #{tnt_forward.1} parent=167 // pred_region
          %v5494 = vld [vmem:[%s67] sm:$0x1]
          %v5495 = vld [vmem:[%s69] sm:$0x1]
          %vm5496 = vcmask 253952
          %v5497 = vsel %vm5496, %v5480, 0.0
          %5498 = vadd.xlane.f32.xlu0 %v5497
          %v5499 = vpop.xlane.xlu0 %5498
          %v5500 = vmul.f32 %v5499, %v4673
          %v5501 = vsub.f32 %v5480, %v5500
          %v5502 = vmul.f32 %v5501, %v5501
          %v5503 = vsel %vm5496, %v5502, 0.0
          %5504 = vadd.xlane.f32.xlu0 %v5503
          %v5505 = vpop.xlane.xlu0 %5504
          %v5506 = vmul.f32 %v5505, %v4673
          %v5507 = vadd.f32 %v5506, 1e-05
          %v5508 = vrsqrt.pop %v5507
          %v5509 = vmul.f32 %v5501, %v5508
          %v5510 = vmul.f32 %v5509, %v5494
          %v5511 = vadd.f32 %v5510, %v5495
          %v5512 = vpack.c.bf16 %v5511, %v5511
          %v5513 = vld [vmem:[%s71] sm:$0xf]
          %v5514 = vld [vmem:[%s71 + $0x4] sm:$0xf]
          %v5515 = vld [vmem:[%s71 + $0x8] sm:$0xf]
          %v5516 = vld [vmem:[%s71 + $0xc] sm:$0xf]
          %v5517 = vld [vmem:[%s73] sm:$0x1]
          %v5522 = vunpack.c.l.b16 %v5513
          %v5523 = vunpack.c.l.b16 %v5514
          %v5524 = vunpack.c.l.b16 %v5515
          %v5525 = vunpack.c.l.b16 %v5516
          %v5526 = vpack.c.b16 %v5523, %v5522
          %v5527 = vpack.c.b16 %v5525, %v5524
          %v5531 = vsel %vm4717, %v5512, 0
          %5533 = vmatprep.subr.bf16.mxu0 0
          %5534 = vmatpush1.bf16.msra.mxu0 %v5526
          %5535 = vmatprep.subr.bf16.mxu0 0
          %5536 = vmatpush1.bf16.msra.mxu0 %v5527
          %5537 = vmatprep.subr.bf16.mxu0 0
          %5538 = vmatpush1.bf16.msra.mxu0 0
          %5539 = vmatprep.subr.bf16.mxu0 0
          %5540 = vmatpush1.bf16.msra.mxu0 0
          %5541 = vmatprep.subr.bf16.mxu0 0
          %5542 = vmatpush1.bf16.msra.mxu0 0
          %5543 = vmatprep.subr.bf16.mxu0 0
          %5544 = vmatpush1.bf16.msra.mxu0 0
          %5545 = vmatprep.subr.bf16.mxu0 0
          %5546 = vmatpush1.bf16.msra.mxu0 0
          %5547 = vmatprep.subr.bf16.mxu0 0
          %5548 = vmatpush1.bf16.msra.mxu0 0
          %5549 = vmatprep.subr.bf16.mxu0 0
          %5550 = vmatpush1.bf16.msra.mxu0 0
          %5551 = vmatprep.subr.bf16.mxu0 0
          %5552 = vmatpush1.bf16.msra.mxu0 0
          %5553 = vmatprep.subr.bf16.mxu0 0
          %5554 = vmatpush1.bf16.msra.mxu0 0
          %5555 = vmatprep.subr.bf16.mxu0 0
          %5556 = vmatpush1.bf16.msra.mxu0 0
          %5557 = vmatprep.subr.bf16.mxu0 0
          %5558 = vmatpush1.bf16.msra.mxu0 0
          %5559 = vmatprep.subr.bf16.mxu0 0
          %5560 = vmatpush1.bf16.msra.mxu0 0
          %5561 = vmatprep.subr.bf16.mxu0 0
          %5562 = vmatpush1.bf16.msra.mxu0 0
          %5563 = vmatprep.subr.bf16.mxu0 0
          %5564 = vmatpush1.bf16.msra.mxu0 0
          %5565 = vmatprep.mubr.bf16.mxu0 0
          %5566 = vmatmul.mubr.bf16.gmra.mrb[0].mxu0 %v5531
          %v5567 = vpop.f32.mrb[0].mxu0
          %v5568 = vadd.f32 %v5517, %v5567
          %v5569 = vpop.f32.mrb[0].mxu0
          %v5570 = vpop.f32.mrb[0].mxu0
          %v5571 = vpop.f32.mrb[0].mxu0
          %5572 = vdwg.mxu0
          %vm5573 = vcmask 73728
          %5574 = vst.msk [vmem:[%s1474] sm:$0x1] %vm5573, %v5568
        $region176: #{tnt_forward.1} parent=167 // pred_fallthru
          _
        %s5575 = sand.u32 %s1031, 1
        %s5576 = scalar_lea.sflag [#allocation5], %s5575
        %s5577 = sand.u32 %s1031, 1
        %s5578 = scalar_lea.vmem [#allocation4], %s5577
        // Predicated region
        $region177: #{tnt_forward.1} parent=167 // pred_check
          %p5579 = pneg %p1041
        $region178: #{tnt_forward.1} parent=167 // pred_check_branch
          %5581 = sbr.rel (%p5579) target = $region180
        $region179: #{tnt_forward.1} parent=167 // pred_region
          %s5583 = ssub.s32 16, 16
          %5584 = vsyncadd %s5576, %s5583
          %s5585 = smul.addr %s93, 16
          %s5586 = scalar_lea.hbm %s75, %s5585
          %s5588 = sshll.u32 %s5578, 4
          %s5589 = int_to_ptr.vmem [resolvable:$true] %s5588
          %5591 = dma.vmem_to_hbm [thread:$0]  %s5589, 16, %s5586, %s5576
        $region180: #{tnt_forward.1} parent=167 // pred_fallthru
          _
      $region168: #{tnt_forward.1} parent=5 // pred_fallthru
        _
      %p5592 = scmp.le.s32.totalorder 2, %s84
      // Predicated region
      $region181: #{tnt_forward.1} parent=5 // pred_check
        %p5593 = pneg %p5592
      $region182: #{tnt_forward.1} parent=5 // pred_check_branch
        %5595 = sbr.rel (%p5593) target = $region184
      $region183: #{tnt_forward.1} parent=5 // pred_region
        %s5596 = ssub.s32 %s84, 2
        // Predicated region
        $region185: #{tnt_forward.1} parent=183 // pred_check
          %p5597 = pneg %p1047
        $region186: #{tnt_forward.1} parent=183 // pred_check_branch
          %5599 = sbr.rel (%p5597) target = $region188
        $region187: #{tnt_forward.1} parent=183 // pred_region
          %s5600 = sand.u32 %s1032, 1
          %s5601 = scalar_lea.sflag [#allocation5], %s5600
          %s5602 = sand.u32 %s1032, 1
          %s5603 = scalar_lea.vmem [#allocation4], %s5602
          %5604 = dma.done %s5601, 16
        $region188: #{tnt_forward.1} parent=183 // pred_fallthru
          _
      $region184: #{tnt_forward.1} parent=5 // pred_fallthru
        _
    $region6: #{tnt_forward.1} parent=1 // loop_footer
      %s88 = sadd.s32 1, %s84
    $region7: #{tnt_forward.1} parent=1 // loop_footer_branch
      %83 = sbr.rel target = $region3
    $region8: #{tnt_forward.1} parent=1 // loop_exit
      _
    %5605 = vsyncpa [#allocation5], 1
    %s5606 = scalar_lea.sflag [#allocation5], 1
    %5607 = vsyncpa %s5606, 1

</llo_original>
